<compile_context>
chip_gen: v5e
topology: v5e:2x2
jax: 0.10.0
libtpu: 0.0.40
codegen_flags: <defaults>
</compile_context>

<pallas_src>
import functools

import jax
import jax.numpy as jnp
from jax.experimental import pallas as pl
from jax.experimental.pallas import tpu as pltpu

EPS = 1e-5
KS = 3
NHIDDEN = 128


def _round_up(v, m):
    return (v + m - 1) // m * m


# ---------------------------------------------------------------------------
# Kernel 1: per-(batch, channel) instance-norm statistics
# ---------------------------------------------------------------------------
def _make_stats_kernel(inv_hw):
    """Accumulates sum / sumsq over HW chunks; finalizes mean, 1/sqrt(var+eps)."""

    def kernel(x_ref, st_ref):
        s = pl.program_id(1)
        x = x_ref[...]                                       # (chunk, c_pad) f32

        @pl.when(s == 0)
        def _():
            st_ref[...] = jnp.zeros_like(st_ref)

        st_ref[0:1, :] = st_ref[0:1, :] + jnp.sum(x, axis=0, keepdims=True)
        st_ref[1:2, :] = st_ref[1:2, :] + jnp.sum(x * x, axis=0, keepdims=True)

        @pl.when(s == pl.num_programs(1) - 1)
        def _():
            mean = st_ref[0:1, :] * inv_hw
            # TODO(synk): E[x^2]-mean^2 can cancel for large-mean inputs; a
            # shifted / Welford update would be more robust.
            var = st_ref[1:2, :] * inv_hw - mean * mean
            st_ref[0:1, :] = mean
            st_ref[1:2, :] = jax.lax.rsqrt(jnp.maximum(var, 0.0) + EPS)

    return kernel


# ---------------------------------------------------------------------------
# Kernel 2: fused SPADE per (batch, row-tile)
# ---------------------------------------------------------------------------
def _make_fused_kernel(th, w, lnc_pad):
    """Shared conv+ReLU, gamma/beta conv (in-VMEM taps), instance-norm tail."""
    nh = NHIDDEN

    def kernel(x_ref, stats_ref, attr_ref, w1_ref, b1_ref, wgb_ref, bgb_ref,
               out_ref, act_scr):
        c_pad = out_ref.shape[-1]
        t = pl.program_id(1)
        nt = pl.num_programs(1)

        # ---- shared 3x3 conv + bias + ReLU over th+2 actv rows (1-row halo).
        # 9 tap matmuls accumulated in f32 on the MXU; no im2col temp.
        acc = jnp.zeros(((th + 2) * w, nh), jnp.float32)
        for dy in range(KS):
            for dx in range(KS):
                a = attr_ref[dy:dy + th + 2, dx:dx + w, :]
                a = a.reshape((th + 2) * w, lnc_pad)
                tap = dy * KS + dx
                wt = w1_ref[tap * lnc_pad:(tap + 1) * lnc_pad, :]
                acc = acc + jnp.dot(a, wt, preferred_element_type=jnp.float32)
        actv = jnp.maximum(acc + b1_ref[...], 0.0).astype(jnp.bfloat16)
        actv = actv.reshape(th + 2, w, nh)

        # ---- zero-bordered bf16 activation scratch (th+2, W+2, 128); halo
        # rows that fall outside the image must contribute ZERO to the
        # gamma/beta conv (its zero padding acts on the activation map).
        act_scr[:, 0:1, :] = jnp.zeros((th + 2, 1, nh), jnp.bfloat16)
        act_scr[:, w + 1:w + 2, :] = jnp.zeros((th + 2, 1, nh), jnp.bfloat16)
        act_scr[:, 1:w + 1, :] = actv

        @pl.when(t == 0)
        def _():
            act_scr[0:1, 1:w + 1, :] = jnp.zeros((1, w, nh), jnp.bfloat16)

        @pl.when(t == nt - 1)
        def _():
            act_scr[th + 1:th + 2, 1:w + 1, :] = jnp.zeros((1, w, nh),
                                                           jnp.bfloat16)

        # ---- gamma|beta conv: 3 dy-grouped dots (K = 3*128), f32 accumulate
        gb = jnp.zeros((th * w, 2 * c_pad), jnp.float32)
        for dy in range(KS):
            a_dy = jnp.concatenate(
                [act_scr[dy:dy + th, dx:dx + w, :] for dx in range(KS)],
                axis=-1)
            a_dy = a_dy.reshape(th * w, KS * nh)
            wt = wgb_ref[dy * KS * nh:(dy + 1) * KS * nh, :]
            gb = gb + jnp.dot(a_dy, wt, preferred_element_type=jnp.float32)
        gb = gb + bgb_ref[...]
        gamma = gb[:, :c_pad]
        beta = gb[:, c_pad:]

        # ---- instance norm (precomputed stats) + fused SPADE tail (f32)
        x = x_ref[...]
        mean = stats_ref[0:1, :]
        inv_std = stats_ref[1:2, :]
        out_ref[...] = ((x - mean) * inv_std * (1.0 + gamma)
                        + beta).astype(out_ref.dtype)

    return kernel


# ---------------------------------------------------------------------------
# JAX glue (layout plumbing only)
# ---------------------------------------------------------------------------
def _fold_tap_weight(w_oihw, in_pad):
    """PyTorch OIHW (O,I,3,3) -> (9*in_pad, O); rows ordered (dy, dx, in_ch)."""
    o, i, kh, kw = w_oihw.shape
    wt = jnp.transpose(w_oihw, (2, 3, 1, 0))                # (kh, kw, I, O)
    if in_pad > i:
        wt = jnp.pad(wt, ((0, 0), (0, 0), (0, in_pad - i), (0, 0)))
    return wt.reshape(kh * kw * in_pad, o)


def _vmem_budget_bytes():
    try:
        cap = int(pltpu.get_tpu_info().vmem_capacity_bytes)
    except Exception:
        cap = 64 << 20          # conservative: fits every TPU generation
    return max(32 << 20, (cap * 3) // 4)


def _est_fused_vmem_bytes(th, w, c_pad, lnc_pad):
    """Rough per-tile VMEM footprint of the fused kernel (incl. 2x buffering)."""
    bfb = 2
    nh = NHIDDEN
    attr_blk = (th + 4) * (w + 2) * lnc_pad * bfb
    x_blk = th * w * c_pad * 4
    out_blk = th * w * c_pad * 4
    stats_blk = 8 * c_pad * 4
    weights = (KS * KS * lnc_pad * nh + KS * KS * nh * 2 * c_pad) * bfb \
        + (nh + 2 * c_pad) * 4
    scr = (th + 2) * (w + 2) * nh * bfb
    temps = ((th + 2) * w * nh * 4               # shared-conv f32 accumulator
             + 2 * (th + 2) * w * lnc_pad * bfb  # live tap slices
             + th * w * 2 * c_pad * 4            # gamma/beta f32 accumulator
             + 2 * th * w * KS * nh * bfb        # dy-grouped concat temps
             + 2 * th * w * c_pad * 4)           # tail temps
    return 2 * (attr_blk + x_blk + out_blk + stats_blk + weights) + scr + temps


def _pick_tile_h(h, w, c_pad, lnc_pad, budget, tile_h):
    cap = h if tile_h is None else min(h, max(1, tile_h))
    divs = [d for d in range(cap, 0, -1)
            if h % d == 0 and (d == h or (d * w) % 8 == 0)]
    if not divs:
        divs = [h]
    for th in divs:
        if _est_fused_vmem_bytes(th, w, c_pad, lnc_pad) <= budget:
            return th
    return divs[-1]             # best effort if nothing fits the budget


def _pick_stats_chunk(hw, c_pad, target_bytes=4 << 20):
    target_rows = max(8, target_bytes // (c_pad * 4))
    for d in range(min(hw, target_rows), 0, -1):
        if hw % d == 0 and (d % 8 == 0 or d == hw):
            return d
    return hw


def spade_forward(x_nchw, attr_nchw, params, *, tile_h=None,
                  compute_dtype=jnp.bfloat16):
    """SPADE forward matching the PyTorch module with config 'spadeinstance3x3'."""
    B, C, H, W = x_nchw.shape
    label_nc = attr_nchw.shape[1]
    hw = H * W

    c_pad = _round_up(C, 128)
    lnc_pad = _round_up(label_nc, 128)

    budget = _vmem_budget_bytes()
    th = _pick_tile_h(H, W, c_pad, lnc_pad, budget, tile_h)
    n_t = H // th

    # --- x: NCHW -> (B, HW, c_pad) f32 --------------------------------------
    x_flat = jnp.transpose(x_nchw, (0, 2, 3, 1)).reshape(B, hw, C)
    x_p = jnp.pad(x_flat.astype(jnp.float32), ((0, 0), (0, 0), (0, c_pad - C)))
    # TODO(synk): when C << 128 the lane padding inflates x/out HBM traffic; a
    # (B, C, HW) layout would avoid it for tiny-C layers.
    # TODO(synk): x/out could be streamed in bf16 (~2x less HBM traffic on
    # mem-bound chips); kept f32 here for accuracy headroom.

    # --- attr: RAW channels-last rows with 2-row/1-col zero halo, lane-padded,
    # duplicated into overlapping (th+4)-row tiles (im2col happens in VMEM) ---
    attr_nhwc = jnp.transpose(attr_nchw, (0, 2, 3, 1)).astype(compute_dtype)
    attr_pad = jnp.pad(attr_nhwc,
                       ((0, 0), (2, 2), (1, 1), (0, lnc_pad - label_nc)))
    attr_tiles = jnp.stack(
        [attr_pad[:, t * th:t * th + th + 4] for t in range(n_t)], axis=1)
    attr_tiles = attr_tiles.reshape(B * n_t, th + 4, W + 2, lnc_pad)

    # --- weights / biases ----------------------------------------------------
    w1 = _fold_tap_weight(params["w_shared"], lnc_pad).astype(compute_dtype)
    b1 = params["b_shared"].reshape(1, NHIDDEN).astype(jnp.float32)
    wg = jnp.pad(_fold_tap_weight(params["w_gamma"], NHIDDEN),
                 ((0, 0), (0, c_pad - C)))
    wb = jnp.pad(_fold_tap_weight(params["w_beta"], NHIDDEN),
                 ((0, 0), (0, c_pad - C)))
    wgb = jnp.concatenate([wg, wb], axis=-1).astype(compute_dtype)  # (1152, 2*c_pad)
    bg = jnp.pad(params["b_gamma"], (0, c_pad - C))
    bb = jnp.pad(params["b_beta"], (0, c_pad - C))
    bgb = jnp.concatenate([bg, bb]).reshape(1, 2 * c_pad).astype(jnp.float32)

    # --- pass 1: instance-norm statistics (own small mem-bound chunk) --------
    chunk = _pick_stats_chunk(hw, c_pad)
    n_chunks = hw // chunk
    stats = pl.pallas_call(
        _make_stats_kernel(1.0 / float(hw)),
        out_shape=jax.ShapeDtypeStruct((B, 8, c_pad), jnp.float32),
        grid_spec=pltpu.PrefetchScalarGridSpec(
            num_scalar_prefetch=0,
            grid=(B, n_chunks),
            in_specs=[pl.BlockSpec((None, chunk, c_pad),
                                   lambda b, s: (b, s, 0))],
            out_specs=pl.BlockSpec((None, 8, c_pad), lambda b, s: (b, 0, 0)),
        ),
        compiler_params=pltpu.CompilerParams(
            dimension_semantics=("parallel", "arbitrary"),
            vmem_limit_bytes=int(budget)),
    )(x_p)
    # TODO(synk): for B=1 on 2-TC chips the stats grid could also split HW on a
    # second 'parallel' axis with a wrapper-side combine.

    # --- pass 2: fused SPADE per (batch, row-tile) ----------------------------
    out_p = pl.pallas_call(
        _make_fused_kernel(th, W, lnc_pad),
        out_shape=jax.ShapeDtypeStruct((B, hw, c_pad), jnp.float32),
        grid_spec=pltpu.PrefetchScalarGridSpec(
            num_scalar_prefetch=0,
            grid=(B, n_t),
            in_specs=[
                pl.BlockSpec((None, th * W, c_pad), lambda b, t: (b, t, 0)),
                pl.BlockSpec((None, 8, c_pad), lambda b, t: (b, 0, 0)),
                pl.BlockSpec((None, th + 4, W + 2, lnc_pad),
                             lambda b, t: (b * n_t + t, 0, 0, 0)),
                pl.BlockSpec((KS * KS * lnc_pad, NHIDDEN), lambda b, t: (0, 0)),
                pl.BlockSpec((1, NHIDDEN), lambda b, t: (0, 0)),
                pl.BlockSpec((KS * KS * NHIDDEN, 2 * c_pad),
                             lambda b, t: (0, 0)),
                pl.BlockSpec((1, 2 * c_pad), lambda b, t: (0, 0)),
            ],
            out_specs=pl.BlockSpec((None, th * W, c_pad),
                                   lambda b, t: (b, t, 0)),
            scratch_shapes=[pltpu.VMEM((th + 2, W + 2, NHIDDEN),
                                       jnp.bfloat16)],
        ),
        compiler_params=pltpu.CompilerParams(
            dimension_semantics=("parallel", "parallel"),
            vmem_limit_bytes=int(budget)),
    )(x_p, stats, attr_tiles, w1, b1, wgb, bgb)

    out = out_p[:, :, :C].reshape(B, H, W, C)
    return jnp.transpose(out, (0, 3, 1, 2))                     # NCHW


# ---------------------------------------------------------------------------
# Pure-JAX reference (mirrors the PyTorch forward) for a correctness check
# ---------------------------------------------------------------------------
def spade_reference(x_nchw, attr_nchw, params):
    mean = jnp.mean(x_nchw, axis=(2, 3), keepdims=True)
    var = jnp.mean((x_nchw - mean) ** 2, axis=(2, 3), keepdims=True)
    normalized = (x_nchw - mean) / jnp.sqrt(var + EPS)

    def conv(x, w, b):
        y = jax.lax.conv_general_dilated(
            x, w, window_strides=(1, 1), padding="SAME",
            dimension_numbers=("NCHW", "OIHW", "NCHW"))
        return y + b[None, :, None, None]

    actv = jax.nn.relu(conv(attr_nchw, params["w_shared"], params["b_shared"]))
    gamma = conv(actv, params["w_gamma"], params["b_gamma"])
    beta = conv(actv, params["w_beta"], params["b_beta"])
    return normalized * (1 + gamma) + beta


if __name__ == "__main__":
    B, norm_nc, label_nc, H, W = 2, 4, 4, 16, 16

    key = jax.random.PRNGKey(0)
    keys = jax.random.split(key, 8)
    params = {
        "w_shared": 0.05 * jax.random.normal(keys[0], (NHIDDEN, label_nc, KS, KS), jnp.float32),
        "b_shared": 0.05 * jax.random.normal(keys[1], (NHIDDEN,), jnp.float32),
        "w_gamma":  0.05 * jax.random.normal(keys[2], (norm_nc, NHIDDEN, KS, KS), jnp.float32),
        "b_gamma":  0.05 * jax.random.normal(keys[3], (norm_nc,), jnp.float32),
        "w_beta":   0.05 * jax.random.normal(keys[4], (norm_nc, NHIDDEN, KS, KS), jnp.float32),
        "b_beta":   0.05 * jax.random.normal(keys[5], (norm_nc,), jnp.float32),
    }

    x = jax.random.normal(keys[6], (B, norm_nc, H, W), jnp.float32)          # NCHW
    attr_map = jax.random.normal(keys[7], (B, label_nc, H, W), jnp.float32)  # NCHW
    # id_emb is unused in the no-id config (style path disabled).

    ref = jax.block_until_ready(spade_reference(x, attr_map, params))

    # Exercise both the single-tile path and the multi-tile (halo) path.
    for th_arg in (None, 8):
        fwd = jax.jit(functools.partial(spade_forward, tile_h=th_arg))
        out = jax.block_until_ready(fwd(x, attr_map, params))
        assert out.shape == (B, norm_nc, H, W)
        err = float(jnp.max(jnp.abs(out - ref)))
        # bf16 matmul operands (f32 accumulation) -> relaxed tolerance vs f32 ref.
        assert err < 5e-2, (th_arg, err)

    print("KERNEL_OK")
</pallas_src>

<mosaic_0001>
module attributes {stable_mosaic.version = 11 : i64} {
  func.func @kernel(%arg0: i32, %arg1: i32, %arg2: memref<1x256x128xf32, #tpu.memory_space<vmem>>, %arg3: memref<1x8x128xf32, #tpu.memory_space<vmem>>) attributes {dimension_semantics = [#tpu.dimension_semantics<parallel>, #tpu.dimension_semantics<arbitrary>], iteration_bounds = array<i64: 2, 1>, scalar_prefetch = 0 : i64, scratch_operands = 0 : i64, tpu.core_type = #tpu.core_type<tc>, window_params = [{transform_indices = @transform_0, window_bounds = array<i64: 1, 256, 128>}, {transform_indices = @transform_1, window_bounds = array<i64: 1, 8, 128>}]} {
    %c0 = arith.constant 0 : index
    %c0_0 = arith.constant 0 : index
    %c0_1 = arith.constant 0 : index
    %0 = vector.load %arg2[%c0, %c0_0, %c0_1] : memref<1x256x128xf32, #tpu.memory_space<vmem>>, vector<1x256x128xf32>
    %1 = vector.shape_cast %0 : vector<1x256x128xf32> to vector<256x128xf32>
    %c0_i32 = arith.constant 0 : i32
    %2 = arith.cmpi eq, %arg1, %c0_i32 : i32
    %3 = arith.extui %2 : i1 to i32
    %c0_i32_2 = arith.constant 0 : i32
    %4 = arith.cmpi ne, %3, %c0_i32_2 : i32
    scf.if %4 {
      %cst_17 = arith.constant 0.000000e+00 : f32
      %25 = vector.broadcast %cst_17 : f32 to vector<8x128xf32>
      %c0_18 = arith.constant 0 : index
      %c0_19 = arith.constant 0 : index
      %c0_20 = arith.constant 0 : index
      %26 = vector.load %arg3[%c0_18, %c0_19, %c0_20] : memref<1x8x128xf32, #tpu.memory_space<vmem>>, vector<1x8x128xf32>
      %27 = vector.shape_cast %26 : vector<1x8x128xf32> to vector<8x128xf32>
      %28 = vector.shape_cast %25 : vector<8x128xf32> to vector<1x8x128xf32>
      tpu.vector_store %arg3[%c0_18, %c0_19, %c0_20], %28 {strides = array<i32>} : memref<1x8x128xf32, #tpu.memory_space<vmem>>, vector<1x8x128xf32>,
    } else {
    }
    %c0_3 = arith.constant 0 : index
    %c0_4 = arith.constant 0 : index
    %c0_5 = arith.constant 0 : index
    %5 = vector.load %arg3[%c0_3, %c0_4, %c0_5] : memref<1x8x128xf32, #tpu.memory_space<vmem>>, vector<1x1x128xf32>
    %6 = vector.shape_cast %5 : vector<1x1x128xf32> to vector<1x128xf32>
    %cst = arith.constant dense<0.000000e+00> : vector<128xf32>
    %7 = vector.multi_reduction <add>, %1, %cst [0] : vector<256x128xf32> to vector<128xf32>
    %8 = vector.shape_cast %7 : vector<128xf32> to vector<1x128xf32>
    %9 = arith.addf %6, %8 : vector<1x128xf32>
    %c0_6 = arith.constant 0 : index
    %c0_7 = arith.constant 0 : index
    %c0_8 = arith.constant 0 : index
    %10 = vector.load %arg3[%c0_6, %c0_7, %c0_8] : memref<1x8x128xf32, #tpu.memory_space<vmem>>, vector<1x1x128xf32>
    %11 = vector.shape_cast %10 : vector<1x1x128xf32> to vector<1x128xf32>
    %12 = vector.shape_cast %9 : vector<1x128xf32> to vector<1x1x128xf32>
    tpu.vector_store %arg3[%c0_6, %c0_7, %c0_8], %12 {strides = array<i32>} : memref<1x8x128xf32, #tpu.memory_space<vmem>>, vector<1x1x128xf32>,
    %c0_9 = arith.constant 0 : index
    %c1 = arith.constant 1 : index
    %c0_10 = arith.constant 0 : index
    %13 = vector.load %arg3[%c0_9, %c1, %c0_10] : memref<1x8x128xf32, #tpu.memory_space<vmem>>, vector<1x1x128xf32>
    %14 = vector.shape_cast %13 : vector<1x1x128xf32> to vector<1x128xf32>
    %15 = arith.mulf %1, %1 : vector<256x128xf32>
    %cst_11 = arith.constant dense<0.000000e+00> : vector<128xf32>
    %16 = vector.multi_reduction <add>, %15, %cst_11 [0] : vector<256x128xf32> to vector<128xf32>
    %17 = vector.shape_cast %16 : vector<128xf32> to vector<1x128xf32>
    %18 = arith.addf %14, %17 : vector<1x128xf32>
    %c0_12 = arith.constant 0 : index
    %c1_13 = arith.constant 1 : index
    %c0_14 = arith.constant 0 : index
    %19 = vector.load %arg3[%c0_12, %c1_13, %c0_14] : memref<1x8x128xf32, #tpu.memory_space<vmem>>, vector<1x1x128xf32>
    %20 = vector.shape_cast %19 : vector<1x1x128xf32> to vector<1x128xf32>
    %21 = vector.shape_cast %18 : vector<1x128xf32> to vector<1x1x128xf32>
    tpu.vector_store %arg3[%c0_12, %c1_13, %c0_14], %21 {strides = array<i32>} : memref<1x8x128xf32, #tpu.memory_space<vmem>>, vector<1x1x128xf32>,
    %c0_i32_15 = arith.constant 0 : i32
    %22 = arith.cmpi eq, %arg1, %c0_i32_15 : i32
    %23 = arith.extui %22 : i1 to i32
    %c0_i32_16 = arith.constant 0 : i32
    %24 = arith.cmpi ne, %23, %c0_i32_16 : i32
    scf.if %24 {
      %c0_17 = arith.constant 0 : index
      %c0_18 = arith.constant 0 : index
      %c0_19 = arith.constant 0 : index
      %25 = vector.load %arg3[%c0_17, %c0_18, %c0_19] : memref<1x8x128xf32, #tpu.memory_space<vmem>>, vector<1x1x128xf32>
      %26 = vector.shape_cast %25 : vector<1x1x128xf32> to vector<1x128xf32>
      %cst_20 = arith.constant 3.906250e-03 : f32
      %27 = vector.broadcast %cst_20 : f32 to vector<1x128xf32>
      %28 = arith.mulf %26, %27 : vector<1x128xf32>
      %c0_21 = arith.constant 0 : index
      %c1_22 = arith.constant 1 : index
      %c0_23 = arith.constant 0 : index
      %29 = vector.load %arg3[%c0_21, %c1_22, %c0_23] : memref<1x8x128xf32, #tpu.memory_space<vmem>>, vector<1x1x128xf32>
      %30 = vector.shape_cast %29 : vector<1x1x128xf32> to vector<1x128xf32>
      %cst_24 = arith.constant 3.906250e-03 : f32
      %31 = vector.broadcast %cst_24 : f32 to vector<1x128xf32>
      %32 = arith.mulf %30, %31 : vector<1x128xf32>
      %33 = arith.mulf %28, %28 : vector<1x128xf32>
      %34 = arith.subf %32, %33 : vector<1x128xf32>
      %c0_25 = arith.constant 0 : index
      %c0_26 = arith.constant 0 : index
      %c0_27 = arith.constant 0 : index
      %35 = vector.load %arg3[%c0_25, %c0_26, %c0_27] : memref<1x8x128xf32, #tpu.memory_space<vmem>>, vector<1x1x128xf32>
      %36 = vector.shape_cast %35 : vector<1x1x128xf32> to vector<1x128xf32>
      %37 = vector.shape_cast %28 : vector<1x128xf32> to vector<1x1x128xf32>
      tpu.vector_store %arg3[%c0_25, %c0_26, %c0_27], %37 {strides = array<i32>} : memref<1x8x128xf32, #tpu.memory_space<vmem>>, vector<1x1x128xf32>,
      %cst_28 = arith.constant 0.000000e+00 : f32
      %38 = vector.broadcast %cst_28 : f32 to vector<1x128xf32>
      %39 = arith.maximumf %34, %38 : vector<1x128xf32>
      %cst_29 = arith.constant 9.99999974E-6 : f32
      %40 = vector.broadcast %cst_29 : f32 to vector<1x128xf32>
      %41 = arith.addf %39, %40 : vector<1x128xf32>
      %42 = math.rsqrt %41 : vector<1x128xf32>
      %c0_30 = arith.constant 0 : index
      %c1_31 = arith.constant 1 : index
      %c0_32 = arith.constant 0 : index
      %43 = vector.load %arg3[%c0_30, %c1_31, %c0_32] : memref<1x8x128xf32, #tpu.memory_space<vmem>>, vector<1x1x128xf32>
      %44 = vector.shape_cast %43 : vector<1x1x128xf32> to vector<1x128xf32>
      %45 = vector.shape_cast %42 : vector<1x128xf32> to vector<1x1x128xf32>
      tpu.vector_store %arg3[%c0_30, %c1_31, %c0_32], %45 {strides = array<i32>} : memref<1x8x128xf32, #tpu.memory_space<vmem>>, vector<1x1x128xf32>,
    } else {
    }
    return
  }
  func.func @transform_0(%arg0: i32, %arg1: i32) -> (i32, i32, i32) {
    %c0_i32 = arith.constant 0 : i32
    %c0_i32_0 = arith.constant 0 : i32
    return %arg0, %arg1, %c0_i32 : i32, i32, i32
  }
  func.func @transform_1(%arg0: i32, %arg1: i32) -> (i32, i32, i32) {
    %c0_i32 = arith.constant 0 : i32
    %c0_i32_0 = arith.constant 0 : i32
    %c0_i32_1 = arith.constant 0 : i32
    return %arg0, %c0_i32, %c0_i32_0 : i32, i32, i32
  }
}

module attributes {stable_mosaic.version = 11 : i64} {
  func.func @kernel(%arg0: i32, %arg1: i32, %arg2: memref<1x256x128xf32, #tpu.memory_space<vmem>>, %arg3: memref<1x8x128xf32, #tpu.memory_space<vmem>>, %arg4: memref<1x20x18x128xbf16, #tpu.memory_space<vmem>>, %arg5: memref<1152x128xbf16, #tpu.memory_space<vmem>>, %arg6: memref<1x128xf32, #tpu.memory_space<vmem>>, %arg7: memref<1152x256xbf16, #tpu.memory_space<vmem>>, %arg8: memref<1x256xf32, #tpu.memory_space<vmem>>, %arg9: memref<1x256x128xf32, #tpu.memory_space<vmem>>, %arg10: memref<18x18x128xbf16, #tpu.memory_space<vmem>>) attributes {dimension_semantics = [#tpu.dimension_semantics<parallel>, #tpu.dimension_semantics<parallel>], iteration_bounds = array<i64: 2, 1>, scalar_prefetch = 0 : i64, scratch_operands = 1 : i64, tpu.core_type = #tpu.core_type<tc>, window_params = [{transform_indices = @transform_0, window_bounds = array<i64: 1, 256, 128>}, {transform_indices = @transform_1, window_bounds = array<i64: 1, 8, 128>}, {transform_indices = @transform_2, window_bounds = array<i64: 1, 20, 18, 128>}, {pipeline_mode = #tpu.pipeline_mode<synchronous>, transform_indices = @transform_3, window_bounds = array<i64: 1152, 128>}, {pipeline_mode = #tpu.pipeline_mode<synchronous>, transform_indices = @transform_4, window_bounds = array<i64: 1, 128>}, {pipeline_mode = #tpu.pipeline_mode<synchronous>, transform_indices = @transform_5, window_bounds = array<i64: 1152, 256>}, {pipeline_mode = #tpu.pipeline_mode<synchronous>, transform_indices = @transform_6, window_bounds = array<i64: 1, 256>}, {transform_indices = @transform_7, window_bounds = array<i64: 1, 256, 128>}]} {
    %cst = arith.constant 0.000000e+00 : f32
    %0 = vector.broadcast %cst : f32 to vector<288x128xf32>
    %c0 = arith.constant 0 : index
    %c0_0 = arith.constant 0 : index
    %c0_1 = arith.constant 0 : index
    %c0_2 = arith.constant 0 : index
    %1 = vector.load %arg4[%c0, %c0_0, %c0_1, %c0_2] : memref<1x20x18x128xbf16, #tpu.memory_space<vmem>>, vector<1x18x16x128xbf16>
    %2 = vector.shape_cast %1 : vector<1x18x16x128xbf16> to vector<18x16x128xbf16>
    %3 = vector.shape_cast %2 : vector<18x16x128xbf16> to vector<288x128xbf16>
    %c0_3 = arith.constant 0 : index
    %c0_4 = arith.constant 0 : index
    %4 = vector.load %arg5[%c0_3, %c0_4] : memref<1152x128xbf16, #tpu.memory_space<vmem>>, vector<128x128xbf16>
    %cst_5 = arith.constant dense<0.000000e+00> : vector<288x128xf32>
    %5 = tpu.matmul %3, %4, %cst_5 {dimension_numbers = #tpu.dot_dimension_numbers<[1], [0], [0], [1], [0, 0, 1, 1], [], []>} : vector<288x128xbf16>, vector<128x128xbf16>, vector<288x128xf32> -> vector<288x128xf32>
    %6 = arith.addf %0, %5 : vector<288x128xf32>
    %c0_6 = arith.constant 0 : index
    %c0_7 = arith.constant 0 : index
    %c1 = arith.constant 1 : index
    %c0_8 = arith.constant 0 : index
    %7 = vector.load %arg4[%c0_6, %c0_7, %c1, %c0_8] : memref<1x20x18x128xbf16, #tpu.memory_space<vmem>>, vector<1x18x16x128xbf16>
    %8 = vector.shape_cast %7 : vector<1x18x16x128xbf16> to vector<18x16x128xbf16>
    %9 = vector.shape_cast %8 : vector<18x16x128xbf16> to vector<288x128xbf16>
    %c128 = arith.constant 128 : index
    %c0_9 = arith.constant 0 : index
    %10 = vector.load %arg5[%c128, %c0_9] : memref<1152x128xbf16, #tpu.memory_space<vmem>>, vector<128x128xbf16>
    %cst_10 = arith.constant dense<0.000000e+00> : vector<288x128xf32>
    %11 = tpu.matmul %9, %10, %cst_10 {dimension_numbers = #tpu.dot_dimension_numbers<[1], [0], [0], [1], [0, 0, 1, 1], [], []>} : vector<288x128xbf16>, vector<128x128xbf16>, vector<288x128xf32> -> vector<288x128xf32>
    %12 = arith.addf %6, %11 : vector<288x128xf32>
    %c0_11 = arith.constant 0 : index
    %c0_12 = arith.constant 0 : index
    %c2 = arith.constant 2 : index
    %c0_13 = arith.constant 0 : index
    %13 = vector.load %arg4[%c0_11, %c0_12, %c2, %c0_13] : memref<1x20x18x128xbf16, #tpu.memory_space<vmem>>, vector<1x18x16x128xbf16>
    %14 = vector.shape_cast %13 : vector<1x18x16x128xbf16> to vector<18x16x128xbf16>
    %15 = vector.shape_cast %14 : vector<18x16x128xbf16> to vector<288x128xbf16>
    %c256 = arith.constant 256 : index
    %c0_14 = arith.constant 0 : index
    %16 = vector.load %arg5[%c256, %c0_14] : memref<1152x128xbf16, #tpu.memory_space<vmem>>, vector<128x128xbf16>
    %cst_15 = arith.constant dense<0.000000e+00> : vector<288x128xf32>
    %17 = tpu.matmul %15, %16, %cst_15 {dimension_numbers = #tpu.dot_dimension_numbers<[1], [0], [0], [1], [0, 0, 1, 1], [], []>} : vector<288x128xbf16>, vector<128x128xbf16>, vector<288x128xf32> -> vector<288x128xf32>
    %18 = arith.addf %12, %17 : vector<288x128xf32>
    %c0_16 = arith.constant 0 : index
    %c1_17 = arith.constant 1 : index
    %c0_18 = arith.constant 0 : index
    %c0_19 = arith.constant 0 : index
    %19 = vector.load %arg4[%c0_16, %c1_17, %c0_18, %c0_19] : memref<1x20x18x128xbf16, #tpu.memory_space<vmem>>, vector<1x18x16x128xbf16>
    %20 = vector.shape_cast %19 : vector<1x18x16x128xbf16> to vector<18x16x128xbf16>
    %21 = vector.shape_cast %20 : vector<18x16x128xbf16> to vector<288x128xbf16>
    %c384 = arith.constant 384 : index
    %c0_20 = arith.constant 0 : index
    %22 = vector.load %arg5[%c384, %c0_20] : memref<1152x128xbf16, #tpu.memory_space<vmem>>, vector<128x128xbf16>
    %cst_21 = arith.constant dense<0.000000e+00> : vector<288x128xf32>
    %23 = tpu.matmul %21, %22, %cst_21 {dimension_numbers = #tpu.dot_dimension_numbers<[1], [0], [0], [1], [0, 0, 1, 1], [], []>} : vector<288x128xbf16>, vector<128x128xbf16>, vector<288x128xf32> -> vector<288x128xf32>
    %24 = arith.addf %18, %23 : vector<288x128xf32>
    %c0_22 = arith.constant 0 : index
    %c1_23 = arith.constant 1 : index
    %c1_24 = arith.constant 1 : index
    %c0_25 = arith.constant 0 : index
    %25 = vector.load %arg4[%c0_22, %c1_23, %c1_24, %c0_25] : memref<1x20x18x128xbf16, #tpu.memory_space<vmem>>, vector<1x18x16x128xbf16>
    %26 = vector.shape_cast %25 : vector<1x18x16x128xbf16> to vector<18x16x128xbf16>
    %27 = vector.shape_cast %26 : vector<18x16x128xbf16> to vector<288x128xbf16>
    %c512 = arith.constant 512 : index
    %c0_26 = arith.constant 0 : index
    %28 = vector.load %arg5[%c512, %c0_26] : memref<1152x128xbf16, #tpu.memory_space<vmem>>, vector<128x128xbf16>
    %cst_27 = arith.constant dense<0.000000e+00> : vector<288x128xf32>
    %29 = tpu.matmul %27, %28, %cst_27 {dimension_numbers = #tpu.dot_dimension_numbers<[1], [0], [0], [1], [0, 0, 1, 1], [], []>} : vector<288x128xbf16>, vector<128x128xbf16>, vector<288x128xf32> -> vector<288x128xf32>
    %30 = arith.addf %24, %29 : vector<288x128xf32>
    %c0_28 = arith.constant 0 : index
    %c1_29 = arith.constant 1 : index
    %c2_30 = arith.constant 2 : index
    %c0_31 = arith.constant 0 : index
    %31 = vector.load %arg4[%c0_28, %c1_29, %c2_30, %c0_31] : memref<1x20x18x128xbf16, #tpu.memory_space<vmem>>, vector<1x18x16x128xbf16>
    %32 = vector.shape_cast %31 : vector<1x18x16x128xbf16> to vector<18x16x128xbf16>
    %33 = vector.shape_cast %32 : vector<18x16x128xbf16> to vector<288x128xbf16>
    %c640 = arith.constant 640 : index
    %c0_32 = arith.constant 0 : index
    %34 = vector.load %arg5[%c640, %c0_32] : memref<1152x128xbf16, #tpu.memory_space<vmem>>, vector<128x128xbf16>
    %cst_33 = arith.constant dense<0.000000e+00> : vector<288x128xf32>
    %35 = tpu.matmul %33, %34, %cst_33 {dimension_numbers = #tpu.dot_dimension_numbers<[1], [0], [0], [1], [0, 0, 1, 1], [], []>} : vector<288x128xbf16>, vector<128x128xbf16>, vector<288x128xf32> -> vector<288x128xf32>
    %36 = arith.addf %30, %35 : vector<288x128xf32>
    %c0_34 = arith.constant 0 : index
    %c2_35 = arith.constant 2 : index
    %c0_36 = arith.constant 0 : index
    %c0_37 = arith.constant 0 : index
    %37 = vector.load %arg4[%c0_34, %c2_35, %c0_36, %c0_37] : memref<1x20x18x128xbf16, #tpu.memory_space<vmem>>, vector<1x18x16x128xbf16>
    %38 = vector.shape_cast %37 : vector<1x18x16x128xbf16> to vector<18x16x128xbf16>
    %39 = vector.shape_cast %38 : vector<18x16x128xbf16> to vector<288x128xbf16>
    %c768 = arith.constant 768 : index
    %c0_38 = arith.constant 0 : index
    %40 = vector.load %arg5[%c768, %c0_38] : memref<1152x128xbf16, #tpu.memory_space<vmem>>, vector<128x128xbf16>
    %cst_39 = arith.constant dense<0.000000e+00> : vector<288x128xf32>
    %41 = tpu.matmul %39, %40, %cst_39 {dimension_numbers = #tpu.dot_dimension_numbers<[1], [0], [0], [1], [0, 0, 1, 1], [], []>} : vector<288x128xbf16>, vector<128x128xbf16>, vector<288x128xf32> -> vector<288x128xf32>
    %42 = arith.addf %36, %41 : vector<288x128xf32>
    %c0_40 = arith.constant 0 : index
    %c2_41 = arith.constant 2 : index
    %c1_42 = arith.constant 1 : index
    %c0_43 = arith.constant 0 : index
    %43 = vector.load %arg4[%c0_40, %c2_41, %c1_42, %c0_43] : memref<1x20x18x128xbf16, #tpu.memory_space<vmem>>, vector<1x18x16x128xbf16>
    %44 = vector.shape_cast %43 : vector<1x18x16x128xbf16> to vector<18x16x128xbf16>
    %45 = vector.shape_cast %44 : vector<18x16x128xbf16> to vector<288x128xbf16>
    %c896 = arith.constant 896 : index
    %c0_44 = arith.constant 0 : index
    %46 = vector.load %arg5[%c896, %c0_44] : memref<1152x128xbf16, #tpu.memory_space<vmem>>, vector<128x128xbf16>
    %cst_45 = arith.constant dense<0.000000e+00> : vector<288x128xf32>
    %47 = tpu.matmul %45, %46, %cst_45 {dimension_numbers = #tpu.dot_dimension_numbers<[1], [0], [0], [1], [0, 0, 1, 1], [], []>} : vector<288x128xbf16>, vector<128x128xbf16>, vector<288x128xf32> -> vector<288x128xf32>
    %48 = arith.addf %42, %47 : vector<288x128xf32>
    %c0_46 = arith.constant 0 : index
    %c2_47 = arith.constant 2 : index
    %c2_48 = arith.constant 2 : index
    %c0_49 = arith.constant 0 : index
    %49 = vector.load %arg4[%c0_46, %c2_47, %c2_48, %c0_49] : memref<1x20x18x128xbf16, #tpu.memory_space<vmem>>, vector<1x18x16x128xbf16>
    %50 = vector.shape_cast %49 : vector<1x18x16x128xbf16> to vector<18x16x128xbf16>
    %51 = vector.shape_cast %50 : vector<18x16x128xbf16> to vector<288x128xbf16>
    %c1024 = arith.constant 1024 : index
    %c0_50 = arith.constant 0 : index
    %52 = vector.load %arg5[%c1024, %c0_50] : memref<1152x128xbf16, #tpu.memory_space<vmem>>, vector<128x128xbf16>
    %cst_51 = arith.constant dense<0.000000e+00> : vector<288x128xf32>
    %53 = tpu.matmul %51, %52, %cst_51 {dimension_numbers = #tpu.dot_dimension_numbers<[1], [0], [0], [1], [0, 0, 1, 1], [], []>} : vector<288x128xbf16>, vector<128x128xbf16>, vector<288x128xf32> -> vector<288x128xf32>
    %54 = arith.addf %48, %53 : vector<288x128xf32>
    %c0_52 = arith.constant 0 : index
    %c0_53 = arith.constant 0 : index
    %55 = vector.load %arg6[%c0_52, %c0_53] : memref<1x128xf32, #tpu.memory_space<vmem>>, vector<1x128xf32>
    %56 = vector.broadcast %55 : vector<1x128xf32> to vector<288x128xf32>
    %57 = arith.addf %54, %56 : vector<288x128xf32>
    %cst_54 = arith.constant 0.000000e+00 : f32
    %58 = vector.broadcast %cst_54 : f32 to vector<288x128xf32>
    %59 = arith.maximumf %57, %58 : vector<288x128xf32>
    %60 = arith.truncf %59 : vector<288x128xf32> to vector<288x128xbf16>
    %61 = vector.shape_cast %60 : vector<288x128xbf16> to vector<18x16x128xbf16>
    %cst_55 = arith.constant 0.000000e+00 : bf16
    %62 = vector.broadcast %cst_55 : bf16 to vector<18x1x128xbf16>
    %c0_56 = arith.constant 0 : index
    %c0_57 = arith.constant 0 : index
    %c0_58 = arith.constant 0 : index
    %63 = vector.load %arg10[%c0_56, %c0_57, %c0_58] : memref<18x18x128xbf16, #tpu.memory_space<vmem>>, vector<18x1x128xbf16>
    tpu.vector_store %arg10[%c0_56, %c0_57, %c0_58], %62 {strides = array<i32>} : memref<18x18x128xbf16, #tpu.memory_space<vmem>>, vector<18x1x128xbf16>,
    %cst_59 = arith.constant 0.000000e+00 : bf16
    %64 = vector.broadcast %cst_59 : bf16 to vector<18x1x128xbf16>
    %c0_60 = arith.constant 0 : index
    %c17 = arith.constant 17 : index
    %c0_61 = arith.constant 0 : index
    %65 = vector.load %arg10[%c0_60, %c17, %c0_61] : memref<18x18x128xbf16, #tpu.memory_space<vmem>>, vector<18x1x128xbf16>
    tpu.vector_store %arg10[%c0_60, %c17, %c0_61], %64 {strides = array<i32>} : memref<18x18x128xbf16, #tpu.memory_space<vmem>>, vector<18x1x128xbf16>,
    %c0_62 = arith.constant 0 : index
    %c1_63 = arith.constant 1 : index
    %c0_64 = arith.constant 0 : index
    %66 = vector.load %arg10[%c0_62, %c1_63, %c0_64] : memref<18x18x128xbf16, #tpu.memory_space<vmem>>, vector<18x16x128xbf16>
    tpu.vector_store %arg10[%c0_62, %c1_63, %c0_64], %61 {strides = array<i32>} : memref<18x18x128xbf16, #tpu.memory_space<vmem>>, vector<18x16x128xbf16>,
    %c0_i32 = arith.constant 0 : i32
    %67 = arith.cmpi eq, %arg1, %c0_i32 : i32
    %68 = arith.extui %67 : i1 to i32
    %c0_i32_65 = arith.constant 0 : i32
    %69 = arith.cmpi ne, %68, %c0_i32_65 : i32
    scf.if %69 {
      %cst_120 = arith.constant 0.000000e+00 : bf16
      %120 = vector.broadcast %cst_120 : bf16 to vector<1x16x128xbf16>
      %c0_121 = arith.constant 0 : index
      %c1_122 = arith.constant 1 : index
      %c0_123 = arith.constant 0 : index
      %121 = vector.load %arg10[%c0_121, %c1_122, %c0_123] : memref<18x18x128xbf16, #tpu.memory_space<vmem>>, vector<1x16x128xbf16>
      tpu.vector_store %arg10[%c0_121, %c1_122, %c0_123], %120 {strides = array<i32>} : memref<18x18x128xbf16, #tpu.memory_space<vmem>>, vector<1x16x128xbf16>,
    } else {
    }
    %c0_i32_66 = arith.constant 0 : i32
    %70 = arith.cmpi eq, %arg1, %c0_i32_66 : i32
    %71 = arith.extui %70 : i1 to i32
    %c0_i32_67 = arith.constant 0 : i32
    %72 = arith.cmpi ne, %71, %c0_i32_67 : i32
    scf.if %72 {
      %cst_120 = arith.constant 0.000000e+00 : bf16
      %120 = vector.broadcast %cst_120 : bf16 to vector<1x16x128xbf16>
      %c17_121 = arith.constant 17 : index
      %c1_122 = arith.constant 1 : index
      %c0_123 = arith.constant 0 : index
      %121 = vector.load %arg10[%c17_121, %c1_122, %c0_123] : memref<18x18x128xbf16, #tpu.memory_space<vmem>>, vector<1x16x128xbf16>
      tpu.vector_store %arg10[%c17_121, %c1_122, %c0_123], %120 {strides = array<i32>} : memref<18x18x128xbf16, #tpu.memory_space<vmem>>, vector<1x16x128xbf16>,
    } else {
    }
    %cst_68 = arith.constant 0.000000e+00 : f32
    %73 = vector.broadcast %cst_68 : f32 to vector<256x256xf32>
    %c0_69 = arith.constant 0 : index
    %c0_70 = arith.constant 0 : index
    %c0_71 = arith.constant 0 : index
    %74 = vector.load %arg10[%c0_69, %c0_70, %c0_71] : memref<18x18x128xbf16, #tpu.memory_space<vmem>>, vector<16x16x128xbf16>
    %c0_72 = arith.constant 0 : index
    %c1_73 = arith.constant 1 : index
    %c0_74 = arith.constant 0 : index
    %75 = vector.load %arg10[%c0_72, %c1_73, %c0_74] : memref<18x18x128xbf16, #tpu.memory_space<vmem>>, vector<16x16x128xbf16>
    %c0_75 = arith.constant 0 : index
    %c2_76 = arith.constant 2 : index
    %c0_77 = arith.constant 0 : index
    %76 = vector.load %arg10[%c0_75, %c2_76, %c0_77] : memref<18x18x128xbf16, #tpu.memory_space<vmem>>, vector<16x16x128xbf16>
    %77 = tpu.concatenate %74, %75, %76 in 2 : vector<16x16x128xbf16>, vector<16x16x128xbf16>, vector<16x16x128xbf16> -> vector<16x16x384xbf16>
    %78 = vector.shape_cast %77 : vector<16x16x384xbf16> to vector<256x384xbf16>
    %c0_78 = arith.constant 0 : index
    %c0_79 = arith.constant 0 : index
    %79 = vector.load %arg7[%c0_78, %c0_79] : memref<1152x256xbf16, #tpu.memory_space<vmem>>, vector<384x256xbf16>
    %cst_80 = arith.constant dense<0.000000e+00> : vector<256x256xf32>
    %80 = tpu.matmul %78, %79, %cst_80 {dimension_numbers = #tpu.dot_dimension_numbers<[1], [0], [0], [1], [0, 0, 1, 1], [], []>} : vector<256x384xbf16>, vector<384x256xbf16>, vector<256x256xf32> -> vector<256x256xf32>
    %81 = arith.addf %73, %80 : vector<256x256xf32>
    %c1_81 = arith.constant 1 : index
    %c0_82 = arith.constant 0 : index
    %c0_83 = arith.constant 0 : index
    %82 = vector.load %arg10[%c1_81, %c0_82, %c0_83] : memref<18x18x128xbf16, #tpu.memory_space<vmem>>, vector<16x16x128xbf16>
    %c1_84 = arith.constant 1 : index
    %c1_85 = arith.constant 1 : index
    %c0_86 = arith.constant 0 : index
    %83 = vector.load %arg10[%c1_84, %c1_85, %c0_86] : memref<18x18x128xbf16, #tpu.memory_space<vmem>>, vector<16x16x128xbf16>
    %c1_87 = arith.constant 1 : index
    %c2_88 = arith.constant 2 : index
    %c0_89 = arith.constant 0 : index
    %84 = vector.load %arg10[%c1_87, %c2_88, %c0_89] : memref<18x18x128xbf16, #tpu.memory_space<vmem>>, vector<16x16x128xbf16>
    %85 = tpu.concatenate %82, %83, %84 in 2 : vector<16x16x128xbf16>, vector<16x16x128xbf16>, vector<16x16x128xbf16> -> vector<16x16x384xbf16>
    %86 = vector.shape_cast %85 : vector<16x16x384xbf16> to vector<256x384xbf16>
    %c384_90 = arith.constant 384 : index
    %c0_91 = arith.constant 0 : index
    %87 = vector.load %arg7[%c384_90, %c0_91] : memref<1152x256xbf16, #tpu.memory_space<vmem>>, vector<384x256xbf16>
    %cst_92 = arith.constant dense<0.000000e+00> : vector<256x256xf32>
    %88 = tpu.matmul %86, %87, %cst_92 {dimension_numbers = #tpu.dot_dimension_numbers<[1], [0], [0], [1], [0, 0, 1, 1], [], []>} : vector<256x384xbf16>, vector<384x256xbf16>, vector<256x256xf32> -> vector<256x256xf32>
    %89 = arith.addf %81, %88 : vector<256x256xf32>
    %c2_93 = arith.constant 2 : index
    %c0_94 = arith.constant 0 : index
    %c0_95 = arith.constant 0 : index
    %90 = vector.load %arg10[%c2_93, %c0_94, %c0_95] : memref<18x18x128xbf16, #tpu.memory_space<vmem>>, vector<16x16x128xbf16>
    %c2_96 = arith.constant 2 : index
    %c1_97 = arith.constant 1 : index
    %c0_98 = arith.constant 0 : index
    %91 = vector.load %arg10[%c2_96, %c1_97, %c0_98] : memref<18x18x128xbf16, #tpu.memory_space<vmem>>, vector<16x16x128xbf16>
    %c2_99 = arith.constant 2 : index
    %c2_100 = arith.constant 2 : index
    %c0_101 = arith.constant 0 : index
    %92 = vector.load %arg10[%c2_99, %c2_100, %c0_101] : memref<18x18x128xbf16, #tpu.memory_space<vmem>>, vector<16x16x128xbf16>
    %93 = tpu.concatenate %90, %91, %92 in 2 : vector<16x16x128xbf16>, vector<16x16x128xbf16>, vector<16x16x128xbf16> -> vector<16x16x384xbf16>
    %94 = vector.shape_cast %93 : vector<16x16x384xbf16> to vector<256x384xbf16>
    %c768_102 = arith.constant 768 : index
    %c0_103 = arith.constant 0 : index
    %95 = vector.load %arg7[%c768_102, %c0_103] : memref<1152x256xbf16, #tpu.memory_space<vmem>>, vector<384x256xbf16>
    %cst_104 = arith.constant dense<0.000000e+00> : vector<256x256xf32>
    %96 = tpu.matmul %94, %95, %cst_104 {dimension_numbers = #tpu.dot_dimension_numbers<[1], [0], [0], [1], [0, 0, 1, 1], [], []>} : vector<256x384xbf16>, vector<384x256xbf16>, vector<256x256xf32> -> vector<256x256xf32>
    %97 = arith.addf %89, %96 : vector<256x256xf32>
    %c0_105 = arith.constant 0 : index
    %c0_106 = arith.constant 0 : index
    %98 = vector.load %arg8[%c0_105, %c0_106] : memref<1x256xf32, #tpu.memory_space<vmem>>, vector<1x256xf32>
    %99 = vector.broadcast %98 : vector<1x256xf32> to vector<256x256xf32>
    %100 = arith.addf %97, %99 : vector<256x256xf32>
    %101 = vector.extract_strided_slice %100 {offsets = [0, 0], sizes = [256, 128], strides = [1, 1]} : vector<256x256xf32> to vector<256x128xf32>
    %102 = vector.extract_strided_slice %100 {offsets = [0, 128], sizes = [256, 128], strides = [1, 1]} : vector<256x256xf32> to vector<256x128xf32>
    %c0_107 = arith.constant 0 : index
    %c0_108 = arith.constant 0 : index
    %c0_109 = arith.constant 0 : index
    %103 = vector.load %arg2[%c0_107, %c0_108, %c0_109] : memref<1x256x128xf32, #tpu.memory_space<vmem>>, vector<1x256x128xf32>
    %104 = vector.shape_cast %103 : vector<1x256x128xf32> to vector<256x128xf32>
    %c0_110 = arith.constant 0 : index
    %c0_111 = arith.constant 0 : index
    %c0_112 = arith.constant 0 : index
    %105 = vector.load %arg3[%c0_110, %c0_111, %c0_112] : memref<1x8x128xf32, #tpu.memory_space<vmem>>, vector<1x1x128xf32>
    %106 = vector.shape_cast %105 : vector<1x1x128xf32> to vector<1x128xf32>
    %c0_113 = arith.constant 0 : index
    %c1_114 = arith.constant 1 : index
    %c0_115 = arith.constant 0 : index
    %107 = vector.load %arg3[%c0_113, %c1_114, %c0_115] : memref<1x8x128xf32, #tpu.memory_space<vmem>>, vector<1x1x128xf32>
    %108 = vector.shape_cast %107 : vector<1x1x128xf32> to vector<1x128xf32>
    %109 = vector.broadcast %106 : vector<1x128xf32> to vector<256x128xf32>
    %110 = arith.subf %104, %109 : vector<256x128xf32>
    %111 = vector.broadcast %108 : vector<1x128xf32> to vector<256x128xf32>
    %112 = arith.mulf %110, %111 : vector<256x128xf32>
    %cst_116 = arith.constant 1.000000e+00 : f32
    %113 = vector.broadcast %cst_116 : f32 to vector<256x128xf32>
    %114 = arith.addf %113, %101 : vector<256x128xf32>
    %115 = arith.mulf %112, %114 : vector<256x128xf32>
    %116 = arith.addf %115, %102 : vector<256x128xf32>
    %c0_117 = arith.constant 0 : index
    %c0_118 = arith.constant 0 : index
    %c0_119 = arith.constant 0 : index
    %117 = vector.load %arg9[%c0_117, %c0_118, %c0_119] : memref<1x256x128xf32, #tpu.memory_space<vmem>>, vector<1x256x128xf32>
    %118 = vector.shape_cast %117 : vector<1x256x128xf32> to vector<256x128xf32>
    %119 = vector.shape_cast %116 : vector<256x128xf32> to vector<1x256x128xf32>
    tpu.vector_store %arg9[%c0_117, %c0_118, %c0_119], %119 {strides = array<i32>} : memref<1x256x128xf32, #tpu.memory_space<vmem>>, vector<1x256x128xf32>,
    return
  }
  func.func @transform_0(%arg0: i32, %arg1: i32) -> (i32, i32, i32) {
    %c0_i32 = arith.constant 0 : i32
    %c0_i32_0 = arith.constant 0 : i32
    return %arg0, %arg1, %c0_i32 : i32, i32, i32
  }
  func.func @transform_1(%arg0: i32, %arg1: i32) -> (i32, i32, i32) {
    %c0_i32 = arith.constant 0 : i32
    %c0_i32_0 = arith.constant 0 : i32
    %c0_i32_1 = arith.constant 0 : i32
    return %arg0, %c0_i32, %c0_i32_0 : i32, i32, i32
  }
  func.func @transform_2(%arg0: i32, %arg1: i32) -> (i32, i32, i32, i32) {
    %c1_i32 = arith.constant 1 : i32
    %0 = arith.muli %arg0, %c1_i32 : i32
    %1 = arith.addi %0, %arg1 : i32
    %c0_i32 = arith.constant 0 : i32
    %c0_i32_0 = arith.constant 0 : i32
    %c0_i32_1 = arith.constant 0 : i32
    %c0_i32_2 = arith.constant 0 : i32
    return %1, %c0_i32, %c0_i32_0, %c0_i32_1 : i32, i32, i32, i32
  }
  func.func @transform_3(%arg0: i32, %arg1: i32) -> (i32, i32) {
    %c0_i32 = arith.constant 0 : i32
    %c0_i32_0 = arith.constant 0 : i32
    %c0_i32_1 = arith.constant 0 : i32
    return %c0_i32, %c0_i32_0 : i32, i32
  }
  func.func @transform_4(%arg0: i32, %arg1: i32) -> (i32, i32) {
    %c0_i32 = arith.constant 0 : i32
    %c0_i32_0 = arith.constant 0 : i32
    %c0_i32_1 = arith.constant 0 : i32
    return %c0_i32, %c0_i32_0 : i32, i32
  }
  func.func @transform_5(%arg0: i32, %arg1: i32) -> (i32, i32) {
    %c0_i32 = arith.constant 0 : i32
    %c0_i32_0 = arith.constant 0 : i32
    %c0_i32_1 = arith.constant 0 : i32
    return %c0_i32, %c0_i32_0 : i32, i32
  }
  func.func @transform_6(%arg0: i32, %arg1: i32) -> (i32, i32) {
    %c0_i32 = arith.constant 0 : i32
    %c0_i32_0 = arith.constant 0 : i32
    %c0_i32_1 = arith.constant 0 : i32
    return %c0_i32, %c0_i32_0 : i32, i32
  }
  func.func @transform_7(%arg0: i32, %arg1: i32) -> (i32, i32, i32) {
    %c0_i32 = arith.constant 0 : i32
    %c0_i32_0 = arith.constant 0 : i32
    return %arg0, %arg1, %c0_i32 : i32, i32, i32
  }
}

</mosaic_0001>

<llo_original>
// kernel: spade_forward.2
$region0: #{spade_forward.2}
  #allocation0 [shape = 'u32[]', space=smem, size = 0x4, offset = 0x4, fixed_abs, tag = 'smem constant byte address 0x4 - core index']
  #allocation1 [shape = 'u32[72,128]{1,0:T(1,128)}', space=vmem, size = 0x9000, scoped, tag = 'internal scratch']
  %s0 = inlined_call_operand.vmem [shape: f32[2,256,128], index: 0, kind: input, shape index: {}]
  %s1 = inlined_call_operand.vmem [shape: f32[2,8,128], index: 1, kind: output, shape index: {}]
  %s2 = sld [smem:[#allocation0]]
  $region45: #{spade_forward.2} parent=0
    _
  %s4 = ssub.s32 1, %s2
  %s5 = scalar_select 0, %s4, %s2
  loop: start=0, step=1, limit=4
  $region2: #{spade_forward.2} parent=0 // loop_pre_header
    _
  $region3: #{spade_forward.2} parent=0 // loop_header
    %s7 = sphi 0, %s11
    %p8 = scmp.ge.s32.totalorder %s7, 4
    %s14 = sphi 0, %s26
    %s15 = sphi 0, %s22
    %s16 = sphi 0, %s14
    %s17 = sphi 0, %s15
    %s18 = sphi 0, %s16
    %s19 = sphi 0, %s17
    %s31 = sphi 0, %s33
    %s34 = sphi 0, %s31
    %s35 = sphi 0, %s34
    %s51 = sphi 0, %s35
    %s57 = sphi 0, %s59
    %s60 = sphi 0, %s57
    %s61 = sphi 0, %s60
    %s77 = sphi 0, %s61
  $region4: #{spade_forward.2} parent=0 // loop_header_branch
    %10 = sbr.rel (%p8) target = $region8
  $region5: #{spade_forward.2} parent=0 // loop_body
    %s12 = ssub.s32 %s7, 1
    %s13 = ssub.s32 %s7, 2
    %s20 = sadd.s32 1, %s15
    %p21 = scmp.ge.s32.totalorder %s20, 1
    %s22 = scalar_select %p21, 0, %s20
    %s23 = sadd.s32 1, %s14
    %s24 = scalar_select %p21, %s23, %s14
    %p25 = scmp.ge.s32.totalorder %s24, 2
    %s26 = scalar_select %p25, 0, %s24
    %s27 = ssub.s32 %s14, %s26
    %s28 = ssub.s32 %s15, %s22
    %s29 = sor.u32 %s27, %s28
    %p30 = scmp.eq.s32.totalorder %s29, 0
    %s32 = sadd.s32 %s31, 1
    %s33 = scalar_select %p30, %s31, %s32
    %p36 = pneg %p30
    %p37 = scmp.eq.s32.totalorder %s7, 1
    %p38 = por %p36, %p37
    %p39 = scmp.ne.s32.totalorder %s31, %s34
    %p40 = scmp.eq.s32.totalorder %s7, 0
    %p41 = por %p39, %p40
    %p42 = scmp.ne.s32.totalorder %s31, %s34
    %p43 = scmp.eq.s32.totalorder %s12, 1
    %p44 = por %p42, %p43
    %p45 = scmp.ne.s32.totalorder %s34, %s35
    %p46 = scmp.eq.s32.totalorder %s12, 0
    %p47 = por %p45, %p46
    %p48 = scmp.ne.s32.totalorder %s34, %s35
    %p49 = scmp.eq.s32.totalorder %s13, 1
    %p50 = por %p48, %p49
    %p52 = scmp.ne.s32.totalorder %s35, %s51
    %p53 = scmp.eq.s32.totalorder %s13, 0
    %p54 = por %p52, %p53
    %s55 = ssub.s32 %s14, %s26
    %p56 = scmp.eq.s32.totalorder %s55, 0
    %s58 = sadd.s32 %s57, 1
    %s59 = scalar_select %p56, %s57, %s58
    %p62 = pneg %p56
    %p63 = scmp.eq.s32.totalorder %s7, 1
    %p64 = por %p62, %p63
    %p65 = scmp.ne.s32.totalorder %s57, %s60
    %p66 = scmp.eq.s32.totalorder %s7, 0
    %p67 = por %p65, %p66
    %p68 = scmp.ne.s32.totalorder %s57, %s60
    %p69 = scmp.eq.s32.totalorder %s12, 1
    %p70 = por %p68, %p69
    %p71 = scmp.ne.s32.totalorder %s60, %s61
    %p72 = scmp.eq.s32.totalorder %s12, 0
    %p73 = por %p71, %p72
    %p74 = scmp.ne.s32.totalorder %s60, %s61
    %p75 = scmp.eq.s32.totalorder %s13, 1
    %p76 = por %p74, %p75
    %p78 = scmp.ne.s32.totalorder %s61, %s77
    %p79 = scmp.eq.s32.totalorder %s13, 0
    %p80 = por %p78, %p79
    %p81 = scmp.le.s32.totalorder 1, %s7
    %p82 = scmp.lt.s32.totalorder %s7, 3
    %p83 = pnand %p81, %p82
    %p84 = pneg %p83
    // Predicated region
    $region9: #{spade_forward.2} parent=5 // pred_check
      _
    $region10: #{spade_forward.2} parent=5 // pred_check_branch
      %86 = sbr.rel (%p83) target = $region12
    $region11: #{spade_forward.2} parent=5 // pred_region
      %s87 = ssub.s32 %s7, 1
    $region12: #{spade_forward.2} parent=5 // pred_fallthru
      _
    %p88 = scmp.lt.s32.totalorder %s7, 2
    // Predicated region
    $region13: #{spade_forward.2} parent=5 // pred_check
      %p89 = pneg %p88
    $region14: #{spade_forward.2} parent=5 // pred_check_branch
      %91 = sbr.rel (%p89) target = $region16
    $region15: #{spade_forward.2} parent=5 // pred_region
      // Predicated region
      $region17: #{spade_forward.2} parent=15 // pred_check
        %p92 = pneg %p41
      $region18: #{spade_forward.2} parent=15 // pred_check_branch
        %94 = sbr.rel (%p92) target = $region20
      $region19: #{spade_forward.2} parent=15 // pred_region
        %s95 = smul.u32 32, %s15
        %p96 = scmp.lt.s32.totalorder %s14, 1
        %s97 = scalar_select %p96, %s14, 1
        %p98 = scmp.lt.s32.totalorder %s95, 31
        %s99 = scalar_select %p98, %s95, 31
        %s100 = smul.addr %s97, 32
        %s101 = sadd.s32 %s99, %s100
        %s102 = smul.addr %s101, 8
        %s103 = scalar_lea.vmem %s0, %s102
        %s104 = smul.u32 32, %s15
      $region20: #{spade_forward.2} parent=15 // pred_fallthru
        _
    $region16: #{spade_forward.2} parent=5 // pred_fallthru
      _
    %p105 = scmp.le.s32.totalorder 1, %s7
    %p106 = scmp.lt.s32.totalorder %s7, 3
    %p107 = pnand %p105, %p106
    %p108 = pneg %p107
    // Predicated region
    $region21: #{spade_forward.2} parent=5 // pred_check
      _
    $region22: #{spade_forward.2} parent=5 // pred_check_branch
      %110 = sbr.rel (%p107) target = $region24
    $region23: #{spade_forward.2} parent=5 // pred_region
      %s111 = ssub.s32 %s7, 1
      %s112 = smul.u32 32, %s17
      %p113 = scmp.lt.s32.totalorder %s16, 1
      %s114 = scalar_select %p113, %s16, 1
      %p115 = scmp.lt.s32.totalorder %s112, 31
      %s116 = scalar_select %p115, %s112, 31
      %s117 = smul.addr %s114, 32
      %s118 = sadd.s32 %s116, %s117
      %s119 = smul.addr %s118, 8
      %s120 = scalar_lea.vmem %s0, %s119
      %p121 = pneg %p47
      %p122 = pneg %p44
      %p123 = pneg %p73
      %p124 = pneg %p70
      %p125 = scmp.lt.s32.totalorder %s16, 1
      %s126 = scalar_select %p125, %s16, 1
      %s127 = smul.addr %s126, 8
      %s128 = scalar_lea.vmem %s1, %s127
      %s129 = smul.u32 32, %s17
      %p130 = scmp.lt.s32.totalorder %s16, 1
      %s131 = scalar_select %p130, %s16, 1
      %p132 = scmp.lt.s32.totalorder %s129, 31
      %s133 = scalar_select %p132, %s129, 31
      %s134 = smul.addr %s131, 32
      %s135 = sadd.s32 %s133, %s134
      %s136 = smul.addr %s135, 8
      %s137 = scalar_lea.vmem %s0, %s136
      %s138 = smul.u32 32, %s17
      %p139 = scmp.lt.s32.totalorder %s16, 1
      %s140 = scalar_select %p139, %s16, 1
      %s141 = smul.addr %s140, 8
      %s142 = scalar_lea.vmem %s1, %s141
      %v143 = vld [vmem:[%s137] sm:$0xff]
      %v144 = vld [vmem:[%s137 + $0x8] sm:$0xff]
      %v145 = vld [vmem:[%s137 + $0x10] sm:$0xff]
      %v146 = vld [vmem:[%s137 + $0x18] sm:$0xff]
      %v147 = vld [vmem:[%s137 + $0x20] sm:$0xff]
      %v148 = vld [vmem:[%s137 + $0x28] sm:$0xff]
      %v149 = vld [vmem:[%s137 + $0x30] sm:$0xff]
      %v150 = vld [vmem:[%s137 + $0x38] sm:$0xff]
      %v151 = vld [vmem:[%s137 + $0x40] sm:$0xff]
      %v152 = vld [vmem:[%s137 + $0x48] sm:$0xff]
      %v153 = vld [vmem:[%s137 + $0x50] sm:$0xff]
      %v154 = vld [vmem:[%s137 + $0x58] sm:$0xff]
      %v155 = vld [vmem:[%s137 + $0x60] sm:$0xff]
      %v156 = vld [vmem:[%s137 + $0x68] sm:$0xff]
      %v157 = vld [vmem:[%s137 + $0x70] sm:$0xff]
      %v158 = vld [vmem:[%s137 + $0x78] sm:$0xff]
      %v159 = vld [vmem:[%s137 + $0x80] sm:$0xff]
      %v160 = vld [vmem:[%s137 + $0x88] sm:$0xff]
      %v161 = vld [vmem:[%s137 + $0x90] sm:$0xff]
      %v162 = vld [vmem:[%s137 + $0x98] sm:$0xff]
      %v163 = vld [vmem:[%s137 + $0xa0] sm:$0xff]
      %v164 = vld [vmem:[%s137 + $0xa8] sm:$0xff]
      %v165 = vld [vmem:[%s137 + $0xb0] sm:$0xff]
      %v166 = vld [vmem:[%s137 + $0xb8] sm:$0xff]
      %v167 = vld [vmem:[%s137 + $0xc0] sm:$0xff]
      %v168 = vld [vmem:[%s137 + $0xc8] sm:$0xff]
      %v169 = vld [vmem:[%s137 + $0xd0] sm:$0xff]
      %v170 = vld [vmem:[%s137 + $0xd8] sm:$0xff]
      %v171 = vld [vmem:[%s137 + $0xe0] sm:$0xff]
      %v172 = vld [vmem:[%s137 + $0xe8] sm:$0xff]
      %v173 = vld [vmem:[%s137 + $0xf0] sm:$0xff]
      %v174 = vld [vmem:[%s137 + $0xf8] sm:$0xff]
      %p175 = scmp.eq.s32.totalorder %s17, 0
      // Predicated region
      $region25: #{spade_forward.2} parent=23 // pred_check
        %p176 = pneg %p175
      $region26: #{spade_forward.2} parent=23 // pred_check_branch
        %178 = sbr.rel (%p176) target = $region28
      $region27: #{spade_forward.2} parent=23 // pred_region
        %179 = vst [vmem:[%s142] sm:$0xff] 0.0
      $region28: #{spade_forward.2} parent=23 // pred_fallthru
        _
      %v180 = vld [vmem:[%s142] sm:$0x1]
      %v181 = vadd.f32 %v143, %v144
      %v182 = vadd.f32 %v181, %v145
      %v183 = vadd.f32 %v182, %v146
      %v184 = vadd.f32 %v183, %v147
      %v185 = vadd.f32 %v184, %v148
      %v186 = vadd.f32 %v185, %v149
      %v187 = vadd.f32 %v186, %v150
      %v188 = vadd.f32 %v187, %v151
      %v189 = vadd.f32 %v188, %v152
      %v190 = vadd.f32 %v189, %v153
      %v191 = vadd.f32 %v190, %v154
      %v192 = vadd.f32 %v191, %v155
      %v193 = vadd.f32 %v192, %v156
      %v194 = vadd.f32 %v193, %v157
      %v195 = vadd.f32 %v194, %v158
      %v196 = vadd.f32 %v195, %v159
      %v197 = vadd.f32 %v196, %v160
      %v198 = vadd.f32 %v197, %v161
      %v199 = vadd.f32 %v198, %v162
      %v200 = vadd.f32 %v199, %v163
      %v201 = vadd.f32 %v200, %v164
      %v202 = vadd.f32 %v201, %v165
      %v203 = vadd.f32 %v202, %v166
      %v204 = vadd.f32 %v203, %v167
      %v205 = vadd.f32 %v204, %v168
      %v206 = vadd.f32 %v205, %v169
      %v207 = vadd.f32 %v206, %v170
      %v208 = vadd.f32 %v207, %v171
      %v209 = vadd.f32 %v208, %v172
      %v210 = vadd.f32 %v209, %v173
      %v211 = vadd.f32 %v210, %v174
      %v212 = vrot.slane %v211, 4
      %v213 = vadd.f32 %v211, %v212
      %v214 = vrot.slane %v213, 2
      %v215 = vadd.f32 %v213, %v214
      %v216 = vrot.slane %v215, 1
      %v217 = vadd.f32 %v215, %v216
      %v218 = vadd.f32 %v180, %v217
      %219 = vst [vmem:[%s142] sm:$0x1] %v218
      %v220 = vld [vmem:[%s142 + $0x1] sm:$0x1]
      %v221 = vmul.f32 %v143, %v143
      %v222 = vmul.f32 %v144, %v144
      %v223 = vmul.f32 %v145, %v145
      %v224 = vmul.f32 %v146, %v146
      %v225 = vmul.f32 %v147, %v147
      %v226 = vmul.f32 %v148, %v148
      %v227 = vmul.f32 %v149, %v149
      %v228 = vmul.f32 %v150, %v150
      %v229 = vmul.f32 %v151, %v151
      %v230 = vmul.f32 %v152, %v152
      %v231 = vmul.f32 %v153, %v153
      %v232 = vmul.f32 %v154, %v154
      %v233 = vmul.f32 %v155, %v155
      %v234 = vmul.f32 %v156, %v156
      %v235 = vmul.f32 %v157, %v157
      %v236 = vmul.f32 %v158, %v158
      %v237 = vmul.f32 %v159, %v159
      %v238 = vmul.f32 %v160, %v160
      %v239 = vmul.f32 %v161, %v161
      %v240 = vmul.f32 %v162, %v162
      %v241 = vmul.f32 %v163, %v163
      %v242 = vmul.f32 %v164, %v164
      %v243 = vmul.f32 %v165, %v165
      %v244 = vmul.f32 %v166, %v166
      %v245 = vmul.f32 %v167, %v167
      %v246 = vmul.f32 %v168, %v168
      %v247 = vmul.f32 %v169, %v169
      %v248 = vmul.f32 %v170, %v170
      %v249 = vmul.f32 %v171, %v171
      %v250 = vmul.f32 %v172, %v172
      %v251 = vmul.f32 %v173, %v173
      %v252 = vmul.f32 %v174, %v174
      %v253 = vadd.f32 %v221, %v222
      %v254 = vadd.f32 %v253, %v223
      %v255 = vadd.f32 %v254, %v224
      %v256 = vadd.f32 %v255, %v225
      %v257 = vadd.f32 %v256, %v226
      %v258 = vadd.f32 %v257, %v227
      %v259 = vadd.f32 %v258, %v228
      %v260 = vadd.f32 %v259, %v229
      %v261 = vadd.f32 %v260, %v230
      %v262 = vadd.f32 %v261, %v231
      %v263 = vadd.f32 %v262, %v232
      %v264 = vadd.f32 %v263, %v233
      %v265 = vadd.f32 %v264, %v234
      %v266 = vadd.f32 %v265, %v235
      %v267 = vadd.f32 %v266, %v236
      %v268 = vadd.f32 %v267, %v237
      %v269 = vadd.f32 %v268, %v238
      %v270 = vadd.f32 %v269, %v239
      %v271 = vadd.f32 %v270, %v240
      %v272 = vadd.f32 %v271, %v241
      %v273 = vadd.f32 %v272, %v242
      %v274 = vadd.f32 %v273, %v243
      %v275 = vadd.f32 %v274, %v244
      %v276 = vadd.f32 %v275, %v245
      %v277 = vadd.f32 %v276, %v246
      %v278 = vadd.f32 %v277, %v247
      %v279 = vadd.f32 %v278, %v248
      %v280 = vadd.f32 %v279, %v249
      %v281 = vadd.f32 %v280, %v250
      %v282 = vadd.f32 %v281, %v251
      %v283 = vadd.f32 %v282, %v252
      %v284 = vrot.slane %v283, 4
      %v285 = vadd.f32 %v283, %v284
      %v286 = vrot.slane %v285, 2
      %v287 = vadd.f32 %v285, %v286
      %v288 = vrot.slane %v287, 1
      %v289 = vadd.f32 %v287, %v288
      %v290 = vadd.f32 %v220, %v289
      %291 = vst [vmem:[%s142 + $0x1] sm:$0x1] %v290
      // Predicated region
      $region29: #{spade_forward.2} parent=23 // pred_check
        %p292 = pneg %p175
      $region30: #{spade_forward.2} parent=23 // pred_check_branch
        %294 = sbr.rel (%p292) target = $region32
      $region31: #{spade_forward.2} parent=23 // pred_region
        %v295 = vld [vmem:[%s142] sm:$0x1]
        %v296 = vmul.f32 %v295, 0.00390625
        %v297 = vld [vmem:[%s142 + $0x1] sm:$0x1]
        %v298 = vmul.f32 %v297, 0.00390625
        %v299 = vmul.f32 %v296, %v296
        %v300 = vsub.f32 %v298, %v299
        %301 = vst [vmem:[%s142] sm:$0x1] %v296
        %v302 = vmax.f32 %v300, 0.0
        %v303 = vadd.f32 %v302, 1e-05
        %v304 = vrsqrt.pop %v303
        %v305 = vmul.f32 %v304, %v303
        %v306 = vmul.f32 %v305, %v304
        %v307 = vmul.f32 0.5, %v306
        %v308 = vsub.f32 1.5, %v307
        %v309 = vmul.f32 %v304, %v308
        %vm310 = vweird.f32 %v303
        %vm311 = vweird.f32 %v304
        %vm312 = vmor %vm310, %vm311
        %v313 = vsel %vm312, %v304, %v309
        %314 = vst [vmem:[%s142 + $0x1] sm:$0x1] %v313
      $region32: #{spade_forward.2} parent=23 // pred_fallthru
        _
      %p315 = scmp.lt.s32.totalorder %s16, 1
      %s316 = scalar_select %p315, %s16, 1
      %s317 = smul.addr %s316, 8
      %s318 = scalar_lea.vmem %s1, %s317
      // Predicated region
      $region33: #{spade_forward.2} parent=23 // pred_check
        %p319 = pneg %p70
      $region34: #{spade_forward.2} parent=23 // pred_check_branch
        %321 = sbr.rel (%p319) target = $region36
      $region35: #{spade_forward.2} parent=23 // pred_region
        _
      $region36: #{spade_forward.2} parent=23 // pred_fallthru
        _
    $region24: #{spade_forward.2} parent=5 // pred_fallthru
      _
    %p322 = scmp.le.s32.totalorder 2, %s7
    // Predicated region
    $region37: #{spade_forward.2} parent=5 // pred_check
      %p323 = pneg %p322
    $region38: #{spade_forward.2} parent=5 // pred_check_branch
      %325 = sbr.rel (%p323) target = $region40
    $region39: #{spade_forward.2} parent=5 // pred_region
      %s326 = ssub.s32 %s7, 2
      // Predicated region
      $region41: #{spade_forward.2} parent=39 // pred_check
        %p327 = pneg %p76
      $region42: #{spade_forward.2} parent=39 // pred_check_branch
        %329 = sbr.rel (%p327) target = $region44
      $region43: #{spade_forward.2} parent=39 // pred_region
        %p330 = scmp.lt.s32.totalorder %s18, 1
        %s331 = scalar_select %p330, %s18, 1
        %s332 = smul.addr %s331, 8
        %s333 = scalar_lea.vmem %s1, %s332
      $region44: #{spade_forward.2} parent=39 // pred_fallthru
        _
    $region40: #{spade_forward.2} parent=5 // pred_fallthru
      _
  $region6: #{spade_forward.2} parent=0 // loop_footer
    %s11 = sadd.s32 1, %s7
  $region7: #{spade_forward.2} parent=0 // loop_footer_branch
    %6 = sbr.rel target = $region3
  $region8: #{spade_forward.2} parent=0 // loop_exit
    _

// kernel: spade_forward.3
$region0: #{spade_forward.3}
  #allocation0 [shape = 'u32[]', space=smem, size = 0x4, offset = 0x4, fixed_abs, tag = 'smem constant byte address 0x4 - core index']
  #allocation1 [shape = 'u32[72,128]{1,0:T(1,128)}', space=vmem, size = 0x9000, scoped, tag = 'internal scratch']
  #allocation2 [shape = 'bf16[18,18,128]{2,1,0:T(8,128)(2,1)}', space=vmem, size = 0x1b000, scoped, tag = 'scratch operand']
  %s0 = inlined_call_operand.vmem [shape: f32[2,256,128], index: 0, kind: input, shape index: {}]
  %s1 = inlined_call_operand.vmem [shape: f32[2,8,128], index: 1, kind: input, shape index: {}]
  %s2 = inlined_call_operand.vmem [shape: bf16[2,20,18,128], index: 2, kind: input, shape index: {}]
  %s3 = inlined_call_operand.vmem [shape: bf16[1152,128], index: 3, kind: input, shape index: {}]
  %s4 = inlined_call_operand.vmem [shape: f32[1,128], index: 4, kind: input, shape index: {}]
  %s5 = inlined_call_operand.vmem [shape: bf16[1152,256], index: 5, kind: input, shape index: {}]
  %s6 = inlined_call_operand.vmem [shape: f32[1,256], index: 6, kind: input, shape index: {}]
  %s7 = inlined_call_operand.vmem [shape: f32[2,256,128], index: 7, kind: output, shape index: {}]
  %s8 = sld [smem:[#allocation0]]
  $region65: #{spade_forward.3} parent=0
    _
  %s10 = ssub.s32 1, %s8
  %s11 = scalar_select 0, %s10, %s8
  loop: start=0, step=1, limit=4
  $region2: #{spade_forward.3} parent=0 // loop_pre_header
    _
  $region3: #{spade_forward.3} parent=0 // loop_header
    %s13 = sphi 0, %s17
    %p14 = scmp.ge.s32.totalorder %s13, 4
    %s20 = sphi 0, %s32
    %s21 = sphi 0, %s28
    %s22 = sphi 0, %s20
    %s23 = sphi 0, %s21
    %s24 = sphi 0, %s22
    %s25 = sphi 0, %s23
    %s37 = sphi 0, %s39
    %s40 = sphi 0, %s37
    %s41 = sphi 0, %s40
    %s57 = sphi 0, %s41
    %s63 = sphi 0, %s65
    %s66 = sphi 0, %s63
    %s67 = sphi 0, %s66
    %s83 = sphi 0, %s67
    %s91 = sphi 0, %s93
    %s94 = sphi 0, %s91
    %s95 = sphi 0, %s94
    %s111 = sphi 0, %s95
    %s115 = sphi 0, %s115
    %s117 = sphi 0, %s115
    %s118 = sphi 0, %s117
    %s132 = sphi 0, %s118
    %s136 = sphi 0, %s136
    %s138 = sphi 0, %s136
    %s139 = sphi 0, %s138
    %s153 = sphi 0, %s139
    %s157 = sphi 0, %s157
    %s159 = sphi 0, %s157
    %s160 = sphi 0, %s159
    %s174 = sphi 0, %s160
    %s178 = sphi 0, %s178
    %s180 = sphi 0, %s178
    %s181 = sphi 0, %s180
    %s195 = sphi 0, %s181
    %s203 = sphi 0, %s205
    %s206 = sphi 0, %s203
    %s207 = sphi 0, %s206
    %s223 = sphi 0, %s207
  $region4: #{spade_forward.3} parent=0 // loop_header_branch
    %16 = sbr.rel (%p14) target = $region8
  $region5: #{spade_forward.3} parent=0 // loop_body
    %s18 = ssub.s32 %s13, 1
    %s19 = ssub.s32 %s13, 2
    %s26 = sadd.s32 1, %s21
    %p27 = scmp.ge.s32.totalorder %s26, 1
    %s28 = scalar_select %p27, 0, %s26
    %s29 = sadd.s32 1, %s20
    %s30 = scalar_select %p27, %s29, %s20
    %p31 = scmp.ge.s32.totalorder %s30, 2
    %s32 = scalar_select %p31, 0, %s30
    %s33 = ssub.s32 %s20, %s32
    %s34 = ssub.s32 %s21, %s28
    %s35 = sor.u32 %s33, %s34
    %p36 = scmp.eq.s32.totalorder %s35, 0
    %s38 = sadd.s32 %s37, 1
    %s39 = scalar_select %p36, %s37, %s38
    %p42 = pneg %p36
    %p43 = scmp.eq.s32.totalorder %s13, 1
    %p44 = por %p42, %p43
    %p45 = scmp.ne.s32.totalorder %s37, %s40
    %p46 = scmp.eq.s32.totalorder %s13, 0
    %p47 = por %p45, %p46
    %p48 = scmp.ne.s32.totalorder %s37, %s40
    %p49 = scmp.eq.s32.totalorder %s18, 1
    %p50 = por %p48, %p49
    %p51 = scmp.ne.s32.totalorder %s40, %s41
    %p52 = scmp.eq.s32.totalorder %s18, 0
    %p53 = por %p51, %p52
    %p54 = scmp.ne.s32.totalorder %s40, %s41
    %p55 = scmp.eq.s32.totalorder %s19, 1
    %p56 = por %p54, %p55
    %p58 = scmp.ne.s32.totalorder %s41, %s57
    %p59 = scmp.eq.s32.totalorder %s19, 0
    %p60 = por %p58, %p59
    %s61 = ssub.s32 %s20, %s32
    %p62 = scmp.eq.s32.totalorder %s61, 0
    %s64 = sadd.s32 %s63, 1
    %s65 = scalar_select %p62, %s63, %s64
    %p68 = pneg %p62
    %p69 = scmp.eq.s32.totalorder %s13, 1
    %p70 = por %p68, %p69
    %p71 = scmp.ne.s32.totalorder %s63, %s66
    %p72 = scmp.eq.s32.totalorder %s13, 0
    %p73 = por %p71, %p72
    %p74 = scmp.ne.s32.totalorder %s63, %s66
    %p75 = scmp.eq.s32.totalorder %s18, 1
    %p76 = por %p74, %p75
    %p77 = scmp.ne.s32.totalorder %s66, %s67
    %p78 = scmp.eq.s32.totalorder %s18, 0
    %p79 = por %p77, %p78
    %p80 = scmp.ne.s32.totalorder %s66, %s67
    %p81 = scmp.eq.s32.totalorder %s19, 1
    %p82 = por %p80, %p81
    %p84 = scmp.ne.s32.totalorder %s67, %s83
    %p85 = scmp.eq.s32.totalorder %s19, 0
    %p86 = por %p84, %p85
    %s87 = sadd.s32 %s20, %s21
    %s88 = sadd.s32 %s32, %s28
    %s89 = ssub.s32 %s87, %s88
    %p90 = scmp.eq.s32.totalorder %s89, 0
    %s92 = sadd.s32 %s91, 1
    %s93 = scalar_select %p90, %s91, %s92
    %p96 = pneg %p90
    %p97 = scmp.eq.s32.totalorder %s13, 1
    %p98 = por %p96, %p97
    %p99 = scmp.ne.s32.totalorder %s91, %s94
    %p100 = scmp.eq.s32.totalorder %s13, 0
    %p101 = por %p99, %p100
    %p102 = scmp.ne.s32.totalorder %s91, %s94
    %p103 = scmp.eq.s32.totalorder %s18, 1
    %p104 = por %p102, %p103
    %p105 = scmp.ne.s32.totalorder %s94, %s95
    %p106 = scmp.eq.s32.totalorder %s18, 0
    %p107 = por %p105, %p106
    %p108 = scmp.ne.s32.totalorder %s94, %s95
    %p109 = scmp.eq.s32.totalorder %s19, 1
    %p110 = por %p108, %p109
    %p112 = scmp.ne.s32.totalorder %s95, %s111
    %p113 = scmp.eq.s32.totalorder %s19, 0
    %p114 = por %p112, %p113
    %s116 = sadd.s32 %s115, 1
    %p119 = scmp.eq.s32.totalorder %s13, 1
    %p120 = scmp.ne.s32.totalorder %s115, %s117
    %p121 = scmp.eq.s32.totalorder %s13, 0
    %p122 = por %p120, %p121
    %p123 = scmp.ne.s32.totalorder %s115, %s117
    %p124 = scmp.eq.s32.totalorder %s18, 1
    %p125 = por %p123, %p124
    %p126 = scmp.ne.s32.totalorder %s117, %s118
    %p127 = scmp.eq.s32.totalorder %s18, 0
    %p128 = por %p126, %p127
    %p129 = scmp.ne.s32.totalorder %s117, %s118
    %p130 = scmp.eq.s32.totalorder %s19, 1
    %p131 = por %p129, %p130
    %p133 = scmp.ne.s32.totalorder %s118, %s132
    %p134 = scmp.eq.s32.totalorder %s19, 0
    %p135 = por %p133, %p134
    %s137 = sadd.s32 %s136, 1
    %p140 = scmp.eq.s32.totalorder %s13, 1
    %p141 = scmp.ne.s32.totalorder %s136, %s138
    %p142 = scmp.eq.s32.totalorder %s13, 0
    %p143 = por %p141, %p142
    %p144 = scmp.ne.s32.totalorder %s136, %s138
    %p145 = scmp.eq.s32.totalorder %s18, 1
    %p146 = por %p144, %p145
    %p147 = scmp.ne.s32.totalorder %s138, %s139
    %p148 = scmp.eq.s32.totalorder %s18, 0
    %p149 = por %p147, %p148
    %p150 = scmp.ne.s32.totalorder %s138, %s139
    %p151 = scmp.eq.s32.totalorder %s19, 1
    %p152 = por %p150, %p151
    %p154 = scmp.ne.s32.totalorder %s139, %s153
    %p155 = scmp.eq.s32.totalorder %s19, 0
    %p156 = por %p154, %p155
    %s158 = sadd.s32 %s157, 1
    %p161 = scmp.eq.s32.totalorder %s13, 1
    %p162 = scmp.ne.s32.totalorder %s157, %s159
    %p163 = scmp.eq.s32.totalorder %s13, 0
    %p164 = por %p162, %p163
    %p165 = scmp.ne.s32.totalorder %s157, %s159
    %p166 = scmp.eq.s32.totalorder %s18, 1
    %p167 = por %p165, %p166
    %p168 = scmp.ne.s32.totalorder %s159, %s160
    %p169 = scmp.eq.s32.totalorder %s18, 0
    %p170 = por %p168, %p169
    %p171 = scmp.ne.s32.totalorder %s159, %s160
    %p172 = scmp.eq.s32.totalorder %s19, 1
    %p173 = por %p171, %p172
    %p175 = scmp.ne.s32.totalorder %s160, %s174
    %p176 = scmp.eq.s32.totalorder %s19, 0
    %p177 = por %p175, %p176
    %s179 = sadd.s32 %s178, 1
    %p182 = scmp.eq.s32.totalorder %s13, 1
    %p183 = scmp.ne.s32.totalorder %s178, %s180
    %p184 = scmp.eq.s32.totalorder %s13, 0
    %p185 = por %p183, %p184
    %p186 = scmp.ne.s32.totalorder %s178, %s180
    %p187 = scmp.eq.s32.totalorder %s18, 1
    %p188 = por %p186, %p187
    %p189 = scmp.ne.s32.totalorder %s180, %s181
    %p190 = scmp.eq.s32.totalorder %s18, 0
    %p191 = por %p189, %p190
    %p192 = scmp.ne.s32.totalorder %s180, %s181
    %p193 = scmp.eq.s32.totalorder %s19, 1
    %p194 = por %p192, %p193
    %p196 = scmp.ne.s32.totalorder %s181, %s195
    %p197 = scmp.eq.s32.totalorder %s19, 0
    %p198 = por %p196, %p197
    %s199 = ssub.s32 %s20, %s32
    %s200 = ssub.s32 %s21, %s28
    %s201 = sor.u32 %s199, %s200
    %p202 = scmp.eq.s32.totalorder %s201, 0
    %s204 = sadd.s32 %s203, 1
    %s205 = scalar_select %p202, %s203, %s204
    %p208 = pneg %p202
    %p209 = scmp.eq.s32.totalorder %s13, 1
    %p210 = por %p208, %p209
    %p211 = scmp.ne.s32.totalorder %s203, %s206
    %p212 = scmp.eq.s32.totalorder %s13, 0
    %p213 = por %p211, %p212
    %p214 = scmp.ne.s32.totalorder %s203, %s206
    %p215 = scmp.eq.s32.totalorder %s18, 1
    %p216 = por %p214, %p215
    %p217 = scmp.ne.s32.totalorder %s206, %s207
    %p218 = scmp.eq.s32.totalorder %s18, 0
    %p219 = por %p217, %p218
    %p220 = scmp.ne.s32.totalorder %s206, %s207
    %p221 = scmp.eq.s32.totalorder %s19, 1
    %p222 = por %p220, %p221
    %p224 = scmp.ne.s32.totalorder %s207, %s223
    %p225 = scmp.eq.s32.totalorder %s19, 0
    %p226 = por %p224, %p225
    %p227 = scmp.le.s32.totalorder 1, %s13
    %p228 = scmp.lt.s32.totalorder %s13, 3
    %p229 = pnand %p227, %p228
    %p230 = pneg %p229
    // Predicated region
    $region9: #{spade_forward.3} parent=5 // pred_check
      _
    $region10: #{spade_forward.3} parent=5 // pred_check_branch
      %232 = sbr.rel (%p229) target = $region12
    $region11: #{spade_forward.3} parent=5 // pred_region
      %s233 = ssub.s32 %s13, 1
      // Predicated region
      $region13: #{spade_forward.3} parent=11 // pred_check
        %p234 = pneg %p128
      $region14: #{spade_forward.3} parent=11 // pred_check_branch
        %236 = sbr.rel (%p234) target = $region16
      $region15: #{spade_forward.3} parent=11 // pred_region
        _
      $region16: #{spade_forward.3} parent=11 // pred_fallthru
        _
      // Predicated region
      $region17: #{spade_forward.3} parent=11 // pred_check
        %p237 = pneg %p149
      $region18: #{spade_forward.3} parent=11 // pred_check_branch
        %239 = sbr.rel (%p237) target = $region20
      $region19: #{spade_forward.3} parent=11 // pred_region
        _
      $region20: #{spade_forward.3} parent=11 // pred_fallthru
        _
      // Predicated region
      $region21: #{spade_forward.3} parent=11 // pred_check
        %p240 = pneg %p170
      $region22: #{spade_forward.3} parent=11 // pred_check_branch
        %242 = sbr.rel (%p240) target = $region24
      $region23: #{spade_forward.3} parent=11 // pred_region
        _
      $region24: #{spade_forward.3} parent=11 // pred_fallthru
        _
      // Predicated region
      $region25: #{spade_forward.3} parent=11 // pred_check
        %p243 = pneg %p191
      $region26: #{spade_forward.3} parent=11 // pred_check_branch
        %245 = sbr.rel (%p243) target = $region28
      $region27: #{spade_forward.3} parent=11 // pred_region
        _
      $region28: #{spade_forward.3} parent=11 // pred_fallthru
        _
    $region12: #{spade_forward.3} parent=5 // pred_fallthru
      _
    %p246 = scmp.lt.s32.totalorder %s13, 2
    // Predicated region
    $region29: #{spade_forward.3} parent=5 // pred_check
      %p247 = pneg %p246
    $region30: #{spade_forward.3} parent=5 // pred_check_branch
      %249 = sbr.rel (%p247) target = $region32
    $region31: #{spade_forward.3} parent=5 // pred_region
      // Predicated region
      $region33: #{spade_forward.3} parent=31 // pred_check
        %p250 = pneg %p47
      $region34: #{spade_forward.3} parent=31 // pred_check_branch
        %252 = sbr.rel (%p250) target = $region36
      $region35: #{spade_forward.3} parent=31 // pred_region
        %s253 = smul.u32 32, %s21
        %p254 = scmp.lt.s32.totalorder %s20, 1
        %s255 = scalar_select %p254, %s20, 1
        %p256 = scmp.lt.s32.totalorder %s253, 31
        %s257 = scalar_select %p256, %s253, 31
        %s258 = smul.addr %s255, 32
        %s259 = sadd.s32 %s257, %s258
        %s260 = smul.addr %s259, 8
        %s261 = scalar_lea.vmem %s0, %s260
        %s262 = smul.u32 32, %s21
      $region36: #{spade_forward.3} parent=31 // pred_fallthru
        _
      // Predicated region
      $region37: #{spade_forward.3} parent=31 // pred_check
        %p263 = pneg %p73
      $region38: #{spade_forward.3} parent=31 // pred_check_branch
        %265 = sbr.rel (%p263) target = $region40
      $region39: #{spade_forward.3} parent=31 // pred_region
        %p266 = scmp.lt.s32.totalorder %s20, 1
        %s267 = scalar_select %p266, %s20, 1
        %s268 = smul.addr %s267, 8
        %s269 = scalar_lea.vmem %s1, %s268
      $region40: #{spade_forward.3} parent=31 // pred_fallthru
        _
      // Predicated region
      $region41: #{spade_forward.3} parent=31 // pred_check
        %p270 = pneg %p101
      $region42: #{spade_forward.3} parent=31 // pred_check_branch
        %272 = sbr.rel (%p270) target = $region44
      $region43: #{spade_forward.3} parent=31 // pred_region
        %s273 = sadd.s32 %s20, %s21
        %p274 = scmp.lt.s32.totalorder %s273, 1
        %s275 = scalar_select %p274, %s273, 1
        %s276 = smul.addr %s275, 60
        %s277 = smul.addr %s276, 4
        %s278 = scalar_lea.vmem %s2, %s277
        %s279 = sadd.s32 %s20, %s21
      $region44: #{spade_forward.3} parent=31 // pred_fallthru
        _
    $region32: #{spade_forward.3} parent=5 // pred_fallthru
      _
    %p280 = scmp.le.s32.totalorder 1, %s13
    %p281 = scmp.lt.s32.totalorder %s13, 3
    %p282 = pnand %p280, %p281
    %p283 = pneg %p282
    // Predicated region
    $region45: #{spade_forward.3} parent=5 // pred_check
      _
    $region46: #{spade_forward.3} parent=5 // pred_check_branch
      %285 = sbr.rel (%p282) target = $region48
    $region47: #{spade_forward.3} parent=5 // pred_region
      %s286 = ssub.s32 %s13, 1
      %s287 = smul.u32 32, %s23
      %p288 = scmp.lt.s32.totalorder %s22, 1
      %s289 = scalar_select %p288, %s22, 1
      %p290 = scmp.lt.s32.totalorder %s287, 31
      %s291 = scalar_select %p290, %s287, 31
      %s292 = smul.addr %s289, 32
      %s293 = sadd.s32 %s291, %s292
      %s294 = smul.addr %s293, 8
      %s295 = scalar_lea.vmem %s0, %s294
      %p296 = pneg %p53
      %p297 = pneg %p50
      %p298 = scmp.lt.s32.totalorder %s22, 1
      %s299 = scalar_select %p298, %s22, 1
      %s300 = smul.addr %s299, 8
      %s301 = scalar_lea.vmem %s1, %s300
      %p302 = pneg %p79
      %p303 = pneg %p76
      %s304 = sadd.s32 %s22, %s23
      %p305 = scmp.lt.s32.totalorder %s304, 1
      %s306 = scalar_select %p305, %s304, 1
      %s307 = smul.addr %s306, 60
      %s308 = smul.addr %s307, 4
      %s309 = scalar_lea.vmem %s2, %s308
      %p310 = pneg %p107
      %p311 = pneg %p104
      %p312 = pneg %p128
      %p313 = pneg %p125
      %p314 = pneg %p149
      %p315 = pneg %p146
      %p316 = pneg %p170
      %p317 = pneg %p167
      %p318 = pneg %p191
      %p319 = pneg %p188
      %p320 = pneg %p219
      %p321 = pneg %p216
      %s322 = smul.u32 32, %s23
      %p323 = scmp.lt.s32.totalorder %s22, 1
      %s324 = scalar_select %p323, %s22, 1
      %p325 = scmp.lt.s32.totalorder %s322, 31
      %s326 = scalar_select %p325, %s322, 31
      %s327 = smul.addr %s324, 32
      %s328 = sadd.s32 %s326, %s327
      %s329 = smul.addr %s328, 8
      %s330 = scalar_lea.vmem %s7, %s329
      %s331 = smul.u32 32, %s23
      %p332 = scmp.lt.s32.totalorder %s22, 1
      %s333 = scalar_select %p332, %s22, 1
      %p334 = scmp.lt.s32.totalorder %s331, 31
      %s335 = scalar_select %p334, %s331, 31
      %s336 = smul.addr %s333, 32
      %s337 = sadd.s32 %s335, %s336
      %s338 = smul.addr %s337, 8
      %s339 = scalar_lea.vmem %s0, %s338
      %s340 = smul.u32 32, %s23
      %p341 = scmp.lt.s32.totalorder %s22, 1
      %s342 = scalar_select %p341, %s22, 1
      %s343 = smul.addr %s342, 8
      %s344 = scalar_lea.vmem %s1, %s343
      %s345 = sadd.s32 %s22, %s23
      %p346 = scmp.lt.s32.totalorder %s345, 1
      %s347 = scalar_select %p346, %s345, 1
      %s348 = smul.addr %s347, 60
      %s349 = smul.addr %s348, 4
      %s350 = scalar_lea.vmem %s2, %s349
      %s351 = sadd.s32 %s22, %s23
      %s352 = smul.u32 32, %s23
      %p353 = scmp.lt.s32.totalorder %s22, 1
      %s354 = scalar_select %p353, %s22, 1
      %p355 = scmp.lt.s32.totalorder %s352, 31
      %s356 = scalar_select %p355, %s352, 31
      %s357 = smul.addr %s354, 32
      %s358 = sadd.s32 %s356, %s357
      %s359 = smul.addr %s358, 8
      %s360 = scalar_lea.vmem %s7, %s359
      %s361 = smul.u32 32, %s23
      %v363 = vld [vmem:[%s350] sm:$0xf]
      %v364 = vld [vmem:[%s350 + $0x4] sm:$0xf]
      %v365 = vld [vmem:[%s350 + $0xc] sm:$0xf]
      %v366 = vld [vmem:[%s350 + $0x10] sm:$0xf]
      %v367 = vld [vmem:[%s350 + $0x18] sm:$0xf]
      %v368 = vld [vmem:[%s350 + $0x1c] sm:$0xf]
      %v369 = vld [vmem:[%s350 + $0x24] sm:$0xf]
      %v370 = vld [vmem:[%s350 + $0x28] sm:$0xf]
      %v371 = vld [vmem:[%s350 + $0x30] sm:$0xf]
      %v372 = vld [vmem:[%s350 + $0x34] sm:$0xf]
      %v373 = vld [vmem:[%s350 + $0x3c] sm:$0xf]
      %v374 = vld [vmem:[%s350 + $0x40] sm:$0xf]
      %v375 = vld [vmem:[%s350 + $0x48] sm:$0xf]
      %v376 = vld [vmem:[%s350 + $0x4c] sm:$0xf]
      %v377 = vld [vmem:[%s350 + $0x54] sm:$0xf]
      %v378 = vld [vmem:[%s350 + $0x58] sm:$0xf]
      %v379 = vld [vmem:[%s350 + $0x60] sm:$0xf]
      %v380 = vld [vmem:[%s350 + $0x64] sm:$0xf]
      %v381 = vld [vmem:[%s350 + $0x6c] sm:$0xf]
      %v382 = vld [vmem:[%s350 + $0x70] sm:$0xf]
      %v383 = vld [vmem:[%s350 + $0x78] sm:$0xf]
      %v384 = vld [vmem:[%s350 + $0x7c] sm:$0xf]
      %v385 = vld [vmem:[%s350 + $0x84] sm:$0xf]
      %v386 = vld [vmem:[%s350 + $0x88] sm:$0xf]
      %v387 = vld [vmem:[%s350 + $0x90] sm:$0xf]
      %v388 = vld [vmem:[%s350 + $0x94] sm:$0xf]
      %v389 = vld [vmem:[%s350 + $0x9c] sm:$0xf]
      %v390 = vld [vmem:[%s350 + $0xa0] sm:$0xf]
      %v391 = vld [vmem:[%s350 + $0xa8] sm:$0xf]
      %v392 = vld [vmem:[%s350 + $0xac] sm:$0xf]
      %v393 = vld [vmem:[%s350 + $0xb4] sm:$0xf]
      %v394 = vld [vmem:[%s350 + $0xb8] sm:$0xf]
      %v395 = vld [vmem:[%s350 + $0xc0] sm:$0xf]
      %v396 = vld [vmem:[%s350 + $0xc4] sm:$0xf]
      %v397 = vld [vmem:[%s350 + $0xcc] sm:$0xf]
      %v398 = vld [vmem:[%s350 + $0xd0] sm:$0xf]
      %v399 = vld [vmem:[%s3] sm:$0xf]
      %v400 = vld [vmem:[%s3 + $0x4] sm:$0xf]
      %v401 = vld [vmem:[%s3 + $0x8] sm:$0xf]
      %v402 = vld [vmem:[%s3 + $0xc] sm:$0xf]
      %v403 = vld [vmem:[%s3 + $0x10] sm:$0xf]
      %v404 = vld [vmem:[%s3 + $0x14] sm:$0xf]
      %v405 = vld [vmem:[%s3 + $0x18] sm:$0xf]
      %v406 = vld [vmem:[%s3 + $0x1c] sm:$0xf]
      %v407 = vld [vmem:[%s3 + $0x20] sm:$0xf]
      %v408 = vld [vmem:[%s3 + $0x24] sm:$0xf]
      %v409 = vld [vmem:[%s3 + $0x28] sm:$0xf]
      %v410 = vld [vmem:[%s3 + $0x2c] sm:$0xf]
      %v411 = vld [vmem:[%s3 + $0x30] sm:$0xf]
      %v412 = vld [vmem:[%s3 + $0x34] sm:$0xf]
      %v413 = vld [vmem:[%s3 + $0x38] sm:$0xf]
      %v414 = vld [vmem:[%s3 + $0x3c] sm:$0xf]
      %v415 = vld [vmem:[%s350 + $0x8] sm:$0x1]
      %v416 = vld [vmem:[%s350 + $0x14] sm:$0x1]
      %v417 = vld [vmem:[%s350 + $0x20] sm:$0x1]
      %v418 = vld [vmem:[%s350 + $0x2c] sm:$0x1]
      %v419 = vld [vmem:[%s350 + $0x38] sm:$0x1]
      %v420 = vld [vmem:[%s350 + $0x44] sm:$0x1]
      %v421 = vld [vmem:[%s350 + $0x50] sm:$0x1]
      %v422 = vld [vmem:[%s350 + $0x5c] sm:$0x1]
      %v423 = vld [vmem:[%s350 + $0x68] sm:$0x1]
      %v424 = vld [vmem:[%s350 + $0x74] sm:$0x1]
      %v425 = vld [vmem:[%s350 + $0x80] sm:$0x1]
      %v426 = vld [vmem:[%s350 + $0x8c] sm:$0x1]
      %v427 = vld [vmem:[%s350 + $0x98] sm:$0x1]
      %v428 = vld [vmem:[%s350 + $0xa4] sm:$0x1]
      %v429 = vld [vmem:[%s350 + $0xb0] sm:$0x1]
      %v430 = vld [vmem:[%s350 + $0xbc] sm:$0x1]
      %v431 = vld [vmem:[%s350 + $0xc8] sm:$0x1]
      %v432 = vld [vmem:[%s350 + $0xd4] sm:$0x1]
      %vm433 = vsmask.f32 3328
      %vm434 = vsmask.f32 7440
      %vm435 = vmor %vm433, %vm434
      %v437 = vshrl.u32 %v363, 16
      %v439 = vrot.slane %v437, 4
      %v440 = vshll.u32 %v363, 16
      %v442 = vrot.slane %v440, 5
      %v443 = vor.u32 %v439, %v442
      %v444 = vrot.slane %v443, 4
      %v446 = vshll.u32 %v364, 16
      %v448 = vrot.slane %v446, 5
      %v449 = vsel %vm435, %v444, %v448
      %v450 = vshrl.u32 %v364, 16
      %v452 = vrot.slane %v450, 4
      %v453 = vor.u32 %v452, %v448
      %v454 = vrot.slane %v453, 4
      %v456 = vshll.u32 %v415, 16
      %v458 = vrot.slane %v456, 5
      %v459 = vsel %vm435, %v454, %v458
      %v461 = vshrl.u32 %v365, 16
      %v463 = vrot.slane %v461, 4
      %v464 = vshll.u32 %v365, 16
      %v466 = vrot.slane %v464, 5
      %v467 = vor.u32 %v463, %v466
      %v468 = vrot.slane %v467, 4
      %v470 = vshll.u32 %v366, 16
      %v472 = vrot.slane %v470, 5
      %v473 = vsel %vm435, %v468, %v472
      %v474 = vshrl.u32 %v366, 16
      %v476 = vrot.slane %v474, 4
      %v477 = vor.u32 %v476, %v472
      %v478 = vrot.slane %v477, 4
      %v480 = vshll.u32 %v416, 16
      %v482 = vrot.slane %v480, 5
      %v483 = vsel %vm435, %v478, %v482
      %v485 = vshrl.u32 %v367, 16
      %v487 = vrot.slane %v485, 4
      %v488 = vshll.u32 %v367, 16
      %v490 = vrot.slane %v488, 5
      %v491 = vor.u32 %v487, %v490
      %v492 = vrot.slane %v491, 4
      %v494 = vshll.u32 %v368, 16
      %v496 = vrot.slane %v494, 5
      %v497 = vsel %vm435, %v492, %v496
      %v498 = vshrl.u32 %v368, 16
      %v500 = vrot.slane %v498, 4
      %v501 = vor.u32 %v500, %v496
      %v502 = vrot.slane %v501, 4
      %v504 = vshll.u32 %v417, 16
      %v506 = vrot.slane %v504, 5
      %v507 = vsel %vm435, %v502, %v506
      %v509 = vshrl.u32 %v369, 16
      %v511 = vrot.slane %v509, 4
      %v512 = vshll.u32 %v369, 16
      %v514 = vrot.slane %v512, 5
      %v515 = vor.u32 %v511, %v514
      %v516 = vrot.slane %v515, 4
      %v518 = vshll.u32 %v370, 16
      %v520 = vrot.slane %v518, 5
      %v521 = vsel %vm435, %v516, %v520
      %v522 = vshrl.u32 %v370, 16
      %v524 = vrot.slane %v522, 4
      %v525 = vor.u32 %v524, %v520
      %v526 = vrot.slane %v525, 4
      %v528 = vshll.u32 %v418, 16
      %v530 = vrot.slane %v528, 5
      %v531 = vsel %vm435, %v526, %v530
      %v533 = vshrl.u32 %v371, 16
      %v535 = vrot.slane %v533, 4
      %v536 = vshll.u32 %v371, 16
      %v538 = vrot.slane %v536, 5
      %v539 = vor.u32 %v535, %v538
      %v540 = vrot.slane %v539, 4
      %v542 = vshll.u32 %v372, 16
      %v544 = vrot.slane %v542, 5
      %v545 = vsel %vm435, %v540, %v544
      %v546 = vshrl.u32 %v372, 16
      %v548 = vrot.slane %v546, 4
      %v549 = vor.u32 %v548, %v544
      %v550 = vrot.slane %v549, 4
      %v552 = vshll.u32 %v419, 16
      %v554 = vrot.slane %v552, 5
      %v555 = vsel %vm435, %v550, %v554
      %v557 = vshrl.u32 %v373, 16
      %v559 = vrot.slane %v557, 4
      %v560 = vshll.u32 %v373, 16
      %v562 = vrot.slane %v560, 5
      %v563 = vor.u32 %v559, %v562
      %v564 = vrot.slane %v563, 4
      %v566 = vshll.u32 %v374, 16
      %v568 = vrot.slane %v566, 5
      %v569 = vsel %vm435, %v564, %v568
      %v570 = vshrl.u32 %v374, 16
      %v572 = vrot.slane %v570, 4
      %v573 = vor.u32 %v572, %v568
      %v574 = vrot.slane %v573, 4
      %v576 = vshll.u32 %v420, 16
      %v578 = vrot.slane %v576, 5
      %v579 = vsel %vm435, %v574, %v578
      %v581 = vshrl.u32 %v375, 16
      %v583 = vrot.slane %v581, 4
      %v584 = vshll.u32 %v375, 16
      %v586 = vrot.slane %v584, 5
      %v587 = vor.u32 %v583, %v586
      %v588 = vrot.slane %v587, 4
      %v590 = vshll.u32 %v376, 16
      %v592 = vrot.slane %v590, 5
      %v593 = vsel %vm435, %v588, %v592
      %v594 = vshrl.u32 %v376, 16
      %v596 = vrot.slane %v594, 4
      %v597 = vor.u32 %v596, %v592
      %v598 = vrot.slane %v597, 4
      %v600 = vshll.u32 %v421, 16
      %v602 = vrot.slane %v600, 5
      %v603 = vsel %vm435, %v598, %v602
      %v605 = vshrl.u32 %v377, 16
      %v607 = vrot.slane %v605, 4
      %v608 = vshll.u32 %v377, 16
      %v610 = vrot.slane %v608, 5
      %v611 = vor.u32 %v607, %v610
      %v612 = vrot.slane %v611, 4
      %v614 = vshll.u32 %v378, 16
      %v616 = vrot.slane %v614, 5
      %v617 = vsel %vm435, %v612, %v616
      %v618 = vshrl.u32 %v378, 16
      %v620 = vrot.slane %v618, 4
      %v621 = vor.u32 %v620, %v616
      %v622 = vrot.slane %v621, 4
      %v624 = vshll.u32 %v422, 16
      %v626 = vrot.slane %v624, 5
      %v627 = vsel %vm435, %v622, %v626
      %v629 = vshrl.u32 %v379, 16
      %v631 = vrot.slane %v629, 4
      %v632 = vshll.u32 %v379, 16
      %v634 = vrot.slane %v632, 5
      %v635 = vor.u32 %v631, %v634
      %v636 = vrot.slane %v635, 4
      %v638 = vshll.u32 %v380, 16
      %v640 = vrot.slane %v638, 5
      %v641 = vsel %vm435, %v636, %v640
      %v642 = vshrl.u32 %v380, 16
      %v644 = vrot.slane %v642, 4
      %v645 = vor.u32 %v644, %v640
      %v646 = vrot.slane %v645, 4
      %v648 = vshll.u32 %v423, 16
      %v650 = vrot.slane %v648, 5
      %v651 = vsel %vm435, %v646, %v650
      %v653 = vshrl.u32 %v381, 16
      %v655 = vrot.slane %v653, 4
      %v656 = vshll.u32 %v381, 16
      %v658 = vrot.slane %v656, 5
      %v659 = vor.u32 %v655, %v658
      %v660 = vrot.slane %v659, 4
      %v662 = vshll.u32 %v382, 16
      %v664 = vrot.slane %v662, 5
      %v665 = vsel %vm435, %v660, %v664
      %v666 = vshrl.u32 %v382, 16
      %v668 = vrot.slane %v666, 4
      %v669 = vor.u32 %v668, %v664
      %v670 = vrot.slane %v669, 4
      %v672 = vshll.u32 %v424, 16
      %v674 = vrot.slane %v672, 5
      %v675 = vsel %vm435, %v670, %v674
      %v677 = vshrl.u32 %v383, 16
      %v679 = vrot.slane %v677, 4
      %v680 = vshll.u32 %v383, 16
      %v682 = vrot.slane %v680, 5
      %v683 = vor.u32 %v679, %v682
      %v684 = vrot.slane %v683, 4
      %v686 = vshll.u32 %v384, 16
      %v688 = vrot.slane %v686, 5
      %v689 = vsel %vm435, %v684, %v688
      %v690 = vshrl.u32 %v384, 16
      %v692 = vrot.slane %v690, 4
      %v693 = vor.u32 %v692, %v688
      %v694 = vrot.slane %v693, 4
      %v696 = vshll.u32 %v425, 16
      %v698 = vrot.slane %v696, 5
      %v699 = vsel %vm435, %v694, %v698
      %v701 = vshrl.u32 %v385, 16
      %v703 = vrot.slane %v701, 4
      %v704 = vshll.u32 %v385, 16
      %v706 = vrot.slane %v704, 5
      %v707 = vor.u32 %v703, %v706
      %v708 = vrot.slane %v707, 4
      %v710 = vshll.u32 %v386, 16
      %v712 = vrot.slane %v710, 5
      %v713 = vsel %vm435, %v708, %v712
      %v714 = vshrl.u32 %v386, 16
      %v716 = vrot.slane %v714, 4
      %v717 = vor.u32 %v716, %v712
      %v718 = vrot.slane %v717, 4
      %v720 = vshll.u32 %v426, 16
      %v722 = vrot.slane %v720, 5
      %v723 = vsel %vm435, %v718, %v722
      %v725 = vshrl.u32 %v387, 16
      %v727 = vrot.slane %v725, 4
      %v728 = vshll.u32 %v387, 16
      %v730 = vrot.slane %v728, 5
      %v731 = vor.u32 %v727, %v730
      %v732 = vrot.slane %v731, 4
      %v734 = vshll.u32 %v388, 16
      %v736 = vrot.slane %v734, 5
      %v737 = vsel %vm435, %v732, %v736
      %v738 = vshrl.u32 %v388, 16
      %v740 = vrot.slane %v738, 4
      %v741 = vor.u32 %v740, %v736
      %v742 = vrot.slane %v741, 4
      %v744 = vshll.u32 %v427, 16
      %v746 = vrot.slane %v744, 5
      %v747 = vsel %vm435, %v742, %v746
      %v749 = vshrl.u32 %v389, 16
      %v751 = vrot.slane %v749, 4
      %v752 = vshll.u32 %v389, 16
      %v754 = vrot.slane %v752, 5
      %v755 = vor.u32 %v751, %v754
      %v756 = vrot.slane %v755, 4
      %v758 = vshll.u32 %v390, 16
      %v760 = vrot.slane %v758, 5
      %v761 = vsel %vm435, %v756, %v760
      %v762 = vshrl.u32 %v390, 16
      %v764 = vrot.slane %v762, 4
      %v765 = vor.u32 %v764, %v760
      %v766 = vrot.slane %v765, 4
      %v768 = vshll.u32 %v428, 16
      %v770 = vrot.slane %v768, 5
      %v771 = vsel %vm435, %v766, %v770
      %v773 = vshrl.u32 %v391, 16
      %v775 = vrot.slane %v773, 4
      %v776 = vshll.u32 %v391, 16
      %v778 = vrot.slane %v776, 5
      %v779 = vor.u32 %v775, %v778
      %v780 = vrot.slane %v779, 4
      %v782 = vshll.u32 %v392, 16
      %v784 = vrot.slane %v782, 5
      %v785 = vsel %vm435, %v780, %v784
      %v786 = vshrl.u32 %v392, 16
      %v788 = vrot.slane %v786, 4
      %v789 = vor.u32 %v788, %v784
      %v790 = vrot.slane %v789, 4
      %v792 = vshll.u32 %v429, 16
      %v794 = vrot.slane %v792, 5
      %v795 = vsel %vm435, %v790, %v794
      %v797 = vshrl.u32 %v393, 16
      %v799 = vrot.slane %v797, 4
      %v800 = vshll.u32 %v393, 16
      %v802 = vrot.slane %v800, 5
      %v803 = vor.u32 %v799, %v802
      %v804 = vrot.slane %v803, 4
      %v806 = vshll.u32 %v394, 16
      %v808 = vrot.slane %v806, 5
      %v809 = vsel %vm435, %v804, %v808
      %v810 = vshrl.u32 %v394, 16
      %v812 = vrot.slane %v810, 4
      %v813 = vor.u32 %v812, %v808
      %v814 = vrot.slane %v813, 4
      %v816 = vshll.u32 %v430, 16
      %v818 = vrot.slane %v816, 5
      %v819 = vsel %vm435, %v814, %v818
      %v821 = vshrl.u32 %v395, 16
      %v823 = vrot.slane %v821, 4
      %v824 = vshll.u32 %v395, 16
      %v826 = vrot.slane %v824, 5
      %v827 = vor.u32 %v823, %v826
      %v828 = vrot.slane %v827, 4
      %v830 = vshll.u32 %v396, 16
      %v832 = vrot.slane %v830, 5
      %v833 = vsel %vm435, %v828, %v832
      %v834 = vshrl.u32 %v396, 16
      %v836 = vrot.slane %v834, 4
      %v837 = vor.u32 %v836, %v832
      %v838 = vrot.slane %v837, 4
      %v840 = vshll.u32 %v431, 16
      %v842 = vrot.slane %v840, 5
      %v843 = vsel %vm435, %v838, %v842
      %v845 = vshrl.u32 %v397, 16
      %v847 = vrot.slane %v845, 4
      %v848 = vshll.u32 %v397, 16
      %v850 = vrot.slane %v848, 5
      %v851 = vor.u32 %v847, %v850
      %v852 = vrot.slane %v851, 4
      %v854 = vshll.u32 %v398, 16
      %v856 = vrot.slane %v854, 5
      %v857 = vsel %vm435, %v852, %v856
      %v858 = vshrl.u32 %v398, 16
      %v860 = vrot.slane %v858, 4
      %v861 = vor.u32 %v860, %v856
      %v862 = vrot.slane %v861, 4
      %v864 = vshll.u32 %v432, 16
      %v866 = vrot.slane %v864, 5
      %v867 = vsel %vm435, %v862, %v866
      %v868 = vld [vmem:[%s3 + $0x40] sm:$0xf]
      %v869 = vld [vmem:[%s3 + $0x44] sm:$0xf]
      %v870 = vld [vmem:[%s3 + $0x48] sm:$0xf]
      %v871 = vld [vmem:[%s3 + $0x4c] sm:$0xf]
      %v872 = vld [vmem:[%s3 + $0x50] sm:$0xf]
      %v873 = vld [vmem:[%s3 + $0x54] sm:$0xf]
      %v874 = vld [vmem:[%s3 + $0x58] sm:$0xf]
      %v875 = vld [vmem:[%s3 + $0x5c] sm:$0xf]
      %v876 = vld [vmem:[%s3 + $0x60] sm:$0xf]
      %v877 = vld [vmem:[%s3 + $0x64] sm:$0xf]
      %v878 = vld [vmem:[%s3 + $0x68] sm:$0xf]
      %v879 = vld [vmem:[%s3 + $0x6c] sm:$0xf]
      %v880 = vld [vmem:[%s3 + $0x70] sm:$0xf]
      %v881 = vld [vmem:[%s3 + $0x74] sm:$0xf]
      %v882 = vld [vmem:[%s3 + $0x78] sm:$0xf]
      %v883 = vld [vmem:[%s3 + $0x7c] sm:$0xf]
      %v884 = vunpack.c.l.b16 %v449
      %v885 = vunpack.c.l.b16 %v459
      %v886 = vunpack.c.l.b16 %v473
      %v887 = vunpack.c.l.b16 %v483
      %v888 = vunpack.c.l.b16 %v497
      %v889 = vunpack.c.l.b16 %v507
      %v890 = vunpack.c.l.b16 %v521
      %v891 = vunpack.c.l.b16 %v531
      %v892 = vunpack.c.l.b16 %v545
      %v893 = vunpack.c.l.b16 %v555
      %v894 = vunpack.c.l.b16 %v569
      %v895 = vunpack.c.l.b16 %v579
      %v896 = vunpack.c.l.b16 %v593
      %v897 = vunpack.c.l.b16 %v603
      %v898 = vunpack.c.l.b16 %v617
      %v899 = vunpack.c.l.b16 %v627
      %v900 = vunpack.c.l.b16 %v641
      %v901 = vunpack.c.l.b16 %v651
      %v902 = vunpack.c.l.b16 %v665
      %v903 = vunpack.c.l.b16 %v675
      %v904 = vunpack.c.l.b16 %v689
      %v905 = vunpack.c.l.b16 %v699
      %v906 = vunpack.c.l.b16 %v713
      %v907 = vunpack.c.l.b16 %v723
      %v908 = vunpack.c.l.b16 %v737
      %v909 = vunpack.c.l.b16 %v747
      %v910 = vunpack.c.l.b16 %v761
      %v911 = vunpack.c.l.b16 %v771
      %v912 = vunpack.c.l.b16 %v785
      %v913 = vunpack.c.l.b16 %v795
      %v914 = vunpack.c.l.b16 %v809
      %v915 = vunpack.c.l.b16 %v819
      %v916 = vunpack.c.l.b16 %v833
      %v917 = vunpack.c.l.b16 %v843
      %v918 = vunpack.c.l.b16 %v857
      %v919 = vunpack.c.l.b16 %v867
      %v920 = vpack.c.b16 %v885, %v884
      %v921 = vpack.c.b16 %v887, %v886
      %v922 = vpack.c.b16 %v889, %v888
      %v923 = vpack.c.b16 %v891, %v890
      %v924 = vpack.c.b16 %v893, %v892
      %v925 = vpack.c.b16 %v895, %v894
      %v926 = vpack.c.b16 %v897, %v896
      %v927 = vpack.c.b16 %v899, %v898
      %v928 = vpack.c.b16 %v901, %v900
      %v929 = vpack.c.b16 %v903, %v902
      %v930 = vpack.c.b16 %v905, %v904
      %v931 = vpack.c.b16 %v907, %v906
      %v932 = vpack.c.b16 %v909, %v908
      %v933 = vpack.c.b16 %v911, %v910
      %v934 = vpack.c.b16 %v913, %v912
      %v935 = vpack.c.b16 %v915, %v914
      %v936 = vpack.c.b16 %v917, %v916
      %v937 = vpack.c.b16 %v919, %v918
      %v972 = vunpack.c.l.b16 %v868
      %v973 = vunpack.c.l.b16 %v869
      %v974 = vunpack.c.l.b16 %v870
      %v975 = vunpack.c.l.b16 %v871
      %v976 = vunpack.c.l.b16 %v872
      %v977 = vunpack.c.l.b16 %v873
      %v978 = vunpack.c.l.b16 %v874
      %v979 = vunpack.c.l.b16 %v875
      %v980 = vunpack.c.l.b16 %v876
      %v981 = vunpack.c.l.b16 %v877
      %v982 = vunpack.c.l.b16 %v878
      %v983 = vunpack.c.l.b16 %v879
      %v984 = vunpack.c.l.b16 %v880
      %v985 = vunpack.c.l.b16 %v881
      %v986 = vunpack.c.l.b16 %v882
      %v987 = vunpack.c.l.b16 %v883
      %v988 = vpack.c.b16 %v973, %v972
      %v989 = vpack.c.b16 %v975, %v974
      %v990 = vpack.c.b16 %v977, %v976
      %v991 = vpack.c.b16 %v979, %v978
      %v992 = vpack.c.b16 %v981, %v980
      %v993 = vpack.c.b16 %v983, %v982
      %v994 = vpack.c.b16 %v985, %v984
      %v995 = vpack.c.b16 %v987, %v986
      %1004 = vmatpush.bf16.msra.mxu0 %v995
      %1005 = vmatpush.bf16.msra.mxu0 %v994
      %1006 = vmatpush.bf16.msra.mxu0 %v993
      %1007 = vmatpush.bf16.msra.mxu0 %v992
      %1008 = vmatpush.bf16.msra.mxu0 %v991
      %1009 = vmatpush.bf16.msra.mxu0 %v990
      %1010 = vmatpush.bf16.msra.mxu0 %v989
      %1011 = vmatpush.bf16.msra.mxu0 %v988
      %1012 = vmatmul.bf16.gmra.mxu0 %v920
      %v1013 = vpop.f32.mrf.mxu0
      %v1014 = vadd.f32 0.0, %v1013
      %v1015 = vpop.f32.mrf.mxu0
      %v1016 = vadd.f32 0.0, %v1015
      %1017 = vmatmul.bf16.gmra.mxu0 %v921
      %v1018 = vpop.f32.mrf.mxu0
      %v1019 = vadd.f32 0.0, %v1018
      %v1020 = vpop.f32.mrf.mxu0
      %v1021 = vadd.f32 0.0, %v1020
      %1022 = vmatmul.bf16.gmra.mxu0 %v922
      %v1023 = vpop.f32.mrf.mxu0
      %v1024 = vadd.f32 0.0, %v1023
      %v1025 = vpop.f32.mrf.mxu0
      %v1026 = vadd.f32 0.0, %v1025
      %1027 = vmatmul.bf16.gmra.mxu0 %v923
      %v1028 = vpop.f32.mrf.mxu0
      %v1029 = vadd.f32 0.0, %v1028
      %v1030 = vpop.f32.mrf.mxu0
      %v1031 = vadd.f32 0.0, %v1030
      %1032 = vmatmul.bf16.gmra.mxu0 %v924
      %v1033 = vpop.f32.mrf.mxu0
      %v1034 = vadd.f32 0.0, %v1033
      %v1035 = vpop.f32.mrf.mxu0
      %v1036 = vadd.f32 0.0, %v1035
      %1037 = vmatmul.bf16.gmra.mxu0 %v925
      %v1038 = vpop.f32.mrf.mxu0
      %v1039 = vadd.f32 0.0, %v1038
      %v1040 = vpop.f32.mrf.mxu0
      %v1041 = vadd.f32 0.0, %v1040
      %1042 = vmatmul.bf16.gmra.mxu0 %v926
      %v1043 = vpop.f32.mrf.mxu0
      %v1044 = vadd.f32 0.0, %v1043
      %v1045 = vpop.f32.mrf.mxu0
      %v1046 = vadd.f32 0.0, %v1045
      %1047 = vmatmul.bf16.gmra.mxu0 %v927
      %v1048 = vpop.f32.mrf.mxu0
      %v1049 = vadd.f32 0.0, %v1048
      %v1050 = vpop.f32.mrf.mxu0
      %v1051 = vadd.f32 0.0, %v1050
      %1052 = vmatmul.bf16.gmra.mxu0 %v928
      %v1053 = vpop.f32.mrf.mxu0
      %v1054 = vadd.f32 0.0, %v1053
      %v1055 = vpop.f32.mrf.mxu0
      %v1056 = vadd.f32 0.0, %v1055
      %1057 = vmatmul.bf16.gmra.mxu0 %v929
      %v1058 = vpop.f32.mrf.mxu0
      %v1059 = vadd.f32 0.0, %v1058
      %v1060 = vpop.f32.mrf.mxu0
      %v1061 = vadd.f32 0.0, %v1060
      %1062 = vmatmul.bf16.gmra.mxu0 %v930
      %v1063 = vpop.f32.mrf.mxu0
      %v1064 = vadd.f32 0.0, %v1063
      %v1065 = vpop.f32.mrf.mxu0
      %v1066 = vadd.f32 0.0, %v1065
      %1067 = vmatmul.bf16.gmra.mxu0 %v931
      %v1068 = vpop.f32.mrf.mxu0
      %v1069 = vadd.f32 0.0, %v1068
      %v1070 = vpop.f32.mrf.mxu0
      %v1071 = vadd.f32 0.0, %v1070
      %1072 = vmatmul.bf16.gmra.mxu0 %v932
      %v1073 = vpop.f32.mrf.mxu0
      %v1074 = vadd.f32 0.0, %v1073
      %v1075 = vpop.f32.mrf.mxu0
      %v1076 = vadd.f32 0.0, %v1075
      %1077 = vmatmul.bf16.gmra.mxu0 %v933
      %v1078 = vpop.f32.mrf.mxu0
      %v1079 = vadd.f32 0.0, %v1078
      %v1080 = vpop.f32.mrf.mxu0
      %v1081 = vadd.f32 0.0, %v1080
      %1082 = vmatmul.bf16.gmra.mxu0 %v934
      %v1083 = vpop.f32.mrf.mxu0
      %v1084 = vadd.f32 0.0, %v1083
      %v1085 = vpop.f32.mrf.mxu0
      %v1086 = vadd.f32 0.0, %v1085
      %1087 = vmatmul.bf16.gmra.mxu0 %v935
      %v1088 = vpop.f32.mrf.mxu0
      %v1089 = vadd.f32 0.0, %v1088
      %v1090 = vpop.f32.mrf.mxu0
      %v1091 = vadd.f32 0.0, %v1090
      %1092 = vmatmul.bf16.gmra.mxu0 %v936
      %v1093 = vpop.f32.mrf.mxu0
      %v1094 = vadd.f32 0.0, %v1093
      %v1095 = vpop.f32.mrf.mxu0
      %v1096 = vadd.f32 0.0, %v1095
      %1097 = vmatmul.bf16.gmra.mxu0 %v937
      %v1098 = vpop.f32.mrf.mxu0
      %v1099 = vadd.f32 0.0, %v1098
      %v1100 = vpop.f32.mrf.mxu0
      %v1101 = vadd.f32 0.0, %v1100
      %1102 = vdwg.mxu0
      %v1139 = vunpack.c.l.b16 %v363
      %v1140 = vunpack.c.l.b16 %v364
      %v1141 = vunpack.c.l.b16 %v365
      %v1142 = vunpack.c.l.b16 %v366
      %v1143 = vunpack.c.l.b16 %v367
      %v1144 = vunpack.c.l.b16 %v368
      %v1145 = vunpack.c.l.b16 %v369
      %v1146 = vunpack.c.l.b16 %v370
      %v1147 = vunpack.c.l.b16 %v371
      %v1148 = vunpack.c.l.b16 %v372
      %v1149 = vunpack.c.l.b16 %v373
      %v1150 = vunpack.c.l.b16 %v374
      %v1151 = vunpack.c.l.b16 %v375
      %v1152 = vunpack.c.l.b16 %v376
      %v1153 = vunpack.c.l.b16 %v377
      %v1154 = vunpack.c.l.b16 %v378
      %v1155 = vunpack.c.l.b16 %v379
      %v1156 = vunpack.c.l.b16 %v380
      %v1157 = vunpack.c.l.b16 %v381
      %v1158 = vunpack.c.l.b16 %v382
      %v1159 = vunpack.c.l.b16 %v383
      %v1160 = vunpack.c.l.b16 %v384
      %v1161 = vunpack.c.l.b16 %v385
      %v1162 = vunpack.c.l.b16 %v386
      %v1163 = vunpack.c.l.b16 %v387
      %v1164 = vunpack.c.l.b16 %v388
      %v1165 = vunpack.c.l.b16 %v389
      %v1166 = vunpack.c.l.b16 %v390
      %v1167 = vunpack.c.l.b16 %v391
      %v1168 = vunpack.c.l.b16 %v392
      %v1169 = vunpack.c.l.b16 %v393
      %v1170 = vunpack.c.l.b16 %v394
      %v1171 = vunpack.c.l.b16 %v395
      %v1172 = vunpack.c.l.b16 %v396
      %v1173 = vunpack.c.l.b16 %v397
      %v1174 = vunpack.c.l.b16 %v398
      %v1175 = vpack.c.b16 %v1140, %v1139
      %v1176 = vpack.c.b16 %v1142, %v1141
      %v1177 = vpack.c.b16 %v1144, %v1143
      %v1178 = vpack.c.b16 %v1146, %v1145
      %v1179 = vpack.c.b16 %v1148, %v1147
      %v1180 = vpack.c.b16 %v1150, %v1149
      %v1181 = vpack.c.b16 %v1152, %v1151
      %v1182 = vpack.c.b16 %v1154, %v1153
      %v1183 = vpack.c.b16 %v1156, %v1155
      %v1184 = vpack.c.b16 %v1158, %v1157
      %v1185 = vpack.c.b16 %v1160, %v1159
      %v1186 = vpack.c.b16 %v1162, %v1161
      %v1187 = vpack.c.b16 %v1164, %v1163
      %v1188 = vpack.c.b16 %v1166, %v1165
      %v1189 = vpack.c.b16 %v1168, %v1167
      %v1190 = vpack.c.b16 %v1170, %v1169
      %v1191 = vpack.c.b16 %v1172, %v1171
      %v1192 = vpack.c.b16 %v1174, %v1173
      %v1227 = vunpack.c.l.b16 %v399
      %v1228 = vunpack.c.l.b16 %v400
      %v1229 = vunpack.c.l.b16 %v401
      %v1230 = vunpack.c.l.b16 %v402
      %v1231 = vunpack.c.l.b16 %v403
      %v1232 = vunpack.c.l.b16 %v404
      %v1233 = vunpack.c.l.b16 %v405
      %v1234 = vunpack.c.l.b16 %v406
      %v1235 = vunpack.c.l.b16 %v407
      %v1236 = vunpack.c.l.b16 %v408
      %v1237 = vunpack.c.l.b16 %v409
      %v1238 = vunpack.c.l.b16 %v410
      %v1239 = vunpack.c.l.b16 %v411
      %v1240 = vunpack.c.l.b16 %v412
      %v1241 = vunpack.c.l.b16 %v413
      %v1242 = vunpack.c.l.b16 %v414
      %v1243 = vpack.c.b16 %v1228, %v1227
      %v1244 = vpack.c.b16 %v1230, %v1229
      %v1245 = vpack.c.b16 %v1232, %v1231
      %v1246 = vpack.c.b16 %v1234, %v1233
      %v1247 = vpack.c.b16 %v1236, %v1235
      %v1248 = vpack.c.b16 %v1238, %v1237
      %v1249 = vpack.c.b16 %v1240, %v1239
      %v1250 = vpack.c.b16 %v1242, %v1241
      %1259 = vmatpush.bf16.msra.mxu0 %v1250
      %1260 = vmatpush.bf16.msra.mxu0 %v1249
      %1261 = vmatpush.bf16.msra.mxu0 %v1248
      %1262 = vmatpush.bf16.msra.mxu0 %v1247
      %1263 = vmatpush.bf16.msra.mxu0 %v1246
      %1264 = vmatpush.bf16.msra.mxu0 %v1245
      %1265 = vmatpush.bf16.msra.mxu0 %v1244
      %1266 = vmatpush.bf16.msra.mxu0 %v1243
      %1267 = vmatmul.bf16.gmra.mxu0 %v1175
      %v1268 = vpop.f32.mrf.mxu0
      %v1269 = vadd.f32 %v1014, %v1268
      %v1270 = vpop.f32.mrf.mxu0
      %v1271 = vadd.f32 %v1016, %v1270
      %1272 = vmatmul.bf16.gmra.mxu0 %v1176
      %v1273 = vpop.f32.mrf.mxu0
      %v1274 = vadd.f32 %v1019, %v1273
      %v1275 = vpop.f32.mrf.mxu0
      %v1276 = vadd.f32 %v1021, %v1275
      %1277 = vmatmul.bf16.gmra.mxu0 %v1177
      %v1278 = vpop.f32.mrf.mxu0
      %v1279 = vadd.f32 %v1024, %v1278
      %v1280 = vpop.f32.mrf.mxu0
      %v1281 = vadd.f32 %v1026, %v1280
      %1282 = vmatmul.bf16.gmra.mxu0 %v1178
      %v1283 = vpop.f32.mrf.mxu0
      %v1284 = vadd.f32 %v1029, %v1283
      %v1285 = vpop.f32.mrf.mxu0
      %v1286 = vadd.f32 %v1031, %v1285
      %1287 = vmatmul.bf16.gmra.mxu0 %v1179
      %v1288 = vpop.f32.mrf.mxu0
      %v1289 = vadd.f32 %v1034, %v1288
      %v1290 = vpop.f32.mrf.mxu0
      %v1291 = vadd.f32 %v1036, %v1290
      %1292 = vmatmul.bf16.gmra.mxu0 %v1180
      %v1293 = vpop.f32.mrf.mxu0
      %v1294 = vadd.f32 %v1039, %v1293
      %v1295 = vpop.f32.mrf.mxu0
      %v1296 = vadd.f32 %v1041, %v1295
      %1297 = vmatmul.bf16.gmra.mxu0 %v1181
      %v1298 = vpop.f32.mrf.mxu0
      %v1299 = vadd.f32 %v1044, %v1298
      %v1300 = vpop.f32.mrf.mxu0
      %v1301 = vadd.f32 %v1046, %v1300
      %1302 = vmatmul.bf16.gmra.mxu0 %v1182
      %v1303 = vpop.f32.mrf.mxu0
      %v1304 = vadd.f32 %v1049, %v1303
      %v1305 = vpop.f32.mrf.mxu0
      %v1306 = vadd.f32 %v1051, %v1305
      %1307 = vmatmul.bf16.gmra.mxu0 %v1183
      %v1308 = vpop.f32.mrf.mxu0
      %v1309 = vadd.f32 %v1054, %v1308
      %v1310 = vpop.f32.mrf.mxu0
      %v1311 = vadd.f32 %v1056, %v1310
      %1312 = vmatmul.bf16.gmra.mxu0 %v1184
      %v1313 = vpop.f32.mrf.mxu0
      %v1314 = vadd.f32 %v1059, %v1313
      %v1315 = vpop.f32.mrf.mxu0
      %v1316 = vadd.f32 %v1061, %v1315
      %1317 = vmatmul.bf16.gmra.mxu0 %v1185
      %v1318 = vpop.f32.mrf.mxu0
      %v1319 = vadd.f32 %v1064, %v1318
      %v1320 = vpop.f32.mrf.mxu0
      %v1321 = vadd.f32 %v1066, %v1320
      %1322 = vmatmul.bf16.gmra.mxu0 %v1186
      %v1323 = vpop.f32.mrf.mxu0
      %v1324 = vadd.f32 %v1069, %v1323
      %v1325 = vpop.f32.mrf.mxu0
      %v1326 = vadd.f32 %v1071, %v1325
      %1327 = vmatmul.bf16.gmra.mxu0 %v1187
      %v1328 = vpop.f32.mrf.mxu0
      %v1329 = vadd.f32 %v1074, %v1328
      %v1330 = vpop.f32.mrf.mxu0
      %v1331 = vadd.f32 %v1076, %v1330
      %1332 = vmatmul.bf16.gmra.mxu0 %v1188
      %v1333 = vpop.f32.mrf.mxu0
      %v1334 = vadd.f32 %v1079, %v1333
      %v1335 = vpop.f32.mrf.mxu0
      %v1336 = vadd.f32 %v1081, %v1335
      %1337 = vmatmul.bf16.gmra.mxu0 %v1189
      %v1338 = vpop.f32.mrf.mxu0
      %v1339 = vadd.f32 %v1084, %v1338
      %v1340 = vpop.f32.mrf.mxu0
      %v1341 = vadd.f32 %v1086, %v1340
      %1342 = vmatmul.bf16.gmra.mxu0 %v1190
      %v1343 = vpop.f32.mrf.mxu0
      %v1344 = vadd.f32 %v1089, %v1343
      %v1345 = vpop.f32.mrf.mxu0
      %v1346 = vadd.f32 %v1091, %v1345
      %1347 = vmatmul.bf16.gmra.mxu0 %v1191
      %v1348 = vpop.f32.mrf.mxu0
      %v1349 = vadd.f32 %v1094, %v1348
      %v1350 = vpop.f32.mrf.mxu0
      %v1351 = vadd.f32 %v1096, %v1350
      %1352 = vmatmul.bf16.gmra.mxu0 %v1192
      %v1353 = vpop.f32.mrf.mxu0
      %v1354 = vadd.f32 %v1099, %v1353
      %v1355 = vpop.f32.mrf.mxu0
      %v1356 = vadd.f32 %v1101, %v1355
      %1357 = vdwg.mxu0
      %v1358 = vld [vmem:[%s350] sm:$0xe]
      %v1359 = vld [vmem:[%s350 + $0xc] sm:$0xe]
      %v1360 = vld [vmem:[%s350 + $0x18] sm:$0xe]
      %v1361 = vld [vmem:[%s350 + $0x24] sm:$0xe]
      %v1362 = vld [vmem:[%s350 + $0x30] sm:$0xe]
      %v1363 = vld [vmem:[%s350 + $0x3c] sm:$0xe]
      %v1364 = vld [vmem:[%s350 + $0x48] sm:$0xe]
      %v1365 = vld [vmem:[%s350 + $0x54] sm:$0xe]
      %v1366 = vld [vmem:[%s350 + $0x60] sm:$0xe]
      %v1367 = vld [vmem:[%s350 + $0x6c] sm:$0xe]
      %v1368 = vld [vmem:[%s350 + $0x78] sm:$0xe]
      %v1369 = vld [vmem:[%s350 + $0x84] sm:$0xe]
      %v1370 = vld [vmem:[%s350 + $0x90] sm:$0xe]
      %v1371 = vld [vmem:[%s350 + $0x9c] sm:$0xe]
      %v1372 = vld [vmem:[%s350 + $0xa8] sm:$0xe]
      %v1373 = vld [vmem:[%s350 + $0xb4] sm:$0xe]
      %v1374 = vld [vmem:[%s350 + $0xc0] sm:$0xe]
      %v1375 = vld [vmem:[%s350 + $0xcc] sm:$0xe]
      %vm1412 = vcmask 1042432
      %vm1413 = vcmask 1046532
      %vm1414 = vmor %vm1412, %vm1413
      %v1415 = vrot.slane %v1358, 5
      %v1416 = vrot.slane %v1415, 4
      %v1417 = vrot.slane %v364, 5
      %v1418 = vsel %vm1414, %v1416, %v1417
      %v1419 = vrot.slane %v1417, 4
      %v1420 = vrot.slane %v415, 5
      %v1421 = vsel %vm1414, %v1419, %v1420
      %v1422 = vrot.slane %v1359, 5
      %v1423 = vrot.slane %v1422, 4
      %v1424 = vrot.slane %v366, 5
      %v1425 = vsel %vm1414, %v1423, %v1424
      %v1426 = vrot.slane %v1424, 4
      %v1427 = vrot.slane %v416, 5
      %v1428 = vsel %vm1414, %v1426, %v1427
      %v1429 = vrot.slane %v1360, 5
      %v1430 = vrot.slane %v1429, 4
      %v1431 = vrot.slane %v368, 5
      %v1432 = vsel %vm1414, %v1430, %v1431
      %v1433 = vrot.slane %v1431, 4
      %v1434 = vrot.slane %v417, 5
      %v1435 = vsel %vm1414, %v1433, %v1434
      %v1436 = vrot.slane %v1361, 5
      %v1437 = vrot.slane %v1436, 4
      %v1438 = vrot.slane %v370, 5
      %v1439 = vsel %vm1414, %v1437, %v1438
      %v1440 = vrot.slane %v1438, 4
      %v1441 = vrot.slane %v418, 5
      %v1442 = vsel %vm1414, %v1440, %v1441
      %v1443 = vrot.slane %v1362, 5
      %v1444 = vrot.slane %v1443, 4
      %v1445 = vrot.slane %v372, 5
      %v1446 = vsel %vm1414, %v1444, %v1445
      %v1447 = vrot.slane %v1445, 4
      %v1448 = vrot.slane %v419, 5
      %v1449 = vsel %vm1414, %v1447, %v1448
      %v1450 = vrot.slane %v1363, 5
      %v1451 = vrot.slane %v1450, 4
      %v1452 = vrot.slane %v374, 5
      %v1453 = vsel %vm1414, %v1451, %v1452
      %v1454 = vrot.slane %v1452, 4
      %v1455 = vrot.slane %v420, 5
      %v1456 = vsel %vm1414, %v1454, %v1455
      %v1457 = vrot.slane %v1364, 5
      %v1458 = vrot.slane %v1457, 4
      %v1459 = vrot.slane %v376, 5
      %v1460 = vsel %vm1414, %v1458, %v1459
      %v1461 = vrot.slane %v1459, 4
      %v1462 = vrot.slane %v421, 5
      %v1463 = vsel %vm1414, %v1461, %v1462
      %v1464 = vrot.slane %v1365, 5
      %v1465 = vrot.slane %v1464, 4
      %v1466 = vrot.slane %v378, 5
      %v1467 = vsel %vm1414, %v1465, %v1466
      %v1468 = vrot.slane %v1466, 4
      %v1469 = vrot.slane %v422, 5
      %v1470 = vsel %vm1414, %v1468, %v1469
      %v1471 = vrot.slane %v1366, 5
      %v1472 = vrot.slane %v1471, 4
      %v1473 = vrot.slane %v380, 5
      %v1474 = vsel %vm1414, %v1472, %v1473
      %v1475 = vrot.slane %v1473, 4
      %v1476 = vrot.slane %v423, 5
      %v1477 = vsel %vm1414, %v1475, %v1476
      %v1478 = vrot.slane %v1367, 5
      %v1479 = vrot.slane %v1478, 4
      %v1480 = vrot.slane %v382, 5
      %v1481 = vsel %vm1414, %v1479, %v1480
      %v1482 = vrot.slane %v1480, 4
      %v1483 = vrot.slane %v424, 5
      %v1484 = vsel %vm1414, %v1482, %v1483
      %v1485 = vrot.slane %v1368, 5
      %v1486 = vrot.slane %v1485, 4
      %v1487 = vrot.slane %v384, 5
      %v1488 = vsel %vm1414, %v1486, %v1487
      %v1489 = vrot.slane %v1487, 4
      %v1490 = vrot.slane %v425, 5
      %v1491 = vsel %vm1414, %v1489, %v1490
      %v1492 = vrot.slane %v1369, 5
      %v1493 = vrot.slane %v1492, 4
      %v1494 = vrot.slane %v386, 5
      %v1495 = vsel %vm1414, %v1493, %v1494
      %v1496 = vrot.slane %v1494, 4
      %v1497 = vrot.slane %v426, 5
      %v1498 = vsel %vm1414, %v1496, %v1497
      %v1499 = vrot.slane %v1370, 5
      %v1500 = vrot.slane %v1499, 4
      %v1501 = vrot.slane %v388, 5
      %v1502 = vsel %vm1414, %v1500, %v1501
      %v1503 = vrot.slane %v1501, 4
      %v1504 = vrot.slane %v427, 5
      %v1505 = vsel %vm1414, %v1503, %v1504
      %v1506 = vrot.slane %v1371, 5
      %v1507 = vrot.slane %v1506, 4
      %v1508 = vrot.slane %v390, 5
      %v1509 = vsel %vm1414, %v1507, %v1508
      %v1510 = vrot.slane %v1508, 4
      %v1511 = vrot.slane %v428, 5
      %v1512 = vsel %vm1414, %v1510, %v1511
      %v1513 = vrot.slane %v1372, 5
      %v1514 = vrot.slane %v1513, 4
      %v1515 = vrot.slane %v392, 5
      %v1516 = vsel %vm1414, %v1514, %v1515
      %v1517 = vrot.slane %v1515, 4
      %v1518 = vrot.slane %v429, 5
      %v1519 = vsel %vm1414, %v1517, %v1518
      %v1520 = vrot.slane %v1373, 5
      %v1521 = vrot.slane %v1520, 4
      %v1522 = vrot.slane %v394, 5
      %v1523 = vsel %vm1414, %v1521, %v1522
      %v1524 = vrot.slane %v1522, 4
      %v1525 = vrot.slane %v430, 5
      %v1526 = vsel %vm1414, %v1524, %v1525
      %v1527 = vrot.slane %v1374, 5
      %v1528 = vrot.slane %v1527, 4
      %v1529 = vrot.slane %v396, 5
      %v1530 = vsel %vm1414, %v1528, %v1529
      %v1531 = vrot.slane %v1529, 4
      %v1532 = vrot.slane %v431, 5
      %v1533 = vsel %vm1414, %v1531, %v1532
      %v1534 = vrot.slane %v1375, 5
      %v1535 = vrot.slane %v1534, 4
      %v1536 = vrot.slane %v398, 5
      %v1537 = vsel %vm1414, %v1535, %v1536
      %v1538 = vrot.slane %v1536, 4
      %v1539 = vrot.slane %v432, 5
      %v1540 = vsel %vm1414, %v1538, %v1539
      %v1541 = vld [vmem:[%s3 + $0x80] sm:$0xf]
      %v1542 = vld [vmem:[%s3 + $0x84] sm:$0xf]
      %v1543 = vld [vmem:[%s3 + $0x88] sm:$0xf]
      %v1544 = vld [vmem:[%s3 + $0x8c] sm:$0xf]
      %v1545 = vld [vmem:[%s3 + $0x90] sm:$0xf]
      %v1546 = vld [vmem:[%s3 + $0x94] sm:$0xf]
      %v1547 = vld [vmem:[%s3 + $0x98] sm:$0xf]
      %v1548 = vld [vmem:[%s3 + $0x9c] sm:$0xf]
      %v1549 = vld [vmem:[%s3 + $0xa0] sm:$0xf]
      %v1550 = vld [vmem:[%s3 + $0xa4] sm:$0xf]
      %v1551 = vld [vmem:[%s3 + $0xa8] sm:$0xf]
      %v1552 = vld [vmem:[%s3 + $0xac] sm:$0xf]
      %v1553 = vld [vmem:[%s3 + $0xb0] sm:$0xf]
      %v1554 = vld [vmem:[%s3 + $0xb4] sm:$0xf]
      %v1555 = vld [vmem:[%s3 + $0xb8] sm:$0xf]
      %v1556 = vld [vmem:[%s3 + $0xbc] sm:$0xf]
      %v1557 = vunpack.c.l.b16 %v1418
      %v1558 = vunpack.c.l.b16 %v1421
      %v1559 = vunpack.c.l.b16 %v1425
      %v1560 = vunpack.c.l.b16 %v1428
      %v1561 = vunpack.c.l.b16 %v1432
      %v1562 = vunpack.c.l.b16 %v1435
      %v1563 = vunpack.c.l.b16 %v1439
      %v1564 = vunpack.c.l.b16 %v1442
      %v1565 = vunpack.c.l.b16 %v1446
      %v1566 = vunpack.c.l.b16 %v1449
      %v1567 = vunpack.c.l.b16 %v1453
      %v1568 = vunpack.c.l.b16 %v1456
      %v1569 = vunpack.c.l.b16 %v1460
      %v1570 = vunpack.c.l.b16 %v1463
      %v1571 = vunpack.c.l.b16 %v1467
      %v1572 = vunpack.c.l.b16 %v1470
      %v1573 = vunpack.c.l.b16 %v1474
      %v1574 = vunpack.c.l.b16 %v1477
      %v1575 = vunpack.c.l.b16 %v1481
      %v1576 = vunpack.c.l.b16 %v1484
      %v1577 = vunpack.c.l.b16 %v1488
      %v1578 = vunpack.c.l.b16 %v1491
      %v1579 = vunpack.c.l.b16 %v1495
      %v1580 = vunpack.c.l.b16 %v1498
      %v1581 = vunpack.c.l.b16 %v1502
      %v1582 = vunpack.c.l.b16 %v1505
      %v1583 = vunpack.c.l.b16 %v1509
      %v1584 = vunpack.c.l.b16 %v1512
      %v1585 = vunpack.c.l.b16 %v1516
      %v1586 = vunpack.c.l.b16 %v1519
      %v1587 = vunpack.c.l.b16 %v1523
      %v1588 = vunpack.c.l.b16 %v1526
      %v1589 = vunpack.c.l.b16 %v1530
      %v1590 = vunpack.c.l.b16 %v1533
      %v1591 = vunpack.c.l.b16 %v1537
      %v1592 = vunpack.c.l.b16 %v1540
      %v1593 = vpack.c.b16 %v1558, %v1557
      %v1594 = vpack.c.b16 %v1560, %v1559
      %v1595 = vpack.c.b16 %v1562, %v1561
      %v1596 = vpack.c.b16 %v1564, %v1563
      %v1597 = vpack.c.b16 %v1566, %v1565
      %v1598 = vpack.c.b16 %v1568, %v1567
      %v1599 = vpack.c.b16 %v1570, %v1569
      %v1600 = vpack.c.b16 %v1572, %v1571
      %v1601 = vpack.c.b16 %v1574, %v1573
      %v1602 = vpack.c.b16 %v1576, %v1575
      %v1603 = vpack.c.b16 %v1578, %v1577
      %v1604 = vpack.c.b16 %v1580, %v1579
      %v1605 = vpack.c.b16 %v1582, %v1581
      %v1606 = vpack.c.b16 %v1584, %v1583
      %v1607 = vpack.c.b16 %v1586, %v1585
      %v1608 = vpack.c.b16 %v1588, %v1587
      %v1609 = vpack.c.b16 %v1590, %v1589
      %v1610 = vpack.c.b16 %v1592, %v1591
      %v1645 = vunpack.c.l.b16 %v1541
      %v1646 = vunpack.c.l.b16 %v1542
      %v1647 = vunpack.c.l.b16 %v1543
      %v1648 = vunpack.c.l.b16 %v1544
      %v1649 = vunpack.c.l.b16 %v1545
      %v1650 = vunpack.c.l.b16 %v1546
      %v1651 = vunpack.c.l.b16 %v1547
      %v1652 = vunpack.c.l.b16 %v1548
      %v1653 = vunpack.c.l.b16 %v1549
      %v1654 = vunpack.c.l.b16 %v1550
      %v1655 = vunpack.c.l.b16 %v1551
      %v1656 = vunpack.c.l.b16 %v1552
      %v1657 = vunpack.c.l.b16 %v1553
      %v1658 = vunpack.c.l.b16 %v1554
      %v1659 = vunpack.c.l.b16 %v1555
      %v1660 = vunpack.c.l.b16 %v1556
      %v1661 = vpack.c.b16 %v1646, %v1645
      %v1662 = vpack.c.b16 %v1648, %v1647
      %v1663 = vpack.c.b16 %v1650, %v1649
      %v1664 = vpack.c.b16 %v1652, %v1651
      %v1665 = vpack.c.b16 %v1654, %v1653
      %v1666 = vpack.c.b16 %v1656, %v1655
      %v1667 = vpack.c.b16 %v1658, %v1657
      %v1668 = vpack.c.b16 %v1660, %v1659
      %1677 = vmatpush.bf16.msra.mxu0 %v1668
      %1678 = vmatpush.bf16.msra.mxu0 %v1667
      %1679 = vmatpush.bf16.msra.mxu0 %v1666
      %1680 = vmatpush.bf16.msra.mxu0 %v1665
      %1681 = vmatpush.bf16.msra.mxu0 %v1664
      %1682 = vmatpush.bf16.msra.mxu0 %v1663
      %1683 = vmatpush.bf16.msra.mxu0 %v1662
      %1684 = vmatpush.bf16.msra.mxu0 %v1661
      %1685 = vmatmul.bf16.gmra.mxu0 %v1593
      %v1686 = vpop.f32.mrf.mxu0
      %v1687 = vadd.f32 0.0, %v1686
      %v1688 = vpop.f32.mrf.mxu0
      %v1689 = vadd.f32 0.0, %v1688
      %1690 = vmatmul.bf16.gmra.mxu0 %v1594
      %v1691 = vpop.f32.mrf.mxu0
      %v1692 = vadd.f32 0.0, %v1691
      %v1693 = vpop.f32.mrf.mxu0
      %v1694 = vadd.f32 0.0, %v1693
      %1695 = vmatmul.bf16.gmra.mxu0 %v1595
      %v1696 = vpop.f32.mrf.mxu0
      %v1697 = vadd.f32 0.0, %v1696
      %v1698 = vpop.f32.mrf.mxu0
      %v1699 = vadd.f32 0.0, %v1698
      %1700 = vmatmul.bf16.gmra.mxu0 %v1596
      %v1701 = vpop.f32.mrf.mxu0
      %v1702 = vadd.f32 0.0, %v1701
      %v1703 = vpop.f32.mrf.mxu0
      %v1704 = vadd.f32 0.0, %v1703
      %1705 = vmatmul.bf16.gmra.mxu0 %v1597
      %v1706 = vpop.f32.mrf.mxu0
      %v1707 = vadd.f32 0.0, %v1706
      %v1708 = vpop.f32.mrf.mxu0
      %v1709 = vadd.f32 0.0, %v1708
      %1710 = vmatmul.bf16.gmra.mxu0 %v1598
      %v1711 = vpop.f32.mrf.mxu0
      %v1712 = vadd.f32 0.0, %v1711
      %v1713 = vpop.f32.mrf.mxu0
      %v1714 = vadd.f32 0.0, %v1713
      %1715 = vmatmul.bf16.gmra.mxu0 %v1599
      %v1716 = vpop.f32.mrf.mxu0
      %v1717 = vadd.f32 0.0, %v1716
      %v1718 = vpop.f32.mrf.mxu0
      %v1719 = vadd.f32 0.0, %v1718
      %1720 = vmatmul.bf16.gmra.mxu0 %v1600
      %v1721 = vpop.f32.mrf.mxu0
      %v1722 = vadd.f32 0.0, %v1721
      %v1723 = vpop.f32.mrf.mxu0
      %v1724 = vadd.f32 0.0, %v1723
      %1725 = vmatmul.bf16.gmra.mxu0 %v1601
      %v1726 = vpop.f32.mrf.mxu0
      %v1727 = vadd.f32 0.0, %v1726
      %v1728 = vpop.f32.mrf.mxu0
      %v1729 = vadd.f32 0.0, %v1728
      %1730 = vmatmul.bf16.gmra.mxu0 %v1602
      %v1731 = vpop.f32.mrf.mxu0
      %v1732 = vadd.f32 0.0, %v1731
      %v1733 = vpop.f32.mrf.mxu0
      %v1734 = vadd.f32 0.0, %v1733
      %1735 = vmatmul.bf16.gmra.mxu0 %v1603
      %v1736 = vpop.f32.mrf.mxu0
      %v1737 = vadd.f32 0.0, %v1736
      %v1738 = vpop.f32.mrf.mxu0
      %v1739 = vadd.f32 0.0, %v1738
      %1740 = vmatmul.bf16.gmra.mxu0 %v1604
      %v1741 = vpop.f32.mrf.mxu0
      %v1742 = vadd.f32 0.0, %v1741
      %v1743 = vpop.f32.mrf.mxu0
      %v1744 = vadd.f32 0.0, %v1743
      %1745 = vmatmul.bf16.gmra.mxu0 %v1605
      %v1746 = vpop.f32.mrf.mxu0
      %v1747 = vadd.f32 0.0, %v1746
      %v1748 = vpop.f32.mrf.mxu0
      %v1749 = vadd.f32 0.0, %v1748
      %1750 = vmatmul.bf16.gmra.mxu0 %v1606
      %v1751 = vpop.f32.mrf.mxu0
      %v1752 = vadd.f32 0.0, %v1751
      %v1753 = vpop.f32.mrf.mxu0
      %v1754 = vadd.f32 0.0, %v1753
      %1755 = vmatmul.bf16.gmra.mxu0 %v1607
      %v1756 = vpop.f32.mrf.mxu0
      %v1757 = vadd.f32 0.0, %v1756
      %v1758 = vpop.f32.mrf.mxu0
      %v1759 = vadd.f32 0.0, %v1758
      %1760 = vmatmul.bf16.gmra.mxu0 %v1608
      %v1761 = vpop.f32.mrf.mxu0
      %v1762 = vadd.f32 0.0, %v1761
      %v1763 = vpop.f32.mrf.mxu0
      %v1764 = vadd.f32 0.0, %v1763
      %1765 = vmatmul.bf16.gmra.mxu0 %v1609
      %v1766 = vpop.f32.mrf.mxu0
      %v1767 = vadd.f32 0.0, %v1766
      %v1768 = vpop.f32.mrf.mxu0
      %v1769 = vadd.f32 0.0, %v1768
      %1770 = vmatmul.bf16.gmra.mxu0 %v1610
      %v1771 = vpop.f32.mrf.mxu0
      %v1772 = vadd.f32 0.0, %v1771
      %v1773 = vpop.f32.mrf.mxu0
      %v1774 = vadd.f32 0.0, %v1773
      %1775 = vdwg.mxu0
      %v1776 = vadd.f32 %v1269, %v1687
      %v1777 = vadd.f32 %v1271, %v1689
      %v1778 = vadd.f32 %v1274, %v1692
      %v1779 = vadd.f32 %v1276, %v1694
      %v1780 = vadd.f32 %v1279, %v1697
      %v1781 = vadd.f32 %v1281, %v1699
      %v1782 = vadd.f32 %v1284, %v1702
      %v1783 = vadd.f32 %v1286, %v1704
      %v1784 = vadd.f32 %v1289, %v1707
      %v1785 = vadd.f32 %v1291, %v1709
      %v1786 = vadd.f32 %v1294, %v1712
      %v1787 = vadd.f32 %v1296, %v1714
      %v1788 = vadd.f32 %v1299, %v1717
      %v1789 = vadd.f32 %v1301, %v1719
      %v1790 = vadd.f32 %v1304, %v1722
      %v1791 = vadd.f32 %v1306, %v1724
      %v1792 = vadd.f32 %v1309, %v1727
      %v1793 = vadd.f32 %v1311, %v1729
      %v1794 = vadd.f32 %v1314, %v1732
      %v1795 = vadd.f32 %v1316, %v1734
      %v1796 = vadd.f32 %v1319, %v1737
      %v1797 = vadd.f32 %v1321, %v1739
      %v1798 = vadd.f32 %v1324, %v1742
      %v1799 = vadd.f32 %v1326, %v1744
      %v1800 = vadd.f32 %v1329, %v1747
      %v1801 = vadd.f32 %v1331, %v1749
      %v1802 = vadd.f32 %v1334, %v1752
      %v1803 = vadd.f32 %v1336, %v1754
      %v1804 = vadd.f32 %v1339, %v1757
      %v1805 = vadd.f32 %v1341, %v1759
      %v1806 = vadd.f32 %v1344, %v1762
      %v1807 = vadd.f32 %v1346, %v1764
      %v1808 = vadd.f32 %v1349, %v1767
      %v1809 = vadd.f32 %v1351, %v1769
      %v1810 = vadd.f32 %v1354, %v1772
      %v1811 = vadd.f32 %v1356, %v1774
      %s1812 = scalar_lea.vmem %s350, 12
      %v1813 = vld [vmem:[%s1812] sm:$0xf]
      %v1814 = vld [vmem:[%s1812 + $0x4] sm:$0xf]
      %v1815 = vld [vmem:[%s1812 + $0xc] sm:$0xf]
      %v1816 = vld [vmem:[%s1812 + $0x10] sm:$0xf]
      %v1817 = vld [vmem:[%s1812 + $0x18] sm:$0xf]
      %v1818 = vld [vmem:[%s1812 + $0x1c] sm:$0xf]
      %v1819 = vld [vmem:[%s1812 + $0x24] sm:$0xf]
      %v1820 = vld [vmem:[%s1812 + $0x28] sm:$0xf]
      %v1821 = vld [vmem:[%s1812 + $0x30] sm:$0xf]
      %v1822 = vld [vmem:[%s1812 + $0x34] sm:$0xf]
      %v1823 = vld [vmem:[%s1812 + $0x3c] sm:$0xf]
      %v1824 = vld [vmem:[%s1812 + $0x40] sm:$0xf]
      %v1825 = vld [vmem:[%s1812 + $0x48] sm:$0xf]
      %v1826 = vld [vmem:[%s1812 + $0x4c] sm:$0xf]
      %v1827 = vld [vmem:[%s1812 + $0x54] sm:$0xf]
      %v1828 = vld [vmem:[%s1812 + $0x58] sm:$0xf]
      %v1829 = vld [vmem:[%s1812 + $0x60] sm:$0xf]
      %v1830 = vld [vmem:[%s1812 + $0x64] sm:$0xf]
      %v1831 = vld [vmem:[%s1812 + $0x6c] sm:$0xf]
      %v1832 = vld [vmem:[%s1812 + $0x70] sm:$0xf]
      %v1833 = vld [vmem:[%s1812 + $0x78] sm:$0xf]
      %v1834 = vld [vmem:[%s1812 + $0x7c] sm:$0xf]
      %v1835 = vld [vmem:[%s1812 + $0x84] sm:$0xf]
      %v1836 = vld [vmem:[%s1812 + $0x88] sm:$0xf]
      %v1837 = vld [vmem:[%s1812 + $0x90] sm:$0xf]
      %v1838 = vld [vmem:[%s1812 + $0x94] sm:$0xf]
      %v1839 = vld [vmem:[%s1812 + $0x9c] sm:$0xf]
      %v1840 = vld [vmem:[%s1812 + $0xa0] sm:$0xf]
      %v1841 = vld [vmem:[%s1812 + $0xa8] sm:$0xf]
      %v1842 = vld [vmem:[%s1812 + $0xac] sm:$0xf]
      %v1843 = vld [vmem:[%s1812 + $0xb4] sm:$0xf]
      %v1844 = vld [vmem:[%s1812 + $0xb8] sm:$0xf]
      %v1845 = vld [vmem:[%s1812 + $0xc0] sm:$0xf]
      %v1846 = vld [vmem:[%s1812 + $0xc4] sm:$0xf]
      %v1847 = vld [vmem:[%s1812 + $0xcc] sm:$0xf]
      %v1848 = vld [vmem:[%s1812 + $0xd0] sm:$0xf]
      %v1849 = vld [vmem:[%s3 + $0xc0] sm:$0xf]
      %v1850 = vld [vmem:[%s3 + $0xc4] sm:$0xf]
      %v1851 = vld [vmem:[%s3 + $0xc8] sm:$0xf]
      %v1852 = vld [vmem:[%s3 + $0xcc] sm:$0xf]
      %v1853 = vld [vmem:[%s3 + $0xd0] sm:$0xf]
      %v1854 = vld [vmem:[%s3 + $0xd4] sm:$0xf]
      %v1855 = vld [vmem:[%s3 + $0xd8] sm:$0xf]
      %v1856 = vld [vmem:[%s3 + $0xdc] sm:$0xf]
      %v1857 = vld [vmem:[%s3 + $0xe0] sm:$0xf]
      %v1858 = vld [vmem:[%s3 + $0xe4] sm:$0xf]
      %v1859 = vld [vmem:[%s3 + $0xe8] sm:$0xf]
      %v1860 = vld [vmem:[%s3 + $0xec] sm:$0xf]
      %v1861 = vld [vmem:[%s3 + $0xf0] sm:$0xf]
      %v1862 = vld [vmem:[%s3 + $0xf4] sm:$0xf]
      %v1863 = vld [vmem:[%s3 + $0xf8] sm:$0xf]
      %v1864 = vld [vmem:[%s3 + $0xfc] sm:$0xf]
      %v1901 = vunpack.c.l.b16 %v1813
      %v1902 = vunpack.c.l.b16 %v1814
      %v1903 = vunpack.c.l.b16 %v1815
      %v1904 = vunpack.c.l.b16 %v1816
      %v1905 = vunpack.c.l.b16 %v1817
      %v1906 = vunpack.c.l.b16 %v1818
      %v1907 = vunpack.c.l.b16 %v1819
      %v1908 = vunpack.c.l.b16 %v1820
      %v1909 = vunpack.c.l.b16 %v1821
      %v1910 = vunpack.c.l.b16 %v1822
      %v1911 = vunpack.c.l.b16 %v1823
      %v1912 = vunpack.c.l.b16 %v1824
      %v1913 = vunpack.c.l.b16 %v1825
      %v1914 = vunpack.c.l.b16 %v1826
      %v1915 = vunpack.c.l.b16 %v1827
      %v1916 = vunpack.c.l.b16 %v1828
      %v1917 = vunpack.c.l.b16 %v1829
      %v1918 = vunpack.c.l.b16 %v1830
      %v1919 = vunpack.c.l.b16 %v1831
      %v1920 = vunpack.c.l.b16 %v1832
      %v1921 = vunpack.c.l.b16 %v1833
      %v1922 = vunpack.c.l.b16 %v1834
      %v1923 = vunpack.c.l.b16 %v1835
      %v1924 = vunpack.c.l.b16 %v1836
      %v1925 = vunpack.c.l.b16 %v1837
      %v1926 = vunpack.c.l.b16 %v1838
      %v1927 = vunpack.c.l.b16 %v1839
      %v1928 = vunpack.c.l.b16 %v1840
      %v1929 = vunpack.c.l.b16 %v1841
      %v1930 = vunpack.c.l.b16 %v1842
      %v1931 = vunpack.c.l.b16 %v1843
      %v1932 = vunpack.c.l.b16 %v1844
      %v1933 = vunpack.c.l.b16 %v1845
      %v1934 = vunpack.c.l.b16 %v1846
      %v1935 = vunpack.c.l.b16 %v1847
      %v1936 = vunpack.c.l.b16 %v1848
      %v1937 = vpack.c.b16 %v1902, %v1901
      %v1938 = vpack.c.b16 %v1904, %v1903
      %v1939 = vpack.c.b16 %v1906, %v1905
      %v1940 = vpack.c.b16 %v1908, %v1907
      %v1941 = vpack.c.b16 %v1910, %v1909
      %v1942 = vpack.c.b16 %v1912, %v1911
      %v1943 = vpack.c.b16 %v1914, %v1913
      %v1944 = vpack.c.b16 %v1916, %v1915
      %v1945 = vpack.c.b16 %v1918, %v1917
      %v1946 = vpack.c.b16 %v1920, %v1919
      %v1947 = vpack.c.b16 %v1922, %v1921
      %v1948 = vpack.c.b16 %v1924, %v1923
      %v1949 = vpack.c.b16 %v1926, %v1925
      %v1950 = vpack.c.b16 %v1928, %v1927
      %v1951 = vpack.c.b16 %v1930, %v1929
      %v1952 = vpack.c.b16 %v1932, %v1931
      %v1953 = vpack.c.b16 %v1934, %v1933
      %v1954 = vpack.c.b16 %v1936, %v1935
      %v1989 = vunpack.c.l.b16 %v1849
      %v1990 = vunpack.c.l.b16 %v1850
      %v1991 = vunpack.c.l.b16 %v1851
      %v1992 = vunpack.c.l.b16 %v1852
      %v1993 = vunpack.c.l.b16 %v1853
      %v1994 = vunpack.c.l.b16 %v1854
      %v1995 = vunpack.c.l.b16 %v1855
      %v1996 = vunpack.c.l.b16 %v1856
      %v1997 = vunpack.c.l.b16 %v1857
      %v1998 = vunpack.c.l.b16 %v1858
      %v1999 = vunpack.c.l.b16 %v1859
      %v2000 = vunpack.c.l.b16 %v1860
      %v2001 = vunpack.c.l.b16 %v1861
      %v2002 = vunpack.c.l.b16 %v1862
      %v2003 = vunpack.c.l.b16 %v1863
      %v2004 = vunpack.c.l.b16 %v1864
      %v2005 = vpack.c.b16 %v1990, %v1989
      %v2006 = vpack.c.b16 %v1992, %v1991
      %v2007 = vpack.c.b16 %v1994, %v1993
      %v2008 = vpack.c.b16 %v1996, %v1995
      %v2009 = vpack.c.b16 %v1998, %v1997
      %v2010 = vpack.c.b16 %v2000, %v1999
      %v2011 = vpack.c.b16 %v2002, %v2001
      %v2012 = vpack.c.b16 %v2004, %v2003
      %2021 = vmatpush.bf16.msra.mxu0 %v2012
      %2022 = vmatpush.bf16.msra.mxu0 %v2011
      %2023 = vmatpush.bf16.msra.mxu0 %v2010
      %2024 = vmatpush.bf16.msra.mxu0 %v2009
      %2025 = vmatpush.bf16.msra.mxu0 %v2008
      %2026 = vmatpush.bf16.msra.mxu0 %v2007
      %2027 = vmatpush.bf16.msra.mxu0 %v2006
      %2028 = vmatpush.bf16.msra.mxu0 %v2005
      %2029 = vmatmul.bf16.gmra.mxu0 %v1937
      %v2030 = vpop.f32.mrf.mxu0
      %v2031 = vadd.f32 0.0, %v2030
      %v2032 = vpop.f32.mrf.mxu0
      %v2033 = vadd.f32 0.0, %v2032
      %2034 = vmatmul.bf16.gmra.mxu0 %v1938
      %v2035 = vpop.f32.mrf.mxu0
      %v2036 = vadd.f32 0.0, %v2035
      %v2037 = vpop.f32.mrf.mxu0
      %v2038 = vadd.f32 0.0, %v2037
      %2039 = vmatmul.bf16.gmra.mxu0 %v1939
      %v2040 = vpop.f32.mrf.mxu0
      %v2041 = vadd.f32 0.0, %v2040
      %v2042 = vpop.f32.mrf.mxu0
      %v2043 = vadd.f32 0.0, %v2042
      %2044 = vmatmul.bf16.gmra.mxu0 %v1940
      %v2045 = vpop.f32.mrf.mxu0
      %v2046 = vadd.f32 0.0, %v2045
      %v2047 = vpop.f32.mrf.mxu0
      %v2048 = vadd.f32 0.0, %v2047
      %2049 = vmatmul.bf16.gmra.mxu0 %v1941
      %v2050 = vpop.f32.mrf.mxu0
      %v2051 = vadd.f32 0.0, %v2050
      %v2052 = vpop.f32.mrf.mxu0
      %v2053 = vadd.f32 0.0, %v2052
      %2054 = vmatmul.bf16.gmra.mxu0 %v1942
      %v2055 = vpop.f32.mrf.mxu0
      %v2056 = vadd.f32 0.0, %v2055
      %v2057 = vpop.f32.mrf.mxu0
      %v2058 = vadd.f32 0.0, %v2057
      %2059 = vmatmul.bf16.gmra.mxu0 %v1943
      %v2060 = vpop.f32.mrf.mxu0
      %v2061 = vadd.f32 0.0, %v2060
      %v2062 = vpop.f32.mrf.mxu0
      %v2063 = vadd.f32 0.0, %v2062
      %2064 = vmatmul.bf16.gmra.mxu0 %v1944
      %v2065 = vpop.f32.mrf.mxu0
      %v2066 = vadd.f32 0.0, %v2065
      %v2067 = vpop.f32.mrf.mxu0
      %v2068 = vadd.f32 0.0, %v2067
      %2069 = vmatmul.bf16.gmra.mxu0 %v1945
      %v2070 = vpop.f32.mrf.mxu0
      %v2071 = vadd.f32 0.0, %v2070
      %v2072 = vpop.f32.mrf.mxu0
      %v2073 = vadd.f32 0.0, %v2072
      %2074 = vmatmul.bf16.gmra.mxu0 %v1946
      %v2075 = vpop.f32.mrf.mxu0
      %v2076 = vadd.f32 0.0, %v2075
      %v2077 = vpop.f32.mrf.mxu0
      %v2078 = vadd.f32 0.0, %v2077
      %2079 = vmatmul.bf16.gmra.mxu0 %v1947
      %v2080 = vpop.f32.mrf.mxu0
      %v2081 = vadd.f32 0.0, %v2080
      %v2082 = vpop.f32.mrf.mxu0
      %v2083 = vadd.f32 0.0, %v2082
      %2084 = vmatmul.bf16.gmra.mxu0 %v1948
      %v2085 = vpop.f32.mrf.mxu0
      %v2086 = vadd.f32 0.0, %v2085
      %v2087 = vpop.f32.mrf.mxu0
      %v2088 = vadd.f32 0.0, %v2087
      %2089 = vmatmul.bf16.gmra.mxu0 %v1949
      %v2090 = vpop.f32.mrf.mxu0
      %v2091 = vadd.f32 0.0, %v2090
      %v2092 = vpop.f32.mrf.mxu0
      %v2093 = vadd.f32 0.0, %v2092
      %2094 = vmatmul.bf16.gmra.mxu0 %v1950
      %v2095 = vpop.f32.mrf.mxu0
      %v2096 = vadd.f32 0.0, %v2095
      %v2097 = vpop.f32.mrf.mxu0
      %v2098 = vadd.f32 0.0, %v2097
      %2099 = vmatmul.bf16.gmra.mxu0 %v1951
      %v2100 = vpop.f32.mrf.mxu0
      %v2101 = vadd.f32 0.0, %v2100
      %v2102 = vpop.f32.mrf.mxu0
      %v2103 = vadd.f32 0.0, %v2102
      %2104 = vmatmul.bf16.gmra.mxu0 %v1952
      %v2105 = vpop.f32.mrf.mxu0
      %v2106 = vadd.f32 0.0, %v2105
      %v2107 = vpop.f32.mrf.mxu0
      %v2108 = vadd.f32 0.0, %v2107
      %2109 = vmatmul.bf16.gmra.mxu0 %v1953
      %v2110 = vpop.f32.mrf.mxu0
      %v2111 = vadd.f32 0.0, %v2110
      %v2112 = vpop.f32.mrf.mxu0
      %v2113 = vadd.f32 0.0, %v2112
      %2114 = vmatmul.bf16.gmra.mxu0 %v1954
      %v2115 = vpop.f32.mrf.mxu0
      %v2116 = vadd.f32 0.0, %v2115
      %v2117 = vpop.f32.mrf.mxu0
      %v2118 = vadd.f32 0.0, %v2117
      %2119 = vdwg.mxu0
      %v2120 = vadd.f32 %v1776, %v2031
      %v2121 = vadd.f32 %v1777, %v2033
      %v2122 = vadd.f32 %v1778, %v2036
      %v2123 = vadd.f32 %v1779, %v2038
      %v2124 = vadd.f32 %v1780, %v2041
      %v2125 = vadd.f32 %v1781, %v2043
      %v2126 = vadd.f32 %v1782, %v2046
      %v2127 = vadd.f32 %v1783, %v2048
      %v2128 = vadd.f32 %v1784, %v2051
      %v2129 = vadd.f32 %v1785, %v2053
      %v2130 = vadd.f32 %v1786, %v2056
      %v2131 = vadd.f32 %v1787, %v2058
      %v2132 = vadd.f32 %v1788, %v2061
      %v2133 = vadd.f32 %v1789, %v2063
      %v2134 = vadd.f32 %v1790, %v2066
      %v2135 = vadd.f32 %v1791, %v2068
      %v2136 = vadd.f32 %v1792, %v2071
      %v2137 = vadd.f32 %v1793, %v2073
      %v2138 = vadd.f32 %v1794, %v2076
      %v2139 = vadd.f32 %v1795, %v2078
      %v2140 = vadd.f32 %v1796, %v2081
      %v2141 = vadd.f32 %v1797, %v2083
      %v2142 = vadd.f32 %v1798, %v2086
      %v2143 = vadd.f32 %v1799, %v2088
      %v2144 = vadd.f32 %v1800, %v2091
      %v2145 = vadd.f32 %v1801, %v2093
      %v2146 = vadd.f32 %v1802, %v2096
      %v2147 = vadd.f32 %v1803, %v2098
      %v2148 = vadd.f32 %v1804, %v2101
      %v2149 = vadd.f32 %v1805, %v2103
      %v2150 = vadd.f32 %v1806, %v2106
      %v2151 = vadd.f32 %v1807, %v2108
      %v2152 = vadd.f32 %v1808, %v2111
      %v2153 = vadd.f32 %v1809, %v2113
      %v2154 = vadd.f32 %v1810, %v2116
      %v2155 = vadd.f32 %v1811, %v2118
      %v2156 = vld [vmem:[%s1812] sm:$0xf]
      %v2157 = vld [vmem:[%s1812 + $0x4] sm:$0xf]
      %v2158 = vld [vmem:[%s1812 + $0x8] sm:$0x1]
      %v2159 = vld [vmem:[%s1812 + $0xc] sm:$0xf]
      %v2160 = vld [vmem:[%s1812 + $0x10] sm:$0xf]
      %v2161 = vld [vmem:[%s1812 + $0x14] sm:$0x1]
      %v2162 = vld [vmem:[%s1812 + $0x18] sm:$0xf]
      %v2163 = vld [vmem:[%s1812 + $0x1c] sm:$0xf]
      %v2164 = vld [vmem:[%s1812 + $0x20] sm:$0x1]
      %v2165 = vld [vmem:[%s1812 + $0x24] sm:$0xf]
      %v2166 = vld [vmem:[%s1812 + $0x28] sm:$0xf]
      %v2167 = vld [vmem:[%s1812 + $0x2c] sm:$0x1]
      %v2168 = vld [vmem:[%s1812 + $0x30] sm:$0xf]
      %v2169 = vld [vmem:[%s1812 + $0x34] sm:$0xf]
      %v2170 = vld [vmem:[%s1812 + $0x38] sm:$0x1]
      %v2171 = vld [vmem:[%s1812 + $0x3c] sm:$0xf]
      %v2172 = vld [vmem:[%s1812 + $0x40] sm:$0xf]
      %v2173 = vld [vmem:[%s1812 + $0x44] sm:$0x1]
      %v2174 = vld [vmem:[%s1812 + $0x48] sm:$0xf]
      %v2175 = vld [vmem:[%s1812 + $0x4c] sm:$0xf]
      %v2176 = vld [vmem:[%s1812 + $0x50] sm:$0x1]
      %v2177 = vld [vmem:[%s1812 + $0x54] sm:$0xf]
      %v2178 = vld [vmem:[%s1812 + $0x58] sm:$0xf]
      %v2179 = vld [vmem:[%s1812 + $0x5c] sm:$0x1]
      %v2180 = vld [vmem:[%s1812 + $0x60] sm:$0xf]
      %v2181 = vld [vmem:[%s1812 + $0x64] sm:$0xf]
      %v2182 = vld [vmem:[%s1812 + $0x68] sm:$0x1]
      %v2183 = vld [vmem:[%s1812 + $0x6c] sm:$0xf]
      %v2184 = vld [vmem:[%s1812 + $0x70] sm:$0xf]
      %v2185 = vld [vmem:[%s1812 + $0x74] sm:$0x1]
      %v2186 = vld [vmem:[%s1812 + $0x78] sm:$0xf]
      %v2187 = vld [vmem:[%s1812 + $0x7c] sm:$0xf]
      %v2188 = vld [vmem:[%s1812 + $0x80] sm:$0x1]
      %v2189 = vld [vmem:[%s1812 + $0x84] sm:$0xf]
      %v2190 = vld [vmem:[%s1812 + $0x88] sm:$0xf]
      %v2191 = vld [vmem:[%s1812 + $0x8c] sm:$0x1]
      %v2192 = vld [vmem:[%s1812 + $0x90] sm:$0xf]
      %v2193 = vld [vmem:[%s1812 + $0x94] sm:$0xf]
      %v2194 = vld [vmem:[%s1812 + $0x98] sm:$0x1]
      %v2195 = vld [vmem:[%s1812 + $0x9c] sm:$0xf]
      %v2196 = vld [vmem:[%s1812 + $0xa0] sm:$0xf]
      %v2197 = vld [vmem:[%s1812 + $0xa4] sm:$0x1]
      %v2198 = vld [vmem:[%s1812 + $0xa8] sm:$0xf]
      %v2199 = vld [vmem:[%s1812 + $0xac] sm:$0xf]
      %v2200 = vld [vmem:[%s1812 + $0xb0] sm:$0x1]
      %v2201 = vld [vmem:[%s1812 + $0xb4] sm:$0xf]
      %v2202 = vld [vmem:[%s1812 + $0xb8] sm:$0xf]
      %v2203 = vld [vmem:[%s1812 + $0xbc] sm:$0x1]
      %v2204 = vld [vmem:[%s1812 + $0xc0] sm:$0xf]
      %v2205 = vld [vmem:[%s1812 + $0xc4] sm:$0xf]
      %v2206 = vld [vmem:[%s1812 + $0xc8] sm:$0x1]
      %v2207 = vld [vmem:[%s1812 + $0xcc] sm:$0xf]
      %v2208 = vld [vmem:[%s1812 + $0xd0] sm:$0xf]
      %v2209 = vld [vmem:[%s1812 + $0xd4] sm:$0x1]
      %v2211 = vshrl.u32 %v2156, 16
      %v2213 = vrot.slane %v2211, 4
      %v2214 = vshll.u32 %v2156, 16
      %v2216 = vrot.slane %v2214, 5
      %v2217 = vor.u32 %v2213, %v2216
      %v2218 = vrot.slane %v2217, 4
      %v2220 = vshll.u32 %v2157, 16
      %v2222 = vrot.slane %v2220, 5
      %v2223 = vsel %vm435, %v2218, %v2222
      %v2224 = vshrl.u32 %v2157, 16
      %v2226 = vrot.slane %v2224, 4
      %v2227 = vor.u32 %v2226, %v2222
      %v2228 = vrot.slane %v2227, 4
      %v2230 = vshll.u32 %v2158, 16
      %v2232 = vrot.slane %v2230, 5
      %v2233 = vsel %vm435, %v2228, %v2232
      %v2235 = vshrl.u32 %v2159, 16
      %v2237 = vrot.slane %v2235, 4
      %v2238 = vshll.u32 %v2159, 16
      %v2240 = vrot.slane %v2238, 5
      %v2241 = vor.u32 %v2237, %v2240
      %v2242 = vrot.slane %v2241, 4
      %v2244 = vshll.u32 %v2160, 16
      %v2246 = vrot.slane %v2244, 5
      %v2247 = vsel %vm435, %v2242, %v2246
      %v2248 = vshrl.u32 %v2160, 16
      %v2250 = vrot.slane %v2248, 4
      %v2251 = vor.u32 %v2250, %v2246
      %v2252 = vrot.slane %v2251, 4
      %v2254 = vshll.u32 %v2161, 16
      %v2256 = vrot.slane %v2254, 5
      %v2257 = vsel %vm435, %v2252, %v2256
      %v2259 = vshrl.u32 %v2162, 16
      %v2261 = vrot.slane %v2259, 4
      %v2262 = vshll.u32 %v2162, 16
      %v2264 = vrot.slane %v2262, 5
      %v2265 = vor.u32 %v2261, %v2264
      %v2266 = vrot.slane %v2265, 4
      %v2268 = vshll.u32 %v2163, 16
      %v2270 = vrot.slane %v2268, 5
      %v2271 = vsel %vm435, %v2266, %v2270
      %v2272 = vshrl.u32 %v2163, 16
      %v2274 = vrot.slane %v2272, 4
      %v2275 = vor.u32 %v2274, %v2270
      %v2276 = vrot.slane %v2275, 4
      %v2278 = vshll.u32 %v2164, 16
      %v2280 = vrot.slane %v2278, 5
      %v2281 = vsel %vm435, %v2276, %v2280
      %v2283 = vshrl.u32 %v2165, 16
      %v2285 = vrot.slane %v2283, 4
      %v2286 = vshll.u32 %v2165, 16
      %v2288 = vrot.slane %v2286, 5
      %v2289 = vor.u32 %v2285, %v2288
      %v2290 = vrot.slane %v2289, 4
      %v2292 = vshll.u32 %v2166, 16
      %v2294 = vrot.slane %v2292, 5
      %v2295 = vsel %vm435, %v2290, %v2294
      %v2296 = vshrl.u32 %v2166, 16
      %v2298 = vrot.slane %v2296, 4
      %v2299 = vor.u32 %v2298, %v2294
      %v2300 = vrot.slane %v2299, 4
      %v2302 = vshll.u32 %v2167, 16
      %v2304 = vrot.slane %v2302, 5
      %v2305 = vsel %vm435, %v2300, %v2304
      %v2307 = vshrl.u32 %v2168, 16
      %v2309 = vrot.slane %v2307, 4
      %v2310 = vshll.u32 %v2168, 16
      %v2312 = vrot.slane %v2310, 5
      %v2313 = vor.u32 %v2309, %v2312
      %v2314 = vrot.slane %v2313, 4
      %v2316 = vshll.u32 %v2169, 16
      %v2318 = vrot.slane %v2316, 5
      %v2319 = vsel %vm435, %v2314, %v2318
      %v2320 = vshrl.u32 %v2169, 16
      %v2322 = vrot.slane %v2320, 4
      %v2323 = vor.u32 %v2322, %v2318
      %v2324 = vrot.slane %v2323, 4
      %v2326 = vshll.u32 %v2170, 16
      %v2328 = vrot.slane %v2326, 5
      %v2329 = vsel %vm435, %v2324, %v2328
      %v2331 = vshrl.u32 %v2171, 16
      %v2333 = vrot.slane %v2331, 4
      %v2334 = vshll.u32 %v2171, 16
      %v2336 = vrot.slane %v2334, 5
      %v2337 = vor.u32 %v2333, %v2336
      %v2338 = vrot.slane %v2337, 4
      %v2340 = vshll.u32 %v2172, 16
      %v2342 = vrot.slane %v2340, 5
      %v2343 = vsel %vm435, %v2338, %v2342
      %v2344 = vshrl.u32 %v2172, 16
      %v2346 = vrot.slane %v2344, 4
      %v2347 = vor.u32 %v2346, %v2342
      %v2348 = vrot.slane %v2347, 4
      %v2350 = vshll.u32 %v2173, 16
      %v2352 = vrot.slane %v2350, 5
      %v2353 = vsel %vm435, %v2348, %v2352
      %v2355 = vshrl.u32 %v2174, 16
      %v2357 = vrot.slane %v2355, 4
      %v2358 = vshll.u32 %v2174, 16
      %v2360 = vrot.slane %v2358, 5
      %v2361 = vor.u32 %v2357, %v2360
      %v2362 = vrot.slane %v2361, 4
      %v2364 = vshll.u32 %v2175, 16
      %v2366 = vrot.slane %v2364, 5
      %v2367 = vsel %vm435, %v2362, %v2366
      %v2368 = vshrl.u32 %v2175, 16
      %v2370 = vrot.slane %v2368, 4
      %v2371 = vor.u32 %v2370, %v2366
      %v2372 = vrot.slane %v2371, 4
      %v2374 = vshll.u32 %v2176, 16
      %v2376 = vrot.slane %v2374, 5
      %v2377 = vsel %vm435, %v2372, %v2376
      %v2379 = vshrl.u32 %v2177, 16
      %v2381 = vrot.slane %v2379, 4
      %v2382 = vshll.u32 %v2177, 16
      %v2384 = vrot.slane %v2382, 5
      %v2385 = vor.u32 %v2381, %v2384
      %v2386 = vrot.slane %v2385, 4
      %v2388 = vshll.u32 %v2178, 16
      %v2390 = vrot.slane %v2388, 5
      %v2391 = vsel %vm435, %v2386, %v2390
      %v2392 = vshrl.u32 %v2178, 16
      %v2394 = vrot.slane %v2392, 4
      %v2395 = vor.u32 %v2394, %v2390
      %v2396 = vrot.slane %v2395, 4
      %v2398 = vshll.u32 %v2179, 16
      %v2400 = vrot.slane %v2398, 5
      %v2401 = vsel %vm435, %v2396, %v2400
      %v2403 = vshrl.u32 %v2180, 16
      %v2405 = vrot.slane %v2403, 4
      %v2406 = vshll.u32 %v2180, 16
      %v2408 = vrot.slane %v2406, 5
      %v2409 = vor.u32 %v2405, %v2408
      %v2410 = vrot.slane %v2409, 4
      %v2412 = vshll.u32 %v2181, 16
      %v2414 = vrot.slane %v2412, 5
      %v2415 = vsel %vm435, %v2410, %v2414
      %v2416 = vshrl.u32 %v2181, 16
      %v2418 = vrot.slane %v2416, 4
      %v2419 = vor.u32 %v2418, %v2414
      %v2420 = vrot.slane %v2419, 4
      %v2422 = vshll.u32 %v2182, 16
      %v2424 = vrot.slane %v2422, 5
      %v2425 = vsel %vm435, %v2420, %v2424
      %v2427 = vshrl.u32 %v2183, 16
      %v2429 = vrot.slane %v2427, 4
      %v2430 = vshll.u32 %v2183, 16
      %v2432 = vrot.slane %v2430, 5
      %v2433 = vor.u32 %v2429, %v2432
      %v2434 = vrot.slane %v2433, 4
      %v2436 = vshll.u32 %v2184, 16
      %v2438 = vrot.slane %v2436, 5
      %v2439 = vsel %vm435, %v2434, %v2438
      %v2440 = vshrl.u32 %v2184, 16
      %v2442 = vrot.slane %v2440, 4
      %v2443 = vor.u32 %v2442, %v2438
      %v2444 = vrot.slane %v2443, 4
      %v2446 = vshll.u32 %v2185, 16
      %v2448 = vrot.slane %v2446, 5
      %v2449 = vsel %vm435, %v2444, %v2448
      %v2451 = vshrl.u32 %v2186, 16
      %v2453 = vrot.slane %v2451, 4
      %v2454 = vshll.u32 %v2186, 16
      %v2456 = vrot.slane %v2454, 5
      %v2457 = vor.u32 %v2453, %v2456
      %v2458 = vrot.slane %v2457, 4
      %v2460 = vshll.u32 %v2187, 16
      %v2462 = vrot.slane %v2460, 5
      %v2463 = vsel %vm435, %v2458, %v2462
      %v2464 = vshrl.u32 %v2187, 16
      %v2466 = vrot.slane %v2464, 4
      %v2467 = vor.u32 %v2466, %v2462
      %v2468 = vrot.slane %v2467, 4
      %v2470 = vshll.u32 %v2188, 16
      %v2472 = vrot.slane %v2470, 5
      %v2473 = vsel %vm435, %v2468, %v2472
      %v2475 = vshrl.u32 %v2189, 16
      %v2477 = vrot.slane %v2475, 4
      %v2478 = vshll.u32 %v2189, 16
      %v2480 = vrot.slane %v2478, 5
      %v2481 = vor.u32 %v2477, %v2480
      %v2482 = vrot.slane %v2481, 4
      %v2484 = vshll.u32 %v2190, 16
      %v2486 = vrot.slane %v2484, 5
      %v2487 = vsel %vm435, %v2482, %v2486
      %v2488 = vshrl.u32 %v2190, 16
      %v2490 = vrot.slane %v2488, 4
      %v2491 = vor.u32 %v2490, %v2486
      %v2492 = vrot.slane %v2491, 4
      %v2494 = vshll.u32 %v2191, 16
      %v2496 = vrot.slane %v2494, 5
      %v2497 = vsel %vm435, %v2492, %v2496
      %v2499 = vshrl.u32 %v2192, 16
      %v2501 = vrot.slane %v2499, 4
      %v2502 = vshll.u32 %v2192, 16
      %v2504 = vrot.slane %v2502, 5
      %v2505 = vor.u32 %v2501, %v2504
      %v2506 = vrot.slane %v2505, 4
      %v2508 = vshll.u32 %v2193, 16
      %v2510 = vrot.slane %v2508, 5
      %v2511 = vsel %vm435, %v2506, %v2510
      %v2512 = vshrl.u32 %v2193, 16
      %v2514 = vrot.slane %v2512, 4
      %v2515 = vor.u32 %v2514, %v2510
      %v2516 = vrot.slane %v2515, 4
      %v2518 = vshll.u32 %v2194, 16
      %v2520 = vrot.slane %v2518, 5
      %v2521 = vsel %vm435, %v2516, %v2520
      %v2523 = vshrl.u32 %v2195, 16
      %v2525 = vrot.slane %v2523, 4
      %v2526 = vshll.u32 %v2195, 16
      %v2528 = vrot.slane %v2526, 5
      %v2529 = vor.u32 %v2525, %v2528
      %v2530 = vrot.slane %v2529, 4
      %v2532 = vshll.u32 %v2196, 16
      %v2534 = vrot.slane %v2532, 5
      %v2535 = vsel %vm435, %v2530, %v2534
      %v2536 = vshrl.u32 %v2196, 16
      %v2538 = vrot.slane %v2536, 4
      %v2539 = vor.u32 %v2538, %v2534
      %v2540 = vrot.slane %v2539, 4
      %v2542 = vshll.u32 %v2197, 16
      %v2544 = vrot.slane %v2542, 5
      %v2545 = vsel %vm435, %v2540, %v2544
      %v2547 = vshrl.u32 %v2198, 16
      %v2549 = vrot.slane %v2547, 4
      %v2550 = vshll.u32 %v2198, 16
      %v2552 = vrot.slane %v2550, 5
      %v2553 = vor.u32 %v2549, %v2552
      %v2554 = vrot.slane %v2553, 4
      %v2556 = vshll.u32 %v2199, 16
      %v2558 = vrot.slane %v2556, 5
      %v2559 = vsel %vm435, %v2554, %v2558
      %v2560 = vshrl.u32 %v2199, 16
      %v2562 = vrot.slane %v2560, 4
      %v2563 = vor.u32 %v2562, %v2558
      %v2564 = vrot.slane %v2563, 4
      %v2566 = vshll.u32 %v2200, 16
      %v2568 = vrot.slane %v2566, 5
      %v2569 = vsel %vm435, %v2564, %v2568
      %v2571 = vshrl.u32 %v2201, 16
      %v2573 = vrot.slane %v2571, 4
      %v2574 = vshll.u32 %v2201, 16
      %v2576 = vrot.slane %v2574, 5
      %v2577 = vor.u32 %v2573, %v2576
      %v2578 = vrot.slane %v2577, 4
      %v2580 = vshll.u32 %v2202, 16
      %v2582 = vrot.slane %v2580, 5
      %v2583 = vsel %vm435, %v2578, %v2582
      %v2584 = vshrl.u32 %v2202, 16
      %v2586 = vrot.slane %v2584, 4
      %v2587 = vor.u32 %v2586, %v2582
      %v2588 = vrot.slane %v2587, 4
      %v2590 = vshll.u32 %v2203, 16
      %v2592 = vrot.slane %v2590, 5
      %v2593 = vsel %vm435, %v2588, %v2592
      %v2595 = vshrl.u32 %v2204, 16
      %v2597 = vrot.slane %v2595, 4
      %v2598 = vshll.u32 %v2204, 16
      %v2600 = vrot.slane %v2598, 5
      %v2601 = vor.u32 %v2597, %v2600
      %v2602 = vrot.slane %v2601, 4
      %v2604 = vshll.u32 %v2205, 16
      %v2606 = vrot.slane %v2604, 5
      %v2607 = vsel %vm435, %v2602, %v2606
      %v2608 = vshrl.u32 %v2205, 16
      %v2610 = vrot.slane %v2608, 4
      %v2611 = vor.u32 %v2610, %v2606
      %v2612 = vrot.slane %v2611, 4
      %v2614 = vshll.u32 %v2206, 16
      %v2616 = vrot.slane %v2614, 5
      %v2617 = vsel %vm435, %v2612, %v2616
      %v2619 = vshrl.u32 %v2207, 16
      %v2621 = vrot.slane %v2619, 4
      %v2622 = vshll.u32 %v2207, 16
      %v2624 = vrot.slane %v2622, 5
      %v2625 = vor.u32 %v2621, %v2624
      %v2626 = vrot.slane %v2625, 4
      %v2628 = vshll.u32 %v2208, 16
      %v2630 = vrot.slane %v2628, 5
      %v2631 = vsel %vm435, %v2626, %v2630
      %v2632 = vshrl.u32 %v2208, 16
      %v2634 = vrot.slane %v2632, 4
      %v2635 = vor.u32 %v2634, %v2630
      %v2636 = vrot.slane %v2635, 4
      %v2638 = vshll.u32 %v2209, 16
      %v2640 = vrot.slane %v2638, 5
      %v2641 = vsel %vm435, %v2636, %v2640
      %v2642 = vld [vmem:[%s3 + $0x100] sm:$0xf]
      %v2643 = vld [vmem:[%s3 + $0x104] sm:$0xf]
      %v2644 = vld [vmem:[%s3 + $0x108] sm:$0xf]
      %v2645 = vld [vmem:[%s3 + $0x10c] sm:$0xf]
      %v2646 = vld [vmem:[%s3 + $0x110] sm:$0xf]
      %v2647 = vld [vmem:[%s3 + $0x114] sm:$0xf]
      %v2648 = vld [vmem:[%s3 + $0x118] sm:$0xf]
      %v2649 = vld [vmem:[%s3 + $0x11c] sm:$0xf]
      %v2650 = vld [vmem:[%s3 + $0x120] sm:$0xf]
      %v2651 = vld [vmem:[%s3 + $0x124] sm:$0xf]
      %v2652 = vld [vmem:[%s3 + $0x128] sm:$0xf]
      %v2653 = vld [vmem:[%s3 + $0x12c] sm:$0xf]
      %v2654 = vld [vmem:[%s3 + $0x130] sm:$0xf]
      %v2655 = vld [vmem:[%s3 + $0x134] sm:$0xf]
      %v2656 = vld [vmem:[%s3 + $0x138] sm:$0xf]
      %v2657 = vld [vmem:[%s3 + $0x13c] sm:$0xf]
      %v2658 = vunpack.c.l.b16 %v2223
      %v2659 = vunpack.c.l.b16 %v2233
      %v2660 = vunpack.c.l.b16 %v2247
      %v2661 = vunpack.c.l.b16 %v2257
      %v2662 = vunpack.c.l.b16 %v2271
      %v2663 = vunpack.c.l.b16 %v2281
      %v2664 = vunpack.c.l.b16 %v2295
      %v2665 = vunpack.c.l.b16 %v2305
      %v2666 = vunpack.c.l.b16 %v2319
      %v2667 = vunpack.c.l.b16 %v2329
      %v2668 = vunpack.c.l.b16 %v2343
      %v2669 = vunpack.c.l.b16 %v2353
      %v2670 = vunpack.c.l.b16 %v2367
      %v2671 = vunpack.c.l.b16 %v2377
      %v2672 = vunpack.c.l.b16 %v2391
      %v2673 = vunpack.c.l.b16 %v2401
      %v2674 = vunpack.c.l.b16 %v2415
      %v2675 = vunpack.c.l.b16 %v2425
      %v2676 = vunpack.c.l.b16 %v2439
      %v2677 = vunpack.c.l.b16 %v2449
      %v2678 = vunpack.c.l.b16 %v2463
      %v2679 = vunpack.c.l.b16 %v2473
      %v2680 = vunpack.c.l.b16 %v2487
      %v2681 = vunpack.c.l.b16 %v2497
      %v2682 = vunpack.c.l.b16 %v2511
      %v2683 = vunpack.c.l.b16 %v2521
      %v2684 = vunpack.c.l.b16 %v2535
      %v2685 = vunpack.c.l.b16 %v2545
      %v2686 = vunpack.c.l.b16 %v2559
      %v2687 = vunpack.c.l.b16 %v2569
      %v2688 = vunpack.c.l.b16 %v2583
      %v2689 = vunpack.c.l.b16 %v2593
      %v2690 = vunpack.c.l.b16 %v2607
      %v2691 = vunpack.c.l.b16 %v2617
      %v2692 = vunpack.c.l.b16 %v2631
      %v2693 = vunpack.c.l.b16 %v2641
      %v2694 = vpack.c.b16 %v2659, %v2658
      %v2695 = vpack.c.b16 %v2661, %v2660
      %v2696 = vpack.c.b16 %v2663, %v2662
      %v2697 = vpack.c.b16 %v2665, %v2664
      %v2698 = vpack.c.b16 %v2667, %v2666
      %v2699 = vpack.c.b16 %v2669, %v2668
      %v2700 = vpack.c.b16 %v2671, %v2670
      %v2701 = vpack.c.b16 %v2673, %v2672
      %v2702 = vpack.c.b16 %v2675, %v2674
      %v2703 = vpack.c.b16 %v2677, %v2676
      %v2704 = vpack.c.b16 %v2679, %v2678
      %v2705 = vpack.c.b16 %v2681, %v2680
      %v2706 = vpack.c.b16 %v2683, %v2682
      %v2707 = vpack.c.b16 %v2685, %v2684
      %v2708 = vpack.c.b16 %v2687, %v2686
      %v2709 = vpack.c.b16 %v2689, %v2688
      %v2710 = vpack.c.b16 %v2691, %v2690
      %v2711 = vpack.c.b16 %v2693, %v2692
      %v2746 = vunpack.c.l.b16 %v2642
      %v2747 = vunpack.c.l.b16 %v2643
      %v2748 = vunpack.c.l.b16 %v2644
      %v2749 = vunpack.c.l.b16 %v2645
      %v2750 = vunpack.c.l.b16 %v2646
      %v2751 = vunpack.c.l.b16 %v2647
      %v2752 = vunpack.c.l.b16 %v2648
      %v2753 = vunpack.c.l.b16 %v2649
      %v2754 = vunpack.c.l.b16 %v2650
      %v2755 = vunpack.c.l.b16 %v2651
      %v2756 = vunpack.c.l.b16 %v2652
      %v2757 = vunpack.c.l.b16 %v2653
      %v2758 = vunpack.c.l.b16 %v2654
      %v2759 = vunpack.c.l.b16 %v2655
      %v2760 = vunpack.c.l.b16 %v2656
      %v2761 = vunpack.c.l.b16 %v2657
      %v2762 = vpack.c.b16 %v2747, %v2746
      %v2763 = vpack.c.b16 %v2749, %v2748
      %v2764 = vpack.c.b16 %v2751, %v2750
      %v2765 = vpack.c.b16 %v2753, %v2752
      %v2766 = vpack.c.b16 %v2755, %v2754
      %v2767 = vpack.c.b16 %v2757, %v2756
      %v2768 = vpack.c.b16 %v2759, %v2758
      %v2769 = vpack.c.b16 %v2761, %v2760
      %2778 = vmatpush.bf16.msra.mxu0 %v2769
      %2779 = vmatpush.bf16.msra.mxu0 %v2768
      %2780 = vmatpush.bf16.msra.mxu0 %v2767
      %2781 = vmatpush.bf16.msra.mxu0 %v2766
      %2782 = vmatpush.bf16.msra.mxu0 %v2765
      %2783 = vmatpush.bf16.msra.mxu0 %v2764
      %2784 = vmatpush.bf16.msra.mxu0 %v2763
      %2785 = vmatpush.bf16.msra.mxu0 %v2762
      %2786 = vmatmul.bf16.gmra.mxu0 %v2694
      %v2787 = vpop.f32.mrf.mxu0
      %v2788 = vadd.f32 0.0, %v2787
      %v2789 = vpop.f32.mrf.mxu0
      %v2790 = vadd.f32 0.0, %v2789
      %2791 = vmatmul.bf16.gmra.mxu0 %v2695
      %v2792 = vpop.f32.mrf.mxu0
      %v2793 = vadd.f32 0.0, %v2792
      %v2794 = vpop.f32.mrf.mxu0
      %v2795 = vadd.f32 0.0, %v2794
      %2796 = vmatmul.bf16.gmra.mxu0 %v2696
      %v2797 = vpop.f32.mrf.mxu0
      %v2798 = vadd.f32 0.0, %v2797
      %v2799 = vpop.f32.mrf.mxu0
      %v2800 = vadd.f32 0.0, %v2799
      %2801 = vmatmul.bf16.gmra.mxu0 %v2697
      %v2802 = vpop.f32.mrf.mxu0
      %v2803 = vadd.f32 0.0, %v2802
      %v2804 = vpop.f32.mrf.mxu0
      %v2805 = vadd.f32 0.0, %v2804
      %2806 = vmatmul.bf16.gmra.mxu0 %v2698
      %v2807 = vpop.f32.mrf.mxu0
      %v2808 = vadd.f32 0.0, %v2807
      %v2809 = vpop.f32.mrf.mxu0
      %v2810 = vadd.f32 0.0, %v2809
      %2811 = vmatmul.bf16.gmra.mxu0 %v2699
      %v2812 = vpop.f32.mrf.mxu0
      %v2813 = vadd.f32 0.0, %v2812
      %v2814 = vpop.f32.mrf.mxu0
      %v2815 = vadd.f32 0.0, %v2814
      %2816 = vmatmul.bf16.gmra.mxu0 %v2700
      %v2817 = vpop.f32.mrf.mxu0
      %v2818 = vadd.f32 0.0, %v2817
      %v2819 = vpop.f32.mrf.mxu0
      %v2820 = vadd.f32 0.0, %v2819
      %2821 = vmatmul.bf16.gmra.mxu0 %v2701
      %v2822 = vpop.f32.mrf.mxu0
      %v2823 = vadd.f32 0.0, %v2822
      %v2824 = vpop.f32.mrf.mxu0
      %v2825 = vadd.f32 0.0, %v2824
      %2826 = vmatmul.bf16.gmra.mxu0 %v2702
      %v2827 = vpop.f32.mrf.mxu0
      %v2828 = vadd.f32 0.0, %v2827
      %v2829 = vpop.f32.mrf.mxu0
      %v2830 = vadd.f32 0.0, %v2829
      %2831 = vmatmul.bf16.gmra.mxu0 %v2703
      %v2832 = vpop.f32.mrf.mxu0
      %v2833 = vadd.f32 0.0, %v2832
      %v2834 = vpop.f32.mrf.mxu0
      %v2835 = vadd.f32 0.0, %v2834
      %2836 = vmatmul.bf16.gmra.mxu0 %v2704
      %v2837 = vpop.f32.mrf.mxu0
      %v2838 = vadd.f32 0.0, %v2837
      %v2839 = vpop.f32.mrf.mxu0
      %v2840 = vadd.f32 0.0, %v2839
      %2841 = vmatmul.bf16.gmra.mxu0 %v2705
      %v2842 = vpop.f32.mrf.mxu0
      %v2843 = vadd.f32 0.0, %v2842
      %v2844 = vpop.f32.mrf.mxu0
      %v2845 = vadd.f32 0.0, %v2844
      %2846 = vmatmul.bf16.gmra.mxu0 %v2706
      %v2847 = vpop.f32.mrf.mxu0
      %v2848 = vadd.f32 0.0, %v2847
      %v2849 = vpop.f32.mrf.mxu0
      %v2850 = vadd.f32 0.0, %v2849
      %2851 = vmatmul.bf16.gmra.mxu0 %v2707
      %v2852 = vpop.f32.mrf.mxu0
      %v2853 = vadd.f32 0.0, %v2852
      %v2854 = vpop.f32.mrf.mxu0
      %v2855 = vadd.f32 0.0, %v2854
      %2856 = vmatmul.bf16.gmra.mxu0 %v2708
      %v2857 = vpop.f32.mrf.mxu0
      %v2858 = vadd.f32 0.0, %v2857
      %v2859 = vpop.f32.mrf.mxu0
      %v2860 = vadd.f32 0.0, %v2859
      %2861 = vmatmul.bf16.gmra.mxu0 %v2709
      %v2862 = vpop.f32.mrf.mxu0
      %v2863 = vadd.f32 0.0, %v2862
      %v2864 = vpop.f32.mrf.mxu0
      %v2865 = vadd.f32 0.0, %v2864
      %2866 = vmatmul.bf16.gmra.mxu0 %v2710
      %v2867 = vpop.f32.mrf.mxu0
      %v2868 = vadd.f32 0.0, %v2867
      %v2869 = vpop.f32.mrf.mxu0
      %v2870 = vadd.f32 0.0, %v2869
      %2871 = vmatmul.bf16.gmra.mxu0 %v2711
      %v2872 = vpop.f32.mrf.mxu0
      %v2873 = vadd.f32 0.0, %v2872
      %v2874 = vpop.f32.mrf.mxu0
      %v2875 = vadd.f32 0.0, %v2874
      %2876 = vdwg.mxu0
      %v2877 = vadd.f32 %v2120, %v2788
      %v2878 = vadd.f32 %v2121, %v2790
      %v2879 = vadd.f32 %v2122, %v2793
      %v2880 = vadd.f32 %v2123, %v2795
      %v2881 = vadd.f32 %v2124, %v2798
      %v2882 = vadd.f32 %v2125, %v2800
      %v2883 = vadd.f32 %v2126, %v2803
      %v2884 = vadd.f32 %v2127, %v2805
      %v2885 = vadd.f32 %v2128, %v2808
      %v2886 = vadd.f32 %v2129, %v2810
      %v2887 = vadd.f32 %v2130, %v2813
      %v2888 = vadd.f32 %v2131, %v2815
      %v2889 = vadd.f32 %v2132, %v2818
      %v2890 = vadd.f32 %v2133, %v2820
      %v2891 = vadd.f32 %v2134, %v2823
      %v2892 = vadd.f32 %v2135, %v2825
      %v2893 = vadd.f32 %v2136, %v2828
      %v2894 = vadd.f32 %v2137, %v2830
      %v2895 = vadd.f32 %v2138, %v2833
      %v2896 = vadd.f32 %v2139, %v2835
      %v2897 = vadd.f32 %v2140, %v2838
      %v2898 = vadd.f32 %v2141, %v2840
      %v2899 = vadd.f32 %v2142, %v2843
      %v2900 = vadd.f32 %v2143, %v2845
      %v2901 = vadd.f32 %v2144, %v2848
      %v2902 = vadd.f32 %v2145, %v2850
      %v2903 = vadd.f32 %v2146, %v2853
      %v2904 = vadd.f32 %v2147, %v2855
      %v2905 = vadd.f32 %v2148, %v2858
      %v2906 = vadd.f32 %v2149, %v2860
      %v2907 = vadd.f32 %v2150, %v2863
      %v2908 = vadd.f32 %v2151, %v2865
      %v2909 = vadd.f32 %v2152, %v2868
      %v2910 = vadd.f32 %v2153, %v2870
      %v2911 = vadd.f32 %v2154, %v2873
      %v2912 = vadd.f32 %v2155, %v2875
      %v2913 = vld [vmem:[%s1812] sm:$0xe]
      %v2914 = vld [vmem:[%s1812 + $0xc] sm:$0xe]
      %v2915 = vld [vmem:[%s1812 + $0x18] sm:$0xe]
      %v2916 = vld [vmem:[%s1812 + $0x24] sm:$0xe]
      %v2917 = vld [vmem:[%s1812 + $0x30] sm:$0xe]
      %v2918 = vld [vmem:[%s1812 + $0x3c] sm:$0xe]
      %v2919 = vld [vmem:[%s1812 + $0x48] sm:$0xe]
      %v2920 = vld [vmem:[%s1812 + $0x54] sm:$0xe]
      %v2921 = vld [vmem:[%s1812 + $0x60] sm:$0xe]
      %v2922 = vld [vmem:[%s1812 + $0x6c] sm:$0xe]
      %v2923 = vld [vmem:[%s1812 + $0x78] sm:$0xe]
      %v2924 = vld [vmem:[%s1812 + $0x84] sm:$0xe]
      %v2925 = vld [vmem:[%s1812 + $0x90] sm:$0xe]
      %v2926 = vld [vmem:[%s1812 + $0x9c] sm:$0xe]
      %v2927 = vld [vmem:[%s1812 + $0xa8] sm:$0xe]
      %v2928 = vld [vmem:[%s1812 + $0xb4] sm:$0xe]
      %v2929 = vld [vmem:[%s1812 + $0xc0] sm:$0xe]
      %v2930 = vld [vmem:[%s1812 + $0xcc] sm:$0xe]
      %v2985 = vrot.slane %v2913, 5
      %v2986 = vrot.slane %v2985, 4
      %v2987 = vrot.slane %v2157, 5
      %v2988 = vsel %vm1414, %v2986, %v2987
      %v2989 = vrot.slane %v2987, 4
      %v2990 = vrot.slane %v2158, 5
      %v2991 = vsel %vm1414, %v2989, %v2990
      %v2992 = vrot.slane %v2914, 5
      %v2993 = vrot.slane %v2992, 4
      %v2994 = vrot.slane %v2160, 5
      %v2995 = vsel %vm1414, %v2993, %v2994
      %v2996 = vrot.slane %v2994, 4
      %v2997 = vrot.slane %v2161, 5
      %v2998 = vsel %vm1414, %v2996, %v2997
      %v2999 = vrot.slane %v2915, 5
      %v3000 = vrot.slane %v2999, 4
      %v3001 = vrot.slane %v2163, 5
      %v3002 = vsel %vm1414, %v3000, %v3001
      %v3003 = vrot.slane %v3001, 4
      %v3004 = vrot.slane %v2164, 5
      %v3005 = vsel %vm1414, %v3003, %v3004
      %v3006 = vrot.slane %v2916, 5
      %v3007 = vrot.slane %v3006, 4
      %v3008 = vrot.slane %v2166, 5
      %v3009 = vsel %vm1414, %v3007, %v3008
      %v3010 = vrot.slane %v3008, 4
      %v3011 = vrot.slane %v2167, 5
      %v3012 = vsel %vm1414, %v3010, %v3011
      %v3013 = vrot.slane %v2917, 5
      %v3014 = vrot.slane %v3013, 4
      %v3015 = vrot.slane %v2169, 5
      %v3016 = vsel %vm1414, %v3014, %v3015
      %v3017 = vrot.slane %v3015, 4
      %v3018 = vrot.slane %v2170, 5
      %v3019 = vsel %vm1414, %v3017, %v3018
      %v3020 = vrot.slane %v2918, 5
      %v3021 = vrot.slane %v3020, 4
      %v3022 = vrot.slane %v2172, 5
      %v3023 = vsel %vm1414, %v3021, %v3022
      %v3024 = vrot.slane %v3022, 4
      %v3025 = vrot.slane %v2173, 5
      %v3026 = vsel %vm1414, %v3024, %v3025
      %v3027 = vrot.slane %v2919, 5
      %v3028 = vrot.slane %v3027, 4
      %v3029 = vrot.slane %v2175, 5
      %v3030 = vsel %vm1414, %v3028, %v3029
      %v3031 = vrot.slane %v3029, 4
      %v3032 = vrot.slane %v2176, 5
      %v3033 = vsel %vm1414, %v3031, %v3032
      %v3034 = vrot.slane %v2920, 5
      %v3035 = vrot.slane %v3034, 4
      %v3036 = vrot.slane %v2178, 5
      %v3037 = vsel %vm1414, %v3035, %v3036
      %v3038 = vrot.slane %v3036, 4
      %v3039 = vrot.slane %v2179, 5
      %v3040 = vsel %vm1414, %v3038, %v3039
      %v3041 = vrot.slane %v2921, 5
      %v3042 = vrot.slane %v3041, 4
      %v3043 = vrot.slane %v2181, 5
      %v3044 = vsel %vm1414, %v3042, %v3043
      %v3045 = vrot.slane %v3043, 4
      %v3046 = vrot.slane %v2182, 5
      %v3047 = vsel %vm1414, %v3045, %v3046
      %v3048 = vrot.slane %v2922, 5
      %v3049 = vrot.slane %v3048, 4
      %v3050 = vrot.slane %v2184, 5
      %v3051 = vsel %vm1414, %v3049, %v3050
      %v3052 = vrot.slane %v3050, 4
      %v3053 = vrot.slane %v2185, 5
      %v3054 = vsel %vm1414, %v3052, %v3053
      %v3055 = vrot.slane %v2923, 5
      %v3056 = vrot.slane %v3055, 4
      %v3057 = vrot.slane %v2187, 5
      %v3058 = vsel %vm1414, %v3056, %v3057
      %v3059 = vrot.slane %v3057, 4
      %v3060 = vrot.slane %v2188, 5
      %v3061 = vsel %vm1414, %v3059, %v3060
      %v3062 = vrot.slane %v2924, 5
      %v3063 = vrot.slane %v3062, 4
      %v3064 = vrot.slane %v2190, 5
      %v3065 = vsel %vm1414, %v3063, %v3064
      %v3066 = vrot.slane %v3064, 4
      %v3067 = vrot.slane %v2191, 5
      %v3068 = vsel %vm1414, %v3066, %v3067
      %v3069 = vrot.slane %v2925, 5
      %v3070 = vrot.slane %v3069, 4
      %v3071 = vrot.slane %v2193, 5
      %v3072 = vsel %vm1414, %v3070, %v3071
      %v3073 = vrot.slane %v3071, 4
      %v3074 = vrot.slane %v2194, 5
      %v3075 = vsel %vm1414, %v3073, %v3074
      %v3076 = vrot.slane %v2926, 5
      %v3077 = vrot.slane %v3076, 4
      %v3078 = vrot.slane %v2196, 5
      %v3079 = vsel %vm1414, %v3077, %v3078
      %v3080 = vrot.slane %v3078, 4
      %v3081 = vrot.slane %v2197, 5
      %v3082 = vsel %vm1414, %v3080, %v3081
      %v3083 = vrot.slane %v2927, 5
      %v3084 = vrot.slane %v3083, 4
      %v3085 = vrot.slane %v2199, 5
      %v3086 = vsel %vm1414, %v3084, %v3085
      %v3087 = vrot.slane %v3085, 4
      %v3088 = vrot.slane %v2200, 5
      %v3089 = vsel %vm1414, %v3087, %v3088
      %v3090 = vrot.slane %v2928, 5
      %v3091 = vrot.slane %v3090, 4
      %v3092 = vrot.slane %v2202, 5
      %v3093 = vsel %vm1414, %v3091, %v3092
      %v3094 = vrot.slane %v3092, 4
      %v3095 = vrot.slane %v2203, 5
      %v3096 = vsel %vm1414, %v3094, %v3095
      %v3097 = vrot.slane %v2929, 5
      %v3098 = vrot.slane %v3097, 4
      %v3099 = vrot.slane %v2205, 5
      %v3100 = vsel %vm1414, %v3098, %v3099
      %v3101 = vrot.slane %v3099, 4
      %v3102 = vrot.slane %v2206, 5
      %v3103 = vsel %vm1414, %v3101, %v3102
      %v3104 = vrot.slane %v2930, 5
      %v3105 = vrot.slane %v3104, 4
      %v3106 = vrot.slane %v2208, 5
      %v3107 = vsel %vm1414, %v3105, %v3106
      %v3108 = vrot.slane %v3106, 4
      %v3109 = vrot.slane %v2209, 5
      %v3110 = vsel %vm1414, %v3108, %v3109
      %v3111 = vld [vmem:[%s3 + $0x140] sm:$0xf]
      %v3112 = vld [vmem:[%s3 + $0x144] sm:$0xf]
      %v3113 = vld [vmem:[%s3 + $0x148] sm:$0xf]
      %v3114 = vld [vmem:[%s3 + $0x14c] sm:$0xf]
      %v3115 = vld [vmem:[%s3 + $0x150] sm:$0xf]
      %v3116 = vld [vmem:[%s3 + $0x154] sm:$0xf]
      %v3117 = vld [vmem:[%s3 + $0x158] sm:$0xf]
      %v3118 = vld [vmem:[%s3 + $0x15c] sm:$0xf]
      %v3119 = vld [vmem:[%s3 + $0x160] sm:$0xf]
      %v3120 = vld [vmem:[%s3 + $0x164] sm:$0xf]
      %v3121 = vld [vmem:[%s3 + $0x168] sm:$0xf]
      %v3122 = vld [vmem:[%s3 + $0x16c] sm:$0xf]
      %v3123 = vld [vmem:[%s3 + $0x170] sm:$0xf]
      %v3124 = vld [vmem:[%s3 + $0x174] sm:$0xf]
      %v3125 = vld [vmem:[%s3 + $0x178] sm:$0xf]
      %v3126 = vld [vmem:[%s3 + $0x17c] sm:$0xf]
      %v3127 = vunpack.c.l.b16 %v2988
      %v3128 = vunpack.c.l.b16 %v2991
      %v3129 = vunpack.c.l.b16 %v2995
      %v3130 = vunpack.c.l.b16 %v2998
      %v3131 = vunpack.c.l.b16 %v3002
      %v3132 = vunpack.c.l.b16 %v3005
      %v3133 = vunpack.c.l.b16 %v3009
      %v3134 = vunpack.c.l.b16 %v3012
      %v3135 = vunpack.c.l.b16 %v3016
      %v3136 = vunpack.c.l.b16 %v3019
      %v3137 = vunpack.c.l.b16 %v3023
      %v3138 = vunpack.c.l.b16 %v3026
      %v3139 = vunpack.c.l.b16 %v3030
      %v3140 = vunpack.c.l.b16 %v3033
      %v3141 = vunpack.c.l.b16 %v3037
      %v3142 = vunpack.c.l.b16 %v3040
      %v3143 = vunpack.c.l.b16 %v3044
      %v3144 = vunpack.c.l.b16 %v3047
      %v3145 = vunpack.c.l.b16 %v3051
      %v3146 = vunpack.c.l.b16 %v3054
      %v3147 = vunpack.c.l.b16 %v3058
      %v3148 = vunpack.c.l.b16 %v3061
      %v3149 = vunpack.c.l.b16 %v3065
      %v3150 = vunpack.c.l.b16 %v3068
      %v3151 = vunpack.c.l.b16 %v3072
      %v3152 = vunpack.c.l.b16 %v3075
      %v3153 = vunpack.c.l.b16 %v3079
      %v3154 = vunpack.c.l.b16 %v3082
      %v3155 = vunpack.c.l.b16 %v3086
      %v3156 = vunpack.c.l.b16 %v3089
      %v3157 = vunpack.c.l.b16 %v3093
      %v3158 = vunpack.c.l.b16 %v3096
      %v3159 = vunpack.c.l.b16 %v3100
      %v3160 = vunpack.c.l.b16 %v3103
      %v3161 = vunpack.c.l.b16 %v3107
      %v3162 = vunpack.c.l.b16 %v3110
      %v3163 = vpack.c.b16 %v3128, %v3127
      %v3164 = vpack.c.b16 %v3130, %v3129
      %v3165 = vpack.c.b16 %v3132, %v3131
      %v3166 = vpack.c.b16 %v3134, %v3133
      %v3167 = vpack.c.b16 %v3136, %v3135
      %v3168 = vpack.c.b16 %v3138, %v3137
      %v3169 = vpack.c.b16 %v3140, %v3139
      %v3170 = vpack.c.b16 %v3142, %v3141
      %v3171 = vpack.c.b16 %v3144, %v3143
      %v3172 = vpack.c.b16 %v3146, %v3145
      %v3173 = vpack.c.b16 %v3148, %v3147
      %v3174 = vpack.c.b16 %v3150, %v3149
      %v3175 = vpack.c.b16 %v3152, %v3151
      %v3176 = vpack.c.b16 %v3154, %v3153
      %v3177 = vpack.c.b16 %v3156, %v3155
      %v3178 = vpack.c.b16 %v3158, %v3157
      %v3179 = vpack.c.b16 %v3160, %v3159
      %v3180 = vpack.c.b16 %v3162, %v3161
      %v3215 = vunpack.c.l.b16 %v3111
      %v3216 = vunpack.c.l.b16 %v3112
      %v3217 = vunpack.c.l.b16 %v3113
      %v3218 = vunpack.c.l.b16 %v3114
      %v3219 = vunpack.c.l.b16 %v3115
      %v3220 = vunpack.c.l.b16 %v3116
      %v3221 = vunpack.c.l.b16 %v3117
      %v3222 = vunpack.c.l.b16 %v3118
      %v3223 = vunpack.c.l.b16 %v3119
      %v3224 = vunpack.c.l.b16 %v3120
      %v3225 = vunpack.c.l.b16 %v3121
      %v3226 = vunpack.c.l.b16 %v3122
      %v3227 = vunpack.c.l.b16 %v3123
      %v3228 = vunpack.c.l.b16 %v3124
      %v3229 = vunpack.c.l.b16 %v3125
      %v3230 = vunpack.c.l.b16 %v3126
      %v3231 = vpack.c.b16 %v3216, %v3215
      %v3232 = vpack.c.b16 %v3218, %v3217
      %v3233 = vpack.c.b16 %v3220, %v3219
      %v3234 = vpack.c.b16 %v3222, %v3221
      %v3235 = vpack.c.b16 %v3224, %v3223
      %v3236 = vpack.c.b16 %v3226, %v3225
      %v3237 = vpack.c.b16 %v3228, %v3227
      %v3238 = vpack.c.b16 %v3230, %v3229
      %3247 = vmatpush.bf16.msra.mxu0 %v3238
      %3248 = vmatpush.bf16.msra.mxu0 %v3237
      %3249 = vmatpush.bf16.msra.mxu0 %v3236
      %3250 = vmatpush.bf16.msra.mxu0 %v3235
      %3251 = vmatpush.bf16.msra.mxu0 %v3234
      %3252 = vmatpush.bf16.msra.mxu0 %v3233
      %3253 = vmatpush.bf16.msra.mxu0 %v3232
      %3254 = vmatpush.bf16.msra.mxu0 %v3231
      %3255 = vmatmul.bf16.gmra.mxu0 %v3163
      %v3256 = vpop.f32.mrf.mxu0
      %v3257 = vadd.f32 0.0, %v3256
      %v3258 = vpop.f32.mrf.mxu0
      %v3259 = vadd.f32 0.0, %v3258
      %3260 = vmatmul.bf16.gmra.mxu0 %v3164
      %v3261 = vpop.f32.mrf.mxu0
      %v3262 = vadd.f32 0.0, %v3261
      %v3263 = vpop.f32.mrf.mxu0
      %v3264 = vadd.f32 0.0, %v3263
      %3265 = vmatmul.bf16.gmra.mxu0 %v3165
      %v3266 = vpop.f32.mrf.mxu0
      %v3267 = vadd.f32 0.0, %v3266
      %v3268 = vpop.f32.mrf.mxu0
      %v3269 = vadd.f32 0.0, %v3268
      %3270 = vmatmul.bf16.gmra.mxu0 %v3166
      %v3271 = vpop.f32.mrf.mxu0
      %v3272 = vadd.f32 0.0, %v3271
      %v3273 = vpop.f32.mrf.mxu0
      %v3274 = vadd.f32 0.0, %v3273
      %3275 = vmatmul.bf16.gmra.mxu0 %v3167
      %v3276 = vpop.f32.mrf.mxu0
      %v3277 = vadd.f32 0.0, %v3276
      %v3278 = vpop.f32.mrf.mxu0
      %v3279 = vadd.f32 0.0, %v3278
      %3280 = vmatmul.bf16.gmra.mxu0 %v3168
      %v3281 = vpop.f32.mrf.mxu0
      %v3282 = vadd.f32 0.0, %v3281
      %v3283 = vpop.f32.mrf.mxu0
      %v3284 = vadd.f32 0.0, %v3283
      %3285 = vmatmul.bf16.gmra.mxu0 %v3169
      %v3286 = vpop.f32.mrf.mxu0
      %v3287 = vadd.f32 0.0, %v3286
      %v3288 = vpop.f32.mrf.mxu0
      %v3289 = vadd.f32 0.0, %v3288
      %3290 = vmatmul.bf16.gmra.mxu0 %v3170
      %v3291 = vpop.f32.mrf.mxu0
      %v3292 = vadd.f32 0.0, %v3291
      %v3293 = vpop.f32.mrf.mxu0
      %v3294 = vadd.f32 0.0, %v3293
      %3295 = vmatmul.bf16.gmra.mxu0 %v3171
      %v3296 = vpop.f32.mrf.mxu0
      %v3297 = vadd.f32 0.0, %v3296
      %v3298 = vpop.f32.mrf.mxu0
      %v3299 = vadd.f32 0.0, %v3298
      %3300 = vmatmul.bf16.gmra.mxu0 %v3172
      %v3301 = vpop.f32.mrf.mxu0
      %v3302 = vadd.f32 0.0, %v3301
      %v3303 = vpop.f32.mrf.mxu0
      %v3304 = vadd.f32 0.0, %v3303
      %3305 = vmatmul.bf16.gmra.mxu0 %v3173
      %v3306 = vpop.f32.mrf.mxu0
      %v3307 = vadd.f32 0.0, %v3306
      %v3308 = vpop.f32.mrf.mxu0
      %v3309 = vadd.f32 0.0, %v3308
      %3310 = vmatmul.bf16.gmra.mxu0 %v3174
      %v3311 = vpop.f32.mrf.mxu0
      %v3312 = vadd.f32 0.0, %v3311
      %v3313 = vpop.f32.mrf.mxu0
      %v3314 = vadd.f32 0.0, %v3313
      %3315 = vmatmul.bf16.gmra.mxu0 %v3175
      %v3316 = vpop.f32.mrf.mxu0
      %v3317 = vadd.f32 0.0, %v3316
      %v3318 = vpop.f32.mrf.mxu0
      %v3319 = vadd.f32 0.0, %v3318
      %3320 = vmatmul.bf16.gmra.mxu0 %v3176
      %v3321 = vpop.f32.mrf.mxu0
      %v3322 = vadd.f32 0.0, %v3321
      %v3323 = vpop.f32.mrf.mxu0
      %v3324 = vadd.f32 0.0, %v3323
      %3325 = vmatmul.bf16.gmra.mxu0 %v3177
      %v3326 = vpop.f32.mrf.mxu0
      %v3327 = vadd.f32 0.0, %v3326
      %v3328 = vpop.f32.mrf.mxu0
      %v3329 = vadd.f32 0.0, %v3328
      %3330 = vmatmul.bf16.gmra.mxu0 %v3178
      %v3331 = vpop.f32.mrf.mxu0
      %v3332 = vadd.f32 0.0, %v3331
      %v3333 = vpop.f32.mrf.mxu0
      %v3334 = vadd.f32 0.0, %v3333
      %3335 = vmatmul.bf16.gmra.mxu0 %v3179
      %v3336 = vpop.f32.mrf.mxu0
      %v3337 = vadd.f32 0.0, %v3336
      %v3338 = vpop.f32.mrf.mxu0
      %v3339 = vadd.f32 0.0, %v3338
      %3340 = vmatmul.bf16.gmra.mxu0 %v3180
      %v3341 = vpop.f32.mrf.mxu0
      %v3342 = vadd.f32 0.0, %v3341
      %v3343 = vpop.f32.mrf.mxu0
      %v3344 = vadd.f32 0.0, %v3343
      %3345 = vdwg.mxu0
      %v3346 = vadd.f32 %v2877, %v3257
      %v3347 = vadd.f32 %v2878, %v3259
      %v3348 = vadd.f32 %v2879, %v3262
      %v3349 = vadd.f32 %v2880, %v3264
      %v3350 = vadd.f32 %v2881, %v3267
      %v3351 = vadd.f32 %v2882, %v3269
      %v3352 = vadd.f32 %v2883, %v3272
      %v3353 = vadd.f32 %v2884, %v3274
      %v3354 = vadd.f32 %v2885, %v3277
      %v3355 = vadd.f32 %v2886, %v3279
      %v3356 = vadd.f32 %v2887, %v3282
      %v3357 = vadd.f32 %v2888, %v3284
      %v3358 = vadd.f32 %v2889, %v3287
      %v3359 = vadd.f32 %v2890, %v3289
      %v3360 = vadd.f32 %v2891, %v3292
      %v3361 = vadd.f32 %v2892, %v3294
      %v3362 = vadd.f32 %v2893, %v3297
      %v3363 = vadd.f32 %v2894, %v3299
      %v3364 = vadd.f32 %v2895, %v3302
      %v3365 = vadd.f32 %v2896, %v3304
      %v3366 = vadd.f32 %v2897, %v3307
      %v3367 = vadd.f32 %v2898, %v3309
      %v3368 = vadd.f32 %v2899, %v3312
      %v3369 = vadd.f32 %v2900, %v3314
      %v3370 = vadd.f32 %v2901, %v3317
      %v3371 = vadd.f32 %v2902, %v3319
      %v3372 = vadd.f32 %v2903, %v3322
      %v3373 = vadd.f32 %v2904, %v3324
      %v3374 = vadd.f32 %v2905, %v3327
      %v3375 = vadd.f32 %v2906, %v3329
      %v3376 = vadd.f32 %v2907, %v3332
      %v3377 = vadd.f32 %v2908, %v3334
      %v3378 = vadd.f32 %v2909, %v3337
      %v3379 = vadd.f32 %v2910, %v3339
      %v3380 = vadd.f32 %v2911, %v3342
      %v3381 = vadd.f32 %v2912, %v3344
      %s3382 = scalar_lea.vmem %s350, 24
      %v3383 = vld [vmem:[%s3382] sm:$0xf]
      %v3384 = vld [vmem:[%s3382 + $0x4] sm:$0xf]
      %v3385 = vld [vmem:[%s3382 + $0xc] sm:$0xf]
      %v3386 = vld [vmem:[%s3382 + $0x10] sm:$0xf]
      %v3387 = vld [vmem:[%s3382 + $0x18] sm:$0xf]
      %v3388 = vld [vmem:[%s3382 + $0x1c] sm:$0xf]
      %v3389 = vld [vmem:[%s3382 + $0x24] sm:$0xf]
      %v3390 = vld [vmem:[%s3382 + $0x28] sm:$0xf]
      %v3391 = vld [vmem:[%s3382 + $0x30] sm:$0xf]
      %v3392 = vld [vmem:[%s3382 + $0x34] sm:$0xf]
      %v3393 = vld [vmem:[%s3382 + $0x3c] sm:$0xf]
      %v3394 = vld [vmem:[%s3382 + $0x40] sm:$0xf]
      %v3395 = vld [vmem:[%s3382 + $0x48] sm:$0xf]
      %v3396 = vld [vmem:[%s3382 + $0x4c] sm:$0xf]
      %v3397 = vld [vmem:[%s3382 + $0x54] sm:$0xf]
      %v3398 = vld [vmem:[%s3382 + $0x58] sm:$0xf]
      %v3399 = vld [vmem:[%s3382 + $0x60] sm:$0xf]
      %v3400 = vld [vmem:[%s3382 + $0x64] sm:$0xf]
      %v3401 = vld [vmem:[%s3382 + $0x6c] sm:$0xf]
      %v3402 = vld [vmem:[%s3382 + $0x70] sm:$0xf]
      %v3403 = vld [vmem:[%s3382 + $0x78] sm:$0xf]
      %v3404 = vld [vmem:[%s3382 + $0x7c] sm:$0xf]
      %v3405 = vld [vmem:[%s3382 + $0x84] sm:$0xf]
      %v3406 = vld [vmem:[%s3382 + $0x88] sm:$0xf]
      %v3407 = vld [vmem:[%s3382 + $0x90] sm:$0xf]
      %v3408 = vld [vmem:[%s3382 + $0x94] sm:$0xf]
      %v3409 = vld [vmem:[%s3382 + $0x9c] sm:$0xf]
      %v3410 = vld [vmem:[%s3382 + $0xa0] sm:$0xf]
      %v3411 = vld [vmem:[%s3382 + $0xa8] sm:$0xf]
      %v3412 = vld [vmem:[%s3382 + $0xac] sm:$0xf]
      %v3413 = vld [vmem:[%s3382 + $0xb4] sm:$0xf]
      %v3414 = vld [vmem:[%s3382 + $0xb8] sm:$0xf]
      %v3415 = vld [vmem:[%s3382 + $0xc0] sm:$0xf]
      %v3416 = vld [vmem:[%s3382 + $0xc4] sm:$0xf]
      %v3417 = vld [vmem:[%s3382 + $0xcc] sm:$0xf]
      %v3418 = vld [vmem:[%s3382 + $0xd0] sm:$0xf]
      %v3419 = vld [vmem:[%s3 + $0x180] sm:$0xf]
      %v3420 = vld [vmem:[%s3 + $0x184] sm:$0xf]
      %v3421 = vld [vmem:[%s3 + $0x188] sm:$0xf]
      %v3422 = vld [vmem:[%s3 + $0x18c] sm:$0xf]
      %v3423 = vld [vmem:[%s3 + $0x190] sm:$0xf]
      %v3424 = vld [vmem:[%s3 + $0x194] sm:$0xf]
      %v3425 = vld [vmem:[%s3 + $0x198] sm:$0xf]
      %v3426 = vld [vmem:[%s3 + $0x19c] sm:$0xf]
      %v3427 = vld [vmem:[%s3 + $0x1a0] sm:$0xf]
      %v3428 = vld [vmem:[%s3 + $0x1a4] sm:$0xf]
      %v3429 = vld [vmem:[%s3 + $0x1a8] sm:$0xf]
      %v3430 = vld [vmem:[%s3 + $0x1ac] sm:$0xf]
      %v3431 = vld [vmem:[%s3 + $0x1b0] sm:$0xf]
      %v3432 = vld [vmem:[%s3 + $0x1b4] sm:$0xf]
      %v3433 = vld [vmem:[%s3 + $0x1b8] sm:$0xf]
      %v3434 = vld [vmem:[%s3 + $0x1bc] sm:$0xf]
      %v3471 = vunpack.c.l.b16 %v3383
      %v3472 = vunpack.c.l.b16 %v3384
      %v3473 = vunpack.c.l.b16 %v3385
      %v3474 = vunpack.c.l.b16 %v3386
      %v3475 = vunpack.c.l.b16 %v3387
      %v3476 = vunpack.c.l.b16 %v3388
      %v3477 = vunpack.c.l.b16 %v3389
      %v3478 = vunpack.c.l.b16 %v3390
      %v3479 = vunpack.c.l.b16 %v3391
      %v3480 = vunpack.c.l.b16 %v3392
      %v3481 = vunpack.c.l.b16 %v3393
      %v3482 = vunpack.c.l.b16 %v3394
      %v3483 = vunpack.c.l.b16 %v3395
      %v3484 = vunpack.c.l.b16 %v3396
      %v3485 = vunpack.c.l.b16 %v3397
      %v3486 = vunpack.c.l.b16 %v3398
      %v3487 = vunpack.c.l.b16 %v3399
      %v3488 = vunpack.c.l.b16 %v3400
      %v3489 = vunpack.c.l.b16 %v3401
      %v3490 = vunpack.c.l.b16 %v3402
      %v3491 = vunpack.c.l.b16 %v3403
      %v3492 = vunpack.c.l.b16 %v3404
      %v3493 = vunpack.c.l.b16 %v3405
      %v3494 = vunpack.c.l.b16 %v3406
      %v3495 = vunpack.c.l.b16 %v3407
      %v3496 = vunpack.c.l.b16 %v3408
      %v3497 = vunpack.c.l.b16 %v3409
      %v3498 = vunpack.c.l.b16 %v3410
      %v3499 = vunpack.c.l.b16 %v3411
      %v3500 = vunpack.c.l.b16 %v3412
      %v3501 = vunpack.c.l.b16 %v3413
      %v3502 = vunpack.c.l.b16 %v3414
      %v3503 = vunpack.c.l.b16 %v3415
      %v3504 = vunpack.c.l.b16 %v3416
      %v3505 = vunpack.c.l.b16 %v3417
      %v3506 = vunpack.c.l.b16 %v3418
      %v3507 = vpack.c.b16 %v3472, %v3471
      %v3508 = vpack.c.b16 %v3474, %v3473
      %v3509 = vpack.c.b16 %v3476, %v3475
      %v3510 = vpack.c.b16 %v3478, %v3477
      %v3511 = vpack.c.b16 %v3480, %v3479
      %v3512 = vpack.c.b16 %v3482, %v3481
      %v3513 = vpack.c.b16 %v3484, %v3483
      %v3514 = vpack.c.b16 %v3486, %v3485
      %v3515 = vpack.c.b16 %v3488, %v3487
      %v3516 = vpack.c.b16 %v3490, %v3489
      %v3517 = vpack.c.b16 %v3492, %v3491
      %v3518 = vpack.c.b16 %v3494, %v3493
      %v3519 = vpack.c.b16 %v3496, %v3495
      %v3520 = vpack.c.b16 %v3498, %v3497
      %v3521 = vpack.c.b16 %v3500, %v3499
      %v3522 = vpack.c.b16 %v3502, %v3501
      %v3523 = vpack.c.b16 %v3504, %v3503
      %v3524 = vpack.c.b16 %v3506, %v3505
      %v3559 = vunpack.c.l.b16 %v3419
      %v3560 = vunpack.c.l.b16 %v3420
      %v3561 = vunpack.c.l.b16 %v3421
      %v3562 = vunpack.c.l.b16 %v3422
      %v3563 = vunpack.c.l.b16 %v3423
      %v3564 = vunpack.c.l.b16 %v3424
      %v3565 = vunpack.c.l.b16 %v3425
      %v3566 = vunpack.c.l.b16 %v3426
      %v3567 = vunpack.c.l.b16 %v3427
      %v3568 = vunpack.c.l.b16 %v3428
      %v3569 = vunpack.c.l.b16 %v3429
      %v3570 = vunpack.c.l.b16 %v3430
      %v3571 = vunpack.c.l.b16 %v3431
      %v3572 = vunpack.c.l.b16 %v3432
      %v3573 = vunpack.c.l.b16 %v3433
      %v3574 = vunpack.c.l.b16 %v3434
      %v3575 = vpack.c.b16 %v3560, %v3559
      %v3576 = vpack.c.b16 %v3562, %v3561
      %v3577 = vpack.c.b16 %v3564, %v3563
      %v3578 = vpack.c.b16 %v3566, %v3565
      %v3579 = vpack.c.b16 %v3568, %v3567
      %v3580 = vpack.c.b16 %v3570, %v3569
      %v3581 = vpack.c.b16 %v3572, %v3571
      %v3582 = vpack.c.b16 %v3574, %v3573
      %3591 = vmatpush.bf16.msra.mxu0 %v3582
      %3592 = vmatpush.bf16.msra.mxu0 %v3581
      %3593 = vmatpush.bf16.msra.mxu0 %v3580
      %3594 = vmatpush.bf16.msra.mxu0 %v3579
      %3595 = vmatpush.bf16.msra.mxu0 %v3578
      %3596 = vmatpush.bf16.msra.mxu0 %v3577
      %3597 = vmatpush.bf16.msra.mxu0 %v3576
      %3598 = vmatpush.bf16.msra.mxu0 %v3575
      %3599 = vmatmul.bf16.gmra.mxu0 %v3507
      %v3600 = vpop.f32.mrf.mxu0
      %v3601 = vadd.f32 0.0, %v3600
      %v3602 = vpop.f32.mrf.mxu0
      %v3603 = vadd.f32 0.0, %v3602
      %3604 = vmatmul.bf16.gmra.mxu0 %v3508
      %v3605 = vpop.f32.mrf.mxu0
      %v3606 = vadd.f32 0.0, %v3605
      %v3607 = vpop.f32.mrf.mxu0
      %v3608 = vadd.f32 0.0, %v3607
      %3609 = vmatmul.bf16.gmra.mxu0 %v3509
      %v3610 = vpop.f32.mrf.mxu0
      %v3611 = vadd.f32 0.0, %v3610
      %v3612 = vpop.f32.mrf.mxu0
      %v3613 = vadd.f32 0.0, %v3612
      %3614 = vmatmul.bf16.gmra.mxu0 %v3510
      %v3615 = vpop.f32.mrf.mxu0
      %v3616 = vadd.f32 0.0, %v3615
      %v3617 = vpop.f32.mrf.mxu0
      %v3618 = vadd.f32 0.0, %v3617
      %3619 = vmatmul.bf16.gmra.mxu0 %v3511
      %v3620 = vpop.f32.mrf.mxu0
      %v3621 = vadd.f32 0.0, %v3620
      %v3622 = vpop.f32.mrf.mxu0
      %v3623 = vadd.f32 0.0, %v3622
      %3624 = vmatmul.bf16.gmra.mxu0 %v3512
      %v3625 = vpop.f32.mrf.mxu0
      %v3626 = vadd.f32 0.0, %v3625
      %v3627 = vpop.f32.mrf.mxu0
      %v3628 = vadd.f32 0.0, %v3627
      %3629 = vmatmul.bf16.gmra.mxu0 %v3513
      %v3630 = vpop.f32.mrf.mxu0
      %v3631 = vadd.f32 0.0, %v3630
      %v3632 = vpop.f32.mrf.mxu0
      %v3633 = vadd.f32 0.0, %v3632
      %3634 = vmatmul.bf16.gmra.mxu0 %v3514
      %v3635 = vpop.f32.mrf.mxu0
      %v3636 = vadd.f32 0.0, %v3635
      %v3637 = vpop.f32.mrf.mxu0
      %v3638 = vadd.f32 0.0, %v3637
      %3639 = vmatmul.bf16.gmra.mxu0 %v3515
      %v3640 = vpop.f32.mrf.mxu0
      %v3641 = vadd.f32 0.0, %v3640
      %v3642 = vpop.f32.mrf.mxu0
      %v3643 = vadd.f32 0.0, %v3642
      %3644 = vmatmul.bf16.gmra.mxu0 %v3516
      %v3645 = vpop.f32.mrf.mxu0
      %v3646 = vadd.f32 0.0, %v3645
      %v3647 = vpop.f32.mrf.mxu0
      %v3648 = vadd.f32 0.0, %v3647
      %3649 = vmatmul.bf16.gmra.mxu0 %v3517
      %v3650 = vpop.f32.mrf.mxu0
      %v3651 = vadd.f32 0.0, %v3650
      %v3652 = vpop.f32.mrf.mxu0
      %v3653 = vadd.f32 0.0, %v3652
      %3654 = vmatmul.bf16.gmra.mxu0 %v3518
      %v3655 = vpop.f32.mrf.mxu0
      %v3656 = vadd.f32 0.0, %v3655
      %v3657 = vpop.f32.mrf.mxu0
      %v3658 = vadd.f32 0.0, %v3657
      %3659 = vmatmul.bf16.gmra.mxu0 %v3519
      %v3660 = vpop.f32.mrf.mxu0
      %v3661 = vadd.f32 0.0, %v3660
      %v3662 = vpop.f32.mrf.mxu0
      %v3663 = vadd.f32 0.0, %v3662
      %3664 = vmatmul.bf16.gmra.mxu0 %v3520
      %v3665 = vpop.f32.mrf.mxu0
      %v3666 = vadd.f32 0.0, %v3665
      %v3667 = vpop.f32.mrf.mxu0
      %v3668 = vadd.f32 0.0, %v3667
      %3669 = vmatmul.bf16.gmra.mxu0 %v3521
      %v3670 = vpop.f32.mrf.mxu0
      %v3671 = vadd.f32 0.0, %v3670
      %v3672 = vpop.f32.mrf.mxu0
      %v3673 = vadd.f32 0.0, %v3672
      %3674 = vmatmul.bf16.gmra.mxu0 %v3522
      %v3675 = vpop.f32.mrf.mxu0
      %v3676 = vadd.f32 0.0, %v3675
      %v3677 = vpop.f32.mrf.mxu0
      %v3678 = vadd.f32 0.0, %v3677
      %3679 = vmatmul.bf16.gmra.mxu0 %v3523
      %v3680 = vpop.f32.mrf.mxu0
      %v3681 = vadd.f32 0.0, %v3680
      %v3682 = vpop.f32.mrf.mxu0
      %v3683 = vadd.f32 0.0, %v3682
      %3684 = vmatmul.bf16.gmra.mxu0 %v3524
      %v3685 = vpop.f32.mrf.mxu0
      %v3686 = vadd.f32 0.0, %v3685
      %v3687 = vpop.f32.mrf.mxu0
      %v3688 = vadd.f32 0.0, %v3687
      %3689 = vdwg.mxu0
      %v3690 = vadd.f32 %v3346, %v3601
      %v3691 = vadd.f32 %v3347, %v3603
      %v3692 = vadd.f32 %v3348, %v3606
      %v3693 = vadd.f32 %v3349, %v3608
      %v3694 = vadd.f32 %v3350, %v3611
      %v3695 = vadd.f32 %v3351, %v3613
      %v3696 = vadd.f32 %v3352, %v3616
      %v3697 = vadd.f32 %v3353, %v3618
      %v3698 = vadd.f32 %v3354, %v3621
      %v3699 = vadd.f32 %v3355, %v3623
      %v3700 = vadd.f32 %v3356, %v3626
      %v3701 = vadd.f32 %v3357, %v3628
      %v3702 = vadd.f32 %v3358, %v3631
      %v3703 = vadd.f32 %v3359, %v3633
      %v3704 = vadd.f32 %v3360, %v3636
      %v3705 = vadd.f32 %v3361, %v3638
      %v3706 = vadd.f32 %v3362, %v3641
      %v3707 = vadd.f32 %v3363, %v3643
      %v3708 = vadd.f32 %v3364, %v3646
      %v3709 = vadd.f32 %v3365, %v3648
      %v3710 = vadd.f32 %v3366, %v3651
      %v3711 = vadd.f32 %v3367, %v3653
      %v3712 = vadd.f32 %v3368, %v3656
      %v3713 = vadd.f32 %v3369, %v3658
      %v3714 = vadd.f32 %v3370, %v3661
      %v3715 = vadd.f32 %v3371, %v3663
      %v3716 = vadd.f32 %v3372, %v3666
      %v3717 = vadd.f32 %v3373, %v3668
      %v3718 = vadd.f32 %v3374, %v3671
      %v3719 = vadd.f32 %v3375, %v3673
      %v3720 = vadd.f32 %v3376, %v3676
      %v3721 = vadd.f32 %v3377, %v3678
      %v3722 = vadd.f32 %v3378, %v3681
      %v3723 = vadd.f32 %v3379, %v3683
      %v3724 = vadd.f32 %v3380, %v3686
      %v3725 = vadd.f32 %v3381, %v3688
      %v3726 = vld [vmem:[%s3382] sm:$0xf]
      %v3727 = vld [vmem:[%s3382 + $0x4] sm:$0xf]
      %v3728 = vld [vmem:[%s3382 + $0x8] sm:$0x1]
      %v3729 = vld [vmem:[%s3382 + $0xc] sm:$0xf]
      %v3730 = vld [vmem:[%s3382 + $0x10] sm:$0xf]
      %v3731 = vld [vmem:[%s3382 + $0x14] sm:$0x1]
      %v3732 = vld [vmem:[%s3382 + $0x18] sm:$0xf]
      %v3733 = vld [vmem:[%s3382 + $0x1c] sm:$0xf]
      %v3734 = vld [vmem:[%s3382 + $0x20] sm:$0x1]
      %v3735 = vld [vmem:[%s3382 + $0x24] sm:$0xf]
      %v3736 = vld [vmem:[%s3382 + $0x28] sm:$0xf]
      %v3737 = vld [vmem:[%s3382 + $0x2c] sm:$0x1]
      %v3738 = vld [vmem:[%s3382 + $0x30] sm:$0xf]
      %v3739 = vld [vmem:[%s3382 + $0x34] sm:$0xf]
      %v3740 = vld [vmem:[%s3382 + $0x38] sm:$0x1]
      %v3741 = vld [vmem:[%s3382 + $0x3c] sm:$0xf]
      %v3742 = vld [vmem:[%s3382 + $0x40] sm:$0xf]
      %v3743 = vld [vmem:[%s3382 + $0x44] sm:$0x1]
      %v3744 = vld [vmem:[%s3382 + $0x48] sm:$0xf]
      %v3745 = vld [vmem:[%s3382 + $0x4c] sm:$0xf]
      %v3746 = vld [vmem:[%s3382 + $0x50] sm:$0x1]
      %v3747 = vld [vmem:[%s3382 + $0x54] sm:$0xf]
      %v3748 = vld [vmem:[%s3382 + $0x58] sm:$0xf]
      %v3749 = vld [vmem:[%s3382 + $0x5c] sm:$0x1]
      %v3750 = vld [vmem:[%s3382 + $0x60] sm:$0xf]
      %v3751 = vld [vmem:[%s3382 + $0x64] sm:$0xf]
      %v3752 = vld [vmem:[%s3382 + $0x68] sm:$0x1]
      %v3753 = vld [vmem:[%s3382 + $0x6c] sm:$0xf]
      %v3754 = vld [vmem:[%s3382 + $0x70] sm:$0xf]
      %v3755 = vld [vmem:[%s3382 + $0x74] sm:$0x1]
      %v3756 = vld [vmem:[%s3382 + $0x78] sm:$0xf]
      %v3757 = vld [vmem:[%s3382 + $0x7c] sm:$0xf]
      %v3758 = vld [vmem:[%s3382 + $0x80] sm:$0x1]
      %v3759 = vld [vmem:[%s3382 + $0x84] sm:$0xf]
      %v3760 = vld [vmem:[%s3382 + $0x88] sm:$0xf]
      %v3761 = vld [vmem:[%s3382 + $0x8c] sm:$0x1]
      %v3762 = vld [vmem:[%s3382 + $0x90] sm:$0xf]
      %v3763 = vld [vmem:[%s3382 + $0x94] sm:$0xf]
      %v3764 = vld [vmem:[%s3382 + $0x98] sm:$0x1]
      %v3765 = vld [vmem:[%s3382 + $0x9c] sm:$0xf]
      %v3766 = vld [vmem:[%s3382 + $0xa0] sm:$0xf]
      %v3767 = vld [vmem:[%s3382 + $0xa4] sm:$0x1]
      %v3768 = vld [vmem:[%s3382 + $0xa8] sm:$0xf]
      %v3769 = vld [vmem:[%s3382 + $0xac] sm:$0xf]
      %v3770 = vld [vmem:[%s3382 + $0xb0] sm:$0x1]
      %v3771 = vld [vmem:[%s3382 + $0xb4] sm:$0xf]
      %v3772 = vld [vmem:[%s3382 + $0xb8] sm:$0xf]
      %v3773 = vld [vmem:[%s3382 + $0xbc] sm:$0x1]
      %v3774 = vld [vmem:[%s3382 + $0xc0] sm:$0xf]
      %v3775 = vld [vmem:[%s3382 + $0xc4] sm:$0xf]
      %v3776 = vld [vmem:[%s3382 + $0xc8] sm:$0x1]
      %v3777 = vld [vmem:[%s3382 + $0xcc] sm:$0xf]
      %v3778 = vld [vmem:[%s3382 + $0xd0] sm:$0xf]
      %v3779 = vld [vmem:[%s3382 + $0xd4] sm:$0x1]
      %v3781 = vshrl.u32 %v3726, 16
      %v3783 = vrot.slane %v3781, 4
      %v3784 = vshll.u32 %v3726, 16
      %v3786 = vrot.slane %v3784, 5
      %v3787 = vor.u32 %v3783, %v3786
      %v3788 = vrot.slane %v3787, 4
      %v3790 = vshll.u32 %v3727, 16
      %v3792 = vrot.slane %v3790, 5
      %v3793 = vsel %vm435, %v3788, %v3792
      %v3794 = vshrl.u32 %v3727, 16
      %v3796 = vrot.slane %v3794, 4
      %v3797 = vor.u32 %v3796, %v3792
      %v3798 = vrot.slane %v3797, 4
      %v3800 = vshll.u32 %v3728, 16
      %v3802 = vrot.slane %v3800, 5
      %v3803 = vsel %vm435, %v3798, %v3802
      %v3805 = vshrl.u32 %v3729, 16
      %v3807 = vrot.slane %v3805, 4
      %v3808 = vshll.u32 %v3729, 16
      %v3810 = vrot.slane %v3808, 5
      %v3811 = vor.u32 %v3807, %v3810
      %v3812 = vrot.slane %v3811, 4
      %v3814 = vshll.u32 %v3730, 16
      %v3816 = vrot.slane %v3814, 5
      %v3817 = vsel %vm435, %v3812, %v3816
      %v3818 = vshrl.u32 %v3730, 16
      %v3820 = vrot.slane %v3818, 4
      %v3821 = vor.u32 %v3820, %v3816
      %v3822 = vrot.slane %v3821, 4
      %v3824 = vshll.u32 %v3731, 16
      %v3826 = vrot.slane %v3824, 5
      %v3827 = vsel %vm435, %v3822, %v3826
      %v3829 = vshrl.u32 %v3732, 16
      %v3831 = vrot.slane %v3829, 4
      %v3832 = vshll.u32 %v3732, 16
      %v3834 = vrot.slane %v3832, 5
      %v3835 = vor.u32 %v3831, %v3834
      %v3836 = vrot.slane %v3835, 4
      %v3838 = vshll.u32 %v3733, 16
      %v3840 = vrot.slane %v3838, 5
      %v3841 = vsel %vm435, %v3836, %v3840
      %v3842 = vshrl.u32 %v3733, 16
      %v3844 = vrot.slane %v3842, 4
      %v3845 = vor.u32 %v3844, %v3840
      %v3846 = vrot.slane %v3845, 4
      %v3848 = vshll.u32 %v3734, 16
      %v3850 = vrot.slane %v3848, 5
      %v3851 = vsel %vm435, %v3846, %v3850
      %v3853 = vshrl.u32 %v3735, 16
      %v3855 = vrot.slane %v3853, 4
      %v3856 = vshll.u32 %v3735, 16
      %v3858 = vrot.slane %v3856, 5
      %v3859 = vor.u32 %v3855, %v3858
      %v3860 = vrot.slane %v3859, 4
      %v3862 = vshll.u32 %v3736, 16
      %v3864 = vrot.slane %v3862, 5
      %v3865 = vsel %vm435, %v3860, %v3864
      %v3866 = vshrl.u32 %v3736, 16
      %v3868 = vrot.slane %v3866, 4
      %v3869 = vor.u32 %v3868, %v3864
      %v3870 = vrot.slane %v3869, 4
      %v3872 = vshll.u32 %v3737, 16
      %v3874 = vrot.slane %v3872, 5
      %v3875 = vsel %vm435, %v3870, %v3874
      %v3877 = vshrl.u32 %v3738, 16
      %v3879 = vrot.slane %v3877, 4
      %v3880 = vshll.u32 %v3738, 16
      %v3882 = vrot.slane %v3880, 5
      %v3883 = vor.u32 %v3879, %v3882
      %v3884 = vrot.slane %v3883, 4
      %v3886 = vshll.u32 %v3739, 16
      %v3888 = vrot.slane %v3886, 5
      %v3889 = vsel %vm435, %v3884, %v3888
      %v3890 = vshrl.u32 %v3739, 16
      %v3892 = vrot.slane %v3890, 4
      %v3893 = vor.u32 %v3892, %v3888
      %v3894 = vrot.slane %v3893, 4
      %v3896 = vshll.u32 %v3740, 16
      %v3898 = vrot.slane %v3896, 5
      %v3899 = vsel %vm435, %v3894, %v3898
      %v3901 = vshrl.u32 %v3741, 16
      %v3903 = vrot.slane %v3901, 4
      %v3904 = vshll.u32 %v3741, 16
      %v3906 = vrot.slane %v3904, 5
      %v3907 = vor.u32 %v3903, %v3906
      %v3908 = vrot.slane %v3907, 4
      %v3910 = vshll.u32 %v3742, 16
      %v3912 = vrot.slane %v3910, 5
      %v3913 = vsel %vm435, %v3908, %v3912
      %v3914 = vshrl.u32 %v3742, 16
      %v3916 = vrot.slane %v3914, 4
      %v3917 = vor.u32 %v3916, %v3912
      %v3918 = vrot.slane %v3917, 4
      %v3920 = vshll.u32 %v3743, 16
      %v3922 = vrot.slane %v3920, 5
      %v3923 = vsel %vm435, %v3918, %v3922
      %v3925 = vshrl.u32 %v3744, 16
      %v3927 = vrot.slane %v3925, 4
      %v3928 = vshll.u32 %v3744, 16
      %v3930 = vrot.slane %v3928, 5
      %v3931 = vor.u32 %v3927, %v3930
      %v3932 = vrot.slane %v3931, 4
      %v3934 = vshll.u32 %v3745, 16
      %v3936 = vrot.slane %v3934, 5
      %v3937 = vsel %vm435, %v3932, %v3936
      %v3938 = vshrl.u32 %v3745, 16
      %v3940 = vrot.slane %v3938, 4
      %v3941 = vor.u32 %v3940, %v3936
      %v3942 = vrot.slane %v3941, 4
      %v3944 = vshll.u32 %v3746, 16
      %v3946 = vrot.slane %v3944, 5
      %v3947 = vsel %vm435, %v3942, %v3946
      %v3949 = vshrl.u32 %v3747, 16
      %v3951 = vrot.slane %v3949, 4
      %v3952 = vshll.u32 %v3747, 16
      %v3954 = vrot.slane %v3952, 5
      %v3955 = vor.u32 %v3951, %v3954
      %v3956 = vrot.slane %v3955, 4
      %v3958 = vshll.u32 %v3748, 16
      %v3960 = vrot.slane %v3958, 5
      %v3961 = vsel %vm435, %v3956, %v3960
      %v3962 = vshrl.u32 %v3748, 16
      %v3964 = vrot.slane %v3962, 4
      %v3965 = vor.u32 %v3964, %v3960
      %v3966 = vrot.slane %v3965, 4
      %v3968 = vshll.u32 %v3749, 16
      %v3970 = vrot.slane %v3968, 5
      %v3971 = vsel %vm435, %v3966, %v3970
      %v3973 = vshrl.u32 %v3750, 16
      %v3975 = vrot.slane %v3973, 4
      %v3976 = vshll.u32 %v3750, 16
      %v3978 = vrot.slane %v3976, 5
      %v3979 = vor.u32 %v3975, %v3978
      %v3980 = vrot.slane %v3979, 4
      %v3982 = vshll.u32 %v3751, 16
      %v3984 = vrot.slane %v3982, 5
      %v3985 = vsel %vm435, %v3980, %v3984
      %v3986 = vshrl.u32 %v3751, 16
      %v3988 = vrot.slane %v3986, 4
      %v3989 = vor.u32 %v3988, %v3984
      %v3990 = vrot.slane %v3989, 4
      %v3992 = vshll.u32 %v3752, 16
      %v3994 = vrot.slane %v3992, 5
      %v3995 = vsel %vm435, %v3990, %v3994
      %v3997 = vshrl.u32 %v3753, 16
      %v3999 = vrot.slane %v3997, 4
      %v4000 = vshll.u32 %v3753, 16
      %v4002 = vrot.slane %v4000, 5
      %v4003 = vor.u32 %v3999, %v4002
      %v4004 = vrot.slane %v4003, 4
      %v4006 = vshll.u32 %v3754, 16
      %v4008 = vrot.slane %v4006, 5
      %v4009 = vsel %vm435, %v4004, %v4008
      %v4010 = vshrl.u32 %v3754, 16
      %v4012 = vrot.slane %v4010, 4
      %v4013 = vor.u32 %v4012, %v4008
      %v4014 = vrot.slane %v4013, 4
      %v4016 = vshll.u32 %v3755, 16
      %v4018 = vrot.slane %v4016, 5
      %v4019 = vsel %vm435, %v4014, %v4018
      %v4021 = vshrl.u32 %v3756, 16
      %v4023 = vrot.slane %v4021, 4
      %v4024 = vshll.u32 %v3756, 16
      %v4026 = vrot.slane %v4024, 5
      %v4027 = vor.u32 %v4023, %v4026
      %v4028 = vrot.slane %v4027, 4
      %v4030 = vshll.u32 %v3757, 16
      %v4032 = vrot.slane %v4030, 5
      %v4033 = vsel %vm435, %v4028, %v4032
      %v4034 = vshrl.u32 %v3757, 16
      %v4036 = vrot.slane %v4034, 4
      %v4037 = vor.u32 %v4036, %v4032
      %v4038 = vrot.slane %v4037, 4
      %v4040 = vshll.u32 %v3758, 16
      %v4042 = vrot.slane %v4040, 5
      %v4043 = vsel %vm435, %v4038, %v4042
      %v4045 = vshrl.u32 %v3759, 16
      %v4047 = vrot.slane %v4045, 4
      %v4048 = vshll.u32 %v3759, 16
      %v4050 = vrot.slane %v4048, 5
      %v4051 = vor.u32 %v4047, %v4050
      %v4052 = vrot.slane %v4051, 4
      %v4054 = vshll.u32 %v3760, 16
      %v4056 = vrot.slane %v4054, 5
      %v4057 = vsel %vm435, %v4052, %v4056
      %v4058 = vshrl.u32 %v3760, 16
      %v4060 = vrot.slane %v4058, 4
      %v4061 = vor.u32 %v4060, %v4056
      %v4062 = vrot.slane %v4061, 4
      %v4064 = vshll.u32 %v3761, 16
      %v4066 = vrot.slane %v4064, 5
      %v4067 = vsel %vm435, %v4062, %v4066
      %v4069 = vshrl.u32 %v3762, 16
      %v4071 = vrot.slane %v4069, 4
      %v4072 = vshll.u32 %v3762, 16
      %v4074 = vrot.slane %v4072, 5
      %v4075 = vor.u32 %v4071, %v4074
      %v4076 = vrot.slane %v4075, 4
      %v4078 = vshll.u32 %v3763, 16
      %v4080 = vrot.slane %v4078, 5
      %v4081 = vsel %vm435, %v4076, %v4080
      %v4082 = vshrl.u32 %v3763, 16
      %v4084 = vrot.slane %v4082, 4
      %v4085 = vor.u32 %v4084, %v4080
      %v4086 = vrot.slane %v4085, 4
      %v4088 = vshll.u32 %v3764, 16
      %v4090 = vrot.slane %v4088, 5
      %v4091 = vsel %vm435, %v4086, %v4090
      %v4093 = vshrl.u32 %v3765, 16
      %v4095 = vrot.slane %v4093, 4
      %v4096 = vshll.u32 %v3765, 16
      %v4098 = vrot.slane %v4096, 5
      %v4099 = vor.u32 %v4095, %v4098
      %v4100 = vrot.slane %v4099, 4
      %v4102 = vshll.u32 %v3766, 16
      %v4104 = vrot.slane %v4102, 5
      %v4105 = vsel %vm435, %v4100, %v4104
      %v4106 = vshrl.u32 %v3766, 16
      %v4108 = vrot.slane %v4106, 4
      %v4109 = vor.u32 %v4108, %v4104
      %v4110 = vrot.slane %v4109, 4
      %v4112 = vshll.u32 %v3767, 16
      %v4114 = vrot.slane %v4112, 5
      %v4115 = vsel %vm435, %v4110, %v4114
      %v4117 = vshrl.u32 %v3768, 16
      %v4119 = vrot.slane %v4117, 4
      %v4120 = vshll.u32 %v3768, 16
      %v4122 = vrot.slane %v4120, 5
      %v4123 = vor.u32 %v4119, %v4122
      %v4124 = vrot.slane %v4123, 4
      %v4126 = vshll.u32 %v3769, 16
      %v4128 = vrot.slane %v4126, 5
      %v4129 = vsel %vm435, %v4124, %v4128
      %v4130 = vshrl.u32 %v3769, 16
      %v4132 = vrot.slane %v4130, 4
      %v4133 = vor.u32 %v4132, %v4128
      %v4134 = vrot.slane %v4133, 4
      %v4136 = vshll.u32 %v3770, 16
      %v4138 = vrot.slane %v4136, 5
      %v4139 = vsel %vm435, %v4134, %v4138
      %v4141 = vshrl.u32 %v3771, 16
      %v4143 = vrot.slane %v4141, 4
      %v4144 = vshll.u32 %v3771, 16
      %v4146 = vrot.slane %v4144, 5
      %v4147 = vor.u32 %v4143, %v4146
      %v4148 = vrot.slane %v4147, 4
      %v4150 = vshll.u32 %v3772, 16
      %v4152 = vrot.slane %v4150, 5
      %v4153 = vsel %vm435, %v4148, %v4152
      %v4154 = vshrl.u32 %v3772, 16
      %v4156 = vrot.slane %v4154, 4
      %v4157 = vor.u32 %v4156, %v4152
      %v4158 = vrot.slane %v4157, 4
      %v4160 = vshll.u32 %v3773, 16
      %v4162 = vrot.slane %v4160, 5
      %v4163 = vsel %vm435, %v4158, %v4162
      %v4165 = vshrl.u32 %v3774, 16
      %v4167 = vrot.slane %v4165, 4
      %v4168 = vshll.u32 %v3774, 16
      %v4170 = vrot.slane %v4168, 5
      %v4171 = vor.u32 %v4167, %v4170
      %v4172 = vrot.slane %v4171, 4
      %v4174 = vshll.u32 %v3775, 16
      %v4176 = vrot.slane %v4174, 5
      %v4177 = vsel %vm435, %v4172, %v4176
      %v4178 = vshrl.u32 %v3775, 16
      %v4180 = vrot.slane %v4178, 4
      %v4181 = vor.u32 %v4180, %v4176
      %v4182 = vrot.slane %v4181, 4
      %v4184 = vshll.u32 %v3776, 16
      %v4186 = vrot.slane %v4184, 5
      %v4187 = vsel %vm435, %v4182, %v4186
      %v4189 = vshrl.u32 %v3777, 16
      %v4191 = vrot.slane %v4189, 4
      %v4192 = vshll.u32 %v3777, 16
      %v4194 = vrot.slane %v4192, 5
      %v4195 = vor.u32 %v4191, %v4194
      %v4196 = vrot.slane %v4195, 4
      %v4198 = vshll.u32 %v3778, 16
      %v4200 = vrot.slane %v4198, 5
      %v4201 = vsel %vm435, %v4196, %v4200
      %v4202 = vshrl.u32 %v3778, 16
      %v4204 = vrot.slane %v4202, 4
      %v4205 = vor.u32 %v4204, %v4200
      %v4206 = vrot.slane %v4205, 4
      %v4208 = vshll.u32 %v3779, 16
      %v4210 = vrot.slane %v4208, 5
      %v4211 = vsel %vm435, %v4206, %v4210
      %v4212 = vld [vmem:[%s3 + $0x1c0] sm:$0xf]
      %v4213 = vld [vmem:[%s3 + $0x1c4] sm:$0xf]
      %v4214 = vld [vmem:[%s3 + $0x1c8] sm:$0xf]
      %v4215 = vld [vmem:[%s3 + $0x1cc] sm:$0xf]
      %v4216 = vld [vmem:[%s3 + $0x1d0] sm:$0xf]
      %v4217 = vld [vmem:[%s3 + $0x1d4] sm:$0xf]
      %v4218 = vld [vmem:[%s3 + $0x1d8] sm:$0xf]
      %v4219 = vld [vmem:[%s3 + $0x1dc] sm:$0xf]
      %v4220 = vld [vmem:[%s3 + $0x1e0] sm:$0xf]
      %v4221 = vld [vmem:[%s3 + $0x1e4] sm:$0xf]
      %v4222 = vld [vmem:[%s3 + $0x1e8] sm:$0xf]
      %v4223 = vld [vmem:[%s3 + $0x1ec] sm:$0xf]
      %v4224 = vld [vmem:[%s3 + $0x1f0] sm:$0xf]
      %v4225 = vld [vmem:[%s3 + $0x1f4] sm:$0xf]
      %v4226 = vld [vmem:[%s3 + $0x1f8] sm:$0xf]
      %v4227 = vld [vmem:[%s3 + $0x1fc] sm:$0xf]
      %v4228 = vunpack.c.l.b16 %v3793
      %v4229 = vunpack.c.l.b16 %v3803
      %v4230 = vunpack.c.l.b16 %v3817
      %v4231 = vunpack.c.l.b16 %v3827
      %v4232 = vunpack.c.l.b16 %v3841
      %v4233 = vunpack.c.l.b16 %v3851
      %v4234 = vunpack.c.l.b16 %v3865
      %v4235 = vunpack.c.l.b16 %v3875
      %v4236 = vunpack.c.l.b16 %v3889
      %v4237 = vunpack.c.l.b16 %v3899
      %v4238 = vunpack.c.l.b16 %v3913
      %v4239 = vunpack.c.l.b16 %v3923
      %v4240 = vunpack.c.l.b16 %v3937
      %v4241 = vunpack.c.l.b16 %v3947
      %v4242 = vunpack.c.l.b16 %v3961
      %v4243 = vunpack.c.l.b16 %v3971
      %v4244 = vunpack.c.l.b16 %v3985
      %v4245 = vunpack.c.l.b16 %v3995
      %v4246 = vunpack.c.l.b16 %v4009
      %v4247 = vunpack.c.l.b16 %v4019
      %v4248 = vunpack.c.l.b16 %v4033
      %v4249 = vunpack.c.l.b16 %v4043
      %v4250 = vunpack.c.l.b16 %v4057
      %v4251 = vunpack.c.l.b16 %v4067
      %v4252 = vunpack.c.l.b16 %v4081
      %v4253 = vunpack.c.l.b16 %v4091
      %v4254 = vunpack.c.l.b16 %v4105
      %v4255 = vunpack.c.l.b16 %v4115
      %v4256 = vunpack.c.l.b16 %v4129
      %v4257 = vunpack.c.l.b16 %v4139
      %v4258 = vunpack.c.l.b16 %v4153
      %v4259 = vunpack.c.l.b16 %v4163
      %v4260 = vunpack.c.l.b16 %v4177
      %v4261 = vunpack.c.l.b16 %v4187
      %v4262 = vunpack.c.l.b16 %v4201
      %v4263 = vunpack.c.l.b16 %v4211
      %v4264 = vpack.c.b16 %v4229, %v4228
      %v4265 = vpack.c.b16 %v4231, %v4230
      %v4266 = vpack.c.b16 %v4233, %v4232
      %v4267 = vpack.c.b16 %v4235, %v4234
      %v4268 = vpack.c.b16 %v4237, %v4236
      %v4269 = vpack.c.b16 %v4239, %v4238
      %v4270 = vpack.c.b16 %v4241, %v4240
      %v4271 = vpack.c.b16 %v4243, %v4242
      %v4272 = vpack.c.b16 %v4245, %v4244
      %v4273 = vpack.c.b16 %v4247, %v4246
      %v4274 = vpack.c.b16 %v4249, %v4248
      %v4275 = vpack.c.b16 %v4251, %v4250
      %v4276 = vpack.c.b16 %v4253, %v4252
      %v4277 = vpack.c.b16 %v4255, %v4254
      %v4278 = vpack.c.b16 %v4257, %v4256
      %v4279 = vpack.c.b16 %v4259, %v4258
      %v4280 = vpack.c.b16 %v4261, %v4260
      %v4281 = vpack.c.b16 %v4263, %v4262
      %v4316 = vunpack.c.l.b16 %v4212
      %v4317 = vunpack.c.l.b16 %v4213
      %v4318 = vunpack.c.l.b16 %v4214
      %v4319 = vunpack.c.l.b16 %v4215
      %v4320 = vunpack.c.l.b16 %v4216
      %v4321 = vunpack.c.l.b16 %v4217
      %v4322 = vunpack.c.l.b16 %v4218
      %v4323 = vunpack.c.l.b16 %v4219
      %v4324 = vunpack.c.l.b16 %v4220
      %v4325 = vunpack.c.l.b16 %v4221
      %v4326 = vunpack.c.l.b16 %v4222
      %v4327 = vunpack.c.l.b16 %v4223
      %v4328 = vunpack.c.l.b16 %v4224
      %v4329 = vunpack.c.l.b16 %v4225
      %v4330 = vunpack.c.l.b16 %v4226
      %v4331 = vunpack.c.l.b16 %v4227
      %v4332 = vpack.c.b16 %v4317, %v4316
      %v4333 = vpack.c.b16 %v4319, %v4318
      %v4334 = vpack.c.b16 %v4321, %v4320
      %v4335 = vpack.c.b16 %v4323, %v4322
      %v4336 = vpack.c.b16 %v4325, %v4324
      %v4337 = vpack.c.b16 %v4327, %v4326
      %v4338 = vpack.c.b16 %v4329, %v4328
      %v4339 = vpack.c.b16 %v4331, %v4330
      %4348 = vmatpush.bf16.msra.mxu0 %v4339
      %4349 = vmatpush.bf16.msra.mxu0 %v4338
      %4350 = vmatpush.bf16.msra.mxu0 %v4337
      %4351 = vmatpush.bf16.msra.mxu0 %v4336
      %4352 = vmatpush.bf16.msra.mxu0 %v4335
      %4353 = vmatpush.bf16.msra.mxu0 %v4334
      %4354 = vmatpush.bf16.msra.mxu0 %v4333
      %4355 = vmatpush.bf16.msra.mxu0 %v4332
      %4356 = vmatmul.bf16.gmra.mxu0 %v4264
      %v4357 = vpop.f32.mrf.mxu0
      %v4358 = vadd.f32 0.0, %v4357
      %v4359 = vpop.f32.mrf.mxu0
      %v4360 = vadd.f32 0.0, %v4359
      %4361 = vmatmul.bf16.gmra.mxu0 %v4265
      %v4362 = vpop.f32.mrf.mxu0
      %v4363 = vadd.f32 0.0, %v4362
      %v4364 = vpop.f32.mrf.mxu0
      %v4365 = vadd.f32 0.0, %v4364
      %4366 = vmatmul.bf16.gmra.mxu0 %v4266
      %v4367 = vpop.f32.mrf.mxu0
      %v4368 = vadd.f32 0.0, %v4367
      %v4369 = vpop.f32.mrf.mxu0
      %v4370 = vadd.f32 0.0, %v4369
      %4371 = vmatmul.bf16.gmra.mxu0 %v4267
      %v4372 = vpop.f32.mrf.mxu0
      %v4373 = vadd.f32 0.0, %v4372
      %v4374 = vpop.f32.mrf.mxu0
      %v4375 = vadd.f32 0.0, %v4374
      %4376 = vmatmul.bf16.gmra.mxu0 %v4268
      %v4377 = vpop.f32.mrf.mxu0
      %v4378 = vadd.f32 0.0, %v4377
      %v4379 = vpop.f32.mrf.mxu0
      %v4380 = vadd.f32 0.0, %v4379
      %4381 = vmatmul.bf16.gmra.mxu0 %v4269
      %v4382 = vpop.f32.mrf.mxu0
      %v4383 = vadd.f32 0.0, %v4382
      %v4384 = vpop.f32.mrf.mxu0
      %v4385 = vadd.f32 0.0, %v4384
      %4386 = vmatmul.bf16.gmra.mxu0 %v4270
      %v4387 = vpop.f32.mrf.mxu0
      %v4388 = vadd.f32 0.0, %v4387
      %v4389 = vpop.f32.mrf.mxu0
      %v4390 = vadd.f32 0.0, %v4389
      %4391 = vmatmul.bf16.gmra.mxu0 %v4271
      %v4392 = vpop.f32.mrf.mxu0
      %v4393 = vadd.f32 0.0, %v4392
      %v4394 = vpop.f32.mrf.mxu0
      %v4395 = vadd.f32 0.0, %v4394
      %4396 = vmatmul.bf16.gmra.mxu0 %v4272
      %v4397 = vpop.f32.mrf.mxu0
      %v4398 = vadd.f32 0.0, %v4397
      %v4399 = vpop.f32.mrf.mxu0
      %v4400 = vadd.f32 0.0, %v4399
      %4401 = vmatmul.bf16.gmra.mxu0 %v4273
      %v4402 = vpop.f32.mrf.mxu0
      %v4403 = vadd.f32 0.0, %v4402
      %v4404 = vpop.f32.mrf.mxu0
      %v4405 = vadd.f32 0.0, %v4404
      %4406 = vmatmul.bf16.gmra.mxu0 %v4274
      %v4407 = vpop.f32.mrf.mxu0
      %v4408 = vadd.f32 0.0, %v4407
      %v4409 = vpop.f32.mrf.mxu0
      %v4410 = vadd.f32 0.0, %v4409
      %4411 = vmatmul.bf16.gmra.mxu0 %v4275
      %v4412 = vpop.f32.mrf.mxu0
      %v4413 = vadd.f32 0.0, %v4412
      %v4414 = vpop.f32.mrf.mxu0
      %v4415 = vadd.f32 0.0, %v4414
      %4416 = vmatmul.bf16.gmra.mxu0 %v4276
      %v4417 = vpop.f32.mrf.mxu0
      %v4418 = vadd.f32 0.0, %v4417
      %v4419 = vpop.f32.mrf.mxu0
      %v4420 = vadd.f32 0.0, %v4419
      %4421 = vmatmul.bf16.gmra.mxu0 %v4277
      %v4422 = vpop.f32.mrf.mxu0
      %v4423 = vadd.f32 0.0, %v4422
      %v4424 = vpop.f32.mrf.mxu0
      %v4425 = vadd.f32 0.0, %v4424
      %4426 = vmatmul.bf16.gmra.mxu0 %v4278
      %v4427 = vpop.f32.mrf.mxu0
      %v4428 = vadd.f32 0.0, %v4427
      %v4429 = vpop.f32.mrf.mxu0
      %v4430 = vadd.f32 0.0, %v4429
      %4431 = vmatmul.bf16.gmra.mxu0 %v4279
      %v4432 = vpop.f32.mrf.mxu0
      %v4433 = vadd.f32 0.0, %v4432
      %v4434 = vpop.f32.mrf.mxu0
      %v4435 = vadd.f32 0.0, %v4434
      %4436 = vmatmul.bf16.gmra.mxu0 %v4280
      %v4437 = vpop.f32.mrf.mxu0
      %v4438 = vadd.f32 0.0, %v4437
      %v4439 = vpop.f32.mrf.mxu0
      %v4440 = vadd.f32 0.0, %v4439
      %4441 = vmatmul.bf16.gmra.mxu0 %v4281
      %v4442 = vpop.f32.mrf.mxu0
      %v4443 = vadd.f32 0.0, %v4442
      %v4444 = vpop.f32.mrf.mxu0
      %v4445 = vadd.f32 0.0, %v4444
      %4446 = vdwg.mxu0
      %v4447 = vadd.f32 %v3690, %v4358
      %v4448 = vadd.f32 %v3691, %v4360
      %v4449 = vadd.f32 %v3692, %v4363
      %v4450 = vadd.f32 %v3693, %v4365
      %v4451 = vadd.f32 %v3694, %v4368
      %v4452 = vadd.f32 %v3695, %v4370
      %v4453 = vadd.f32 %v3696, %v4373
      %v4454 = vadd.f32 %v3697, %v4375
      %v4455 = vadd.f32 %v3698, %v4378
      %v4456 = vadd.f32 %v3699, %v4380
      %v4457 = vadd.f32 %v3700, %v4383
      %v4458 = vadd.f32 %v3701, %v4385
      %v4459 = vadd.f32 %v3702, %v4388
      %v4460 = vadd.f32 %v3703, %v4390
      %v4461 = vadd.f32 %v3704, %v4393
      %v4462 = vadd.f32 %v3705, %v4395
      %v4463 = vadd.f32 %v3706, %v4398
      %v4464 = vadd.f32 %v3707, %v4400
      %v4465 = vadd.f32 %v3708, %v4403
      %v4466 = vadd.f32 %v3709, %v4405
      %v4467 = vadd.f32 %v3710, %v4408
      %v4468 = vadd.f32 %v3711, %v4410
      %v4469 = vadd.f32 %v3712, %v4413
      %v4470 = vadd.f32 %v3713, %v4415
      %v4471 = vadd.f32 %v3714, %v4418
      %v4472 = vadd.f32 %v3715, %v4420
      %v4473 = vadd.f32 %v3716, %v4423
      %v4474 = vadd.f32 %v3717, %v4425
      %v4475 = vadd.f32 %v3718, %v4428
      %v4476 = vadd.f32 %v3719, %v4430
      %v4477 = vadd.f32 %v3720, %v4433
      %v4478 = vadd.f32 %v3721, %v4435
      %v4479 = vadd.f32 %v3722, %v4438
      %v4480 = vadd.f32 %v3723, %v4440
      %v4481 = vadd.f32 %v3724, %v4443
      %v4482 = vadd.f32 %v3725, %v4445
      %v4483 = vld [vmem:[%s3382] sm:$0xe]
      %v4484 = vld [vmem:[%s3382 + $0xc] sm:$0xe]
      %v4485 = vld [vmem:[%s3382 + $0x18] sm:$0xe]
      %v4486 = vld [vmem:[%s3382 + $0x24] sm:$0xe]
      %v4487 = vld [vmem:[%s3382 + $0x30] sm:$0xe]
      %v4488 = vld [vmem:[%s3382 + $0x3c] sm:$0xe]
      %v4489 = vld [vmem:[%s3382 + $0x48] sm:$0xe]
      %v4490 = vld [vmem:[%s3382 + $0x54] sm:$0xe]
      %v4491 = vld [vmem:[%s3382 + $0x60] sm:$0xe]
      %v4492 = vld [vmem:[%s3382 + $0x6c] sm:$0xe]
      %v4493 = vld [vmem:[%s3382 + $0x78] sm:$0xe]
      %v4494 = vld [vmem:[%s3382 + $0x84] sm:$0xe]
      %v4495 = vld [vmem:[%s3382 + $0x90] sm:$0xe]
      %v4496 = vld [vmem:[%s3382 + $0x9c] sm:$0xe]
      %v4497 = vld [vmem:[%s3382 + $0xa8] sm:$0xe]
      %v4498 = vld [vmem:[%s3382 + $0xb4] sm:$0xe]
      %v4499 = vld [vmem:[%s3382 + $0xc0] sm:$0xe]
      %v4500 = vld [vmem:[%s3382 + $0xcc] sm:$0xe]
      %v4555 = vrot.slane %v4483, 5
      %v4556 = vrot.slane %v4555, 4
      %v4557 = vrot.slane %v3727, 5
      %v4558 = vsel %vm1414, %v4556, %v4557
      %v4559 = vrot.slane %v4557, 4
      %v4560 = vrot.slane %v3728, 5
      %v4561 = vsel %vm1414, %v4559, %v4560
      %v4562 = vrot.slane %v4484, 5
      %v4563 = vrot.slane %v4562, 4
      %v4564 = vrot.slane %v3730, 5
      %v4565 = vsel %vm1414, %v4563, %v4564
      %v4566 = vrot.slane %v4564, 4
      %v4567 = vrot.slane %v3731, 5
      %v4568 = vsel %vm1414, %v4566, %v4567
      %v4569 = vrot.slane %v4485, 5
      %v4570 = vrot.slane %v4569, 4
      %v4571 = vrot.slane %v3733, 5
      %v4572 = vsel %vm1414, %v4570, %v4571
      %v4573 = vrot.slane %v4571, 4
      %v4574 = vrot.slane %v3734, 5
      %v4575 = vsel %vm1414, %v4573, %v4574
      %v4576 = vrot.slane %v4486, 5
      %v4577 = vrot.slane %v4576, 4
      %v4578 = vrot.slane %v3736, 5
      %v4579 = vsel %vm1414, %v4577, %v4578
      %v4580 = vrot.slane %v4578, 4
      %v4581 = vrot.slane %v3737, 5
      %v4582 = vsel %vm1414, %v4580, %v4581
      %v4583 = vrot.slane %v4487, 5
      %v4584 = vrot.slane %v4583, 4
      %v4585 = vrot.slane %v3739, 5
      %v4586 = vsel %vm1414, %v4584, %v4585
      %v4587 = vrot.slane %v4585, 4
      %v4588 = vrot.slane %v3740, 5
      %v4589 = vsel %vm1414, %v4587, %v4588
      %v4590 = vrot.slane %v4488, 5
      %v4591 = vrot.slane %v4590, 4
      %v4592 = vrot.slane %v3742, 5
      %v4593 = vsel %vm1414, %v4591, %v4592
      %v4594 = vrot.slane %v4592, 4
      %v4595 = vrot.slane %v3743, 5
      %v4596 = vsel %vm1414, %v4594, %v4595
      %v4597 = vrot.slane %v4489, 5
      %v4598 = vrot.slane %v4597, 4
      %v4599 = vrot.slane %v3745, 5
      %v4600 = vsel %vm1414, %v4598, %v4599
      %v4601 = vrot.slane %v4599, 4
      %v4602 = vrot.slane %v3746, 5
      %v4603 = vsel %vm1414, %v4601, %v4602
      %v4604 = vrot.slane %v4490, 5
      %v4605 = vrot.slane %v4604, 4
      %v4606 = vrot.slane %v3748, 5
      %v4607 = vsel %vm1414, %v4605, %v4606
      %v4608 = vrot.slane %v4606, 4
      %v4609 = vrot.slane %v3749, 5
      %v4610 = vsel %vm1414, %v4608, %v4609
      %v4611 = vrot.slane %v4491, 5
      %v4612 = vrot.slane %v4611, 4
      %v4613 = vrot.slane %v3751, 5
      %v4614 = vsel %vm1414, %v4612, %v4613
      %v4615 = vrot.slane %v4613, 4
      %v4616 = vrot.slane %v3752, 5
      %v4617 = vsel %vm1414, %v4615, %v4616
      %v4618 = vrot.slane %v4492, 5
      %v4619 = vrot.slane %v4618, 4
      %v4620 = vrot.slane %v3754, 5
      %v4621 = vsel %vm1414, %v4619, %v4620
      %v4622 = vrot.slane %v4620, 4
      %v4623 = vrot.slane %v3755, 5
      %v4624 = vsel %vm1414, %v4622, %v4623
      %v4625 = vrot.slane %v4493, 5
      %v4626 = vrot.slane %v4625, 4
      %v4627 = vrot.slane %v3757, 5
      %v4628 = vsel %vm1414, %v4626, %v4627
      %v4629 = vrot.slane %v4627, 4
      %v4630 = vrot.slane %v3758, 5
      %v4631 = vsel %vm1414, %v4629, %v4630
      %v4632 = vrot.slane %v4494, 5
      %v4633 = vrot.slane %v4632, 4
      %v4634 = vrot.slane %v3760, 5
      %v4635 = vsel %vm1414, %v4633, %v4634
      %v4636 = vrot.slane %v4634, 4
      %v4637 = vrot.slane %v3761, 5
      %v4638 = vsel %vm1414, %v4636, %v4637
      %v4639 = vrot.slane %v4495, 5
      %v4640 = vrot.slane %v4639, 4
      %v4641 = vrot.slane %v3763, 5
      %v4642 = vsel %vm1414, %v4640, %v4641
      %v4643 = vrot.slane %v4641, 4
      %v4644 = vrot.slane %v3764, 5
      %v4645 = vsel %vm1414, %v4643, %v4644
      %v4646 = vrot.slane %v4496, 5
      %v4647 = vrot.slane %v4646, 4
      %v4648 = vrot.slane %v3766, 5
      %v4649 = vsel %vm1414, %v4647, %v4648
      %v4650 = vrot.slane %v4648, 4
      %v4651 = vrot.slane %v3767, 5
      %v4652 = vsel %vm1414, %v4650, %v4651
      %v4653 = vrot.slane %v4497, 5
      %v4654 = vrot.slane %v4653, 4
      %v4655 = vrot.slane %v3769, 5
      %v4656 = vsel %vm1414, %v4654, %v4655
      %v4657 = vrot.slane %v4655, 4
      %v4658 = vrot.slane %v3770, 5
      %v4659 = vsel %vm1414, %v4657, %v4658
      %v4660 = vrot.slane %v4498, 5
      %v4661 = vrot.slane %v4660, 4
      %v4662 = vrot.slane %v3772, 5
      %v4663 = vsel %vm1414, %v4661, %v4662
      %v4664 = vrot.slane %v4662, 4
      %v4665 = vrot.slane %v3773, 5
      %v4666 = vsel %vm1414, %v4664, %v4665
      %v4667 = vrot.slane %v4499, 5
      %v4668 = vrot.slane %v4667, 4
      %v4669 = vrot.slane %v3775, 5
      %v4670 = vsel %vm1414, %v4668, %v4669
      %v4671 = vrot.slane %v4669, 4
      %v4672 = vrot.slane %v3776, 5
      %v4673 = vsel %vm1414, %v4671, %v4672
      %v4674 = vrot.slane %v4500, 5
      %v4675 = vrot.slane %v4674, 4
      %v4676 = vrot.slane %v3778, 5
      %v4677 = vsel %vm1414, %v4675, %v4676
      %v4678 = vrot.slane %v4676, 4
      %v4679 = vrot.slane %v3779, 5
      %v4680 = vsel %vm1414, %v4678, %v4679
      %v4681 = vld [vmem:[%s3 + $0x200] sm:$0xf]
      %v4682 = vld [vmem:[%s3 + $0x204] sm:$0xf]
      %v4683 = vld [vmem:[%s3 + $0x208] sm:$0xf]
      %v4684 = vld [vmem:[%s3 + $0x20c] sm:$0xf]
      %v4685 = vld [vmem:[%s3 + $0x210] sm:$0xf]
      %v4686 = vld [vmem:[%s3 + $0x214] sm:$0xf]
      %v4687 = vld [vmem:[%s3 + $0x218] sm:$0xf]
      %v4688 = vld [vmem:[%s3 + $0x21c] sm:$0xf]
      %v4689 = vld [vmem:[%s3 + $0x220] sm:$0xf]
      %v4690 = vld [vmem:[%s3 + $0x224] sm:$0xf]
      %v4691 = vld [vmem:[%s3 + $0x228] sm:$0xf]
      %v4692 = vld [vmem:[%s3 + $0x22c] sm:$0xf]
      %v4693 = vld [vmem:[%s3 + $0x230] sm:$0xf]
      %v4694 = vld [vmem:[%s3 + $0x234] sm:$0xf]
      %v4695 = vld [vmem:[%s3 + $0x238] sm:$0xf]
      %v4696 = vld [vmem:[%s3 + $0x23c] sm:$0xf]
      %v4697 = vunpack.c.l.b16 %v4558
      %v4698 = vunpack.c.l.b16 %v4561
      %v4699 = vunpack.c.l.b16 %v4565
      %v4700 = vunpack.c.l.b16 %v4568
      %v4701 = vunpack.c.l.b16 %v4572
      %v4702 = vunpack.c.l.b16 %v4575
      %v4703 = vunpack.c.l.b16 %v4579
      %v4704 = vunpack.c.l.b16 %v4582
      %v4705 = vunpack.c.l.b16 %v4586
      %v4706 = vunpack.c.l.b16 %v4589
      %v4707 = vunpack.c.l.b16 %v4593
      %v4708 = vunpack.c.l.b16 %v4596
      %v4709 = vunpack.c.l.b16 %v4600
      %v4710 = vunpack.c.l.b16 %v4603
      %v4711 = vunpack.c.l.b16 %v4607
      %v4712 = vunpack.c.l.b16 %v4610
      %v4713 = vunpack.c.l.b16 %v4614
      %v4714 = vunpack.c.l.b16 %v4617
      %v4715 = vunpack.c.l.b16 %v4621
      %v4716 = vunpack.c.l.b16 %v4624
      %v4717 = vunpack.c.l.b16 %v4628
      %v4718 = vunpack.c.l.b16 %v4631
      %v4719 = vunpack.c.l.b16 %v4635
      %v4720 = vunpack.c.l.b16 %v4638
      %v4721 = vunpack.c.l.b16 %v4642
      %v4722 = vunpack.c.l.b16 %v4645
      %v4723 = vunpack.c.l.b16 %v4649
      %v4724 = vunpack.c.l.b16 %v4652
      %v4725 = vunpack.c.l.b16 %v4656
      %v4726 = vunpack.c.l.b16 %v4659
      %v4727 = vunpack.c.l.b16 %v4663
      %v4728 = vunpack.c.l.b16 %v4666
      %v4729 = vunpack.c.l.b16 %v4670
      %v4730 = vunpack.c.l.b16 %v4673
      %v4731 = vunpack.c.l.b16 %v4677
      %v4732 = vunpack.c.l.b16 %v4680
      %v4733 = vpack.c.b16 %v4698, %v4697
      %v4734 = vpack.c.b16 %v4700, %v4699
      %v4735 = vpack.c.b16 %v4702, %v4701
      %v4736 = vpack.c.b16 %v4704, %v4703
      %v4737 = vpack.c.b16 %v4706, %v4705
      %v4738 = vpack.c.b16 %v4708, %v4707
      %v4739 = vpack.c.b16 %v4710, %v4709
      %v4740 = vpack.c.b16 %v4712, %v4711
      %v4741 = vpack.c.b16 %v4714, %v4713
      %v4742 = vpack.c.b16 %v4716, %v4715
      %v4743 = vpack.c.b16 %v4718, %v4717
      %v4744 = vpack.c.b16 %v4720, %v4719
      %v4745 = vpack.c.b16 %v4722, %v4721
      %v4746 = vpack.c.b16 %v4724, %v4723
      %v4747 = vpack.c.b16 %v4726, %v4725
      %v4748 = vpack.c.b16 %v4728, %v4727
      %v4749 = vpack.c.b16 %v4730, %v4729
      %v4750 = vpack.c.b16 %v4732, %v4731
      %v4785 = vunpack.c.l.b16 %v4681
      %v4786 = vunpack.c.l.b16 %v4682
      %v4787 = vunpack.c.l.b16 %v4683
      %v4788 = vunpack.c.l.b16 %v4684
      %v4789 = vunpack.c.l.b16 %v4685
      %v4790 = vunpack.c.l.b16 %v4686
      %v4791 = vunpack.c.l.b16 %v4687
      %v4792 = vunpack.c.l.b16 %v4688
      %v4793 = vunpack.c.l.b16 %v4689
      %v4794 = vunpack.c.l.b16 %v4690
      %v4795 = vunpack.c.l.b16 %v4691
      %v4796 = vunpack.c.l.b16 %v4692
      %v4797 = vunpack.c.l.b16 %v4693
      %v4798 = vunpack.c.l.b16 %v4694
      %v4799 = vunpack.c.l.b16 %v4695
      %v4800 = vunpack.c.l.b16 %v4696
      %v4801 = vpack.c.b16 %v4786, %v4785
      %v4802 = vpack.c.b16 %v4788, %v4787
      %v4803 = vpack.c.b16 %v4790, %v4789
      %v4804 = vpack.c.b16 %v4792, %v4791
      %v4805 = vpack.c.b16 %v4794, %v4793
      %v4806 = vpack.c.b16 %v4796, %v4795
      %v4807 = vpack.c.b16 %v4798, %v4797
      %v4808 = vpack.c.b16 %v4800, %v4799
      %4817 = vmatpush.bf16.msra.mxu0 %v4808
      %4818 = vmatpush.bf16.msra.mxu0 %v4807
      %4819 = vmatpush.bf16.msra.mxu0 %v4806
      %4820 = vmatpush.bf16.msra.mxu0 %v4805
      %4821 = vmatpush.bf16.msra.mxu0 %v4804
      %4822 = vmatpush.bf16.msra.mxu0 %v4803
      %4823 = vmatpush.bf16.msra.mxu0 %v4802
      %4824 = vmatpush.bf16.msra.mxu0 %v4801
      %4825 = vmatmul.bf16.gmra.mxu0 %v4733
      %v4826 = vpop.f32.mrf.mxu0
      %v4827 = vadd.f32 0.0, %v4826
      %v4828 = vpop.f32.mrf.mxu0
      %v4829 = vadd.f32 0.0, %v4828
      %4830 = vmatmul.bf16.gmra.mxu0 %v4734
      %v4831 = vpop.f32.mrf.mxu0
      %v4832 = vadd.f32 0.0, %v4831
      %v4833 = vpop.f32.mrf.mxu0
      %v4834 = vadd.f32 0.0, %v4833
      %4835 = vmatmul.bf16.gmra.mxu0 %v4735
      %v4836 = vpop.f32.mrf.mxu0
      %v4837 = vadd.f32 0.0, %v4836
      %v4838 = vpop.f32.mrf.mxu0
      %v4839 = vadd.f32 0.0, %v4838
      %4840 = vmatmul.bf16.gmra.mxu0 %v4736
      %v4841 = vpop.f32.mrf.mxu0
      %v4842 = vadd.f32 0.0, %v4841
      %v4843 = vpop.f32.mrf.mxu0
      %v4844 = vadd.f32 0.0, %v4843
      %4845 = vmatmul.bf16.gmra.mxu0 %v4737
      %v4846 = vpop.f32.mrf.mxu0
      %v4847 = vadd.f32 0.0, %v4846
      %v4848 = vpop.f32.mrf.mxu0
      %v4849 = vadd.f32 0.0, %v4848
      %4850 = vmatmul.bf16.gmra.mxu0 %v4738
      %v4851 = vpop.f32.mrf.mxu0
      %v4852 = vadd.f32 0.0, %v4851
      %v4853 = vpop.f32.mrf.mxu0
      %v4854 = vadd.f32 0.0, %v4853
      %4855 = vmatmul.bf16.gmra.mxu0 %v4739
      %v4856 = vpop.f32.mrf.mxu0
      %v4857 = vadd.f32 0.0, %v4856
      %v4858 = vpop.f32.mrf.mxu0
      %v4859 = vadd.f32 0.0, %v4858
      %4860 = vmatmul.bf16.gmra.mxu0 %v4740
      %v4861 = vpop.f32.mrf.mxu0
      %v4862 = vadd.f32 0.0, %v4861
      %v4863 = vpop.f32.mrf.mxu0
      %v4864 = vadd.f32 0.0, %v4863
      %4865 = vmatmul.bf16.gmra.mxu0 %v4741
      %v4866 = vpop.f32.mrf.mxu0
      %v4867 = vadd.f32 0.0, %v4866
      %v4868 = vpop.f32.mrf.mxu0
      %v4869 = vadd.f32 0.0, %v4868
      %4870 = vmatmul.bf16.gmra.mxu0 %v4742
      %v4871 = vpop.f32.mrf.mxu0
      %v4872 = vadd.f32 0.0, %v4871
      %v4873 = vpop.f32.mrf.mxu0
      %v4874 = vadd.f32 0.0, %v4873
      %4875 = vmatmul.bf16.gmra.mxu0 %v4743
      %v4876 = vpop.f32.mrf.mxu0
      %v4877 = vadd.f32 0.0, %v4876
      %v4878 = vpop.f32.mrf.mxu0
      %v4879 = vadd.f32 0.0, %v4878
      %4880 = vmatmul.bf16.gmra.mxu0 %v4744
      %v4881 = vpop.f32.mrf.mxu0
      %v4882 = vadd.f32 0.0, %v4881
      %v4883 = vpop.f32.mrf.mxu0
      %v4884 = vadd.f32 0.0, %v4883
      %4885 = vmatmul.bf16.gmra.mxu0 %v4745
      %v4886 = vpop.f32.mrf.mxu0
      %v4887 = vadd.f32 0.0, %v4886
      %v4888 = vpop.f32.mrf.mxu0
      %v4889 = vadd.f32 0.0, %v4888
      %4890 = vmatmul.bf16.gmra.mxu0 %v4746
      %v4891 = vpop.f32.mrf.mxu0
      %v4892 = vadd.f32 0.0, %v4891
      %v4893 = vpop.f32.mrf.mxu0
      %v4894 = vadd.f32 0.0, %v4893
      %4895 = vmatmul.bf16.gmra.mxu0 %v4747
      %v4896 = vpop.f32.mrf.mxu0
      %v4897 = vadd.f32 0.0, %v4896
      %v4898 = vpop.f32.mrf.mxu0
      %v4899 = vadd.f32 0.0, %v4898
      %4900 = vmatmul.bf16.gmra.mxu0 %v4748
      %v4901 = vpop.f32.mrf.mxu0
      %v4902 = vadd.f32 0.0, %v4901
      %v4903 = vpop.f32.mrf.mxu0
      %v4904 = vadd.f32 0.0, %v4903
      %4905 = vmatmul.bf16.gmra.mxu0 %v4749
      %v4906 = vpop.f32.mrf.mxu0
      %v4907 = vadd.f32 0.0, %v4906
      %v4908 = vpop.f32.mrf.mxu0
      %v4909 = vadd.f32 0.0, %v4908
      %4910 = vmatmul.bf16.gmra.mxu0 %v4750
      %v4911 = vpop.f32.mrf.mxu0
      %v4912 = vadd.f32 0.0, %v4911
      %v4913 = vpop.f32.mrf.mxu0
      %v4914 = vadd.f32 0.0, %v4913
      %4915 = vdwg.mxu0
      %v4916 = vadd.f32 %v4447, %v4827
      %v4917 = vadd.f32 %v4448, %v4829
      %v4918 = vadd.f32 %v4449, %v4832
      %v4919 = vadd.f32 %v4450, %v4834
      %v4920 = vadd.f32 %v4451, %v4837
      %v4921 = vadd.f32 %v4452, %v4839
      %v4922 = vadd.f32 %v4453, %v4842
      %v4923 = vadd.f32 %v4454, %v4844
      %v4924 = vadd.f32 %v4455, %v4847
      %v4925 = vadd.f32 %v4456, %v4849
      %v4926 = vadd.f32 %v4457, %v4852
      %v4927 = vadd.f32 %v4458, %v4854
      %v4928 = vadd.f32 %v4459, %v4857
      %v4929 = vadd.f32 %v4460, %v4859
      %v4930 = vadd.f32 %v4461, %v4862
      %v4931 = vadd.f32 %v4462, %v4864
      %v4932 = vadd.f32 %v4463, %v4867
      %v4933 = vadd.f32 %v4464, %v4869
      %v4934 = vadd.f32 %v4465, %v4872
      %v4935 = vadd.f32 %v4466, %v4874
      %v4936 = vadd.f32 %v4467, %v4877
      %v4937 = vadd.f32 %v4468, %v4879
      %v4938 = vadd.f32 %v4469, %v4882
      %v4939 = vadd.f32 %v4470, %v4884
      %v4940 = vadd.f32 %v4471, %v4887
      %v4941 = vadd.f32 %v4472, %v4889
      %v4942 = vadd.f32 %v4473, %v4892
      %v4943 = vadd.f32 %v4474, %v4894
      %v4944 = vadd.f32 %v4475, %v4897
      %v4945 = vadd.f32 %v4476, %v4899
      %v4946 = vadd.f32 %v4477, %v4902
      %v4947 = vadd.f32 %v4478, %v4904
      %v4948 = vadd.f32 %v4479, %v4907
      %v4949 = vadd.f32 %v4480, %v4909
      %v4950 = vadd.f32 %v4481, %v4912
      %v4951 = vadd.f32 %v4482, %v4914
      %v4952 = vld [vmem:[%s4] sm:$0x1]
      %v4954 = vperm.slane %v4952, 0
      %v4956 = vadd.f32 %v4916, %v4954
      %v4957 = vadd.f32 %v4917, %v4954
      %v4958 = vadd.f32 %v4918, %v4954
      %v4959 = vadd.f32 %v4919, %v4954
      %v4960 = vadd.f32 %v4920, %v4954
      %v4961 = vadd.f32 %v4921, %v4954
      %v4962 = vadd.f32 %v4922, %v4954
      %v4963 = vadd.f32 %v4923, %v4954
      %v4964 = vadd.f32 %v4924, %v4954
      %v4965 = vadd.f32 %v4925, %v4954
      %v4966 = vadd.f32 %v4926, %v4954
      %v4967 = vadd.f32 %v4927, %v4954
      %v4968 = vadd.f32 %v4928, %v4954
      %v4969 = vadd.f32 %v4929, %v4954
      %v4970 = vadd.f32 %v4930, %v4954
      %v4971 = vadd.f32 %v4931, %v4954
      %v4972 = vadd.f32 %v4932, %v4954
      %v4973 = vadd.f32 %v4933, %v4954
      %v4974 = vadd.f32 %v4934, %v4954
      %v4975 = vadd.f32 %v4935, %v4954
      %v4976 = vadd.f32 %v4936, %v4954
      %v4977 = vadd.f32 %v4937, %v4954
      %v4978 = vadd.f32 %v4938, %v4954
      %v4979 = vadd.f32 %v4939, %v4954
      %v4980 = vadd.f32 %v4940, %v4954
      %v4981 = vadd.f32 %v4941, %v4954
      %v4982 = vadd.f32 %v4942, %v4954
      %v4983 = vadd.f32 %v4943, %v4954
      %v4984 = vadd.f32 %v4944, %v4954
      %v4985 = vadd.f32 %v4945, %v4954
      %v4986 = vadd.f32 %v4946, %v4954
      %v4987 = vadd.f32 %v4947, %v4954
      %v4988 = vadd.f32 %v4948, %v4954
      %v4989 = vadd.f32 %v4949, %v4954
      %v4990 = vadd.f32 %v4950, %v4954
      %v4991 = vadd.f32 %v4951, %v4954
      %v4992 = vmax.f32 %v4956, 0.0
      %v4993 = vmax.f32 %v4957, 0.0
      %v4994 = vmax.f32 %v4958, 0.0
      %v4995 = vmax.f32 %v4959, 0.0
      %v4996 = vmax.f32 %v4960, 0.0
      %v4997 = vmax.f32 %v4961, 0.0
      %v4998 = vmax.f32 %v4962, 0.0
      %v4999 = vmax.f32 %v4963, 0.0
      %v5000 = vmax.f32 %v4964, 0.0
      %v5001 = vmax.f32 %v4965, 0.0
      %v5002 = vmax.f32 %v4966, 0.0
      %v5003 = vmax.f32 %v4967, 0.0
      %v5004 = vmax.f32 %v4968, 0.0
      %v5005 = vmax.f32 %v4969, 0.0
      %v5006 = vmax.f32 %v4970, 0.0
      %v5007 = vmax.f32 %v4971, 0.0
      %v5008 = vmax.f32 %v4972, 0.0
      %v5009 = vmax.f32 %v4973, 0.0
      %v5010 = vmax.f32 %v4974, 0.0
      %v5011 = vmax.f32 %v4975, 0.0
      %v5012 = vmax.f32 %v4976, 0.0
      %v5013 = vmax.f32 %v4977, 0.0
      %v5014 = vmax.f32 %v4978, 0.0
      %v5015 = vmax.f32 %v4979, 0.0
      %v5016 = vmax.f32 %v4980, 0.0
      %v5017 = vmax.f32 %v4981, 0.0
      %v5018 = vmax.f32 %v4982, 0.0
      %v5019 = vmax.f32 %v4983, 0.0
      %v5020 = vmax.f32 %v4984, 0.0
      %v5021 = vmax.f32 %v4985, 0.0
      %v5022 = vmax.f32 %v4986, 0.0
      %v5023 = vmax.f32 %v4987, 0.0
      %v5024 = vmax.f32 %v4988, 0.0
      %v5025 = vmax.f32 %v4989, 0.0
      %v5026 = vmax.f32 %v4990, 0.0
      %v5027 = vmax.f32 %v4991, 0.0
      %v5028 = vpack.c.bf16 %v4992, %v4992
      %v5029 = vpack.c.bf16 %v4993, %v4993
      %v5030 = vpack.c.bf16 %v4994, %v4994
      %v5031 = vpack.c.bf16 %v4995, %v4995
      %v5032 = vpack.c.bf16 %v4996, %v4996
      %v5033 = vpack.c.bf16 %v4997, %v4997
      %v5034 = vpack.c.bf16 %v4998, %v4998
      %v5035 = vpack.c.bf16 %v4999, %v4999
      %v5036 = vpack.c.bf16 %v5000, %v5000
      %v5037 = vpack.c.bf16 %v5001, %v5001
      %v5038 = vpack.c.bf16 %v5002, %v5002
      %v5039 = vpack.c.bf16 %v5003, %v5003
      %v5040 = vpack.c.bf16 %v5004, %v5004
      %v5041 = vpack.c.bf16 %v5005, %v5005
      %v5042 = vpack.c.bf16 %v5006, %v5006
      %v5043 = vpack.c.bf16 %v5007, %v5007
      %v5044 = vpack.c.bf16 %v5008, %v5008
      %v5045 = vpack.c.bf16 %v5009, %v5009
      %v5046 = vpack.c.bf16 %v5010, %v5010
      %v5047 = vpack.c.bf16 %v5011, %v5011
      %v5048 = vpack.c.bf16 %v5012, %v5012
      %v5049 = vpack.c.bf16 %v5013, %v5013
      %v5050 = vpack.c.bf16 %v5014, %v5014
      %v5051 = vpack.c.bf16 %v5015, %v5015
      %v5052 = vpack.c.bf16 %v5016, %v5016
      %v5053 = vpack.c.bf16 %v5017, %v5017
      %v5054 = vpack.c.bf16 %v5018, %v5018
      %v5055 = vpack.c.bf16 %v5019, %v5019
      %v5056 = vpack.c.bf16 %v5020, %v5020
      %v5057 = vpack.c.bf16 %v5021, %v5021
      %v5058 = vpack.c.bf16 %v5022, %v5022
      %v5059 = vpack.c.bf16 %v5023, %v5023
      %v5060 = vpack.c.bf16 %v5024, %v5024
      %v5061 = vpack.c.bf16 %v5025, %v5025
      %v5062 = vpack.c.bf16 %v5026, %v5026
      %v5063 = vpack.c.bf16 %v5027, %v5027
      %vm5064 = vcmask 1040384
      %vm5065 = vsmask.f32 256
      %vm5066 = vmand %vm5064, %vm5065
      %v5067 = vld [vmem:[#allocation2] sm:$0x1]
      %v5068 = vsel %vm5066, 0, %v5067
      %5069 = vst [vmem:[#allocation2] sm:$0x1] %v5068
      %v5070 = vld [vmem:[#allocation2 + $0xc] sm:$0x1]
      %v5071 = vsel %vm5066, 0, %v5070
      %5072 = vst [vmem:[#allocation2 + $0xc] sm:$0x1] %v5071
      %v5073 = vld [vmem:[#allocation2 + $0x18] sm:$0x1]
      %v5074 = vsel %vm5066, 0, %v5073
      %5075 = vst [vmem:[#allocation2 + $0x18] sm:$0x1] %v5074
      %v5076 = vld [vmem:[#allocation2 + $0x24] sm:$0x1]
      %v5077 = vsel %vm5066, 0, %v5076
      %5078 = vst [vmem:[#allocation2 + $0x24] sm:$0x1] %v5077
      %v5079 = vld [vmem:[#allocation2 + $0x30] sm:$0x1]
      %v5080 = vsel %vm5066, 0, %v5079
      %5081 = vst [vmem:[#allocation2 + $0x30] sm:$0x1] %v5080
      %v5082 = vld [vmem:[#allocation2 + $0x3c] sm:$0x1]
      %v5083 = vsel %vm5066, 0, %v5082
      %5084 = vst [vmem:[#allocation2 + $0x3c] sm:$0x1] %v5083
      %v5085 = vld [vmem:[#allocation2 + $0x48] sm:$0x1]
      %v5086 = vsel %vm5066, 0, %v5085
      %5087 = vst [vmem:[#allocation2 + $0x48] sm:$0x1] %v5086
      %v5088 = vld [vmem:[#allocation2 + $0x54] sm:$0x1]
      %v5089 = vsel %vm5066, 0, %v5088
      %5090 = vst [vmem:[#allocation2 + $0x54] sm:$0x1] %v5089
      %v5091 = vld [vmem:[#allocation2 + $0x60] sm:$0x1]
      %v5092 = vsel %vm5066, 0, %v5091
      %5093 = vst [vmem:[#allocation2 + $0x60] sm:$0x1] %v5092
      %v5094 = vld [vmem:[#allocation2 + $0x6c] sm:$0x1]
      %v5095 = vsel %vm5066, 0, %v5094
      %5096 = vst [vmem:[#allocation2 + $0x6c] sm:$0x1] %v5095
      %v5097 = vld [vmem:[#allocation2 + $0x78] sm:$0x1]
      %v5098 = vsel %vm5066, 0, %v5097
      %5099 = vst [vmem:[#allocation2 + $0x78] sm:$0x1] %v5098
      %v5100 = vld [vmem:[#allocation2 + $0x84] sm:$0x1]
      %v5101 = vsel %vm5066, 0, %v5100
      %5102 = vst [vmem:[#allocation2 + $0x84] sm:$0x1] %v5101
      %v5103 = vld [vmem:[#allocation2 + $0x90] sm:$0x1]
      %v5104 = vsel %vm5066, 0, %v5103
      %5105 = vst [vmem:[#allocation2 + $0x90] sm:$0x1] %v5104
      %v5106 = vld [vmem:[#allocation2 + $0x9c] sm:$0x1]
      %v5107 = vsel %vm5066, 0, %v5106
      %5108 = vst [vmem:[#allocation2 + $0x9c] sm:$0x1] %v5107
      %v5109 = vld [vmem:[#allocation2 + $0xa8] sm:$0x1]
      %v5110 = vsel %vm5066, 0, %v5109
      %5111 = vst [vmem:[#allocation2 + $0xa8] sm:$0x1] %v5110
      %v5112 = vld [vmem:[#allocation2 + $0xb4] sm:$0x1]
      %v5113 = vsel %vm5066, 0, %v5112
      %5114 = vst [vmem:[#allocation2 + $0xb4] sm:$0x1] %v5113
      %v5115 = vld [vmem:[#allocation2 + $0xc0] sm:$0x1]
      %v5116 = vsel %vm5066, 0, %v5115
      %5117 = vst [vmem:[#allocation2 + $0xc0] sm:$0x1] %v5116
      %v5118 = vld [vmem:[#allocation2 + $0xcc] sm:$0x1]
      %v5119 = vsel %vm5066, 0, %v5118
      %5120 = vst [vmem:[#allocation2 + $0xcc] sm:$0x1] %v5119
      %vm5121 = vsmask.f32 7938
      %vm5122 = vmand %vm5064, %vm5121
      %v5123 = vld [vmem:[#allocation2 + $0x8] sm:$0x1]
      %v5124 = vsel %vm5122, 0, %v5123
      %5125 = vst [vmem:[#allocation2 + $0x8] sm:$0x1] %v5124
      %v5126 = vld [vmem:[#allocation2 + $0x14] sm:$0x1]
      %v5127 = vsel %vm5122, 0, %v5126
      %5128 = vst [vmem:[#allocation2 + $0x14] sm:$0x1] %v5127
      %v5129 = vld [vmem:[#allocation2 + $0x20] sm:$0x1]
      %v5130 = vsel %vm5122, 0, %v5129
      %5131 = vst [vmem:[#allocation2 + $0x20] sm:$0x1] %v5130
      %v5132 = vld [vmem:[#allocation2 + $0x2c] sm:$0x1]
      %v5133 = vsel %vm5122, 0, %v5132
      %5134 = vst [vmem:[#allocation2 + $0x2c] sm:$0x1] %v5133
      %v5135 = vld [vmem:[#allocation2 + $0x38] sm:$0x1]
      %v5136 = vsel %vm5122, 0, %v5135
      %5137 = vst [vmem:[#allocation2 + $0x38] sm:$0x1] %v5136
      %v5138 = vld [vmem:[#allocation2 + $0x44] sm:$0x1]
      %v5139 = vsel %vm5122, 0, %v5138
      %5140 = vst [vmem:[#allocation2 + $0x44] sm:$0x1] %v5139
      %v5141 = vld [vmem:[#allocation2 + $0x50] sm:$0x1]
      %v5142 = vsel %vm5122, 0, %v5141
      %5143 = vst [vmem:[#allocation2 + $0x50] sm:$0x1] %v5142
      %v5144 = vld [vmem:[#allocation2 + $0x5c] sm:$0x1]
      %v5145 = vsel %vm5122, 0, %v5144
      %5146 = vst [vmem:[#allocation2 + $0x5c] sm:$0x1] %v5145
      %v5147 = vld [vmem:[#allocation2 + $0x68] sm:$0x1]
      %v5148 = vsel %vm5122, 0, %v5147
      %5149 = vst [vmem:[#allocation2 + $0x68] sm:$0x1] %v5148
      %v5150 = vld [vmem:[#allocation2 + $0x74] sm:$0x1]
      %v5151 = vsel %vm5122, 0, %v5150
      %5152 = vst [vmem:[#allocation2 + $0x74] sm:$0x1] %v5151
      %v5153 = vld [vmem:[#allocation2 + $0x80] sm:$0x1]
      %v5154 = vsel %vm5122, 0, %v5153
      %5155 = vst [vmem:[#allocation2 + $0x80] sm:$0x1] %v5154
      %v5156 = vld [vmem:[#allocation2 + $0x8c] sm:$0x1]
      %v5157 = vsel %vm5122, 0, %v5156
      %5158 = vst [vmem:[#allocation2 + $0x8c] sm:$0x1] %v5157
      %v5159 = vld [vmem:[#allocation2 + $0x98] sm:$0x1]
      %v5160 = vsel %vm5122, 0, %v5159
      %5161 = vst [vmem:[#allocation2 + $0x98] sm:$0x1] %v5160
      %v5162 = vld [vmem:[#allocation2 + $0xa4] sm:$0x1]
      %v5163 = vsel %vm5122, 0, %v5162
      %5164 = vst [vmem:[#allocation2 + $0xa4] sm:$0x1] %v5163
      %v5165 = vld [vmem:[#allocation2 + $0xb0] sm:$0x1]
      %v5166 = vsel %vm5122, 0, %v5165
      %5167 = vst [vmem:[#allocation2 + $0xb0] sm:$0x1] %v5166
      %v5168 = vld [vmem:[#allocation2 + $0xbc] sm:$0x1]
      %v5169 = vsel %vm5122, 0, %v5168
      %5170 = vst [vmem:[#allocation2 + $0xbc] sm:$0x1] %v5169
      %v5171 = vld [vmem:[#allocation2 + $0xc8] sm:$0x1]
      %v5172 = vsel %vm5122, 0, %v5171
      %5173 = vst [vmem:[#allocation2 + $0xc8] sm:$0x1] %v5172
      %v5174 = vld [vmem:[#allocation2 + $0xd4] sm:$0x1]
      %v5175 = vsel %vm5122, 0, %v5174
      %5176 = vst [vmem:[#allocation2 + $0xd4] sm:$0x1] %v5175
      %vm5177 = vsmask.f32 4368
      %vm5178 = vmor %vm5065, %vm5177
      %v5180 = vshrl.u32 %v5028, 16
      %v5182 = vrot.slane %v5180, 7
      %v5183 = vshll.u32 %v5028, 16
      %v5185 = vor.u32 %v5182, %v5183
      %v5186 = vrot.slane %v5182, 4
      %v5188 = vshrl.u32 %v5029, 16
      %v5190 = vrot.slane %v5188, 7
      %v5191 = vshll.u32 %v5029, 16
      %v5193 = vor.u32 %v5190, %v5191
      %v5194 = vsel %vm5178, %v5186, %v5193
      %v5195 = vrot.slane %v5190, 4
      %v5197 = vshrl.u32 %v5030, 16
      %v5199 = vrot.slane %v5197, 7
      %v5200 = vshll.u32 %v5030, 16
      %v5202 = vor.u32 %v5199, %v5200
      %v5203 = vrot.slane %v5199, 4
      %v5205 = vshrl.u32 %v5031, 16
      %v5207 = vrot.slane %v5205, 7
      %v5208 = vshll.u32 %v5031, 16
      %v5210 = vor.u32 %v5207, %v5208
      %v5211 = vsel %vm5178, %v5203, %v5210
      %v5212 = vrot.slane %v5207, 4
      %v5214 = vshrl.u32 %v5032, 16
      %v5216 = vrot.slane %v5214, 7
      %v5217 = vshll.u32 %v5032, 16
      %v5219 = vor.u32 %v5216, %v5217
      %v5220 = vrot.slane %v5216, 4
      %v5222 = vshrl.u32 %v5033, 16
      %v5224 = vrot.slane %v5222, 7
      %v5225 = vshll.u32 %v5033, 16
      %v5227 = vor.u32 %v5224, %v5225
      %v5228 = vsel %vm5178, %v5220, %v5227
      %v5229 = vrot.slane %v5224, 4
      %v5231 = vshrl.u32 %v5034, 16
      %v5233 = vrot.slane %v5231, 7
      %v5234 = vshll.u32 %v5034, 16
      %v5236 = vor.u32 %v5233, %v5234
      %v5237 = vrot.slane %v5233, 4
      %v5239 = vshrl.u32 %v5035, 16
      %v5241 = vrot.slane %v5239, 7
      %v5242 = vshll.u32 %v5035, 16
      %v5244 = vor.u32 %v5241, %v5242
      %v5245 = vsel %vm5178, %v5237, %v5244
      %v5246 = vrot.slane %v5241, 4
      %v5248 = vshrl.u32 %v5036, 16
      %v5250 = vrot.slane %v5248, 7
      %v5251 = vshll.u32 %v5036, 16
      %v5253 = vor.u32 %v5250, %v5251
      %v5254 = vrot.slane %v5250, 4
      %v5256 = vshrl.u32 %v5037, 16
      %v5258 = vrot.slane %v5256, 7
      %v5259 = vshll.u32 %v5037, 16
      %v5261 = vor.u32 %v5258, %v5259
      %v5262 = vsel %vm5178, %v5254, %v5261
      %v5263 = vrot.slane %v5258, 4
      %v5265 = vshrl.u32 %v5038, 16
      %v5267 = vrot.slane %v5265, 7
      %v5268 = vshll.u32 %v5038, 16
      %v5270 = vor.u32 %v5267, %v5268
      %v5271 = vrot.slane %v5267, 4
      %v5273 = vshrl.u32 %v5039, 16
      %v5275 = vrot.slane %v5273, 7
      %v5276 = vshll.u32 %v5039, 16
      %v5278 = vor.u32 %v5275, %v5276
      %v5279 = vsel %vm5178, %v5271, %v5278
      %v5280 = vrot.slane %v5275, 4
      %v5282 = vshrl.u32 %v5040, 16
      %v5284 = vrot.slane %v5282, 7
      %v5285 = vshll.u32 %v5040, 16
      %v5287 = vor.u32 %v5284, %v5285
      %v5288 = vrot.slane %v5284, 4
      %v5290 = vshrl.u32 %v5041, 16
      %v5292 = vrot.slane %v5290, 7
      %v5293 = vshll.u32 %v5041, 16
      %v5295 = vor.u32 %v5292, %v5293
      %v5296 = vsel %vm5178, %v5288, %v5295
      %v5297 = vrot.slane %v5292, 4
      %v5299 = vshrl.u32 %v5042, 16
      %v5301 = vrot.slane %v5299, 7
      %v5302 = vshll.u32 %v5042, 16
      %v5304 = vor.u32 %v5301, %v5302
      %v5305 = vrot.slane %v5301, 4
      %v5307 = vshrl.u32 %v5043, 16
      %v5309 = vrot.slane %v5307, 7
      %v5310 = vshll.u32 %v5043, 16
      %v5312 = vor.u32 %v5309, %v5310
      %v5313 = vsel %vm5178, %v5305, %v5312
      %v5314 = vrot.slane %v5309, 4
      %v5316 = vshrl.u32 %v5044, 16
      %v5318 = vrot.slane %v5316, 7
      %v5319 = vshll.u32 %v5044, 16
      %v5321 = vor.u32 %v5318, %v5319
      %v5322 = vrot.slane %v5318, 4
      %v5324 = vshrl.u32 %v5045, 16
      %v5326 = vrot.slane %v5324, 7
      %v5327 = vshll.u32 %v5045, 16
      %v5329 = vor.u32 %v5326, %v5327
      %v5330 = vsel %vm5178, %v5322, %v5329
      %v5331 = vrot.slane %v5326, 4
      %v5333 = vshrl.u32 %v5046, 16
      %v5335 = vrot.slane %v5333, 7
      %v5336 = vshll.u32 %v5046, 16
      %v5338 = vor.u32 %v5335, %v5336
      %v5339 = vrot.slane %v5335, 4
      %v5341 = vshrl.u32 %v5047, 16
      %v5343 = vrot.slane %v5341, 7
      %v5344 = vshll.u32 %v5047, 16
      %v5346 = vor.u32 %v5343, %v5344
      %v5347 = vsel %vm5178, %v5339, %v5346
      %v5348 = vrot.slane %v5343, 4
      %v5350 = vshrl.u32 %v5048, 16
      %v5352 = vrot.slane %v5350, 7
      %v5353 = vshll.u32 %v5048, 16
      %v5355 = vor.u32 %v5352, %v5353
      %v5356 = vrot.slane %v5352, 4
      %v5358 = vshrl.u32 %v5049, 16
      %v5360 = vrot.slane %v5358, 7
      %v5361 = vshll.u32 %v5049, 16
      %v5363 = vor.u32 %v5360, %v5361
      %v5364 = vsel %vm5178, %v5356, %v5363
      %v5365 = vrot.slane %v5360, 4
      %v5367 = vshrl.u32 %v5050, 16
      %v5369 = vrot.slane %v5367, 7
      %v5370 = vshll.u32 %v5050, 16
      %v5372 = vor.u32 %v5369, %v5370
      %v5373 = vrot.slane %v5369, 4
      %v5375 = vshrl.u32 %v5051, 16
      %v5377 = vrot.slane %v5375, 7
      %v5378 = vshll.u32 %v5051, 16
      %v5380 = vor.u32 %v5377, %v5378
      %v5381 = vsel %vm5178, %v5373, %v5380
      %v5382 = vrot.slane %v5377, 4
      %v5384 = vshrl.u32 %v5052, 16
      %v5386 = vrot.slane %v5384, 7
      %v5387 = vshll.u32 %v5052, 16
      %v5389 = vor.u32 %v5386, %v5387
      %v5390 = vrot.slane %v5386, 4
      %v5392 = vshrl.u32 %v5053, 16
      %v5394 = vrot.slane %v5392, 7
      %v5395 = vshll.u32 %v5053, 16
      %v5397 = vor.u32 %v5394, %v5395
      %v5398 = vsel %vm5178, %v5390, %v5397
      %v5399 = vrot.slane %v5394, 4
      %v5401 = vshrl.u32 %v5054, 16
      %v5403 = vrot.slane %v5401, 7
      %v5404 = vshll.u32 %v5054, 16
      %v5406 = vor.u32 %v5403, %v5404
      %v5407 = vrot.slane %v5403, 4
      %v5409 = vshrl.u32 %v5055, 16
      %v5411 = vrot.slane %v5409, 7
      %v5412 = vshll.u32 %v5055, 16
      %v5414 = vor.u32 %v5411, %v5412
      %v5415 = vsel %vm5178, %v5407, %v5414
      %v5416 = vrot.slane %v5411, 4
      %v5418 = vshrl.u32 %v5056, 16
      %v5420 = vrot.slane %v5418, 7
      %v5421 = vshll.u32 %v5056, 16
      %v5423 = vor.u32 %v5420, %v5421
      %v5424 = vrot.slane %v5420, 4
      %v5426 = vshrl.u32 %v5057, 16
      %v5428 = vrot.slane %v5426, 7
      %v5429 = vshll.u32 %v5057, 16
      %v5431 = vor.u32 %v5428, %v5429
      %v5432 = vsel %vm5178, %v5424, %v5431
      %v5433 = vrot.slane %v5428, 4
      %v5435 = vshrl.u32 %v5058, 16
      %v5437 = vrot.slane %v5435, 7
      %v5438 = vshll.u32 %v5058, 16
      %v5440 = vor.u32 %v5437, %v5438
      %v5441 = vrot.slane %v5437, 4
      %v5443 = vshrl.u32 %v5059, 16
      %v5445 = vrot.slane %v5443, 7
      %v5446 = vshll.u32 %v5059, 16
      %v5448 = vor.u32 %v5445, %v5446
      %v5449 = vsel %vm5178, %v5441, %v5448
      %v5450 = vrot.slane %v5445, 4
      %v5452 = vshrl.u32 %v5060, 16
      %v5454 = vrot.slane %v5452, 7
      %v5455 = vshll.u32 %v5060, 16
      %v5457 = vor.u32 %v5454, %v5455
      %v5458 = vrot.slane %v5454, 4
      %v5460 = vshrl.u32 %v5061, 16
      %v5462 = vrot.slane %v5460, 7
      %v5463 = vshll.u32 %v5061, 16
      %v5465 = vor.u32 %v5462, %v5463
      %v5466 = vsel %vm5178, %v5458, %v5465
      %v5467 = vrot.slane %v5462, 4
      %v5469 = vshrl.u32 %v5062, 16
      %v5471 = vrot.slane %v5469, 7
      %v5472 = vshll.u32 %v5062, 16
      %v5474 = vor.u32 %v5471, %v5472
      %v5475 = vrot.slane %v5471, 4
      %v5477 = vshrl.u32 %v5063, 16
      %v5479 = vrot.slane %v5477, 7
      %v5480 = vshll.u32 %v5063, 16
      %v5482 = vor.u32 %v5479, %v5480
      %v5483 = vsel %vm5178, %v5475, %v5482
      %v5484 = vrot.slane %v5479, 4
      %vm5539 = vcmask 1043456
      %vm5540 = vmand %vm5539, %vm5121
      %v5541 = vld [vmem:[#allocation2] sm:$0xf]
      %v5542 = vsel %vm5540, %v5185, %v5541
      %5543 = vst [vmem:[#allocation2] sm:$0xf] %v5542
      %5544 = vst [vmem:[#allocation2 + $0x4] sm:$0xf] %v5194
      %v5545 = vld [vmem:[#allocation2 + $0x8] sm:$0x1]
      %v5546 = vsel %vm5066, %v5195, %v5545
      %5547 = vst [vmem:[#allocation2 + $0x8] sm:$0x1] %v5546
      %v5548 = vld [vmem:[#allocation2 + $0xc] sm:$0xf]
      %v5549 = vsel %vm5540, %v5202, %v5548
      %5550 = vst [vmem:[#allocation2 + $0xc] sm:$0xf] %v5549
      %5551 = vst [vmem:[#allocation2 + $0x10] sm:$0xf] %v5211
      %v5552 = vld [vmem:[#allocation2 + $0x14] sm:$0x1]
      %v5553 = vsel %vm5066, %v5212, %v5552
      %5554 = vst [vmem:[#allocation2 + $0x14] sm:$0x1] %v5553
      %v5555 = vld [vmem:[#allocation2 + $0x18] sm:$0xf]
      %v5556 = vsel %vm5540, %v5219, %v5555
      %5557 = vst [vmem:[#allocation2 + $0x18] sm:$0xf] %v5556
      %5558 = vst [vmem:[#allocation2 + $0x1c] sm:$0xf] %v5228
      %v5559 = vld [vmem:[#allocation2 + $0x20] sm:$0x1]
      %v5560 = vsel %vm5066, %v5229, %v5559
      %5561 = vst [vmem:[#allocation2 + $0x20] sm:$0x1] %v5560
      %v5562 = vld [vmem:[#allocation2 + $0x24] sm:$0xf]
      %v5563 = vsel %vm5540, %v5236, %v5562
      %5564 = vst [vmem:[#allocation2 + $0x24] sm:$0xf] %v5563
      %5565 = vst [vmem:[#allocation2 + $0x28] sm:$0xf] %v5245
      %v5566 = vld [vmem:[#allocation2 + $0x2c] sm:$0x1]
      %v5567 = vsel %vm5066, %v5246, %v5566
      %5568 = vst [vmem:[#allocation2 + $0x2c] sm:$0x1] %v5567
      %v5569 = vld [vmem:[#allocation2 + $0x30] sm:$0xf]
      %v5570 = vsel %vm5540, %v5253, %v5569
      %5571 = vst [vmem:[#allocation2 + $0x30] sm:$0xf] %v5570
      %5572 = vst [vmem:[#allocation2 + $0x34] sm:$0xf] %v5262
      %v5573 = vld [vmem:[#allocation2 + $0x38] sm:$0x1]
      %v5574 = vsel %vm5066, %v5263, %v5573
      %5575 = vst [vmem:[#allocation2 + $0x38] sm:$0x1] %v5574
      %v5576 = vld [vmem:[#allocation2 + $0x3c] sm:$0xf]
      %v5577 = vsel %vm5540, %v5270, %v5576
      %5578 = vst [vmem:[#allocation2 + $0x3c] sm:$0xf] %v5577
      %5579 = vst [vmem:[#allocation2 + $0x40] sm:$0xf] %v5279
      %v5580 = vld [vmem:[#allocation2 + $0x44] sm:$0x1]
      %v5581 = vsel %vm5066, %v5280, %v5580
      %5582 = vst [vmem:[#allocation2 + $0x44] sm:$0x1] %v5581
      %v5583 = vld [vmem:[#allocation2 + $0x48] sm:$0xf]
      %v5584 = vsel %vm5540, %v5287, %v5583
      %5585 = vst [vmem:[#allocation2 + $0x48] sm:$0xf] %v5584
      %5586 = vst [vmem:[#allocation2 + $0x4c] sm:$0xf] %v5296
      %v5587 = vld [vmem:[#allocation2 + $0x50] sm:$0x1]
      %v5588 = vsel %vm5066, %v5297, %v5587
      %5589 = vst [vmem:[#allocation2 + $0x50] sm:$0x1] %v5588
      %v5590 = vld [vmem:[#allocation2 + $0x54] sm:$0xf]
      %v5591 = vsel %vm5540, %v5304, %v5590
      %5592 = vst [vmem:[#allocation2 + $0x54] sm:$0xf] %v5591
      %5593 = vst [vmem:[#allocation2 + $0x58] sm:$0xf] %v5313
      %v5594 = vld [vmem:[#allocation2 + $0x5c] sm:$0x1]
      %v5595 = vsel %vm5066, %v5314, %v5594
      %5596 = vst [vmem:[#allocation2 + $0x5c] sm:$0x1] %v5595
      %v5597 = vld [vmem:[#allocation2 + $0x60] sm:$0xf]
      %v5598 = vsel %vm5540, %v5321, %v5597
      %5599 = vst [vmem:[#allocation2 + $0x60] sm:$0xf] %v5598
      %5600 = vst [vmem:[#allocation2 + $0x64] sm:$0xf] %v5330
      %v5601 = vld [vmem:[#allocation2 + $0x68] sm:$0x1]
      %v5602 = vsel %vm5066, %v5331, %v5601
      %5603 = vst [vmem:[#allocation2 + $0x68] sm:$0x1] %v5602
      %v5604 = vld [vmem:[#allocation2 + $0x6c] sm:$0xf]
      %v5605 = vsel %vm5540, %v5338, %v5604
      %5606 = vst [vmem:[#allocation2 + $0x6c] sm:$0xf] %v5605
      %5607 = vst [vmem:[#allocation2 + $0x70] sm:$0xf] %v5347
      %v5608 = vld [vmem:[#allocation2 + $0x74] sm:$0x1]
      %v5609 = vsel %vm5066, %v5348, %v5608
      %5610 = vst [vmem:[#allocation2 + $0x74] sm:$0x1] %v5609
      %v5611 = vld [vmem:[#allocation2 + $0x78] sm:$0xf]
      %v5612 = vsel %vm5540, %v5355, %v5611
      %5613 = vst [vmem:[#allocation2 + $0x78] sm:$0xf] %v5612
      %5614 = vst [vmem:[#allocation2 + $0x7c] sm:$0xf] %v5364
      %v5615 = vld [vmem:[#allocation2 + $0x80] sm:$0x1]
      %v5616 = vsel %vm5066, %v5365, %v5615
      %5617 = vst [vmem:[#allocation2 + $0x80] sm:$0x1] %v5616
      %v5618 = vld [vmem:[#allocation2 + $0x84] sm:$0xf]
      %v5619 = vsel %vm5540, %v5372, %v5618
      %5620 = vst [vmem:[#allocation2 + $0x84] sm:$0xf] %v5619
      %5621 = vst [vmem:[#allocation2 + $0x88] sm:$0xf] %v5381
      %v5622 = vld [vmem:[#allocation2 + $0x8c] sm:$0x1]
      %v5623 = vsel %vm5066, %v5382, %v5622
      %5624 = vst [vmem:[#allocation2 + $0x8c] sm:$0x1] %v5623
      %v5625 = vld [vmem:[#allocation2 + $0x90] sm:$0xf]
      %v5626 = vsel %vm5540, %v5389, %v5625
      %5627 = vst [vmem:[#allocation2 + $0x90] sm:$0xf] %v5626
      %5628 = vst [vmem:[#allocation2 + $0x94] sm:$0xf] %v5398
      %v5629 = vld [vmem:[#allocation2 + $0x98] sm:$0x1]
      %v5630 = vsel %vm5066, %v5399, %v5629
      %5631 = vst [vmem:[#allocation2 + $0x98] sm:$0x1] %v5630
      %v5632 = vld [vmem:[#allocation2 + $0x9c] sm:$0xf]
      %v5633 = vsel %vm5540, %v5406, %v5632
      %5634 = vst [vmem:[#allocation2 + $0x9c] sm:$0xf] %v5633
      %5635 = vst [vmem:[#allocation2 + $0xa0] sm:$0xf] %v5415
      %v5636 = vld [vmem:[#allocation2 + $0xa4] sm:$0x1]
      %v5637 = vsel %vm5066, %v5416, %v5636
      %5638 = vst [vmem:[#allocation2 + $0xa4] sm:$0x1] %v5637
      %v5639 = vld [vmem:[#allocation2 + $0xa8] sm:$0xf]
      %v5640 = vsel %vm5540, %v5423, %v5639
      %5641 = vst [vmem:[#allocation2 + $0xa8] sm:$0xf] %v5640
      %5642 = vst [vmem:[#allocation2 + $0xac] sm:$0xf] %v5432
      %v5643 = vld [vmem:[#allocation2 + $0xb0] sm:$0x1]
      %v5644 = vsel %vm5066, %v5433, %v5643
      %5645 = vst [vmem:[#allocation2 + $0xb0] sm:$0x1] %v5644
      %v5646 = vld [vmem:[#allocation2 + $0xb4] sm:$0xf]
      %v5647 = vsel %vm5540, %v5440, %v5646
      %5648 = vst [vmem:[#allocation2 + $0xb4] sm:$0xf] %v5647
      %5649 = vst [vmem:[#allocation2 + $0xb8] sm:$0xf] %v5449
      %v5650 = vld [vmem:[#allocation2 + $0xbc] sm:$0x1]
      %v5651 = vsel %vm5066, %v5450, %v5650
      %5652 = vst [vmem:[#allocation2 + $0xbc] sm:$0x1] %v5651
      %v5653 = vld [vmem:[#allocation2 + $0xc0] sm:$0xf]
      %v5654 = vsel %vm5540, %v5457, %v5653
      %5655 = vst [vmem:[#allocation2 + $0xc0] sm:$0xf] %v5654
      %5656 = vst [vmem:[#allocation2 + $0xc4] sm:$0xf] %v5466
      %v5657 = vld [vmem:[#allocation2 + $0xc8] sm:$0x1]
      %v5658 = vsel %vm5066, %v5467, %v5657
      %5659 = vst [vmem:[#allocation2 + $0xc8] sm:$0x1] %v5658
      %v5660 = vld [vmem:[#allocation2 + $0xcc] sm:$0xf]
      %v5661 = vsel %vm5540, %v5474, %v5660
      %5662 = vst [vmem:[#allocation2 + $0xcc] sm:$0xf] %v5661
      %5663 = vst [vmem:[#allocation2 + $0xd0] sm:$0xf] %v5483
      %v5664 = vld [vmem:[#allocation2 + $0xd4] sm:$0x1]
      %v5665 = vsel %vm5066, %v5484, %v5664
      %5666 = vst [vmem:[#allocation2 + $0xd4] sm:$0x1] %v5665
      %p5667 = scmp.eq.s32.totalorder %s23, 0
      // Predicated region
      $region49: #{spade_forward.3} parent=47 // pred_check
        %p5668 = pneg %p5667
      $region50: #{spade_forward.3} parent=47 // pred_check_branch
        %5670 = sbr.rel (%p5668) target = $region52
      $region51: #{spade_forward.3} parent=47 // pred_region
        %v5671 = vld [vmem:[#allocation2] sm:$0xf]
        %v5672 = vsel %vm5540, 0, %v5671
        %5673 = vst [vmem:[#allocation2] sm:$0xf] %v5672
        %5674 = vst [vmem:[#allocation2 + $0x4] sm:$0xf] 0
        %v5675 = vld [vmem:[#allocation2 + $0x8] sm:$0x1]
        %v5676 = vsel %vm5066, 0, %v5675
        %5677 = vst [vmem:[#allocation2 + $0x8] sm:$0x1] %v5676
        %s5678 = scalar_lea.vmem [#allocation2], 204
        %v5679 = vld [vmem:[%s5678] sm:$0xf]
        %v5680 = vsel %vm5540, 0, %v5679
        %5681 = vst [vmem:[%s5678] sm:$0xf] %v5680
        %5682 = vst [vmem:[%s5678 + $0x4] sm:$0xf] 0
        %v5683 = vld [vmem:[%s5678 + $0x8] sm:$0x1]
        %v5684 = vsel %vm5066, 0, %v5683
        %5685 = vst [vmem:[%s5678 + $0x8] sm:$0x1] %v5684
      $region52: #{spade_forward.3} parent=47 // pred_fallthru
        _
      %v5686 = vld [vmem:[#allocation2] sm:$0xf]
      %v5687 = vld [vmem:[#allocation2 + $0x4] sm:$0xf]
      %v5688 = vld [vmem:[#allocation2 + $0xc] sm:$0xf]
      %v5689 = vld [vmem:[#allocation2 + $0x10] sm:$0xf]
      %v5690 = vld [vmem:[#allocation2 + $0x18] sm:$0xf]
      %v5691 = vld [vmem:[#allocation2 + $0x1c] sm:$0xf]
      %v5692 = vld [vmem:[#allocation2 + $0x24] sm:$0xf]
      %v5693 = vld [vmem:[#allocation2 + $0x28] sm:$0xf]
      %v5694 = vld [vmem:[#allocation2 + $0x30] sm:$0xf]
      %v5695 = vld [vmem:[#allocation2 + $0x34] sm:$0xf]
      %v5696 = vld [vmem:[#allocation2 + $0x3c] sm:$0xf]
      %v5697 = vld [vmem:[#allocation2 + $0x40] sm:$0xf]
      %v5698 = vld [vmem:[#allocation2 + $0x48] sm:$0xf]
      %v5699 = vld [vmem:[#allocation2 + $0x4c] sm:$0xf]
      %v5700 = vld [vmem:[#allocation2 + $0x54] sm:$0xf]
      %v5701 = vld [vmem:[#allocation2 + $0x58] sm:$0xf]
      %v5702 = vld [vmem:[#allocation2 + $0x60] sm:$0xf]
      %v5703 = vld [vmem:[#allocation2 + $0x64] sm:$0xf]
      %v5704 = vld [vmem:[#allocation2 + $0x6c] sm:$0xf]
      %v5705 = vld [vmem:[#allocation2 + $0x70] sm:$0xf]
      %v5706 = vld [vmem:[#allocation2 + $0x78] sm:$0xf]
      %v5707 = vld [vmem:[#allocation2 + $0x7c] sm:$0xf]
      %v5708 = vld [vmem:[#allocation2 + $0x84] sm:$0xf]
      %v5709 = vld [vmem:[#allocation2 + $0x88] sm:$0xf]
      %v5710 = vld [vmem:[#allocation2 + $0x90] sm:$0xf]
      %v5711 = vld [vmem:[#allocation2 + $0x94] sm:$0xf]
      %v5712 = vld [vmem:[#allocation2 + $0x9c] sm:$0xf]
      %v5713 = vld [vmem:[#allocation2 + $0xa0] sm:$0xf]
      %v5714 = vld [vmem:[#allocation2 + $0xa8] sm:$0xf]
      %v5715 = vld [vmem:[#allocation2 + $0xac] sm:$0xf]
      %v5716 = vld [vmem:[#allocation2 + $0xb4] sm:$0xf]
      %v5717 = vld [vmem:[#allocation2 + $0xb8] sm:$0xf]
      %v5718 = vld [vmem:[#allocation2 + $0x8] sm:$0x1]
      %v5719 = vld [vmem:[#allocation2 + $0x14] sm:$0x1]
      %v5720 = vld [vmem:[#allocation2 + $0x20] sm:$0x1]
      %v5721 = vld [vmem:[#allocation2 + $0x2c] sm:$0x1]
      %v5722 = vld [vmem:[#allocation2 + $0x38] sm:$0x1]
      %v5723 = vld [vmem:[#allocation2 + $0x44] sm:$0x1]
      %v5724 = vld [vmem:[#allocation2 + $0x50] sm:$0x1]
      %v5725 = vld [vmem:[#allocation2 + $0x5c] sm:$0x1]
      %v5726 = vld [vmem:[#allocation2 + $0x68] sm:$0x1]
      %v5727 = vld [vmem:[#allocation2 + $0x74] sm:$0x1]
      %v5728 = vld [vmem:[#allocation2 + $0x80] sm:$0x1]
      %v5729 = vld [vmem:[#allocation2 + $0x8c] sm:$0x1]
      %v5730 = vld [vmem:[#allocation2 + $0x98] sm:$0x1]
      %v5731 = vld [vmem:[#allocation2 + $0xa4] sm:$0x1]
      %v5732 = vld [vmem:[#allocation2 + $0xb0] sm:$0x1]
      %v5733 = vld [vmem:[#allocation2 + $0xbc] sm:$0x1]
      %v5734 = vld [vmem:[#allocation2] sm:$0xe]
      %v5735 = vld [vmem:[#allocation2 + $0xc] sm:$0xe]
      %v5736 = vld [vmem:[#allocation2 + $0x18] sm:$0xe]
      %v5737 = vld [vmem:[#allocation2 + $0x24] sm:$0xe]
      %v5738 = vld [vmem:[#allocation2 + $0x30] sm:$0xe]
      %v5739 = vld [vmem:[#allocation2 + $0x3c] sm:$0xe]
      %v5740 = vld [vmem:[#allocation2 + $0x48] sm:$0xe]
      %v5741 = vld [vmem:[#allocation2 + $0x54] sm:$0xe]
      %v5742 = vld [vmem:[#allocation2 + $0x60] sm:$0xe]
      %v5743 = vld [vmem:[#allocation2 + $0x6c] sm:$0xe]
      %v5744 = vld [vmem:[#allocation2 + $0x78] sm:$0xe]
      %v5745 = vld [vmem:[#allocation2 + $0x84] sm:$0xe]
      %v5746 = vld [vmem:[#allocation2 + $0x90] sm:$0xe]
      %v5747 = vld [vmem:[#allocation2 + $0x9c] sm:$0xe]
      %v5748 = vld [vmem:[#allocation2 + $0xa8] sm:$0xe]
      %v5749 = vld [vmem:[#allocation2 + $0xb4] sm:$0xe]
      %v5782 = vunpack.c.l.b16 %v5686
      %v5783 = vunpack.c.l.b16 %v5687
      %v5784 = vunpack.c.l.b16 %v5688
      %v5785 = vunpack.c.l.b16 %v5689
      %v5786 = vunpack.c.l.b16 %v5690
      %v5787 = vunpack.c.l.b16 %v5691
      %v5788 = vunpack.c.l.b16 %v5692
      %v5789 = vunpack.c.l.b16 %v5693
      %v5790 = vunpack.c.l.b16 %v5694
      %v5791 = vunpack.c.l.b16 %v5695
      %v5792 = vunpack.c.l.b16 %v5696
      %v5793 = vunpack.c.l.b16 %v5697
      %v5794 = vunpack.c.l.b16 %v5698
      %v5795 = vunpack.c.l.b16 %v5699
      %v5796 = vunpack.c.l.b16 %v5700
      %v5797 = vunpack.c.l.b16 %v5701
      %v5798 = vunpack.c.l.b16 %v5702
      %v5799 = vunpack.c.l.b16 %v5703
      %v5800 = vunpack.c.l.b16 %v5704
      %v5801 = vunpack.c.l.b16 %v5705
      %v5802 = vunpack.c.l.b16 %v5706
      %v5803 = vunpack.c.l.b16 %v5707
      %v5804 = vunpack.c.l.b16 %v5708
      %v5805 = vunpack.c.l.b16 %v5709
      %v5806 = vunpack.c.l.b16 %v5710
      %v5807 = vunpack.c.l.b16 %v5711
      %v5808 = vunpack.c.l.b16 %v5712
      %v5809 = vunpack.c.l.b16 %v5713
      %v5810 = vunpack.c.l.b16 %v5714
      %v5811 = vunpack.c.l.b16 %v5715
      %v5812 = vunpack.c.l.b16 %v5716
      %v5813 = vunpack.c.l.b16 %v5717
      %v5814 = vpack.c.b16 %v5783, %v5782
      %v5815 = vpack.c.b16 %v5785, %v5784
      %v5816 = vpack.c.b16 %v5787, %v5786
      %v5817 = vpack.c.b16 %v5789, %v5788
      %v5818 = vpack.c.b16 %v5791, %v5790
      %v5819 = vpack.c.b16 %v5793, %v5792
      %v5820 = vpack.c.b16 %v5795, %v5794
      %v5821 = vpack.c.b16 %v5797, %v5796
      %v5822 = vpack.c.b16 %v5799, %v5798
      %v5823 = vpack.c.b16 %v5801, %v5800
      %v5824 = vpack.c.b16 %v5803, %v5802
      %v5825 = vpack.c.b16 %v5805, %v5804
      %v5826 = vpack.c.b16 %v5807, %v5806
      %v5827 = vpack.c.b16 %v5809, %v5808
      %v5828 = vpack.c.b16 %v5811, %v5810
      %v5829 = vpack.c.b16 %v5813, %v5812
      %v5862 = vunpack.c.l.b16 %v5718
      %v5863 = vunpack.c.l.b16 %v5719
      %v5864 = vunpack.c.l.b16 %v5720
      %v5865 = vunpack.c.l.b16 %v5721
      %v5866 = vunpack.c.l.b16 %v5722
      %v5867 = vunpack.c.l.b16 %v5723
      %v5868 = vunpack.c.l.b16 %v5724
      %v5869 = vunpack.c.l.b16 %v5725
      %v5870 = vunpack.c.l.b16 %v5726
      %v5871 = vunpack.c.l.b16 %v5727
      %v5872 = vunpack.c.l.b16 %v5728
      %v5873 = vunpack.c.l.b16 %v5729
      %v5874 = vunpack.c.l.b16 %v5730
      %v5875 = vunpack.c.l.b16 %v5731
      %v5876 = vunpack.c.l.b16 %v5732
      %v5877 = vunpack.c.l.b16 %v5733
      %v5878 = vpack.c.b16 %v5862, %v5862
      %v5879 = vpack.c.b16 %v5863, %v5863
      %v5880 = vpack.c.b16 %v5864, %v5864
      %v5881 = vpack.c.b16 %v5865, %v5865
      %v5882 = vpack.c.b16 %v5866, %v5866
      %v5883 = vpack.c.b16 %v5867, %v5867
      %v5884 = vpack.c.b16 %v5868, %v5868
      %v5885 = vpack.c.b16 %v5869, %v5869
      %v5886 = vpack.c.b16 %v5870, %v5870
      %v5887 = vpack.c.b16 %v5871, %v5871
      %v5888 = vpack.c.b16 %v5872, %v5872
      %v5889 = vpack.c.b16 %v5873, %v5873
      %v5890 = vpack.c.b16 %v5874, %v5874
      %v5891 = vpack.c.b16 %v5875, %v5875
      %v5892 = vpack.c.b16 %v5876, %v5876
      %v5893 = vpack.c.b16 %v5877, %v5877
      %vm5894 = vsmask.f32 7424
      %v5896 = vshrl.u32 %v5814, 16
      %v5898 = vshll.u32 %v5814, 16
      %v5900 = vrot.slane %v5898, 1
      %v5901 = vor.u32 %v5896, %v5900
      %v5903 = vshll.u32 %v5878, 16
      %v5905 = vrot.slane %v5903, 1
      %v5906 = vsel %vm5894, %v5901, %v5905
      %v5908 = vshrl.u32 %v5815, 16
      %v5910 = vshll.u32 %v5815, 16
      %v5912 = vrot.slane %v5910, 1
      %v5913 = vor.u32 %v5908, %v5912
      %v5915 = vshll.u32 %v5879, 16
      %v5917 = vrot.slane %v5915, 1
      %v5918 = vsel %vm5894, %v5913, %v5917
      %v5920 = vshrl.u32 %v5816, 16
      %v5922 = vshll.u32 %v5816, 16
      %v5924 = vrot.slane %v5922, 1
      %v5925 = vor.u32 %v5920, %v5924
      %v5927 = vshll.u32 %v5880, 16
      %v5929 = vrot.slane %v5927, 1
      %v5930 = vsel %vm5894, %v5925, %v5929
      %v5932 = vshrl.u32 %v5817, 16
      %v5934 = vshll.u32 %v5817, 16
      %v5936 = vrot.slane %v5934, 1
      %v5937 = vor.u32 %v5932, %v5936
      %v5939 = vshll.u32 %v5881, 16
      %v5941 = vrot.slane %v5939, 1
      %v5942 = vsel %vm5894, %v5937, %v5941
      %v5944 = vshrl.u32 %v5818, 16
      %v5946 = vshll.u32 %v5818, 16
      %v5948 = vrot.slane %v5946, 1
      %v5949 = vor.u32 %v5944, %v5948
      %v5951 = vshll.u32 %v5882, 16
      %v5953 = vrot.slane %v5951, 1
      %v5954 = vsel %vm5894, %v5949, %v5953
      %v5956 = vshrl.u32 %v5819, 16
      %v5958 = vshll.u32 %v5819, 16
      %v5960 = vrot.slane %v5958, 1
      %v5961 = vor.u32 %v5956, %v5960
      %v5963 = vshll.u32 %v5883, 16
      %v5965 = vrot.slane %v5963, 1
      %v5966 = vsel %vm5894, %v5961, %v5965
      %v5968 = vshrl.u32 %v5820, 16
      %v5970 = vshll.u32 %v5820, 16
      %v5972 = vrot.slane %v5970, 1
      %v5973 = vor.u32 %v5968, %v5972
      %v5975 = vshll.u32 %v5884, 16
      %v5977 = vrot.slane %v5975, 1
      %v5978 = vsel %vm5894, %v5973, %v5977
      %v5980 = vshrl.u32 %v5821, 16
      %v5982 = vshll.u32 %v5821, 16
      %v5984 = vrot.slane %v5982, 1
      %v5985 = vor.u32 %v5980, %v5984
      %v5987 = vshll.u32 %v5885, 16
      %v5989 = vrot.slane %v5987, 1
      %v5990 = vsel %vm5894, %v5985, %v5989
      %v5992 = vshrl.u32 %v5822, 16
      %v5994 = vshll.u32 %v5822, 16
      %v5996 = vrot.slane %v5994, 1
      %v5997 = vor.u32 %v5992, %v5996
      %v5999 = vshll.u32 %v5886, 16
      %v6001 = vrot.slane %v5999, 1
      %v6002 = vsel %vm5894, %v5997, %v6001
      %v6004 = vshrl.u32 %v5823, 16
      %v6006 = vshll.u32 %v5823, 16
      %v6008 = vrot.slane %v6006, 1
      %v6009 = vor.u32 %v6004, %v6008
      %v6011 = vshll.u32 %v5887, 16
      %v6013 = vrot.slane %v6011, 1
      %v6014 = vsel %vm5894, %v6009, %v6013
      %v6016 = vshrl.u32 %v5824, 16
      %v6018 = vshll.u32 %v5824, 16
      %v6020 = vrot.slane %v6018, 1
      %v6021 = vor.u32 %v6016, %v6020
      %v6023 = vshll.u32 %v5888, 16
      %v6025 = vrot.slane %v6023, 1
      %v6026 = vsel %vm5894, %v6021, %v6025
      %v6028 = vshrl.u32 %v5825, 16
      %v6030 = vshll.u32 %v5825, 16
      %v6032 = vrot.slane %v6030, 1
      %v6033 = vor.u32 %v6028, %v6032
      %v6035 = vshll.u32 %v5889, 16
      %v6037 = vrot.slane %v6035, 1
      %v6038 = vsel %vm5894, %v6033, %v6037
      %v6040 = vshrl.u32 %v5826, 16
      %v6042 = vshll.u32 %v5826, 16
      %v6044 = vrot.slane %v6042, 1
      %v6045 = vor.u32 %v6040, %v6044
      %v6047 = vshll.u32 %v5890, 16
      %v6049 = vrot.slane %v6047, 1
      %v6050 = vsel %vm5894, %v6045, %v6049
      %v6052 = vshrl.u32 %v5827, 16
      %v6054 = vshll.u32 %v5827, 16
      %v6056 = vrot.slane %v6054, 1
      %v6057 = vor.u32 %v6052, %v6056
      %v6059 = vshll.u32 %v5891, 16
      %v6061 = vrot.slane %v6059, 1
      %v6062 = vsel %vm5894, %v6057, %v6061
      %v6064 = vshrl.u32 %v5828, 16
      %v6066 = vshll.u32 %v5828, 16
      %v6068 = vrot.slane %v6066, 1
      %v6069 = vor.u32 %v6064, %v6068
      %v6071 = vshll.u32 %v5892, 16
      %v6073 = vrot.slane %v6071, 1
      %v6074 = vsel %vm5894, %v6069, %v6073
      %v6076 = vshrl.u32 %v5829, 16
      %v6078 = vshll.u32 %v5829, 16
      %v6080 = vrot.slane %v6078, 1
      %v6081 = vor.u32 %v6076, %v6080
      %v6083 = vshll.u32 %v5893, 16
      %v6085 = vrot.slane %v6083, 1
      %v6086 = vsel %vm5894, %v6081, %v6085
      %v6119 = vunpack.c.l.b16 %v5734
      %v6120 = vunpack.c.l.b16 %v5735
      %v6121 = vunpack.c.l.b16 %v5736
      %v6122 = vunpack.c.l.b16 %v5737
      %v6123 = vunpack.c.l.b16 %v5738
      %v6124 = vunpack.c.l.b16 %v5739
      %v6125 = vunpack.c.l.b16 %v5740
      %v6126 = vunpack.c.l.b16 %v5741
      %v6127 = vunpack.c.l.b16 %v5742
      %v6128 = vunpack.c.l.b16 %v5743
      %v6129 = vunpack.c.l.b16 %v5744
      %v6130 = vunpack.c.l.b16 %v5745
      %v6131 = vunpack.c.l.b16 %v5746
      %v6132 = vunpack.c.l.b16 %v5747
      %v6133 = vunpack.c.l.b16 %v5748
      %v6134 = vunpack.c.l.b16 %v5749
      %v6135 = vpack.c.b16 %v5783, %v6119
      %v6136 = vpack.c.b16 %v5785, %v6120
      %v6137 = vpack.c.b16 %v5787, %v6121
      %v6138 = vpack.c.b16 %v5789, %v6122
      %v6139 = vpack.c.b16 %v5791, %v6123
      %v6140 = vpack.c.b16 %v5793, %v6124
      %v6141 = vpack.c.b16 %v5795, %v6125
      %v6142 = vpack.c.b16 %v5797, %v6126
      %v6143 = vpack.c.b16 %v5799, %v6127
      %v6144 = vpack.c.b16 %v5801, %v6128
      %v6145 = vpack.c.b16 %v5803, %v6129
      %v6146 = vpack.c.b16 %v5805, %v6130
      %v6147 = vpack.c.b16 %v5807, %v6131
      %v6148 = vpack.c.b16 %v5809, %v6132
      %v6149 = vpack.c.b16 %v5811, %v6133
      %v6150 = vpack.c.b16 %v5813, %v6134
      %vm6151 = vcmask 1046528
      %v6152 = vrot.slane %v6135, 1
      %v6153 = vrot.slane %v5878, 1
      %v6154 = vsel %vm6151, %v6152, %v6153
      %v6155 = vrot.slane %v6136, 1
      %v6156 = vrot.slane %v5879, 1
      %v6157 = vsel %vm6151, %v6155, %v6156
      %v6158 = vrot.slane %v6137, 1
      %v6159 = vrot.slane %v5880, 1
      %v6160 = vsel %vm6151, %v6158, %v6159
      %v6161 = vrot.slane %v6138, 1
      %v6162 = vrot.slane %v5881, 1
      %v6163 = vsel %vm6151, %v6161, %v6162
      %v6164 = vrot.slane %v6139, 1
      %v6165 = vrot.slane %v5882, 1
      %v6166 = vsel %vm6151, %v6164, %v6165
      %v6167 = vrot.slane %v6140, 1
      %v6168 = vrot.slane %v5883, 1
      %v6169 = vsel %vm6151, %v6167, %v6168
      %v6170 = vrot.slane %v6141, 1
      %v6171 = vrot.slane %v5884, 1
      %v6172 = vsel %vm6151, %v6170, %v6171
      %v6173 = vrot.slane %v6142, 1
      %v6174 = vrot.slane %v5885, 1
      %v6175 = vsel %vm6151, %v6173, %v6174
      %v6176 = vrot.slane %v6143, 1
      %v6177 = vrot.slane %v5886, 1
      %v6178 = vsel %vm6151, %v6176, %v6177
      %v6179 = vrot.slane %v6144, 1
      %v6180 = vrot.slane %v5887, 1
      %v6181 = vsel %vm6151, %v6179, %v6180
      %v6182 = vrot.slane %v6145, 1
      %v6183 = vrot.slane %v5888, 1
      %v6184 = vsel %vm6151, %v6182, %v6183
      %v6185 = vrot.slane %v6146, 1
      %v6186 = vrot.slane %v5889, 1
      %v6187 = vsel %vm6151, %v6185, %v6186
      %v6188 = vrot.slane %v6147, 1
      %v6189 = vrot.slane %v5890, 1
      %v6190 = vsel %vm6151, %v6188, %v6189
      %v6191 = vrot.slane %v6148, 1
      %v6192 = vrot.slane %v5891, 1
      %v6193 = vsel %vm6151, %v6191, %v6192
      %v6194 = vrot.slane %v6149, 1
      %v6195 = vrot.slane %v5892, 1
      %v6196 = vsel %vm6151, %v6194, %v6195
      %v6197 = vrot.slane %v6150, 1
      %v6198 = vrot.slane %v5893, 1
      %v6199 = vsel %vm6151, %v6197, %v6198
      %v6216 = vld [vmem:[%s5] sm:$0xff]
      %v6217 = vld [vmem:[%s5 + $0x8] sm:$0xff]
      %v6218 = vld [vmem:[%s5 + $0x10] sm:$0xff]
      %v6219 = vld [vmem:[%s5 + $0x18] sm:$0xff]
      %v6220 = vld [vmem:[%s5 + $0x20] sm:$0xff]
      %v6221 = vld [vmem:[%s5 + $0x28] sm:$0xff]
      %v6222 = vld [vmem:[%s5 + $0x30] sm:$0xff]
      %v6223 = vld [vmem:[%s5 + $0x38] sm:$0xff]
      %v6224 = vld [vmem:[%s5 + $0x40] sm:$0xff]
      %v6225 = vld [vmem:[%s5 + $0x48] sm:$0xff]
      %v6226 = vld [vmem:[%s5 + $0x50] sm:$0xff]
      %v6227 = vld [vmem:[%s5 + $0x58] sm:$0xff]
      %v6228 = vld [vmem:[%s5 + $0x60] sm:$0xff]
      %v6229 = vld [vmem:[%s5 + $0x68] sm:$0xff]
      %v6230 = vld [vmem:[%s5 + $0x70] sm:$0xff]
      %v6231 = vld [vmem:[%s5 + $0x78] sm:$0xff]
      %v6232 = vld [vmem:[%s5 + $0x80] sm:$0xff]
      %v6233 = vld [vmem:[%s5 + $0x88] sm:$0xff]
      %v6234 = vld [vmem:[%s5 + $0x90] sm:$0xff]
      %v6235 = vld [vmem:[%s5 + $0x98] sm:$0xff]
      %v6236 = vld [vmem:[%s5 + $0xa0] sm:$0xff]
      %v6237 = vld [vmem:[%s5 + $0xa8] sm:$0xff]
      %v6238 = vld [vmem:[%s5 + $0xb0] sm:$0xff]
      %v6239 = vld [vmem:[%s5 + $0xb8] sm:$0xff]
      %v6240 = vld [vmem:[%s5 + $0xc0] sm:$0xff]
      %v6241 = vld [vmem:[%s5 + $0xc8] sm:$0xff]
      %v6242 = vld [vmem:[%s5 + $0xd0] sm:$0xff]
      %v6243 = vld [vmem:[%s5 + $0xd8] sm:$0xff]
      %v6244 = vld [vmem:[%s5 + $0xe0] sm:$0xff]
      %v6245 = vld [vmem:[%s5 + $0xe8] sm:$0xff]
      %v6246 = vld [vmem:[%s5 + $0xf0] sm:$0xff]
      %v6247 = vld [vmem:[%s5 + $0xf8] sm:$0xff]
      %v6248 = vld [vmem:[%s5 + $0x100] sm:$0xff]
      %v6249 = vld [vmem:[%s5 + $0x108] sm:$0xff]
      %v6250 = vld [vmem:[%s5 + $0x110] sm:$0xff]
      %v6251 = vld [vmem:[%s5 + $0x118] sm:$0xff]
      %v6252 = vld [vmem:[%s5 + $0x120] sm:$0xff]
      %v6253 = vld [vmem:[%s5 + $0x128] sm:$0xff]
      %v6254 = vld [vmem:[%s5 + $0x130] sm:$0xff]
      %v6255 = vld [vmem:[%s5 + $0x138] sm:$0xff]
      %v6256 = vld [vmem:[%s5 + $0x140] sm:$0xff]
      %v6257 = vld [vmem:[%s5 + $0x148] sm:$0xff]
      %v6258 = vld [vmem:[%s5 + $0x150] sm:$0xff]
      %v6259 = vld [vmem:[%s5 + $0x158] sm:$0xff]
      %v6260 = vld [vmem:[%s5 + $0x160] sm:$0xff]
      %v6261 = vld [vmem:[%s5 + $0x168] sm:$0xff]
      %v6262 = vld [vmem:[%s5 + $0x170] sm:$0xff]
      %v6263 = vld [vmem:[%s5 + $0x178] sm:$0xff]
      %s6264 = scalar_lea.vmem [#allocation2], 12
      %v6265 = vld [vmem:[%s6264] sm:$0xf]
      %v6266 = vld [vmem:[%s6264 + $0x4] sm:$0xf]
      %v6267 = vld [vmem:[%s6264 + $0xc] sm:$0xf]
      %v6268 = vld [vmem:[%s6264 + $0x10] sm:$0xf]
      %v6269 = vld [vmem:[%s6264 + $0x18] sm:$0xf]
      %v6270 = vld [vmem:[%s6264 + $0x1c] sm:$0xf]
      %v6271 = vld [vmem:[%s6264 + $0x24] sm:$0xf]
      %v6272 = vld [vmem:[%s6264 + $0x28] sm:$0xf]
      %v6273 = vld [vmem:[%s6264 + $0x30] sm:$0xf]
      %v6274 = vld [vmem:[%s6264 + $0x34] sm:$0xf]
      %v6275 = vld [vmem:[%s6264 + $0x3c] sm:$0xf]
      %v6276 = vld [vmem:[%s6264 + $0x40] sm:$0xf]
      %v6277 = vld [vmem:[%s6264 + $0x48] sm:$0xf]
      %v6278 = vld [vmem:[%s6264 + $0x4c] sm:$0xf]
      %v6279 = vld [vmem:[%s6264 + $0x54] sm:$0xf]
      %v6280 = vld [vmem:[%s6264 + $0x58] sm:$0xf]
      %v6281 = vld [vmem:[%s6264 + $0x60] sm:$0xf]
      %v6282 = vld [vmem:[%s6264 + $0x64] sm:$0xf]
      %v6283 = vld [vmem:[%s6264 + $0x6c] sm:$0xf]
      %v6284 = vld [vmem:[%s6264 + $0x70] sm:$0xf]
      %v6285 = vld [vmem:[%s6264 + $0x78] sm:$0xf]
      %v6286 = vld [vmem:[%s6264 + $0x7c] sm:$0xf]
      %v6287 = vld [vmem:[%s6264 + $0x84] sm:$0xf]
      %v6288 = vld [vmem:[%s6264 + $0x88] sm:$0xf]
      %v6289 = vld [vmem:[%s6264 + $0x90] sm:$0xf]
      %v6290 = vld [vmem:[%s6264 + $0x94] sm:$0xf]
      %v6291 = vld [vmem:[%s6264 + $0x9c] sm:$0xf]
      %v6292 = vld [vmem:[%s6264 + $0xa0] sm:$0xf]
      %v6293 = vld [vmem:[%s6264 + $0xa8] sm:$0xf]
      %v6294 = vld [vmem:[%s6264 + $0xac] sm:$0xf]
      %v6295 = vld [vmem:[%s6264 + $0xb4] sm:$0xf]
      %v6296 = vld [vmem:[%s6264 + $0xb8] sm:$0xf]
      %v6297 = vld [vmem:[%s6264 + $0x8] sm:$0x1]
      %v6298 = vld [vmem:[%s6264 + $0x14] sm:$0x1]
      %v6299 = vld [vmem:[%s6264 + $0x20] sm:$0x1]
      %v6300 = vld [vmem:[%s6264 + $0x2c] sm:$0x1]
      %v6301 = vld [vmem:[%s6264 + $0x38] sm:$0x1]
      %v6302 = vld [vmem:[%s6264 + $0x44] sm:$0x1]
      %v6303 = vld [vmem:[%s6264 + $0x50] sm:$0x1]
      %v6304 = vld [vmem:[%s6264 + $0x5c] sm:$0x1]
      %v6305 = vld [vmem:[%s6264 + $0x68] sm:$0x1]
      %v6306 = vld [vmem:[%s6264 + $0x74] sm:$0x1]
      %v6307 = vld [vmem:[%s6264 + $0x80] sm:$0x1]
      %v6308 = vld [vmem:[%s6264 + $0x8c] sm:$0x1]
      %v6309 = vld [vmem:[%s6264 + $0x98] sm:$0x1]
      %v6310 = vld [vmem:[%s6264 + $0xa4] sm:$0x1]
      %v6311 = vld [vmem:[%s6264 + $0xb0] sm:$0x1]
      %v6312 = vld [vmem:[%s6264 + $0xbc] sm:$0x1]
      %v6313 = vld [vmem:[%s6264] sm:$0xe]
      %v6314 = vld [vmem:[%s6264 + $0xc] sm:$0xe]
      %v6315 = vld [vmem:[%s6264 + $0x18] sm:$0xe]
      %v6316 = vld [vmem:[%s6264 + $0x24] sm:$0xe]
      %v6317 = vld [vmem:[%s6264 + $0x30] sm:$0xe]
      %v6318 = vld [vmem:[%s6264 + $0x3c] sm:$0xe]
      %v6319 = vld [vmem:[%s6264 + $0x48] sm:$0xe]
      %v6320 = vld [vmem:[%s6264 + $0x54] sm:$0xe]
      %v6321 = vld [vmem:[%s6264 + $0x60] sm:$0xe]
      %v6322 = vld [vmem:[%s6264 + $0x6c] sm:$0xe]
      %v6323 = vld [vmem:[%s6264 + $0x78] sm:$0xe]
      %v6324 = vld [vmem:[%s6264 + $0x84] sm:$0xe]
      %v6325 = vld [vmem:[%s6264 + $0x90] sm:$0xe]
      %v6326 = vld [vmem:[%s6264 + $0x9c] sm:$0xe]
      %v6327 = vld [vmem:[%s6264 + $0xa8] sm:$0xe]
      %v6328 = vld [vmem:[%s6264 + $0xb4] sm:$0xe]
      %v6361 = vunpack.c.l.b16 %v6265
      %v6362 = vunpack.c.l.b16 %v6266
      %v6363 = vunpack.c.l.b16 %v6267
      %v6364 = vunpack.c.l.b16 %v6268
      %v6365 = vunpack.c.l.b16 %v6269
      %v6366 = vunpack.c.l.b16 %v6270
      %v6367 = vunpack.c.l.b16 %v6271
      %v6368 = vunpack.c.l.b16 %v6272
      %v6369 = vunpack.c.l.b16 %v6273
      %v6370 = vunpack.c.l.b16 %v6274
      %v6371 = vunpack.c.l.b16 %v6275
      %v6372 = vunpack.c.l.b16 %v6276
      %v6373 = vunpack.c.l.b16 %v6277
      %v6374 = vunpack.c.l.b16 %v6278
      %v6375 = vunpack.c.l.b16 %v6279
      %v6376 = vunpack.c.l.b16 %v6280
      %v6377 = vunpack.c.l.b16 %v6281
      %v6378 = vunpack.c.l.b16 %v6282
      %v6379 = vunpack.c.l.b16 %v6283
      %v6380 = vunpack.c.l.b16 %v6284
      %v6381 = vunpack.c.l.b16 %v6285
      %v6382 = vunpack.c.l.b16 %v6286
      %v6383 = vunpack.c.l.b16 %v6287
      %v6384 = vunpack.c.l.b16 %v6288
      %v6385 = vunpack.c.l.b16 %v6289
      %v6386 = vunpack.c.l.b16 %v6290
      %v6387 = vunpack.c.l.b16 %v6291
      %v6388 = vunpack.c.l.b16 %v6292
      %v6389 = vunpack.c.l.b16 %v6293
      %v6390 = vunpack.c.l.b16 %v6294
      %v6391 = vunpack.c.l.b16 %v6295
      %v6392 = vunpack.c.l.b16 %v6296
      %v6393 = vpack.c.b16 %v6362, %v6361
      %v6394 = vpack.c.b16 %v6364, %v6363
      %v6395 = vpack.c.b16 %v6366, %v6365
      %v6396 = vpack.c.b16 %v6368, %v6367
      %v6397 = vpack.c.b16 %v6370, %v6369
      %v6398 = vpack.c.b16 %v6372, %v6371
      %v6399 = vpack.c.b16 %v6374, %v6373
      %v6400 = vpack.c.b16 %v6376, %v6375
      %v6401 = vpack.c.b16 %v6378, %v6377
      %v6402 = vpack.c.b16 %v6380, %v6379
      %v6403 = vpack.c.b16 %v6382, %v6381
      %v6404 = vpack.c.b16 %v6384, %v6383
      %v6405 = vpack.c.b16 %v6386, %v6385
      %v6406 = vpack.c.b16 %v6388, %v6387
      %v6407 = vpack.c.b16 %v6390, %v6389
      %v6408 = vpack.c.b16 %v6392, %v6391
      %v6441 = vunpack.c.l.b16 %v6297
      %v6442 = vunpack.c.l.b16 %v6298
      %v6443 = vunpack.c.l.b16 %v6299
      %v6444 = vunpack.c.l.b16 %v6300
      %v6445 = vunpack.c.l.b16 %v6301
      %v6446 = vunpack.c.l.b16 %v6302
      %v6447 = vunpack.c.l.b16 %v6303
      %v6448 = vunpack.c.l.b16 %v6304
      %v6449 = vunpack.c.l.b16 %v6305
      %v6450 = vunpack.c.l.b16 %v6306
      %v6451 = vunpack.c.l.b16 %v6307
      %v6452 = vunpack.c.l.b16 %v6308
      %v6453 = vunpack.c.l.b16 %v6309
      %v6454 = vunpack.c.l.b16 %v6310
      %v6455 = vunpack.c.l.b16 %v6311
      %v6456 = vunpack.c.l.b16 %v6312
      %v6457 = vpack.c.b16 %v6441, %v6441
      %v6458 = vpack.c.b16 %v6442, %v6442
      %v6459 = vpack.c.b16 %v6443, %v6443
      %v6460 = vpack.c.b16 %v6444, %v6444
      %v6461 = vpack.c.b16 %v6445, %v6445
      %v6462 = vpack.c.b16 %v6446, %v6446
      %v6463 = vpack.c.b16 %v6447, %v6447
      %v6464 = vpack.c.b16 %v6448, %v6448
      %v6465 = vpack.c.b16 %v6449, %v6449
      %v6466 = vpack.c.b16 %v6450, %v6450
      %v6467 = vpack.c.b16 %v6451, %v6451
      %v6468 = vpack.c.b16 %v6452, %v6452
      %v6469 = vpack.c.b16 %v6453, %v6453
      %v6470 = vpack.c.b16 %v6454, %v6454
      %v6471 = vpack.c.b16 %v6455, %v6455
      %v6472 = vpack.c.b16 %v6456, %v6456
      %v6474 = vshrl.u32 %v6393, 16
      %v6476 = vshll.u32 %v6393, 16
      %v6478 = vrot.slane %v6476, 1
      %v6479 = vor.u32 %v6474, %v6478
      %v6481 = vshll.u32 %v6457, 16
      %v6483 = vrot.slane %v6481, 1
      %v6484 = vsel %vm5894, %v6479, %v6483
      %v6486 = vshrl.u32 %v6394, 16
      %v6488 = vshll.u32 %v6394, 16
      %v6490 = vrot.slane %v6488, 1
      %v6491 = vor.u32 %v6486, %v6490
      %v6493 = vshll.u32 %v6458, 16
      %v6495 = vrot.slane %v6493, 1
      %v6496 = vsel %vm5894, %v6491, %v6495
      %v6498 = vshrl.u32 %v6395, 16
      %v6500 = vshll.u32 %v6395, 16
      %v6502 = vrot.slane %v6500, 1
      %v6503 = vor.u32 %v6498, %v6502
      %v6505 = vshll.u32 %v6459, 16
      %v6507 = vrot.slane %v6505, 1
      %v6508 = vsel %vm5894, %v6503, %v6507
      %v6510 = vshrl.u32 %v6396, 16
      %v6512 = vshll.u32 %v6396, 16
      %v6514 = vrot.slane %v6512, 1
      %v6515 = vor.u32 %v6510, %v6514
      %v6517 = vshll.u32 %v6460, 16
      %v6519 = vrot.slane %v6517, 1
      %v6520 = vsel %vm5894, %v6515, %v6519
      %v6522 = vshrl.u32 %v6397, 16
      %v6524 = vshll.u32 %v6397, 16
      %v6526 = vrot.slane %v6524, 1
      %v6527 = vor.u32 %v6522, %v6526
      %v6529 = vshll.u32 %v6461, 16
      %v6531 = vrot.slane %v6529, 1
      %v6532 = vsel %vm5894, %v6527, %v6531
      %v6534 = vshrl.u32 %v6398, 16
      %v6536 = vshll.u32 %v6398, 16
      %v6538 = vrot.slane %v6536, 1
      %v6539 = vor.u32 %v6534, %v6538
      %v6541 = vshll.u32 %v6462, 16
      %v6543 = vrot.slane %v6541, 1
      %v6544 = vsel %vm5894, %v6539, %v6543
      %v6546 = vshrl.u32 %v6399, 16
      %v6548 = vshll.u32 %v6399, 16
      %v6550 = vrot.slane %v6548, 1
      %v6551 = vor.u32 %v6546, %v6550
      %v6553 = vshll.u32 %v6463, 16
      %v6555 = vrot.slane %v6553, 1
      %v6556 = vsel %vm5894, %v6551, %v6555
      %v6558 = vshrl.u32 %v6400, 16
      %v6560 = vshll.u32 %v6400, 16
      %v6562 = vrot.slane %v6560, 1
      %v6563 = vor.u32 %v6558, %v6562
      %v6565 = vshll.u32 %v6464, 16
      %v6567 = vrot.slane %v6565, 1
      %v6568 = vsel %vm5894, %v6563, %v6567
      %v6570 = vshrl.u32 %v6401, 16
      %v6572 = vshll.u32 %v6401, 16
      %v6574 = vrot.slane %v6572, 1
      %v6575 = vor.u32 %v6570, %v6574
      %v6577 = vshll.u32 %v6465, 16
      %v6579 = vrot.slane %v6577, 1
      %v6580 = vsel %vm5894, %v6575, %v6579
      %v6582 = vshrl.u32 %v6402, 16
      %v6584 = vshll.u32 %v6402, 16
      %v6586 = vrot.slane %v6584, 1
      %v6587 = vor.u32 %v6582, %v6586
      %v6589 = vshll.u32 %v6466, 16
      %v6591 = vrot.slane %v6589, 1
      %v6592 = vsel %vm5894, %v6587, %v6591
      %v6594 = vshrl.u32 %v6403, 16
      %v6596 = vshll.u32 %v6403, 16
      %v6598 = vrot.slane %v6596, 1
      %v6599 = vor.u32 %v6594, %v6598
      %v6601 = vshll.u32 %v6467, 16
      %v6603 = vrot.slane %v6601, 1
      %v6604 = vsel %vm5894, %v6599, %v6603
      %v6606 = vshrl.u32 %v6404, 16
      %v6608 = vshll.u32 %v6404, 16
      %v6610 = vrot.slane %v6608, 1
      %v6611 = vor.u32 %v6606, %v6610
      %v6613 = vshll.u32 %v6468, 16
      %v6615 = vrot.slane %v6613, 1
      %v6616 = vsel %vm5894, %v6611, %v6615
      %v6618 = vshrl.u32 %v6405, 16
      %v6620 = vshll.u32 %v6405, 16
      %v6622 = vrot.slane %v6620, 1
      %v6623 = vor.u32 %v6618, %v6622
      %v6625 = vshll.u32 %v6469, 16
      %v6627 = vrot.slane %v6625, 1
      %v6628 = vsel %vm5894, %v6623, %v6627
      %v6630 = vshrl.u32 %v6406, 16
      %v6632 = vshll.u32 %v6406, 16
      %v6634 = vrot.slane %v6632, 1
      %v6635 = vor.u32 %v6630, %v6634
      %v6637 = vshll.u32 %v6470, 16
      %v6639 = vrot.slane %v6637, 1
      %v6640 = vsel %vm5894, %v6635, %v6639
      %v6642 = vshrl.u32 %v6407, 16
      %v6644 = vshll.u32 %v6407, 16
      %v6646 = vrot.slane %v6644, 1
      %v6647 = vor.u32 %v6642, %v6646
      %v6649 = vshll.u32 %v6471, 16
      %v6651 = vrot.slane %v6649, 1
      %v6652 = vsel %vm5894, %v6647, %v6651
      %v6654 = vshrl.u32 %v6408, 16
      %v6656 = vshll.u32 %v6408, 16
      %v6658 = vrot.slane %v6656, 1
      %v6659 = vor.u32 %v6654, %v6658
      %v6661 = vshll.u32 %v6472, 16
      %v6663 = vrot.slane %v6661, 1
      %v6664 = vsel %vm5894, %v6659, %v6663
      %v6697 = vunpack.c.l.b16 %v6313
      %v6698 = vunpack.c.l.b16 %v6314
      %v6699 = vunpack.c.l.b16 %v6315
      %v6700 = vunpack.c.l.b16 %v6316
      %v6701 = vunpack.c.l.b16 %v6317
      %v6702 = vunpack.c.l.b16 %v6318
      %v6703 = vunpack.c.l.b16 %v6319
      %v6704 = vunpack.c.l.b16 %v6320
      %v6705 = vunpack.c.l.b16 %v6321
      %v6706 = vunpack.c.l.b16 %v6322
      %v6707 = vunpack.c.l.b16 %v6323
      %v6708 = vunpack.c.l.b16 %v6324
      %v6709 = vunpack.c.l.b16 %v6325
      %v6710 = vunpack.c.l.b16 %v6326
      %v6711 = vunpack.c.l.b16 %v6327
      %v6712 = vunpack.c.l.b16 %v6328
      %v6713 = vpack.c.b16 %v6362, %v6697
      %v6714 = vpack.c.b16 %v6364, %v6698
      %v6715 = vpack.c.b16 %v6366, %v6699
      %v6716 = vpack.c.b16 %v6368, %v6700
      %v6717 = vpack.c.b16 %v6370, %v6701
      %v6718 = vpack.c.b16 %v6372, %v6702
      %v6719 = vpack.c.b16 %v6374, %v6703
      %v6720 = vpack.c.b16 %v6376, %v6704
      %v6721 = vpack.c.b16 %v6378, %v6705
      %v6722 = vpack.c.b16 %v6380, %v6706
      %v6723 = vpack.c.b16 %v6382, %v6707
      %v6724 = vpack.c.b16 %v6384, %v6708
      %v6725 = vpack.c.b16 %v6386, %v6709
      %v6726 = vpack.c.b16 %v6388, %v6710
      %v6727 = vpack.c.b16 %v6390, %v6711
      %v6728 = vpack.c.b16 %v6392, %v6712
      %v6729 = vrot.slane %v6713, 1
      %v6730 = vrot.slane %v6457, 1
      %v6731 = vsel %vm6151, %v6729, %v6730
      %v6732 = vrot.slane %v6714, 1
      %v6733 = vrot.slane %v6458, 1
      %v6734 = vsel %vm6151, %v6732, %v6733
      %v6735 = vrot.slane %v6715, 1
      %v6736 = vrot.slane %v6459, 1
      %v6737 = vsel %vm6151, %v6735, %v6736
      %v6738 = vrot.slane %v6716, 1
      %v6739 = vrot.slane %v6460, 1
      %v6740 = vsel %vm6151, %v6738, %v6739
      %v6741 = vrot.slane %v6717, 1
      %v6742 = vrot.slane %v6461, 1
      %v6743 = vsel %vm6151, %v6741, %v6742
      %v6744 = vrot.slane %v6718, 1
      %v6745 = vrot.slane %v6462, 1
      %v6746 = vsel %vm6151, %v6744, %v6745
      %v6747 = vrot.slane %v6719, 1
      %v6748 = vrot.slane %v6463, 1
      %v6749 = vsel %vm6151, %v6747, %v6748
      %v6750 = vrot.slane %v6720, 1
      %v6751 = vrot.slane %v6464, 1
      %v6752 = vsel %vm6151, %v6750, %v6751
      %v6753 = vrot.slane %v6721, 1
      %v6754 = vrot.slane %v6465, 1
      %v6755 = vsel %vm6151, %v6753, %v6754
      %v6756 = vrot.slane %v6722, 1
      %v6757 = vrot.slane %v6466, 1
      %v6758 = vsel %vm6151, %v6756, %v6757
      %v6759 = vrot.slane %v6723, 1
      %v6760 = vrot.slane %v6467, 1
      %v6761 = vsel %vm6151, %v6759, %v6760
      %v6762 = vrot.slane %v6724, 1
      %v6763 = vrot.slane %v6468, 1
      %v6764 = vsel %vm6151, %v6762, %v6763
      %v6765 = vrot.slane %v6725, 1
      %v6766 = vrot.slane %v6469, 1
      %v6767 = vsel %vm6151, %v6765, %v6766
      %v6768 = vrot.slane %v6726, 1
      %v6769 = vrot.slane %v6470, 1
      %v6770 = vsel %vm6151, %v6768, %v6769
      %v6771 = vrot.slane %v6727, 1
      %v6772 = vrot.slane %v6471, 1
      %v6773 = vsel %vm6151, %v6771, %v6772
      %v6774 = vrot.slane %v6728, 1
      %v6775 = vrot.slane %v6472, 1
      %v6776 = vsel %vm6151, %v6774, %v6775
      %v6793 = vld [vmem:[%s5 + $0x180] sm:$0xff]
      %v6794 = vld [vmem:[%s5 + $0x188] sm:$0xff]
      %v6795 = vld [vmem:[%s5 + $0x190] sm:$0xff]
      %v6796 = vld [vmem:[%s5 + $0x198] sm:$0xff]
      %v6797 = vld [vmem:[%s5 + $0x1a0] sm:$0xff]
      %v6798 = vld [vmem:[%s5 + $0x1a8] sm:$0xff]
      %v6799 = vld [vmem:[%s5 + $0x1b0] sm:$0xff]
      %v6800 = vld [vmem:[%s5 + $0x1b8] sm:$0xff]
      %v6801 = vld [vmem:[%s5 + $0x1c0] sm:$0xff]
      %v6802 = vld [vmem:[%s5 + $0x1c8] sm:$0xff]
      %v6803 = vld [vmem:[%s5 + $0x1d0] sm:$0xff]
      %v6804 = vld [vmem:[%s5 + $0x1d8] sm:$0xff]
      %v6805 = vld [vmem:[%s5 + $0x1e0] sm:$0xff]
      %v6806 = vld [vmem:[%s5 + $0x1e8] sm:$0xff]
      %v6807 = vld [vmem:[%s5 + $0x1f0] sm:$0xff]
      %v6808 = vld [vmem:[%s5 + $0x1f8] sm:$0xff]
      %v6809 = vld [vmem:[%s5 + $0x200] sm:$0xff]
      %v6810 = vld [vmem:[%s5 + $0x208] sm:$0xff]
      %v6811 = vld [vmem:[%s5 + $0x210] sm:$0xff]
      %v6812 = vld [vmem:[%s5 + $0x218] sm:$0xff]
      %v6813 = vld [vmem:[%s5 + $0x220] sm:$0xff]
      %v6814 = vld [vmem:[%s5 + $0x228] sm:$0xff]
      %v6815 = vld [vmem:[%s5 + $0x230] sm:$0xff]
      %v6816 = vld [vmem:[%s5 + $0x238] sm:$0xff]
      %v6817 = vld [vmem:[%s5 + $0x240] sm:$0xff]
      %v6818 = vld [vmem:[%s5 + $0x248] sm:$0xff]
      %v6819 = vld [vmem:[%s5 + $0x250] sm:$0xff]
      %v6820 = vld [vmem:[%s5 + $0x258] sm:$0xff]
      %v6821 = vld [vmem:[%s5 + $0x260] sm:$0xff]
      %v6822 = vld [vmem:[%s5 + $0x268] sm:$0xff]
      %v6823 = vld [vmem:[%s5 + $0x270] sm:$0xff]
      %v6824 = vld [vmem:[%s5 + $0x278] sm:$0xff]
      %v6825 = vld [vmem:[%s5 + $0x280] sm:$0xff]
      %v6826 = vld [vmem:[%s5 + $0x288] sm:$0xff]
      %v6827 = vld [vmem:[%s5 + $0x290] sm:$0xff]
      %v6828 = vld [vmem:[%s5 + $0x298] sm:$0xff]
      %v6829 = vld [vmem:[%s5 + $0x2a0] sm:$0xff]
      %v6830 = vld [vmem:[%s5 + $0x2a8] sm:$0xff]
      %v6831 = vld [vmem:[%s5 + $0x2b0] sm:$0xff]
      %v6832 = vld [vmem:[%s5 + $0x2b8] sm:$0xff]
      %v6833 = vld [vmem:[%s5 + $0x2c0] sm:$0xff]
      %v6834 = vld [vmem:[%s5 + $0x2c8] sm:$0xff]
      %v6835 = vld [vmem:[%s5 + $0x2d0] sm:$0xff]
      %v6836 = vld [vmem:[%s5 + $0x2d8] sm:$0xff]
      %v6837 = vld [vmem:[%s5 + $0x2e0] sm:$0xff]
      %v6838 = vld [vmem:[%s5 + $0x2e8] sm:$0xff]
      %v6839 = vld [vmem:[%s5 + $0x2f0] sm:$0xff]
      %v6840 = vld [vmem:[%s5 + $0x2f8] sm:$0xff]
      %v6889 = vunpack.c.l.b16 %v6793
      %v6890 = vunpack.c.h.b16 %v6793
      %v6891 = vunpack.c.l.b16 %v6794
      %v6892 = vunpack.c.h.b16 %v6794
      %v6893 = vunpack.c.l.b16 %v6795
      %v6894 = vunpack.c.h.b16 %v6795
      %v6895 = vunpack.c.l.b16 %v6796
      %v6896 = vunpack.c.h.b16 %v6796
      %v6897 = vunpack.c.l.b16 %v6797
      %v6898 = vunpack.c.h.b16 %v6797
      %v6899 = vunpack.c.l.b16 %v6798
      %v6900 = vunpack.c.h.b16 %v6798
      %v6901 = vunpack.c.l.b16 %v6799
      %v6902 = vunpack.c.h.b16 %v6799
      %v6903 = vunpack.c.l.b16 %v6800
      %v6904 = vunpack.c.h.b16 %v6800
      %v6905 = vunpack.c.l.b16 %v6801
      %v6906 = vunpack.c.h.b16 %v6801
      %v6907 = vunpack.c.l.b16 %v6802
      %v6908 = vunpack.c.h.b16 %v6802
      %v6909 = vunpack.c.l.b16 %v6803
      %v6910 = vunpack.c.h.b16 %v6803
      %v6911 = vunpack.c.l.b16 %v6804
      %v6912 = vunpack.c.h.b16 %v6804
      %v6913 = vunpack.c.l.b16 %v6805
      %v6914 = vunpack.c.h.b16 %v6805
      %v6915 = vunpack.c.l.b16 %v6806
      %v6916 = vunpack.c.h.b16 %v6806
      %v6917 = vunpack.c.l.b16 %v6807
      %v6918 = vunpack.c.h.b16 %v6807
      %v6919 = vunpack.c.l.b16 %v6808
      %v6920 = vunpack.c.h.b16 %v6808
      %v6921 = vunpack.c.l.b16 %v6809
      %v6922 = vunpack.c.h.b16 %v6809
      %v6923 = vunpack.c.l.b16 %v6810
      %v6924 = vunpack.c.h.b16 %v6810
      %v6925 = vunpack.c.l.b16 %v6811
      %v6926 = vunpack.c.h.b16 %v6811
      %v6927 = vunpack.c.l.b16 %v6812
      %v6928 = vunpack.c.h.b16 %v6812
      %v6929 = vunpack.c.l.b16 %v6813
      %v6930 = vunpack.c.h.b16 %v6813
      %v6931 = vunpack.c.l.b16 %v6814
      %v6932 = vunpack.c.h.b16 %v6814
      %v6933 = vunpack.c.l.b16 %v6815
      %v6934 = vunpack.c.h.b16 %v6815
      %v6935 = vunpack.c.l.b16 %v6816
      %v6936 = vunpack.c.h.b16 %v6816
      %v6937 = vunpack.c.l.b16 %v6817
      %v6938 = vunpack.c.h.b16 %v6817
      %v6939 = vunpack.c.l.b16 %v6818
      %v6940 = vunpack.c.h.b16 %v6818
      %v6941 = vunpack.c.l.b16 %v6819
      %v6942 = vunpack.c.h.b16 %v6819
      %v6943 = vunpack.c.l.b16 %v6820
      %v6944 = vunpack.c.h.b16 %v6820
      %v6945 = vunpack.c.l.b16 %v6821
      %v6946 = vunpack.c.h.b16 %v6821
      %v6947 = vunpack.c.l.b16 %v6822
      %v6948 = vunpack.c.h.b16 %v6822
      %v6949 = vunpack.c.l.b16 %v6823
      %v6950 = vunpack.c.h.b16 %v6823
      %v6951 = vunpack.c.l.b16 %v6824
      %v6952 = vunpack.c.h.b16 %v6824
      %v6953 = vunpack.c.l.b16 %v6825
      %v6954 = vunpack.c.h.b16 %v6825
      %v6955 = vunpack.c.l.b16 %v6826
      %v6956 = vunpack.c.h.b16 %v6826
      %v6957 = vunpack.c.l.b16 %v6827
      %v6958 = vunpack.c.h.b16 %v6827
      %v6959 = vunpack.c.l.b16 %v6828
      %v6960 = vunpack.c.h.b16 %v6828
      %v6961 = vunpack.c.l.b16 %v6829
      %v6962 = vunpack.c.h.b16 %v6829
      %v6963 = vunpack.c.l.b16 %v6830
      %v6964 = vunpack.c.h.b16 %v6830
      %v6965 = vunpack.c.l.b16 %v6831
      %v6966 = vunpack.c.h.b16 %v6831
      %v6967 = vunpack.c.l.b16 %v6832
      %v6968 = vunpack.c.h.b16 %v6832
      %v6969 = vunpack.c.l.b16 %v6833
      %v6970 = vunpack.c.h.b16 %v6833
      %v6971 = vunpack.c.l.b16 %v6834
      %v6972 = vunpack.c.h.b16 %v6834
      %v6973 = vunpack.c.l.b16 %v6835
      %v6974 = vunpack.c.h.b16 %v6835
      %v6975 = vunpack.c.l.b16 %v6836
      %v6976 = vunpack.c.h.b16 %v6836
      %v6977 = vunpack.c.l.b16 %v6837
      %v6978 = vunpack.c.h.b16 %v6837
      %v6979 = vunpack.c.l.b16 %v6838
      %v6980 = vunpack.c.h.b16 %v6838
      %v6981 = vunpack.c.l.b16 %v6839
      %v6982 = vunpack.c.h.b16 %v6839
      %v6983 = vunpack.c.l.b16 %v6840
      %v6984 = vunpack.c.h.b16 %v6840
      %v6985 = vpack.c.b16 %v6891, %v6889
      %v6986 = vpack.c.b16 %v6892, %v6890
      %v6987 = vpack.c.b16 %v6895, %v6893
      %v6988 = vpack.c.b16 %v6896, %v6894
      %v6989 = vpack.c.b16 %v6899, %v6897
      %v6990 = vpack.c.b16 %v6900, %v6898
      %v6991 = vpack.c.b16 %v6903, %v6901
      %v6992 = vpack.c.b16 %v6904, %v6902
      %v6993 = vpack.c.b16 %v6907, %v6905
      %v6994 = vpack.c.b16 %v6908, %v6906
      %v6995 = vpack.c.b16 %v6911, %v6909
      %v6996 = vpack.c.b16 %v6912, %v6910
      %v6997 = vpack.c.b16 %v6915, %v6913
      %v6998 = vpack.c.b16 %v6916, %v6914
      %v6999 = vpack.c.b16 %v6919, %v6917
      %v7000 = vpack.c.b16 %v6920, %v6918
      %v7001 = vpack.c.b16 %v6923, %v6921
      %v7002 = vpack.c.b16 %v6924, %v6922
      %v7003 = vpack.c.b16 %v6927, %v6925
      %v7004 = vpack.c.b16 %v6928, %v6926
      %v7005 = vpack.c.b16 %v6931, %v6929
      %v7006 = vpack.c.b16 %v6932, %v6930
      %v7007 = vpack.c.b16 %v6935, %v6933
      %v7008 = vpack.c.b16 %v6936, %v6934
      %v7009 = vpack.c.b16 %v6939, %v6937
      %v7010 = vpack.c.b16 %v6940, %v6938
      %v7011 = vpack.c.b16 %v6943, %v6941
      %v7012 = vpack.c.b16 %v6944, %v6942
      %v7013 = vpack.c.b16 %v6947, %v6945
      %v7014 = vpack.c.b16 %v6948, %v6946
      %v7015 = vpack.c.b16 %v6951, %v6949
      %v7016 = vpack.c.b16 %v6952, %v6950
      %v7017 = vpack.c.b16 %v6955, %v6953
      %v7018 = vpack.c.b16 %v6956, %v6954
      %v7019 = vpack.c.b16 %v6959, %v6957
      %v7020 = vpack.c.b16 %v6960, %v6958
      %v7021 = vpack.c.b16 %v6963, %v6961
      %v7022 = vpack.c.b16 %v6964, %v6962
      %v7023 = vpack.c.b16 %v6967, %v6965
      %v7024 = vpack.c.b16 %v6968, %v6966
      %v7025 = vpack.c.b16 %v6971, %v6969
      %v7026 = vpack.c.b16 %v6972, %v6970
      %v7027 = vpack.c.b16 %v6975, %v6973
      %v7028 = vpack.c.b16 %v6976, %v6974
      %v7029 = vpack.c.b16 %v6979, %v6977
      %v7030 = vpack.c.b16 %v6980, %v6978
      %v7031 = vpack.c.b16 %v6983, %v6981
      %v7032 = vpack.c.b16 %v6984, %v6982
      %7081 = vmatpush.bf16.msra.mxu0 %v6999
      %7082 = vmatpush.bf16.msra.mxu0 %v6997
      %7083 = vmatpush.bf16.msra.mxu0 %v6995
      %7084 = vmatpush.bf16.msra.mxu0 %v6993
      %7085 = vmatpush.bf16.msra.mxu0 %v6991
      %7086 = vmatpush.bf16.msra.mxu0 %v6989
      %7087 = vmatpush.bf16.msra.mxu0 %v6987
      %7088 = vmatpush.bf16.msra.mxu0 %v6985
      %7089 = vmatmul.bf16.gmra.mxu0 %v6393
      %v7090 = vpop.f32.mrf.mxu0
      %v7091 = vadd.f32 0.0, %v7090
      %v7092 = vpop.f32.mrf.mxu0
      %v7093 = vadd.f32 0.0, %v7092
      %7094 = vmatmul.bf16.gmra.mxu0 %v6394
      %v7095 = vpop.f32.mrf.mxu0
      %v7096 = vadd.f32 0.0, %v7095
      %v7097 = vpop.f32.mrf.mxu0
      %v7098 = vadd.f32 0.0, %v7097
      %7099 = vmatmul.bf16.gmra.mxu0 %v6395
      %v7100 = vpop.f32.mrf.mxu0
      %v7101 = vadd.f32 0.0, %v7100
      %v7102 = vpop.f32.mrf.mxu0
      %v7103 = vadd.f32 0.0, %v7102
      %7104 = vmatmul.bf16.gmra.mxu0 %v6396
      %v7105 = vpop.f32.mrf.mxu0
      %v7106 = vadd.f32 0.0, %v7105
      %v7107 = vpop.f32.mrf.mxu0
      %v7108 = vadd.f32 0.0, %v7107
      %7109 = vmatmul.bf16.gmra.mxu0 %v6397
      %v7110 = vpop.f32.mrf.mxu0
      %v7111 = vadd.f32 0.0, %v7110
      %v7112 = vpop.f32.mrf.mxu0
      %v7113 = vadd.f32 0.0, %v7112
      %7114 = vmatmul.bf16.gmra.mxu0 %v6398
      %v7115 = vpop.f32.mrf.mxu0
      %v7116 = vadd.f32 0.0, %v7115
      %v7117 = vpop.f32.mrf.mxu0
      %v7118 = vadd.f32 0.0, %v7117
      %7119 = vmatmul.bf16.gmra.mxu0 %v6399
      %v7120 = vpop.f32.mrf.mxu0
      %v7121 = vadd.f32 0.0, %v7120
      %v7122 = vpop.f32.mrf.mxu0
      %v7123 = vadd.f32 0.0, %v7122
      %7124 = vmatmul.bf16.gmra.mxu0 %v6400
      %v7125 = vpop.f32.mrf.mxu0
      %v7126 = vadd.f32 0.0, %v7125
      %v7127 = vpop.f32.mrf.mxu0
      %v7128 = vadd.f32 0.0, %v7127
      %7129 = vmatmul.bf16.gmra.mxu0 %v6401
      %v7130 = vpop.f32.mrf.mxu0
      %v7131 = vadd.f32 0.0, %v7130
      %v7132 = vpop.f32.mrf.mxu0
      %v7133 = vadd.f32 0.0, %v7132
      %7134 = vmatmul.bf16.gmra.mxu0 %v6402
      %v7135 = vpop.f32.mrf.mxu0
      %v7136 = vadd.f32 0.0, %v7135
      %v7137 = vpop.f32.mrf.mxu0
      %v7138 = vadd.f32 0.0, %v7137
      %7139 = vmatmul.bf16.gmra.mxu0 %v6403
      %v7140 = vpop.f32.mrf.mxu0
      %v7141 = vadd.f32 0.0, %v7140
      %v7142 = vpop.f32.mrf.mxu0
      %v7143 = vadd.f32 0.0, %v7142
      %7144 = vmatmul.bf16.gmra.mxu0 %v6404
      %v7145 = vpop.f32.mrf.mxu0
      %v7146 = vadd.f32 0.0, %v7145
      %v7147 = vpop.f32.mrf.mxu0
      %v7148 = vadd.f32 0.0, %v7147
      %7149 = vmatmul.bf16.gmra.mxu0 %v6405
      %v7150 = vpop.f32.mrf.mxu0
      %v7151 = vadd.f32 0.0, %v7150
      %v7152 = vpop.f32.mrf.mxu0
      %v7153 = vadd.f32 0.0, %v7152
      %7154 = vmatmul.bf16.gmra.mxu0 %v6406
      %v7155 = vpop.f32.mrf.mxu0
      %v7156 = vadd.f32 0.0, %v7155
      %v7157 = vpop.f32.mrf.mxu0
      %v7158 = vadd.f32 0.0, %v7157
      %7159 = vmatmul.bf16.gmra.mxu0 %v6407
      %v7160 = vpop.f32.mrf.mxu0
      %v7161 = vadd.f32 0.0, %v7160
      %v7162 = vpop.f32.mrf.mxu0
      %v7163 = vadd.f32 0.0, %v7162
      %7164 = vmatmul.bf16.gmra.mxu0 %v6408
      %v7165 = vpop.f32.mrf.mxu0
      %v7166 = vadd.f32 0.0, %v7165
      %v7167 = vpop.f32.mrf.mxu0
      %v7168 = vadd.f32 0.0, %v7167
      %7169 = vdwg.mxu0
      %7170 = vmatpush.bf16.msra.mxu0 %v7015
      %7171 = vmatpush.bf16.msra.mxu0 %v7013
      %7172 = vmatpush.bf16.msra.mxu0 %v7011
      %7173 = vmatpush.bf16.msra.mxu0 %v7009
      %7174 = vmatpush.bf16.msra.mxu0 %v7007
      %7175 = vmatpush.bf16.msra.mxu0 %v7005
      %7176 = vmatpush.bf16.msra.mxu0 %v7003
      %7177 = vmatpush.bf16.msra.mxu0 %v7001
      %7178 = vmatmul.bf16.gmra.mxu0 %v6484
      %v7179 = vpop.f32.mrf.mxu0
      %v7180 = vadd.f32 %v7091, %v7179
      %v7181 = vpop.f32.mrf.mxu0
      %v7182 = vadd.f32 %v7093, %v7181
      %7183 = vmatmul.bf16.gmra.mxu0 %v6496
      %v7184 = vpop.f32.mrf.mxu0
      %v7185 = vadd.f32 %v7096, %v7184
      %v7186 = vpop.f32.mrf.mxu0
      %v7187 = vadd.f32 %v7098, %v7186
      %7188 = vmatmul.bf16.gmra.mxu0 %v6508
      %v7189 = vpop.f32.mrf.mxu0
      %v7190 = vadd.f32 %v7101, %v7189
      %v7191 = vpop.f32.mrf.mxu0
      %v7192 = vadd.f32 %v7103, %v7191
      %7193 = vmatmul.bf16.gmra.mxu0 %v6520
      %v7194 = vpop.f32.mrf.mxu0
      %v7195 = vadd.f32 %v7106, %v7194
      %v7196 = vpop.f32.mrf.mxu0
      %v7197 = vadd.f32 %v7108, %v7196
      %7198 = vmatmul.bf16.gmra.mxu0 %v6532
      %v7199 = vpop.f32.mrf.mxu0
      %v7200 = vadd.f32 %v7111, %v7199
      %v7201 = vpop.f32.mrf.mxu0
      %v7202 = vadd.f32 %v7113, %v7201
      %7203 = vmatmul.bf16.gmra.mxu0 %v6544
      %v7204 = vpop.f32.mrf.mxu0
      %v7205 = vadd.f32 %v7116, %v7204
      %v7206 = vpop.f32.mrf.mxu0
      %v7207 = vadd.f32 %v7118, %v7206
      %7208 = vmatmul.bf16.gmra.mxu0 %v6556
      %v7209 = vpop.f32.mrf.mxu0
      %v7210 = vadd.f32 %v7121, %v7209
      %v7211 = vpop.f32.mrf.mxu0
      %v7212 = vadd.f32 %v7123, %v7211
      %7213 = vmatmul.bf16.gmra.mxu0 %v6568
      %v7214 = vpop.f32.mrf.mxu0
      %v7215 = vadd.f32 %v7126, %v7214
      %v7216 = vpop.f32.mrf.mxu0
      %v7217 = vadd.f32 %v7128, %v7216
      %7218 = vmatmul.bf16.gmra.mxu0 %v6580
      %v7219 = vpop.f32.mrf.mxu0
      %v7220 = vadd.f32 %v7131, %v7219
      %v7221 = vpop.f32.mrf.mxu0
      %v7222 = vadd.f32 %v7133, %v7221
      %7223 = vmatmul.bf16.gmra.mxu0 %v6592
      %v7224 = vpop.f32.mrf.mxu0
      %v7225 = vadd.f32 %v7136, %v7224
      %v7226 = vpop.f32.mrf.mxu0
      %v7227 = vadd.f32 %v7138, %v7226
      %7228 = vmatmul.bf16.gmra.mxu0 %v6604
      %v7229 = vpop.f32.mrf.mxu0
      %v7230 = vadd.f32 %v7141, %v7229
      %v7231 = vpop.f32.mrf.mxu0
      %v7232 = vadd.f32 %v7143, %v7231
      %7233 = vmatmul.bf16.gmra.mxu0 %v6616
      %v7234 = vpop.f32.mrf.mxu0
      %v7235 = vadd.f32 %v7146, %v7234
      %v7236 = vpop.f32.mrf.mxu0
      %v7237 = vadd.f32 %v7148, %v7236
      %7238 = vmatmul.bf16.gmra.mxu0 %v6628
      %v7239 = vpop.f32.mrf.mxu0
      %v7240 = vadd.f32 %v7151, %v7239
      %v7241 = vpop.f32.mrf.mxu0
      %v7242 = vadd.f32 %v7153, %v7241
      %7243 = vmatmul.bf16.gmra.mxu0 %v6640
      %v7244 = vpop.f32.mrf.mxu0
      %v7245 = vadd.f32 %v7156, %v7244
      %v7246 = vpop.f32.mrf.mxu0
      %v7247 = vadd.f32 %v7158, %v7246
      %7248 = vmatmul.bf16.gmra.mxu0 %v6652
      %v7249 = vpop.f32.mrf.mxu0
      %v7250 = vadd.f32 %v7161, %v7249
      %v7251 = vpop.f32.mrf.mxu0
      %v7252 = vadd.f32 %v7163, %v7251
      %7253 = vmatmul.bf16.gmra.mxu0 %v6664
      %v7254 = vpop.f32.mrf.mxu0
      %v7255 = vadd.f32 %v7166, %v7254
      %v7256 = vpop.f32.mrf.mxu0
      %v7257 = vadd.f32 %v7168, %v7256
      %7258 = vdwg.mxu0
      %7259 = vmatpush.bf16.msra.mxu0 %v7031
      %7260 = vmatpush.bf16.msra.mxu0 %v7029
      %7261 = vmatpush.bf16.msra.mxu0 %v7027
      %7262 = vmatpush.bf16.msra.mxu0 %v7025
      %7263 = vmatpush.bf16.msra.mxu0 %v7023
      %7264 = vmatpush.bf16.msra.mxu0 %v7021
      %7265 = vmatpush.bf16.msra.mxu0 %v7019
      %7266 = vmatpush.bf16.msra.mxu0 %v7017
      %7267 = vmatmul.bf16.gmra.mxu0 %v6731
      %v7268 = vpop.f32.mrf.mxu0
      %v7269 = vadd.f32 %v7180, %v7268
      %v7270 = vpop.f32.mrf.mxu0
      %v7271 = vadd.f32 %v7182, %v7270
      %7272 = vmatmul.bf16.gmra.mxu0 %v6734
      %v7273 = vpop.f32.mrf.mxu0
      %v7274 = vadd.f32 %v7185, %v7273
      %v7275 = vpop.f32.mrf.mxu0
      %v7276 = vadd.f32 %v7187, %v7275
      %7277 = vmatmul.bf16.gmra.mxu0 %v6737
      %v7278 = vpop.f32.mrf.mxu0
      %v7279 = vadd.f32 %v7190, %v7278
      %v7280 = vpop.f32.mrf.mxu0
      %v7281 = vadd.f32 %v7192, %v7280
      %7282 = vmatmul.bf16.gmra.mxu0 %v6740
      %v7283 = vpop.f32.mrf.mxu0
      %v7284 = vadd.f32 %v7195, %v7283
      %v7285 = vpop.f32.mrf.mxu0
      %v7286 = vadd.f32 %v7197, %v7285
      %7287 = vmatmul.bf16.gmra.mxu0 %v6743
      %v7288 = vpop.f32.mrf.mxu0
      %v7289 = vadd.f32 %v7200, %v7288
      %v7290 = vpop.f32.mrf.mxu0
      %v7291 = vadd.f32 %v7202, %v7290
      %7292 = vmatmul.bf16.gmra.mxu0 %v6746
      %v7293 = vpop.f32.mrf.mxu0
      %v7294 = vadd.f32 %v7205, %v7293
      %v7295 = vpop.f32.mrf.mxu0
      %v7296 = vadd.f32 %v7207, %v7295
      %7297 = vmatmul.bf16.gmra.mxu0 %v6749
      %v7298 = vpop.f32.mrf.mxu0
      %v7299 = vadd.f32 %v7210, %v7298
      %v7300 = vpop.f32.mrf.mxu0
      %v7301 = vadd.f32 %v7212, %v7300
      %7302 = vmatmul.bf16.gmra.mxu0 %v6752
      %v7303 = vpop.f32.mrf.mxu0
      %v7304 = vadd.f32 %v7215, %v7303
      %v7305 = vpop.f32.mrf.mxu0
      %v7306 = vadd.f32 %v7217, %v7305
      %7307 = vmatmul.bf16.gmra.mxu0 %v6755
      %v7308 = vpop.f32.mrf.mxu0
      %v7309 = vadd.f32 %v7220, %v7308
      %v7310 = vpop.f32.mrf.mxu0
      %v7311 = vadd.f32 %v7222, %v7310
      %7312 = vmatmul.bf16.gmra.mxu0 %v6758
      %v7313 = vpop.f32.mrf.mxu0
      %v7314 = vadd.f32 %v7225, %v7313
      %v7315 = vpop.f32.mrf.mxu0
      %v7316 = vadd.f32 %v7227, %v7315
      %7317 = vmatmul.bf16.gmra.mxu0 %v6761
      %v7318 = vpop.f32.mrf.mxu0
      %v7319 = vadd.f32 %v7230, %v7318
      %v7320 = vpop.f32.mrf.mxu0
      %v7321 = vadd.f32 %v7232, %v7320
      %7322 = vmatmul.bf16.gmra.mxu0 %v6764
      %v7323 = vpop.f32.mrf.mxu0
      %v7324 = vadd.f32 %v7235, %v7323
      %v7325 = vpop.f32.mrf.mxu0
      %v7326 = vadd.f32 %v7237, %v7325
      %7327 = vmatmul.bf16.gmra.mxu0 %v6767
      %v7328 = vpop.f32.mrf.mxu0
      %v7329 = vadd.f32 %v7240, %v7328
      %v7330 = vpop.f32.mrf.mxu0
      %v7331 = vadd.f32 %v7242, %v7330
      %7332 = vmatmul.bf16.gmra.mxu0 %v6770
      %v7333 = vpop.f32.mrf.mxu0
      %v7334 = vadd.f32 %v7245, %v7333
      %v7335 = vpop.f32.mrf.mxu0
      %v7336 = vadd.f32 %v7247, %v7335
      %7337 = vmatmul.bf16.gmra.mxu0 %v6773
      %v7338 = vpop.f32.mrf.mxu0
      %v7339 = vadd.f32 %v7250, %v7338
      %v7340 = vpop.f32.mrf.mxu0
      %v7341 = vadd.f32 %v7252, %v7340
      %7342 = vmatmul.bf16.gmra.mxu0 %v6776
      %v7343 = vpop.f32.mrf.mxu0
      %v7344 = vadd.f32 %v7255, %v7343
      %v7345 = vpop.f32.mrf.mxu0
      %v7346 = vadd.f32 %v7257, %v7345
      %7347 = vdwg.mxu0
      %7348 = vmatpush.bf16.msra.mxu0 %v7000
      %7349 = vmatpush.bf16.msra.mxu0 %v6998
      %7350 = vmatpush.bf16.msra.mxu0 %v6996
      %7351 = vmatpush.bf16.msra.mxu0 %v6994
      %7352 = vmatpush.bf16.msra.mxu0 %v6992
      %7353 = vmatpush.bf16.msra.mxu0 %v6990
      %7354 = vmatpush.bf16.msra.mxu0 %v6988
      %7355 = vmatpush.bf16.msra.mxu0 %v6986
      %7356 = vmatmul.bf16.gmra.mxu0 %v6393
      %v7357 = vpop.f32.mrf.mxu0
      %v7358 = vadd.f32 0.0, %v7357
      %v7359 = vpop.f32.mrf.mxu0
      %v7360 = vadd.f32 0.0, %v7359
      %7361 = vmatmul.bf16.gmra.mxu0 %v6394
      %v7362 = vpop.f32.mrf.mxu0
      %v7363 = vadd.f32 0.0, %v7362
      %v7364 = vpop.f32.mrf.mxu0
      %v7365 = vadd.f32 0.0, %v7364
      %7366 = vmatmul.bf16.gmra.mxu0 %v6395
      %v7367 = vpop.f32.mrf.mxu0
      %v7368 = vadd.f32 0.0, %v7367
      %v7369 = vpop.f32.mrf.mxu0
      %v7370 = vadd.f32 0.0, %v7369
      %7371 = vmatmul.bf16.gmra.mxu0 %v6396
      %v7372 = vpop.f32.mrf.mxu0
      %v7373 = vadd.f32 0.0, %v7372
      %v7374 = vpop.f32.mrf.mxu0
      %v7375 = vadd.f32 0.0, %v7374
      %7376 = vmatmul.bf16.gmra.mxu0 %v6397
      %v7377 = vpop.f32.mrf.mxu0
      %v7378 = vadd.f32 0.0, %v7377
      %v7379 = vpop.f32.mrf.mxu0
      %v7380 = vadd.f32 0.0, %v7379
      %7381 = vmatmul.bf16.gmra.mxu0 %v6398
      %v7382 = vpop.f32.mrf.mxu0
      %v7383 = vadd.f32 0.0, %v7382
      %v7384 = vpop.f32.mrf.mxu0
      %v7385 = vadd.f32 0.0, %v7384
      %7386 = vmatmul.bf16.gmra.mxu0 %v6399
      %v7387 = vpop.f32.mrf.mxu0
      %v7388 = vadd.f32 0.0, %v7387
      %v7389 = vpop.f32.mrf.mxu0
      %v7390 = vadd.f32 0.0, %v7389
      %7391 = vmatmul.bf16.gmra.mxu0 %v6400
      %v7392 = vpop.f32.mrf.mxu0
      %v7393 = vadd.f32 0.0, %v7392
      %v7394 = vpop.f32.mrf.mxu0
      %v7395 = vadd.f32 0.0, %v7394
      %7396 = vmatmul.bf16.gmra.mxu0 %v6401
      %v7397 = vpop.f32.mrf.mxu0
      %v7398 = vadd.f32 0.0, %v7397
      %v7399 = vpop.f32.mrf.mxu0
      %v7400 = vadd.f32 0.0, %v7399
      %7401 = vmatmul.bf16.gmra.mxu0 %v6402
      %v7402 = vpop.f32.mrf.mxu0
      %v7403 = vadd.f32 0.0, %v7402
      %v7404 = vpop.f32.mrf.mxu0
      %v7405 = vadd.f32 0.0, %v7404
      %7406 = vmatmul.bf16.gmra.mxu0 %v6403
      %v7407 = vpop.f32.mrf.mxu0
      %v7408 = vadd.f32 0.0, %v7407
      %v7409 = vpop.f32.mrf.mxu0
      %v7410 = vadd.f32 0.0, %v7409
      %7411 = vmatmul.bf16.gmra.mxu0 %v6404
      %v7412 = vpop.f32.mrf.mxu0
      %v7413 = vadd.f32 0.0, %v7412
      %v7414 = vpop.f32.mrf.mxu0
      %v7415 = vadd.f32 0.0, %v7414
      %7416 = vmatmul.bf16.gmra.mxu0 %v6405
      %v7417 = vpop.f32.mrf.mxu0
      %v7418 = vadd.f32 0.0, %v7417
      %v7419 = vpop.f32.mrf.mxu0
      %v7420 = vadd.f32 0.0, %v7419
      %7421 = vmatmul.bf16.gmra.mxu0 %v6406
      %v7422 = vpop.f32.mrf.mxu0
      %v7423 = vadd.f32 0.0, %v7422
      %v7424 = vpop.f32.mrf.mxu0
      %v7425 = vadd.f32 0.0, %v7424
      %7426 = vmatmul.bf16.gmra.mxu0 %v6407
      %v7427 = vpop.f32.mrf.mxu0
      %v7428 = vadd.f32 0.0, %v7427
      %v7429 = vpop.f32.mrf.mxu0
      %v7430 = vadd.f32 0.0, %v7429
      %7431 = vmatmul.bf16.gmra.mxu0 %v6408
      %v7432 = vpop.f32.mrf.mxu0
      %v7433 = vadd.f32 0.0, %v7432
      %v7434 = vpop.f32.mrf.mxu0
      %v7435 = vadd.f32 0.0, %v7434
      %7436 = vdwg.mxu0
      %7437 = vmatpush.bf16.msra.mxu0 %v7016
      %7438 = vmatpush.bf16.msra.mxu0 %v7014
      %7439 = vmatpush.bf16.msra.mxu0 %v7012
      %7440 = vmatpush.bf16.msra.mxu0 %v7010
      %7441 = vmatpush.bf16.msra.mxu0 %v7008
      %7442 = vmatpush.bf16.msra.mxu0 %v7006
      %7443 = vmatpush.bf16.msra.mxu0 %v7004
      %7444 = vmatpush.bf16.msra.mxu0 %v7002
      %7445 = vmatmul.bf16.gmra.mxu0 %v6484
      %v7446 = vpop.f32.mrf.mxu0
      %v7447 = vadd.f32 %v7358, %v7446
      %v7448 = vpop.f32.mrf.mxu0
      %v7449 = vadd.f32 %v7360, %v7448
      %7450 = vmatmul.bf16.gmra.mxu0 %v6496
      %v7451 = vpop.f32.mrf.mxu0
      %v7452 = vadd.f32 %v7363, %v7451
      %v7453 = vpop.f32.mrf.mxu0
      %v7454 = vadd.f32 %v7365, %v7453
      %7455 = vmatmul.bf16.gmra.mxu0 %v6508
      %v7456 = vpop.f32.mrf.mxu0
      %v7457 = vadd.f32 %v7368, %v7456
      %v7458 = vpop.f32.mrf.mxu0
      %v7459 = vadd.f32 %v7370, %v7458
      %7460 = vmatmul.bf16.gmra.mxu0 %v6520
      %v7461 = vpop.f32.mrf.mxu0
      %v7462 = vadd.f32 %v7373, %v7461
      %v7463 = vpop.f32.mrf.mxu0
      %v7464 = vadd.f32 %v7375, %v7463
      %7465 = vmatmul.bf16.gmra.mxu0 %v6532
      %v7466 = vpop.f32.mrf.mxu0
      %v7467 = vadd.f32 %v7378, %v7466
      %v7468 = vpop.f32.mrf.mxu0
      %v7469 = vadd.f32 %v7380, %v7468
      %7470 = vmatmul.bf16.gmra.mxu0 %v6544
      %v7471 = vpop.f32.mrf.mxu0
      %v7472 = vadd.f32 %v7383, %v7471
      %v7473 = vpop.f32.mrf.mxu0
      %v7474 = vadd.f32 %v7385, %v7473
      %7475 = vmatmul.bf16.gmra.mxu0 %v6556
      %v7476 = vpop.f32.mrf.mxu0
      %v7477 = vadd.f32 %v7388, %v7476
      %v7478 = vpop.f32.mrf.mxu0
      %v7479 = vadd.f32 %v7390, %v7478
      %7480 = vmatmul.bf16.gmra.mxu0 %v6568
      %v7481 = vpop.f32.mrf.mxu0
      %v7482 = vadd.f32 %v7393, %v7481
      %v7483 = vpop.f32.mrf.mxu0
      %v7484 = vadd.f32 %v7395, %v7483
      %7485 = vmatmul.bf16.gmra.mxu0 %v6580
      %v7486 = vpop.f32.mrf.mxu0
      %v7487 = vadd.f32 %v7398, %v7486
      %v7488 = vpop.f32.mrf.mxu0
      %v7489 = vadd.f32 %v7400, %v7488
      %7490 = vmatmul.bf16.gmra.mxu0 %v6592
      %v7491 = vpop.f32.mrf.mxu0
      %v7492 = vadd.f32 %v7403, %v7491
      %v7493 = vpop.f32.mrf.mxu0
      %v7494 = vadd.f32 %v7405, %v7493
      %7495 = vmatmul.bf16.gmra.mxu0 %v6604
      %v7496 = vpop.f32.mrf.mxu0
      %v7497 = vadd.f32 %v7408, %v7496
      %v7498 = vpop.f32.mrf.mxu0
      %v7499 = vadd.f32 %v7410, %v7498
      %7500 = vmatmul.bf16.gmra.mxu0 %v6616
      %v7501 = vpop.f32.mrf.mxu0
      %v7502 = vadd.f32 %v7413, %v7501
      %v7503 = vpop.f32.mrf.mxu0
      %v7504 = vadd.f32 %v7415, %v7503
      %7505 = vmatmul.bf16.gmra.mxu0 %v6628
      %v7506 = vpop.f32.mrf.mxu0
      %v7507 = vadd.f32 %v7418, %v7506
      %v7508 = vpop.f32.mrf.mxu0
      %v7509 = vadd.f32 %v7420, %v7508
      %7510 = vmatmul.bf16.gmra.mxu0 %v6640
      %v7511 = vpop.f32.mrf.mxu0
      %v7512 = vadd.f32 %v7423, %v7511
      %v7513 = vpop.f32.mrf.mxu0
      %v7514 = vadd.f32 %v7425, %v7513
      %7515 = vmatmul.bf16.gmra.mxu0 %v6652
      %v7516 = vpop.f32.mrf.mxu0
      %v7517 = vadd.f32 %v7428, %v7516
      %v7518 = vpop.f32.mrf.mxu0
      %v7519 = vadd.f32 %v7430, %v7518
      %7520 = vmatmul.bf16.gmra.mxu0 %v6664
      %v7521 = vpop.f32.mrf.mxu0
      %v7522 = vadd.f32 %v7433, %v7521
      %v7523 = vpop.f32.mrf.mxu0
      %v7524 = vadd.f32 %v7435, %v7523
      %7525 = vdwg.mxu0
      %7526 = vmatpush.bf16.msra.mxu0 %v7032
      %7527 = vmatpush.bf16.msra.mxu0 %v7030
      %7528 = vmatpush.bf16.msra.mxu0 %v7028
      %7529 = vmatpush.bf16.msra.mxu0 %v7026
      %7530 = vmatpush.bf16.msra.mxu0 %v7024
      %7531 = vmatpush.bf16.msra.mxu0 %v7022
      %7532 = vmatpush.bf16.msra.mxu0 %v7020
      %7533 = vmatpush.bf16.msra.mxu0 %v7018
      %7534 = vmatmul.bf16.gmra.mxu0 %v6731
      %v7535 = vpop.f32.mrf.mxu0
      %v7536 = vadd.f32 %v7447, %v7535
      %v7537 = vpop.f32.mrf.mxu0
      %v7538 = vadd.f32 %v7449, %v7537
      %7539 = vmatmul.bf16.gmra.mxu0 %v6734
      %v7540 = vpop.f32.mrf.mxu0
      %v7541 = vadd.f32 %v7452, %v7540
      %v7542 = vpop.f32.mrf.mxu0
      %v7543 = vadd.f32 %v7454, %v7542
      %7544 = vmatmul.bf16.gmra.mxu0 %v6737
      %v7545 = vpop.f32.mrf.mxu0
      %v7546 = vadd.f32 %v7457, %v7545
      %v7547 = vpop.f32.mrf.mxu0
      %v7548 = vadd.f32 %v7459, %v7547
      %7549 = vmatmul.bf16.gmra.mxu0 %v6740
      %v7550 = vpop.f32.mrf.mxu0
      %v7551 = vadd.f32 %v7462, %v7550
      %v7552 = vpop.f32.mrf.mxu0
      %v7553 = vadd.f32 %v7464, %v7552
      %7554 = vmatmul.bf16.gmra.mxu0 %v6743
      %v7555 = vpop.f32.mrf.mxu0
      %v7556 = vadd.f32 %v7467, %v7555
      %v7557 = vpop.f32.mrf.mxu0
      %v7558 = vadd.f32 %v7469, %v7557
      %7559 = vmatmul.bf16.gmra.mxu0 %v6746
      %v7560 = vpop.f32.mrf.mxu0
      %v7561 = vadd.f32 %v7472, %v7560
      %v7562 = vpop.f32.mrf.mxu0
      %v7563 = vadd.f32 %v7474, %v7562
      %7564 = vmatmul.bf16.gmra.mxu0 %v6749
      %v7565 = vpop.f32.mrf.mxu0
      %v7566 = vadd.f32 %v7477, %v7565
      %v7567 = vpop.f32.mrf.mxu0
      %v7568 = vadd.f32 %v7479, %v7567
      %7569 = vmatmul.bf16.gmra.mxu0 %v6752
      %v7570 = vpop.f32.mrf.mxu0
      %v7571 = vadd.f32 %v7482, %v7570
      %v7572 = vpop.f32.mrf.mxu0
      %v7573 = vadd.f32 %v7484, %v7572
      %7574 = vmatmul.bf16.gmra.mxu0 %v6755
      %v7575 = vpop.f32.mrf.mxu0
      %v7576 = vadd.f32 %v7487, %v7575
      %v7577 = vpop.f32.mrf.mxu0
      %v7578 = vadd.f32 %v7489, %v7577
      %7579 = vmatmul.bf16.gmra.mxu0 %v6758
      %v7580 = vpop.f32.mrf.mxu0
      %v7581 = vadd.f32 %v7492, %v7580
      %v7582 = vpop.f32.mrf.mxu0
      %v7583 = vadd.f32 %v7494, %v7582
      %7584 = vmatmul.bf16.gmra.mxu0 %v6761
      %v7585 = vpop.f32.mrf.mxu0
      %v7586 = vadd.f32 %v7497, %v7585
      %v7587 = vpop.f32.mrf.mxu0
      %v7588 = vadd.f32 %v7499, %v7587
      %7589 = vmatmul.bf16.gmra.mxu0 %v6764
      %v7590 = vpop.f32.mrf.mxu0
      %v7591 = vadd.f32 %v7502, %v7590
      %v7592 = vpop.f32.mrf.mxu0
      %v7593 = vadd.f32 %v7504, %v7592
      %7594 = vmatmul.bf16.gmra.mxu0 %v6767
      %v7595 = vpop.f32.mrf.mxu0
      %v7596 = vadd.f32 %v7507, %v7595
      %v7597 = vpop.f32.mrf.mxu0
      %v7598 = vadd.f32 %v7509, %v7597
      %7599 = vmatmul.bf16.gmra.mxu0 %v6770
      %v7600 = vpop.f32.mrf.mxu0
      %v7601 = vadd.f32 %v7512, %v7600
      %v7602 = vpop.f32.mrf.mxu0
      %v7603 = vadd.f32 %v7514, %v7602
      %7604 = vmatmul.bf16.gmra.mxu0 %v6773
      %v7605 = vpop.f32.mrf.mxu0
      %v7606 = vadd.f32 %v7517, %v7605
      %v7607 = vpop.f32.mrf.mxu0
      %v7608 = vadd.f32 %v7519, %v7607
      %7609 = vmatmul.bf16.gmra.mxu0 %v6776
      %v7610 = vpop.f32.mrf.mxu0
      %v7611 = vadd.f32 %v7522, %v7610
      %v7612 = vpop.f32.mrf.mxu0
      %v7613 = vadd.f32 %v7524, %v7612
      %7614 = vdwg.mxu0
      %v7663 = vunpack.c.l.b16 %v6216
      %v7664 = vunpack.c.h.b16 %v6216
      %v7665 = vunpack.c.l.b16 %v6217
      %v7666 = vunpack.c.h.b16 %v6217
      %v7667 = vunpack.c.l.b16 %v6218
      %v7668 = vunpack.c.h.b16 %v6218
      %v7669 = vunpack.c.l.b16 %v6219
      %v7670 = vunpack.c.h.b16 %v6219
      %v7671 = vunpack.c.l.b16 %v6220
      %v7672 = vunpack.c.h.b16 %v6220
      %v7673 = vunpack.c.l.b16 %v6221
      %v7674 = vunpack.c.h.b16 %v6221
      %v7675 = vunpack.c.l.b16 %v6222
      %v7676 = vunpack.c.h.b16 %v6222
      %v7677 = vunpack.c.l.b16 %v6223
      %v7678 = vunpack.c.h.b16 %v6223
      %v7679 = vunpack.c.l.b16 %v6224
      %v7680 = vunpack.c.h.b16 %v6224
      %v7681 = vunpack.c.l.b16 %v6225
      %v7682 = vunpack.c.h.b16 %v6225
      %v7683 = vunpack.c.l.b16 %v6226
      %v7684 = vunpack.c.h.b16 %v6226
      %v7685 = vunpack.c.l.b16 %v6227
      %v7686 = vunpack.c.h.b16 %v6227
      %v7687 = vunpack.c.l.b16 %v6228
      %v7688 = vunpack.c.h.b16 %v6228
      %v7689 = vunpack.c.l.b16 %v6229
      %v7690 = vunpack.c.h.b16 %v6229
      %v7691 = vunpack.c.l.b16 %v6230
      %v7692 = vunpack.c.h.b16 %v6230
      %v7693 = vunpack.c.l.b16 %v6231
      %v7694 = vunpack.c.h.b16 %v6231
      %v7695 = vunpack.c.l.b16 %v6232
      %v7696 = vunpack.c.h.b16 %v6232
      %v7697 = vunpack.c.l.b16 %v6233
      %v7698 = vunpack.c.h.b16 %v6233
      %v7699 = vunpack.c.l.b16 %v6234
      %v7700 = vunpack.c.h.b16 %v6234
      %v7701 = vunpack.c.l.b16 %v6235
      %v7702 = vunpack.c.h.b16 %v6235
      %v7703 = vunpack.c.l.b16 %v6236
      %v7704 = vunpack.c.h.b16 %v6236
      %v7705 = vunpack.c.l.b16 %v6237
      %v7706 = vunpack.c.h.b16 %v6237
      %v7707 = vunpack.c.l.b16 %v6238
      %v7708 = vunpack.c.h.b16 %v6238
      %v7709 = vunpack.c.l.b16 %v6239
      %v7710 = vunpack.c.h.b16 %v6239
      %v7711 = vunpack.c.l.b16 %v6240
      %v7712 = vunpack.c.h.b16 %v6240
      %v7713 = vunpack.c.l.b16 %v6241
      %v7714 = vunpack.c.h.b16 %v6241
      %v7715 = vunpack.c.l.b16 %v6242
      %v7716 = vunpack.c.h.b16 %v6242
      %v7717 = vunpack.c.l.b16 %v6243
      %v7718 = vunpack.c.h.b16 %v6243
      %v7719 = vunpack.c.l.b16 %v6244
      %v7720 = vunpack.c.h.b16 %v6244
      %v7721 = vunpack.c.l.b16 %v6245
      %v7722 = vunpack.c.h.b16 %v6245
      %v7723 = vunpack.c.l.b16 %v6246
      %v7724 = vunpack.c.h.b16 %v6246
      %v7725 = vunpack.c.l.b16 %v6247
      %v7726 = vunpack.c.h.b16 %v6247
      %v7727 = vunpack.c.l.b16 %v6248
      %v7728 = vunpack.c.h.b16 %v6248
      %v7729 = vunpack.c.l.b16 %v6249
      %v7730 = vunpack.c.h.b16 %v6249
      %v7731 = vunpack.c.l.b16 %v6250
      %v7732 = vunpack.c.h.b16 %v6250
      %v7733 = vunpack.c.l.b16 %v6251
      %v7734 = vunpack.c.h.b16 %v6251
      %v7735 = vunpack.c.l.b16 %v6252
      %v7736 = vunpack.c.h.b16 %v6252
      %v7737 = vunpack.c.l.b16 %v6253
      %v7738 = vunpack.c.h.b16 %v6253
      %v7739 = vunpack.c.l.b16 %v6254
      %v7740 = vunpack.c.h.b16 %v6254
      %v7741 = vunpack.c.l.b16 %v6255
      %v7742 = vunpack.c.h.b16 %v6255
      %v7743 = vunpack.c.l.b16 %v6256
      %v7744 = vunpack.c.h.b16 %v6256
      %v7745 = vunpack.c.l.b16 %v6257
      %v7746 = vunpack.c.h.b16 %v6257
      %v7747 = vunpack.c.l.b16 %v6258
      %v7748 = vunpack.c.h.b16 %v6258
      %v7749 = vunpack.c.l.b16 %v6259
      %v7750 = vunpack.c.h.b16 %v6259
      %v7751 = vunpack.c.l.b16 %v6260
      %v7752 = vunpack.c.h.b16 %v6260
      %v7753 = vunpack.c.l.b16 %v6261
      %v7754 = vunpack.c.h.b16 %v6261
      %v7755 = vunpack.c.l.b16 %v6262
      %v7756 = vunpack.c.h.b16 %v6262
      %v7757 = vunpack.c.l.b16 %v6263
      %v7758 = vunpack.c.h.b16 %v6263
      %v7759 = vpack.c.b16 %v7665, %v7663
      %v7760 = vpack.c.b16 %v7666, %v7664
      %v7761 = vpack.c.b16 %v7669, %v7667
      %v7762 = vpack.c.b16 %v7670, %v7668
      %v7763 = vpack.c.b16 %v7673, %v7671
      %v7764 = vpack.c.b16 %v7674, %v7672
      %v7765 = vpack.c.b16 %v7677, %v7675
      %v7766 = vpack.c.b16 %v7678, %v7676
      %v7767 = vpack.c.b16 %v7681, %v7679
      %v7768 = vpack.c.b16 %v7682, %v7680
      %v7769 = vpack.c.b16 %v7685, %v7683
      %v7770 = vpack.c.b16 %v7686, %v7684
      %v7771 = vpack.c.b16 %v7689, %v7687
      %v7772 = vpack.c.b16 %v7690, %v7688
      %v7773 = vpack.c.b16 %v7693, %v7691
      %v7774 = vpack.c.b16 %v7694, %v7692
      %v7775 = vpack.c.b16 %v7697, %v7695
      %v7776 = vpack.c.b16 %v7698, %v7696
      %v7777 = vpack.c.b16 %v7701, %v7699
      %v7778 = vpack.c.b16 %v7702, %v7700
      %v7779 = vpack.c.b16 %v7705, %v7703
      %v7780 = vpack.c.b16 %v7706, %v7704
      %v7781 = vpack.c.b16 %v7709, %v7707
      %v7782 = vpack.c.b16 %v7710, %v7708
      %v7783 = vpack.c.b16 %v7713, %v7711
      %v7784 = vpack.c.b16 %v7714, %v7712
      %v7785 = vpack.c.b16 %v7717, %v7715
      %v7786 = vpack.c.b16 %v7718, %v7716
      %v7787 = vpack.c.b16 %v7721, %v7719
      %v7788 = vpack.c.b16 %v7722, %v7720
      %v7789 = vpack.c.b16 %v7725, %v7723
      %v7790 = vpack.c.b16 %v7726, %v7724
      %v7791 = vpack.c.b16 %v7729, %v7727
      %v7792 = vpack.c.b16 %v7730, %v7728
      %v7793 = vpack.c.b16 %v7733, %v7731
      %v7794 = vpack.c.b16 %v7734, %v7732
      %v7795 = vpack.c.b16 %v7737, %v7735
      %v7796 = vpack.c.b16 %v7738, %v7736
      %v7797 = vpack.c.b16 %v7741, %v7739
      %v7798 = vpack.c.b16 %v7742, %v7740
      %v7799 = vpack.c.b16 %v7745, %v7743
      %v7800 = vpack.c.b16 %v7746, %v7744
      %v7801 = vpack.c.b16 %v7749, %v7747
      %v7802 = vpack.c.b16 %v7750, %v7748
      %v7803 = vpack.c.b16 %v7753, %v7751
      %v7804 = vpack.c.b16 %v7754, %v7752
      %v7805 = vpack.c.b16 %v7757, %v7755
      %v7806 = vpack.c.b16 %v7758, %v7756
      %7855 = vmatpush.bf16.msra.mxu0 %v7773
      %7856 = vmatpush.bf16.msra.mxu0 %v7771
      %7857 = vmatpush.bf16.msra.mxu0 %v7769
      %7858 = vmatpush.bf16.msra.mxu0 %v7767
      %7859 = vmatpush.bf16.msra.mxu0 %v7765
      %7860 = vmatpush.bf16.msra.mxu0 %v7763
      %7861 = vmatpush.bf16.msra.mxu0 %v7761
      %7862 = vmatpush.bf16.msra.mxu0 %v7759
      %7863 = vmatmul.bf16.gmra.mxu0 %v5814
      %v7864 = vpop.f32.mrf.mxu0
      %v7865 = vadd.f32 %v7269, %v7864
      %v7866 = vpop.f32.mrf.mxu0
      %v7867 = vadd.f32 %v7271, %v7866
      %7868 = vmatmul.bf16.gmra.mxu0 %v5815
      %v7869 = vpop.f32.mrf.mxu0
      %v7870 = vadd.f32 %v7274, %v7869
      %v7871 = vpop.f32.mrf.mxu0
      %v7872 = vadd.f32 %v7276, %v7871
      %7873 = vmatmul.bf16.gmra.mxu0 %v5816
      %v7874 = vpop.f32.mrf.mxu0
      %v7875 = vadd.f32 %v7279, %v7874
      %v7876 = vpop.f32.mrf.mxu0
      %v7877 = vadd.f32 %v7281, %v7876
      %7878 = vmatmul.bf16.gmra.mxu0 %v5817
      %v7879 = vpop.f32.mrf.mxu0
      %v7880 = vadd.f32 %v7284, %v7879
      %v7881 = vpop.f32.mrf.mxu0
      %v7882 = vadd.f32 %v7286, %v7881
      %7883 = vmatmul.bf16.gmra.mxu0 %v5818
      %v7884 = vpop.f32.mrf.mxu0
      %v7885 = vadd.f32 %v7289, %v7884
      %v7886 = vpop.f32.mrf.mxu0
      %v7887 = vadd.f32 %v7291, %v7886
      %7888 = vmatmul.bf16.gmra.mxu0 %v5819
      %v7889 = vpop.f32.mrf.mxu0
      %v7890 = vadd.f32 %v7294, %v7889
      %v7891 = vpop.f32.mrf.mxu0
      %v7892 = vadd.f32 %v7296, %v7891
      %7893 = vmatmul.bf16.gmra.mxu0 %v5820
      %v7894 = vpop.f32.mrf.mxu0
      %v7895 = vadd.f32 %v7299, %v7894
      %v7896 = vpop.f32.mrf.mxu0
      %v7897 = vadd.f32 %v7301, %v7896
      %7898 = vmatmul.bf16.gmra.mxu0 %v5821
      %v7899 = vpop.f32.mrf.mxu0
      %v7900 = vadd.f32 %v7304, %v7899
      %v7901 = vpop.f32.mrf.mxu0
      %v7902 = vadd.f32 %v7306, %v7901
      %7903 = vmatmul.bf16.gmra.mxu0 %v5822
      %v7904 = vpop.f32.mrf.mxu0
      %v7905 = vadd.f32 %v7309, %v7904
      %v7906 = vpop.f32.mrf.mxu0
      %v7907 = vadd.f32 %v7311, %v7906
      %7908 = vmatmul.bf16.gmra.mxu0 %v5823
      %v7909 = vpop.f32.mrf.mxu0
      %v7910 = vadd.f32 %v7314, %v7909
      %v7911 = vpop.f32.mrf.mxu0
      %v7912 = vadd.f32 %v7316, %v7911
      %7913 = vmatmul.bf16.gmra.mxu0 %v5824
      %v7914 = vpop.f32.mrf.mxu0
      %v7915 = vadd.f32 %v7319, %v7914
      %v7916 = vpop.f32.mrf.mxu0
      %v7917 = vadd.f32 %v7321, %v7916
      %7918 = vmatmul.bf16.gmra.mxu0 %v5825
      %v7919 = vpop.f32.mrf.mxu0
      %v7920 = vadd.f32 %v7324, %v7919
      %v7921 = vpop.f32.mrf.mxu0
      %v7922 = vadd.f32 %v7326, %v7921
      %7923 = vmatmul.bf16.gmra.mxu0 %v5826
      %v7924 = vpop.f32.mrf.mxu0
      %v7925 = vadd.f32 %v7329, %v7924
      %v7926 = vpop.f32.mrf.mxu0
      %v7927 = vadd.f32 %v7331, %v7926
      %7928 = vmatmul.bf16.gmra.mxu0 %v5827
      %v7929 = vpop.f32.mrf.mxu0
      %v7930 = vadd.f32 %v7334, %v7929
      %v7931 = vpop.f32.mrf.mxu0
      %v7932 = vadd.f32 %v7336, %v7931
      %7933 = vmatmul.bf16.gmra.mxu0 %v5828
      %v7934 = vpop.f32.mrf.mxu0
      %v7935 = vadd.f32 %v7339, %v7934
      %v7936 = vpop.f32.mrf.mxu0
      %v7937 = vadd.f32 %v7341, %v7936
      %7938 = vmatmul.bf16.gmra.mxu0 %v5829
      %v7939 = vpop.f32.mrf.mxu0
      %v7940 = vadd.f32 %v7344, %v7939
      %v7941 = vpop.f32.mrf.mxu0
      %v7942 = vadd.f32 %v7346, %v7941
      %7943 = vdwg.mxu0
      %7944 = vmatpush.bf16.msra.mxu0 %v7789
      %7945 = vmatpush.bf16.msra.mxu0 %v7787
      %7946 = vmatpush.bf16.msra.mxu0 %v7785
      %7947 = vmatpush.bf16.msra.mxu0 %v7783
      %7948 = vmatpush.bf16.msra.mxu0 %v7781
      %7949 = vmatpush.bf16.msra.mxu0 %v7779
      %7950 = vmatpush.bf16.msra.mxu0 %v7777
      %7951 = vmatpush.bf16.msra.mxu0 %v7775
      %7952 = vmatmul.bf16.gmra.mxu0 %v5906
      %v7953 = vpop.f32.mrf.mxu0
      %v7954 = vadd.f32 %v7865, %v7953
      %v7955 = vpop.f32.mrf.mxu0
      %v7956 = vadd.f32 %v7867, %v7955
      %7957 = vmatmul.bf16.gmra.mxu0 %v5918
      %v7958 = vpop.f32.mrf.mxu0
      %v7959 = vadd.f32 %v7870, %v7958
      %v7960 = vpop.f32.mrf.mxu0
      %v7961 = vadd.f32 %v7872, %v7960
      %7962 = vmatmul.bf16.gmra.mxu0 %v5930
      %v7963 = vpop.f32.mrf.mxu0
      %v7964 = vadd.f32 %v7875, %v7963
      %v7965 = vpop.f32.mrf.mxu0
      %v7966 = vadd.f32 %v7877, %v7965
      %7967 = vmatmul.bf16.gmra.mxu0 %v5942
      %v7968 = vpop.f32.mrf.mxu0
      %v7969 = vadd.f32 %v7880, %v7968
      %v7970 = vpop.f32.mrf.mxu0
      %v7971 = vadd.f32 %v7882, %v7970
      %7972 = vmatmul.bf16.gmra.mxu0 %v5954
      %v7973 = vpop.f32.mrf.mxu0
      %v7974 = vadd.f32 %v7885, %v7973
      %v7975 = vpop.f32.mrf.mxu0
      %v7976 = vadd.f32 %v7887, %v7975
      %7977 = vmatmul.bf16.gmra.mxu0 %v5966
      %v7978 = vpop.f32.mrf.mxu0
      %v7979 = vadd.f32 %v7890, %v7978
      %v7980 = vpop.f32.mrf.mxu0
      %v7981 = vadd.f32 %v7892, %v7980
      %7982 = vmatmul.bf16.gmra.mxu0 %v5978
      %v7983 = vpop.f32.mrf.mxu0
      %v7984 = vadd.f32 %v7895, %v7983
      %v7985 = vpop.f32.mrf.mxu0
      %v7986 = vadd.f32 %v7897, %v7985
      %7987 = vmatmul.bf16.gmra.mxu0 %v5990
      %v7988 = vpop.f32.mrf.mxu0
      %v7989 = vadd.f32 %v7900, %v7988
      %v7990 = vpop.f32.mrf.mxu0
      %v7991 = vadd.f32 %v7902, %v7990
      %7992 = vmatmul.bf16.gmra.mxu0 %v6002
      %v7993 = vpop.f32.mrf.mxu0
      %v7994 = vadd.f32 %v7905, %v7993
      %v7995 = vpop.f32.mrf.mxu0
      %v7996 = vadd.f32 %v7907, %v7995
      %7997 = vmatmul.bf16.gmra.mxu0 %v6014
      %v7998 = vpop.f32.mrf.mxu0
      %v7999 = vadd.f32 %v7910, %v7998
      %v8000 = vpop.f32.mrf.mxu0
      %v8001 = vadd.f32 %v7912, %v8000
      %8002 = vmatmul.bf16.gmra.mxu0 %v6026
      %v8003 = vpop.f32.mrf.mxu0
      %v8004 = vadd.f32 %v7915, %v8003
      %v8005 = vpop.f32.mrf.mxu0
      %v8006 = vadd.f32 %v7917, %v8005
      %8007 = vmatmul.bf16.gmra.mxu0 %v6038
      %v8008 = vpop.f32.mrf.mxu0
      %v8009 = vadd.f32 %v7920, %v8008
      %v8010 = vpop.f32.mrf.mxu0
      %v8011 = vadd.f32 %v7922, %v8010
      %8012 = vmatmul.bf16.gmra.mxu0 %v6050
      %v8013 = vpop.f32.mrf.mxu0
      %v8014 = vadd.f32 %v7925, %v8013
      %v8015 = vpop.f32.mrf.mxu0
      %v8016 = vadd.f32 %v7927, %v8015
      %8017 = vmatmul.bf16.gmra.mxu0 %v6062
      %v8018 = vpop.f32.mrf.mxu0
      %v8019 = vadd.f32 %v7930, %v8018
      %v8020 = vpop.f32.mrf.mxu0
      %v8021 = vadd.f32 %v7932, %v8020
      %8022 = vmatmul.bf16.gmra.mxu0 %v6074
      %v8023 = vpop.f32.mrf.mxu0
      %v8024 = vadd.f32 %v7935, %v8023
      %v8025 = vpop.f32.mrf.mxu0
      %v8026 = vadd.f32 %v7937, %v8025
      %8027 = vmatmul.bf16.gmra.mxu0 %v6086
      %v8028 = vpop.f32.mrf.mxu0
      %v8029 = vadd.f32 %v7940, %v8028
      %v8030 = vpop.f32.mrf.mxu0
      %v8031 = vadd.f32 %v7942, %v8030
      %8032 = vdwg.mxu0
      %8033 = vmatpush.bf16.msra.mxu0 %v7805
      %8034 = vmatpush.bf16.msra.mxu0 %v7803
      %8035 = vmatpush.bf16.msra.mxu0 %v7801
      %8036 = vmatpush.bf16.msra.mxu0 %v7799
      %8037 = vmatpush.bf16.msra.mxu0 %v7797
      %8038 = vmatpush.bf16.msra.mxu0 %v7795
      %8039 = vmatpush.bf16.msra.mxu0 %v7793
      %8040 = vmatpush.bf16.msra.mxu0 %v7791
      %8041 = vmatmul.bf16.gmra.mxu0 %v6154
      %v8042 = vpop.f32.mrf.mxu0
      %v8043 = vadd.f32 %v7954, %v8042
      %v8044 = vpop.f32.mrf.mxu0
      %v8045 = vadd.f32 %v7956, %v8044
      %8046 = vmatmul.bf16.gmra.mxu0 %v6157
      %v8047 = vpop.f32.mrf.mxu0
      %v8048 = vadd.f32 %v7959, %v8047
      %v8049 = vpop.f32.mrf.mxu0
      %v8050 = vadd.f32 %v7961, %v8049
      %8051 = vmatmul.bf16.gmra.mxu0 %v6160
      %v8052 = vpop.f32.mrf.mxu0
      %v8053 = vadd.f32 %v7964, %v8052
      %v8054 = vpop.f32.mrf.mxu0
      %v8055 = vadd.f32 %v7966, %v8054
      %8056 = vmatmul.bf16.gmra.mxu0 %v6163
      %v8057 = vpop.f32.mrf.mxu0
      %v8058 = vadd.f32 %v7969, %v8057
      %v8059 = vpop.f32.mrf.mxu0
      %v8060 = vadd.f32 %v7971, %v8059
      %8061 = vmatmul.bf16.gmra.mxu0 %v6166
      %v8062 = vpop.f32.mrf.mxu0
      %v8063 = vadd.f32 %v7974, %v8062
      %v8064 = vpop.f32.mrf.mxu0
      %v8065 = vadd.f32 %v7976, %v8064
      %8066 = vmatmul.bf16.gmra.mxu0 %v6169
      %v8067 = vpop.f32.mrf.mxu0
      %v8068 = vadd.f32 %v7979, %v8067
      %v8069 = vpop.f32.mrf.mxu0
      %v8070 = vadd.f32 %v7981, %v8069
      %8071 = vmatmul.bf16.gmra.mxu0 %v6172
      %v8072 = vpop.f32.mrf.mxu0
      %v8073 = vadd.f32 %v7984, %v8072
      %v8074 = vpop.f32.mrf.mxu0
      %v8075 = vadd.f32 %v7986, %v8074
      %8076 = vmatmul.bf16.gmra.mxu0 %v6175
      %v8077 = vpop.f32.mrf.mxu0
      %v8078 = vadd.f32 %v7989, %v8077
      %v8079 = vpop.f32.mrf.mxu0
      %v8080 = vadd.f32 %v7991, %v8079
      %8081 = vmatmul.bf16.gmra.mxu0 %v6178
      %v8082 = vpop.f32.mrf.mxu0
      %v8083 = vadd.f32 %v7994, %v8082
      %v8084 = vpop.f32.mrf.mxu0
      %v8085 = vadd.f32 %v7996, %v8084
      %8086 = vmatmul.bf16.gmra.mxu0 %v6181
      %v8087 = vpop.f32.mrf.mxu0
      %v8088 = vadd.f32 %v7999, %v8087
      %v8089 = vpop.f32.mrf.mxu0
      %v8090 = vadd.f32 %v8001, %v8089
      %8091 = vmatmul.bf16.gmra.mxu0 %v6184
      %v8092 = vpop.f32.mrf.mxu0
      %v8093 = vadd.f32 %v8004, %v8092
      %v8094 = vpop.f32.mrf.mxu0
      %v8095 = vadd.f32 %v8006, %v8094
      %8096 = vmatmul.bf16.gmra.mxu0 %v6187
      %v8097 = vpop.f32.mrf.mxu0
      %v8098 = vadd.f32 %v8009, %v8097
      %v8099 = vpop.f32.mrf.mxu0
      %v8100 = vadd.f32 %v8011, %v8099
      %8101 = vmatmul.bf16.gmra.mxu0 %v6190
      %v8102 = vpop.f32.mrf.mxu0
      %v8103 = vadd.f32 %v8014, %v8102
      %v8104 = vpop.f32.mrf.mxu0
      %v8105 = vadd.f32 %v8016, %v8104
      %8106 = vmatmul.bf16.gmra.mxu0 %v6193
      %v8107 = vpop.f32.mrf.mxu0
      %v8108 = vadd.f32 %v8019, %v8107
      %v8109 = vpop.f32.mrf.mxu0
      %v8110 = vadd.f32 %v8021, %v8109
      %8111 = vmatmul.bf16.gmra.mxu0 %v6196
      %v8112 = vpop.f32.mrf.mxu0
      %v8113 = vadd.f32 %v8024, %v8112
      %v8114 = vpop.f32.mrf.mxu0
      %v8115 = vadd.f32 %v8026, %v8114
      %8116 = vmatmul.bf16.gmra.mxu0 %v6199
      %v8117 = vpop.f32.mrf.mxu0
      %v8118 = vadd.f32 %v8029, %v8117
      %v8119 = vpop.f32.mrf.mxu0
      %v8120 = vadd.f32 %v8031, %v8119
      %8121 = vdwg.mxu0
      %8122 = vmatpush.bf16.msra.mxu0 %v7774
      %8123 = vmatpush.bf16.msra.mxu0 %v7772
      %8124 = vmatpush.bf16.msra.mxu0 %v7770
      %8125 = vmatpush.bf16.msra.mxu0 %v7768
      %8126 = vmatpush.bf16.msra.mxu0 %v7766
      %8127 = vmatpush.bf16.msra.mxu0 %v7764
      %8128 = vmatpush.bf16.msra.mxu0 %v7762
      %8129 = vmatpush.bf16.msra.mxu0 %v7760
      %8130 = vmatmul.bf16.gmra.mxu0 %v5814
      %v8131 = vpop.f32.mrf.mxu0
      %v8132 = vadd.f32 %v7536, %v8131
      %v8133 = vpop.f32.mrf.mxu0
      %v8134 = vadd.f32 %v7538, %v8133
      %8135 = vmatmul.bf16.gmra.mxu0 %v5815
      %v8136 = vpop.f32.mrf.mxu0
      %v8137 = vadd.f32 %v7541, %v8136
      %v8138 = vpop.f32.mrf.mxu0
      %v8139 = vadd.f32 %v7543, %v8138
      %8140 = vmatmul.bf16.gmra.mxu0 %v5816
      %v8141 = vpop.f32.mrf.mxu0
      %v8142 = vadd.f32 %v7546, %v8141
      %v8143 = vpop.f32.mrf.mxu0
      %v8144 = vadd.f32 %v7548, %v8143
      %8145 = vmatmul.bf16.gmra.mxu0 %v5817
      %v8146 = vpop.f32.mrf.mxu0
      %v8147 = vadd.f32 %v7551, %v8146
      %v8148 = vpop.f32.mrf.mxu0
      %v8149 = vadd.f32 %v7553, %v8148
      %8150 = vmatmul.bf16.gmra.mxu0 %v5818
      %v8151 = vpop.f32.mrf.mxu0
      %v8152 = vadd.f32 %v7556, %v8151
      %v8153 = vpop.f32.mrf.mxu0
      %v8154 = vadd.f32 %v7558, %v8153
      %8155 = vmatmul.bf16.gmra.mxu0 %v5819
      %v8156 = vpop.f32.mrf.mxu0
      %v8157 = vadd.f32 %v7561, %v8156
      %v8158 = vpop.f32.mrf.mxu0
      %v8159 = vadd.f32 %v7563, %v8158
      %8160 = vmatmul.bf16.gmra.mxu0 %v5820
      %v8161 = vpop.f32.mrf.mxu0
      %v8162 = vadd.f32 %v7566, %v8161
      %v8163 = vpop.f32.mrf.mxu0
      %v8164 = vadd.f32 %v7568, %v8163
      %8165 = vmatmul.bf16.gmra.mxu0 %v5821
      %v8166 = vpop.f32.mrf.mxu0
      %v8167 = vadd.f32 %v7571, %v8166
      %v8168 = vpop.f32.mrf.mxu0
      %v8169 = vadd.f32 %v7573, %v8168
      %8170 = vmatmul.bf16.gmra.mxu0 %v5822
      %v8171 = vpop.f32.mrf.mxu0
      %v8172 = vadd.f32 %v7576, %v8171
      %v8173 = vpop.f32.mrf.mxu0
      %v8174 = vadd.f32 %v7578, %v8173
      %8175 = vmatmul.bf16.gmra.mxu0 %v5823
      %v8176 = vpop.f32.mrf.mxu0
      %v8177 = vadd.f32 %v7581, %v8176
      %v8178 = vpop.f32.mrf.mxu0
      %v8179 = vadd.f32 %v7583, %v8178
      %8180 = vmatmul.bf16.gmra.mxu0 %v5824
      %v8181 = vpop.f32.mrf.mxu0
      %v8182 = vadd.f32 %v7586, %v8181
      %v8183 = vpop.f32.mrf.mxu0
      %v8184 = vadd.f32 %v7588, %v8183
      %8185 = vmatmul.bf16.gmra.mxu0 %v5825
      %v8186 = vpop.f32.mrf.mxu0
      %v8187 = vadd.f32 %v7591, %v8186
      %v8188 = vpop.f32.mrf.mxu0
      %v8189 = vadd.f32 %v7593, %v8188
      %8190 = vmatmul.bf16.gmra.mxu0 %v5826
      %v8191 = vpop.f32.mrf.mxu0
      %v8192 = vadd.f32 %v7596, %v8191
      %v8193 = vpop.f32.mrf.mxu0
      %v8194 = vadd.f32 %v7598, %v8193
      %8195 = vmatmul.bf16.gmra.mxu0 %v5827
      %v8196 = vpop.f32.mrf.mxu0
      %v8197 = vadd.f32 %v7601, %v8196
      %v8198 = vpop.f32.mrf.mxu0
      %v8199 = vadd.f32 %v7603, %v8198
      %8200 = vmatmul.bf16.gmra.mxu0 %v5828
      %v8201 = vpop.f32.mrf.mxu0
      %v8202 = vadd.f32 %v7606, %v8201
      %v8203 = vpop.f32.mrf.mxu0
      %v8204 = vadd.f32 %v7608, %v8203
      %8205 = vmatmul.bf16.gmra.mxu0 %v5829
      %v8206 = vpop.f32.mrf.mxu0
      %v8207 = vadd.f32 %v7611, %v8206
      %v8208 = vpop.f32.mrf.mxu0
      %v8209 = vadd.f32 %v7613, %v8208
      %8210 = vdwg.mxu0
      %8211 = vmatpush.bf16.msra.mxu0 %v7790
      %8212 = vmatpush.bf16.msra.mxu0 %v7788
      %8213 = vmatpush.bf16.msra.mxu0 %v7786
      %8214 = vmatpush.bf16.msra.mxu0 %v7784
      %8215 = vmatpush.bf16.msra.mxu0 %v7782
      %8216 = vmatpush.bf16.msra.mxu0 %v7780
      %8217 = vmatpush.bf16.msra.mxu0 %v7778
      %8218 = vmatpush.bf16.msra.mxu0 %v7776
      %8219 = vmatmul.bf16.gmra.mxu0 %v5906
      %v8220 = vpop.f32.mrf.mxu0
      %v8221 = vadd.f32 %v8132, %v8220
      %v8222 = vpop.f32.mrf.mxu0
      %v8223 = vadd.f32 %v8134, %v8222
      %8224 = vmatmul.bf16.gmra.mxu0 %v5918
      %v8225 = vpop.f32.mrf.mxu0
      %v8226 = vadd.f32 %v8137, %v8225
      %v8227 = vpop.f32.mrf.mxu0
      %v8228 = vadd.f32 %v8139, %v8227
      %8229 = vmatmul.bf16.gmra.mxu0 %v5930
      %v8230 = vpop.f32.mrf.mxu0
      %v8231 = vadd.f32 %v8142, %v8230
      %v8232 = vpop.f32.mrf.mxu0
      %v8233 = vadd.f32 %v8144, %v8232
      %8234 = vmatmul.bf16.gmra.mxu0 %v5942
      %v8235 = vpop.f32.mrf.mxu0
      %v8236 = vadd.f32 %v8147, %v8235
      %v8237 = vpop.f32.mrf.mxu0
      %v8238 = vadd.f32 %v8149, %v8237
      %8239 = vmatmul.bf16.gmra.mxu0 %v5954
      %v8240 = vpop.f32.mrf.mxu0
      %v8241 = vadd.f32 %v8152, %v8240
      %v8242 = vpop.f32.mrf.mxu0
      %v8243 = vadd.f32 %v8154, %v8242
      %8244 = vmatmul.bf16.gmra.mxu0 %v5966
      %v8245 = vpop.f32.mrf.mxu0
      %v8246 = vadd.f32 %v8157, %v8245
      %v8247 = vpop.f32.mrf.mxu0
      %v8248 = vadd.f32 %v8159, %v8247
      %8249 = vmatmul.bf16.gmra.mxu0 %v5978
      %v8250 = vpop.f32.mrf.mxu0
      %v8251 = vadd.f32 %v8162, %v8250
      %v8252 = vpop.f32.mrf.mxu0
      %v8253 = vadd.f32 %v8164, %v8252
      %8254 = vmatmul.bf16.gmra.mxu0 %v5990
      %v8255 = vpop.f32.mrf.mxu0
      %v8256 = vadd.f32 %v8167, %v8255
      %v8257 = vpop.f32.mrf.mxu0
      %v8258 = vadd.f32 %v8169, %v8257
      %8259 = vmatmul.bf16.gmra.mxu0 %v6002
      %v8260 = vpop.f32.mrf.mxu0
      %v8261 = vadd.f32 %v8172, %v8260
      %v8262 = vpop.f32.mrf.mxu0
      %v8263 = vadd.f32 %v8174, %v8262
      %8264 = vmatmul.bf16.gmra.mxu0 %v6014
      %v8265 = vpop.f32.mrf.mxu0
      %v8266 = vadd.f32 %v8177, %v8265
      %v8267 = vpop.f32.mrf.mxu0
      %v8268 = vadd.f32 %v8179, %v8267
      %8269 = vmatmul.bf16.gmra.mxu0 %v6026
      %v8270 = vpop.f32.mrf.mxu0
      %v8271 = vadd.f32 %v8182, %v8270
      %v8272 = vpop.f32.mrf.mxu0
      %v8273 = vadd.f32 %v8184, %v8272
      %8274 = vmatmul.bf16.gmra.mxu0 %v6038
      %v8275 = vpop.f32.mrf.mxu0
      %v8276 = vadd.f32 %v8187, %v8275
      %v8277 = vpop.f32.mrf.mxu0
      %v8278 = vadd.f32 %v8189, %v8277
      %8279 = vmatmul.bf16.gmra.mxu0 %v6050
      %v8280 = vpop.f32.mrf.mxu0
      %v8281 = vadd.f32 %v8192, %v8280
      %v8282 = vpop.f32.mrf.mxu0
      %v8283 = vadd.f32 %v8194, %v8282
      %8284 = vmatmul.bf16.gmra.mxu0 %v6062
      %v8285 = vpop.f32.mrf.mxu0
      %v8286 = vadd.f32 %v8197, %v8285
      %v8287 = vpop.f32.mrf.mxu0
      %v8288 = vadd.f32 %v8199, %v8287
      %8289 = vmatmul.bf16.gmra.mxu0 %v6074
      %v8290 = vpop.f32.mrf.mxu0
      %v8291 = vadd.f32 %v8202, %v8290
      %v8292 = vpop.f32.mrf.mxu0
      %v8293 = vadd.f32 %v8204, %v8292
      %8294 = vmatmul.bf16.gmra.mxu0 %v6086
      %v8295 = vpop.f32.mrf.mxu0
      %v8296 = vadd.f32 %v8207, %v8295
      %v8297 = vpop.f32.mrf.mxu0
      %v8298 = vadd.f32 %v8209, %v8297
      %8299 = vdwg.mxu0
      %8300 = vmatpush.bf16.msra.mxu0 %v7806
      %8301 = vmatpush.bf16.msra.mxu0 %v7804
      %8302 = vmatpush.bf16.msra.mxu0 %v7802
      %8303 = vmatpush.bf16.msra.mxu0 %v7800
      %8304 = vmatpush.bf16.msra.mxu0 %v7798
      %8305 = vmatpush.bf16.msra.mxu0 %v7796
      %8306 = vmatpush.bf16.msra.mxu0 %v7794
      %8307 = vmatpush.bf16.msra.mxu0 %v7792
      %8308 = vmatmul.bf16.gmra.mxu0 %v6154
      %v8309 = vpop.f32.mrf.mxu0
      %v8310 = vadd.f32 %v8221, %v8309
      %v8311 = vpop.f32.mrf.mxu0
      %v8312 = vadd.f32 %v8223, %v8311
      %8313 = vmatmul.bf16.gmra.mxu0 %v6157
      %v8314 = vpop.f32.mrf.mxu0
      %v8315 = vadd.f32 %v8226, %v8314
      %v8316 = vpop.f32.mrf.mxu0
      %v8317 = vadd.f32 %v8228, %v8316
      %8318 = vmatmul.bf16.gmra.mxu0 %v6160
      %v8319 = vpop.f32.mrf.mxu0
      %v8320 = vadd.f32 %v8231, %v8319
      %v8321 = vpop.f32.mrf.mxu0
      %v8322 = vadd.f32 %v8233, %v8321
      %8323 = vmatmul.bf16.gmra.mxu0 %v6163
      %v8324 = vpop.f32.mrf.mxu0
      %v8325 = vadd.f32 %v8236, %v8324
      %v8326 = vpop.f32.mrf.mxu0
      %v8327 = vadd.f32 %v8238, %v8326
      %8328 = vmatmul.bf16.gmra.mxu0 %v6166
      %v8329 = vpop.f32.mrf.mxu0
      %v8330 = vadd.f32 %v8241, %v8329
      %v8331 = vpop.f32.mrf.mxu0
      %v8332 = vadd.f32 %v8243, %v8331
      %8333 = vmatmul.bf16.gmra.mxu0 %v6169
      %v8334 = vpop.f32.mrf.mxu0
      %v8335 = vadd.f32 %v8246, %v8334
      %v8336 = vpop.f32.mrf.mxu0
      %v8337 = vadd.f32 %v8248, %v8336
      %8338 = vmatmul.bf16.gmra.mxu0 %v6172
      %v8339 = vpop.f32.mrf.mxu0
      %v8340 = vadd.f32 %v8251, %v8339
      %v8341 = vpop.f32.mrf.mxu0
      %v8342 = vadd.f32 %v8253, %v8341
      %8343 = vmatmul.bf16.gmra.mxu0 %v6175
      %v8344 = vpop.f32.mrf.mxu0
      %v8345 = vadd.f32 %v8256, %v8344
      %v8346 = vpop.f32.mrf.mxu0
      %v8347 = vadd.f32 %v8258, %v8346
      %8348 = vmatmul.bf16.gmra.mxu0 %v6178
      %v8349 = vpop.f32.mrf.mxu0
      %v8350 = vadd.f32 %v8261, %v8349
      %v8351 = vpop.f32.mrf.mxu0
      %v8352 = vadd.f32 %v8263, %v8351
      %8353 = vmatmul.bf16.gmra.mxu0 %v6181
      %v8354 = vpop.f32.mrf.mxu0
      %v8355 = vadd.f32 %v8266, %v8354
      %v8356 = vpop.f32.mrf.mxu0
      %v8357 = vadd.f32 %v8268, %v8356
      %8358 = vmatmul.bf16.gmra.mxu0 %v6184
      %v8359 = vpop.f32.mrf.mxu0
      %v8360 = vadd.f32 %v8271, %v8359
      %v8361 = vpop.f32.mrf.mxu0
      %v8362 = vadd.f32 %v8273, %v8361
      %8363 = vmatmul.bf16.gmra.mxu0 %v6187
      %v8364 = vpop.f32.mrf.mxu0
      %v8365 = vadd.f32 %v8276, %v8364
      %v8366 = vpop.f32.mrf.mxu0
      %v8367 = vadd.f32 %v8278, %v8366
      %8368 = vmatmul.bf16.gmra.mxu0 %v6190
      %v8369 = vpop.f32.mrf.mxu0
      %v8370 = vadd.f32 %v8281, %v8369
      %v8371 = vpop.f32.mrf.mxu0
      %v8372 = vadd.f32 %v8283, %v8371
      %8373 = vmatmul.bf16.gmra.mxu0 %v6193
      %v8374 = vpop.f32.mrf.mxu0
      %v8375 = vadd.f32 %v8286, %v8374
      %v8376 = vpop.f32.mrf.mxu0
      %v8377 = vadd.f32 %v8288, %v8376
      %8378 = vmatmul.bf16.gmra.mxu0 %v6196
      %v8379 = vpop.f32.mrf.mxu0
      %v8380 = vadd.f32 %v8291, %v8379
      %v8381 = vpop.f32.mrf.mxu0
      %v8382 = vadd.f32 %v8293, %v8381
      %8383 = vmatmul.bf16.gmra.mxu0 %v6199
      %v8384 = vpop.f32.mrf.mxu0
      %v8385 = vadd.f32 %v8296, %v8384
      %v8386 = vpop.f32.mrf.mxu0
      %v8387 = vadd.f32 %v8298, %v8386
      %8388 = vdwg.mxu0
      %s8389 = scalar_lea.vmem [#allocation2], 24
      %v8390 = vld [vmem:[%s8389] sm:$0xf]
      %v8391 = vld [vmem:[%s8389 + $0x4] sm:$0xf]
      %v8392 = vld [vmem:[%s8389 + $0xc] sm:$0xf]
      %v8393 = vld [vmem:[%s8389 + $0x10] sm:$0xf]
      %v8394 = vld [vmem:[%s8389 + $0x18] sm:$0xf]
      %v8395 = vld [vmem:[%s8389 + $0x1c] sm:$0xf]
      %v8396 = vld [vmem:[%s8389 + $0x24] sm:$0xf]
      %v8397 = vld [vmem:[%s8389 + $0x28] sm:$0xf]
      %v8398 = vld [vmem:[%s8389 + $0x30] sm:$0xf]
      %v8399 = vld [vmem:[%s8389 + $0x34] sm:$0xf]
      %v8400 = vld [vmem:[%s8389 + $0x3c] sm:$0xf]
      %v8401 = vld [vmem:[%s8389 + $0x40] sm:$0xf]
      %v8402 = vld [vmem:[%s8389 + $0x48] sm:$0xf]
      %v8403 = vld [vmem:[%s8389 + $0x4c] sm:$0xf]
      %v8404 = vld [vmem:[%s8389 + $0x54] sm:$0xf]
      %v8405 = vld [vmem:[%s8389 + $0x58] sm:$0xf]
      %v8406 = vld [vmem:[%s8389 + $0x60] sm:$0xf]
      %v8407 = vld [vmem:[%s8389 + $0x64] sm:$0xf]
      %v8408 = vld [vmem:[%s8389 + $0x6c] sm:$0xf]
      %v8409 = vld [vmem:[%s8389 + $0x70] sm:$0xf]
      %v8410 = vld [vmem:[%s8389 + $0x78] sm:$0xf]
      %v8411 = vld [vmem:[%s8389 + $0x7c] sm:$0xf]
      %v8412 = vld [vmem:[%s8389 + $0x84] sm:$0xf]
      %v8413 = vld [vmem:[%s8389 + $0x88] sm:$0xf]
      %v8414 = vld [vmem:[%s8389 + $0x90] sm:$0xf]
      %v8415 = vld [vmem:[%s8389 + $0x94] sm:$0xf]
      %v8416 = vld [vmem:[%s8389 + $0x9c] sm:$0xf]
      %v8417 = vld [vmem:[%s8389 + $0xa0] sm:$0xf]
      %v8418 = vld [vmem:[%s8389 + $0xa8] sm:$0xf]
      %v8419 = vld [vmem:[%s8389 + $0xac] sm:$0xf]
      %v8420 = vld [vmem:[%s8389 + $0xb4] sm:$0xf]
      %v8421 = vld [vmem:[%s8389 + $0xb8] sm:$0xf]
      %v8422 = vld [vmem:[%s8389 + $0x8] sm:$0x1]
      %v8423 = vld [vmem:[%s8389 + $0x14] sm:$0x1]
      %v8424 = vld [vmem:[%s8389 + $0x20] sm:$0x1]
      %v8425 = vld [vmem:[%s8389 + $0x2c] sm:$0x1]
      %v8426 = vld [vmem:[%s8389 + $0x38] sm:$0x1]
      %v8427 = vld [vmem:[%s8389 + $0x44] sm:$0x1]
      %v8428 = vld [vmem:[%s8389 + $0x50] sm:$0x1]
      %v8429 = vld [vmem:[%s8389 + $0x5c] sm:$0x1]
      %v8430 = vld [vmem:[%s8389 + $0x68] sm:$0x1]
      %v8431 = vld [vmem:[%s8389 + $0x74] sm:$0x1]
      %v8432 = vld [vmem:[%s8389 + $0x80] sm:$0x1]
      %v8433 = vld [vmem:[%s8389 + $0x8c] sm:$0x1]
      %v8434 = vld [vmem:[%s8389 + $0x98] sm:$0x1]
      %v8435 = vld [vmem:[%s8389 + $0xa4] sm:$0x1]
      %v8436 = vld [vmem:[%s8389 + $0xb0] sm:$0x1]
      %v8437 = vld [vmem:[%s8389 + $0xbc] sm:$0x1]
      %v8438 = vld [vmem:[%s8389] sm:$0xe]
      %v8439 = vld [vmem:[%s8389 + $0xc] sm:$0xe]
      %v8440 = vld [vmem:[%s8389 + $0x18] sm:$0xe]
      %v8441 = vld [vmem:[%s8389 + $0x24] sm:$0xe]
      %v8442 = vld [vmem:[%s8389 + $0x30] sm:$0xe]
      %v8443 = vld [vmem:[%s8389 + $0x3c] sm:$0xe]
      %v8444 = vld [vmem:[%s8389 + $0x48] sm:$0xe]
      %v8445 = vld [vmem:[%s8389 + $0x54] sm:$0xe]
      %v8446 = vld [vmem:[%s8389 + $0x60] sm:$0xe]
      %v8447 = vld [vmem:[%s8389 + $0x6c] sm:$0xe]
      %v8448 = vld [vmem:[%s8389 + $0x78] sm:$0xe]
      %v8449 = vld [vmem:[%s8389 + $0x84] sm:$0xe]
      %v8450 = vld [vmem:[%s8389 + $0x90] sm:$0xe]
      %v8451 = vld [vmem:[%s8389 + $0x9c] sm:$0xe]
      %v8452 = vld [vmem:[%s8389 + $0xa8] sm:$0xe]
      %v8453 = vld [vmem:[%s8389 + $0xb4] sm:$0xe]
      %v8486 = vunpack.c.l.b16 %v8390
      %v8487 = vunpack.c.l.b16 %v8391
      %v8488 = vunpack.c.l.b16 %v8392
      %v8489 = vunpack.c.l.b16 %v8393
      %v8490 = vunpack.c.l.b16 %v8394
      %v8491 = vunpack.c.l.b16 %v8395
      %v8492 = vunpack.c.l.b16 %v8396
      %v8493 = vunpack.c.l.b16 %v8397
      %v8494 = vunpack.c.l.b16 %v8398
      %v8495 = vunpack.c.l.b16 %v8399
      %v8496 = vunpack.c.l.b16 %v8400
      %v8497 = vunpack.c.l.b16 %v8401
      %v8498 = vunpack.c.l.b16 %v8402
      %v8499 = vunpack.c.l.b16 %v8403
      %v8500 = vunpack.c.l.b16 %v8404
      %v8501 = vunpack.c.l.b16 %v8405
      %v8502 = vunpack.c.l.b16 %v8406
      %v8503 = vunpack.c.l.b16 %v8407
      %v8504 = vunpack.c.l.b16 %v8408
      %v8505 = vunpack.c.l.b16 %v8409
      %v8506 = vunpack.c.l.b16 %v8410
      %v8507 = vunpack.c.l.b16 %v8411
      %v8508 = vunpack.c.l.b16 %v8412
      %v8509 = vunpack.c.l.b16 %v8413
      %v8510 = vunpack.c.l.b16 %v8414
      %v8511 = vunpack.c.l.b16 %v8415
      %v8512 = vunpack.c.l.b16 %v8416
      %v8513 = vunpack.c.l.b16 %v8417
      %v8514 = vunpack.c.l.b16 %v8418
      %v8515 = vunpack.c.l.b16 %v8419
      %v8516 = vunpack.c.l.b16 %v8420
      %v8517 = vunpack.c.l.b16 %v8421
      %v8518 = vpack.c.b16 %v8487, %v8486
      %v8519 = vpack.c.b16 %v8489, %v8488
      %v8520 = vpack.c.b16 %v8491, %v8490
      %v8521 = vpack.c.b16 %v8493, %v8492
      %v8522 = vpack.c.b16 %v8495, %v8494
      %v8523 = vpack.c.b16 %v8497, %v8496
      %v8524 = vpack.c.b16 %v8499, %v8498
      %v8525 = vpack.c.b16 %v8501, %v8500
      %v8526 = vpack.c.b16 %v8503, %v8502
      %v8527 = vpack.c.b16 %v8505, %v8504
      %v8528 = vpack.c.b16 %v8507, %v8506
      %v8529 = vpack.c.b16 %v8509, %v8508
      %v8530 = vpack.c.b16 %v8511, %v8510
      %v8531 = vpack.c.b16 %v8513, %v8512
      %v8532 = vpack.c.b16 %v8515, %v8514
      %v8533 = vpack.c.b16 %v8517, %v8516
      %v8566 = vunpack.c.l.b16 %v8422
      %v8567 = vunpack.c.l.b16 %v8423
      %v8568 = vunpack.c.l.b16 %v8424
      %v8569 = vunpack.c.l.b16 %v8425
      %v8570 = vunpack.c.l.b16 %v8426
      %v8571 = vunpack.c.l.b16 %v8427
      %v8572 = vunpack.c.l.b16 %v8428
      %v8573 = vunpack.c.l.b16 %v8429
      %v8574 = vunpack.c.l.b16 %v8430
      %v8575 = vunpack.c.l.b16 %v8431
      %v8576 = vunpack.c.l.b16 %v8432
      %v8577 = vunpack.c.l.b16 %v8433
      %v8578 = vunpack.c.l.b16 %v8434
      %v8579 = vunpack.c.l.b16 %v8435
      %v8580 = vunpack.c.l.b16 %v8436
      %v8581 = vunpack.c.l.b16 %v8437
      %v8582 = vpack.c.b16 %v8566, %v8566
      %v8583 = vpack.c.b16 %v8567, %v8567
      %v8584 = vpack.c.b16 %v8568, %v8568
      %v8585 = vpack.c.b16 %v8569, %v8569
      %v8586 = vpack.c.b16 %v8570, %v8570
      %v8587 = vpack.c.b16 %v8571, %v8571
      %v8588 = vpack.c.b16 %v8572, %v8572
      %v8589 = vpack.c.b16 %v8573, %v8573
      %v8590 = vpack.c.b16 %v8574, %v8574
      %v8591 = vpack.c.b16 %v8575, %v8575
      %v8592 = vpack.c.b16 %v8576, %v8576
      %v8593 = vpack.c.b16 %v8577, %v8577
      %v8594 = vpack.c.b16 %v8578, %v8578
      %v8595 = vpack.c.b16 %v8579, %v8579
      %v8596 = vpack.c.b16 %v8580, %v8580
      %v8597 = vpack.c.b16 %v8581, %v8581
      %v8599 = vshrl.u32 %v8518, 16
      %v8601 = vshll.u32 %v8518, 16
      %v8603 = vrot.slane %v8601, 1
      %v8604 = vor.u32 %v8599, %v8603
      %v8606 = vshll.u32 %v8582, 16
      %v8608 = vrot.slane %v8606, 1
      %v8609 = vsel %vm5894, %v8604, %v8608
      %v8611 = vshrl.u32 %v8519, 16
      %v8613 = vshll.u32 %v8519, 16
      %v8615 = vrot.slane %v8613, 1
      %v8616 = vor.u32 %v8611, %v8615
      %v8618 = vshll.u32 %v8583, 16
      %v8620 = vrot.slane %v8618, 1
      %v8621 = vsel %vm5894, %v8616, %v8620
      %v8623 = vshrl.u32 %v8520, 16
      %v8625 = vshll.u32 %v8520, 16
      %v8627 = vrot.slane %v8625, 1
      %v8628 = vor.u32 %v8623, %v8627
      %v8630 = vshll.u32 %v8584, 16
      %v8632 = vrot.slane %v8630, 1
      %v8633 = vsel %vm5894, %v8628, %v8632
      %v8635 = vshrl.u32 %v8521, 16
      %v8637 = vshll.u32 %v8521, 16
      %v8639 = vrot.slane %v8637, 1
      %v8640 = vor.u32 %v8635, %v8639
      %v8642 = vshll.u32 %v8585, 16
      %v8644 = vrot.slane %v8642, 1
      %v8645 = vsel %vm5894, %v8640, %v8644
      %v8647 = vshrl.u32 %v8522, 16
      %v8649 = vshll.u32 %v8522, 16
      %v8651 = vrot.slane %v8649, 1
      %v8652 = vor.u32 %v8647, %v8651
      %v8654 = vshll.u32 %v8586, 16
      %v8656 = vrot.slane %v8654, 1
      %v8657 = vsel %vm5894, %v8652, %v8656
      %v8659 = vshrl.u32 %v8523, 16
      %v8661 = vshll.u32 %v8523, 16
      %v8663 = vrot.slane %v8661, 1
      %v8664 = vor.u32 %v8659, %v8663
      %v8666 = vshll.u32 %v8587, 16
      %v8668 = vrot.slane %v8666, 1
      %v8669 = vsel %vm5894, %v8664, %v8668
      %v8671 = vshrl.u32 %v8524, 16
      %v8673 = vshll.u32 %v8524, 16
      %v8675 = vrot.slane %v8673, 1
      %v8676 = vor.u32 %v8671, %v8675
      %v8678 = vshll.u32 %v8588, 16
      %v8680 = vrot.slane %v8678, 1
      %v8681 = vsel %vm5894, %v8676, %v8680
      %v8683 = vshrl.u32 %v8525, 16
      %v8685 = vshll.u32 %v8525, 16
      %v8687 = vrot.slane %v8685, 1
      %v8688 = vor.u32 %v8683, %v8687
      %v8690 = vshll.u32 %v8589, 16
      %v8692 = vrot.slane %v8690, 1
      %v8693 = vsel %vm5894, %v8688, %v8692
      %v8695 = vshrl.u32 %v8526, 16
      %v8697 = vshll.u32 %v8526, 16
      %v8699 = vrot.slane %v8697, 1
      %v8700 = vor.u32 %v8695, %v8699
      %v8702 = vshll.u32 %v8590, 16
      %v8704 = vrot.slane %v8702, 1
      %v8705 = vsel %vm5894, %v8700, %v8704
      %v8707 = vshrl.u32 %v8527, 16
      %v8709 = vshll.u32 %v8527, 16
      %v8711 = vrot.slane %v8709, 1
      %v8712 = vor.u32 %v8707, %v8711
      %v8714 = vshll.u32 %v8591, 16
      %v8716 = vrot.slane %v8714, 1
      %v8717 = vsel %vm5894, %v8712, %v8716
      %v8719 = vshrl.u32 %v8528, 16
      %v8721 = vshll.u32 %v8528, 16
      %v8723 = vrot.slane %v8721, 1
      %v8724 = vor.u32 %v8719, %v8723
      %v8726 = vshll.u32 %v8592, 16
      %v8728 = vrot.slane %v8726, 1
      %v8729 = vsel %vm5894, %v8724, %v8728
      %v8731 = vshrl.u32 %v8529, 16
      %v8733 = vshll.u32 %v8529, 16
      %v8735 = vrot.slane %v8733, 1
      %v8736 = vor.u32 %v8731, %v8735
      %v8738 = vshll.u32 %v8593, 16
      %v8740 = vrot.slane %v8738, 1
      %v8741 = vsel %vm5894, %v8736, %v8740
      %v8743 = vshrl.u32 %v8530, 16
      %v8745 = vshll.u32 %v8530, 16
      %v8747 = vrot.slane %v8745, 1
      %v8748 = vor.u32 %v8743, %v8747
      %v8750 = vshll.u32 %v8594, 16
      %v8752 = vrot.slane %v8750, 1
      %v8753 = vsel %vm5894, %v8748, %v8752
      %v8755 = vshrl.u32 %v8531, 16
      %v8757 = vshll.u32 %v8531, 16
      %v8759 = vrot.slane %v8757, 1
      %v8760 = vor.u32 %v8755, %v8759
      %v8762 = vshll.u32 %v8595, 16
      %v8764 = vrot.slane %v8762, 1
      %v8765 = vsel %vm5894, %v8760, %v8764
      %v8767 = vshrl.u32 %v8532, 16
      %v8769 = vshll.u32 %v8532, 16
      %v8771 = vrot.slane %v8769, 1
      %v8772 = vor.u32 %v8767, %v8771
      %v8774 = vshll.u32 %v8596, 16
      %v8776 = vrot.slane %v8774, 1
      %v8777 = vsel %vm5894, %v8772, %v8776
      %v8779 = vshrl.u32 %v8533, 16
      %v8781 = vshll.u32 %v8533, 16
      %v8783 = vrot.slane %v8781, 1
      %v8784 = vor.u32 %v8779, %v8783
      %v8786 = vshll.u32 %v8597, 16
      %v8788 = vrot.slane %v8786, 1
      %v8789 = vsel %vm5894, %v8784, %v8788
      %v8822 = vunpack.c.l.b16 %v8438
      %v8823 = vunpack.c.l.b16 %v8439
      %v8824 = vunpack.c.l.b16 %v8440
      %v8825 = vunpack.c.l.b16 %v8441
      %v8826 = vunpack.c.l.b16 %v8442
      %v8827 = vunpack.c.l.b16 %v8443
      %v8828 = vunpack.c.l.b16 %v8444
      %v8829 = vunpack.c.l.b16 %v8445
      %v8830 = vunpack.c.l.b16 %v8446
      %v8831 = vunpack.c.l.b16 %v8447
      %v8832 = vunpack.c.l.b16 %v8448
      %v8833 = vunpack.c.l.b16 %v8449
      %v8834 = vunpack.c.l.b16 %v8450
      %v8835 = vunpack.c.l.b16 %v8451
      %v8836 = vunpack.c.l.b16 %v8452
      %v8837 = vunpack.c.l.b16 %v8453
      %v8838 = vpack.c.b16 %v8487, %v8822
      %v8839 = vpack.c.b16 %v8489, %v8823
      %v8840 = vpack.c.b16 %v8491, %v8824
      %v8841 = vpack.c.b16 %v8493, %v8825
      %v8842 = vpack.c.b16 %v8495, %v8826
      %v8843 = vpack.c.b16 %v8497, %v8827
      %v8844 = vpack.c.b16 %v8499, %v8828
      %v8845 = vpack.c.b16 %v8501, %v8829
      %v8846 = vpack.c.b16 %v8503, %v8830
      %v8847 = vpack.c.b16 %v8505, %v8831
      %v8848 = vpack.c.b16 %v8507, %v8832
      %v8849 = vpack.c.b16 %v8509, %v8833
      %v8850 = vpack.c.b16 %v8511, %v8834
      %v8851 = vpack.c.b16 %v8513, %v8835
      %v8852 = vpack.c.b16 %v8515, %v8836
      %v8853 = vpack.c.b16 %v8517, %v8837
      %v8854 = vrot.slane %v8838, 1
      %v8855 = vrot.slane %v8582, 1
      %v8856 = vsel %vm6151, %v8854, %v8855
      %v8857 = vrot.slane %v8839, 1
      %v8858 = vrot.slane %v8583, 1
      %v8859 = vsel %vm6151, %v8857, %v8858
      %v8860 = vrot.slane %v8840, 1
      %v8861 = vrot.slane %v8584, 1
      %v8862 = vsel %vm6151, %v8860, %v8861
      %v8863 = vrot.slane %v8841, 1
      %v8864 = vrot.slane %v8585, 1
      %v8865 = vsel %vm6151, %v8863, %v8864
      %v8866 = vrot.slane %v8842, 1
      %v8867 = vrot.slane %v8586, 1
      %v8868 = vsel %vm6151, %v8866, %v8867
      %v8869 = vrot.slane %v8843, 1
      %v8870 = vrot.slane %v8587, 1
      %v8871 = vsel %vm6151, %v8869, %v8870
      %v8872 = vrot.slane %v8844, 1
      %v8873 = vrot.slane %v8588, 1
      %v8874 = vsel %vm6151, %v8872, %v8873
      %v8875 = vrot.slane %v8845, 1
      %v8876 = vrot.slane %v8589, 1
      %v8877 = vsel %vm6151, %v8875, %v8876
      %v8878 = vrot.slane %v8846, 1
      %v8879 = vrot.slane %v8590, 1
      %v8880 = vsel %vm6151, %v8878, %v8879
      %v8881 = vrot.slane %v8847, 1
      %v8882 = vrot.slane %v8591, 1
      %v8883 = vsel %vm6151, %v8881, %v8882
      %v8884 = vrot.slane %v8848, 1
      %v8885 = vrot.slane %v8592, 1
      %v8886 = vsel %vm6151, %v8884, %v8885
      %v8887 = vrot.slane %v8849, 1
      %v8888 = vrot.slane %v8593, 1
      %v8889 = vsel %vm6151, %v8887, %v8888
      %v8890 = vrot.slane %v8850, 1
      %v8891 = vrot.slane %v8594, 1
      %v8892 = vsel %vm6151, %v8890, %v8891
      %v8893 = vrot.slane %v8851, 1
      %v8894 = vrot.slane %v8595, 1
      %v8895 = vsel %vm6151, %v8893, %v8894
      %v8896 = vrot.slane %v8852, 1
      %v8897 = vrot.slane %v8596, 1
      %v8898 = vsel %vm6151, %v8896, %v8897
      %v8899 = vrot.slane %v8853, 1
      %v8900 = vrot.slane %v8597, 1
      %v8901 = vsel %vm6151, %v8899, %v8900
      %v8918 = vld [vmem:[%s5 + $0x300] sm:$0xff]
      %v8919 = vld [vmem:[%s5 + $0x308] sm:$0xff]
      %v8920 = vld [vmem:[%s5 + $0x310] sm:$0xff]
      %v8921 = vld [vmem:[%s5 + $0x318] sm:$0xff]
      %v8922 = vld [vmem:[%s5 + $0x320] sm:$0xff]
      %v8923 = vld [vmem:[%s5 + $0x328] sm:$0xff]
      %v8924 = vld [vmem:[%s5 + $0x330] sm:$0xff]
      %v8925 = vld [vmem:[%s5 + $0x338] sm:$0xff]
      %v8926 = vld [vmem:[%s5 + $0x340] sm:$0xff]
      %v8927 = vld [vmem:[%s5 + $0x348] sm:$0xff]
      %v8928 = vld [vmem:[%s5 + $0x350] sm:$0xff]
      %v8929 = vld [vmem:[%s5 + $0x358] sm:$0xff]
      %v8930 = vld [vmem:[%s5 + $0x360] sm:$0xff]
      %v8931 = vld [vmem:[%s5 + $0x368] sm:$0xff]
      %v8932 = vld [vmem:[%s5 + $0x370] sm:$0xff]
      %v8933 = vld [vmem:[%s5 + $0x378] sm:$0xff]
      %v8934 = vld [vmem:[%s5 + $0x380] sm:$0xff]
      %v8935 = vld [vmem:[%s5 + $0x388] sm:$0xff]
      %v8936 = vld [vmem:[%s5 + $0x390] sm:$0xff]
      %v8937 = vld [vmem:[%s5 + $0x398] sm:$0xff]
      %v8938 = vld [vmem:[%s5 + $0x3a0] sm:$0xff]
      %v8939 = vld [vmem:[%s5 + $0x3a8] sm:$0xff]
      %v8940 = vld [vmem:[%s5 + $0x3b0] sm:$0xff]
      %v8941 = vld [vmem:[%s5 + $0x3b8] sm:$0xff]
      %v8942 = vld [vmem:[%s5 + $0x3c0] sm:$0xff]
      %v8943 = vld [vmem:[%s5 + $0x3c8] sm:$0xff]
      %v8944 = vld [vmem:[%s5 + $0x3d0] sm:$0xff]
      %v8945 = vld [vmem:[%s5 + $0x3d8] sm:$0xff]
      %v8946 = vld [vmem:[%s5 + $0x3e0] sm:$0xff]
      %v8947 = vld [vmem:[%s5 + $0x3e8] sm:$0xff]
      %v8948 = vld [vmem:[%s5 + $0x3f0] sm:$0xff]
      %v8949 = vld [vmem:[%s5 + $0x3f8] sm:$0xff]
      %v8950 = vld [vmem:[%s5 + $0x400] sm:$0xff]
      %v8951 = vld [vmem:[%s5 + $0x408] sm:$0xff]
      %v8952 = vld [vmem:[%s5 + $0x410] sm:$0xff]
      %v8953 = vld [vmem:[%s5 + $0x418] sm:$0xff]
      %v8954 = vld [vmem:[%s5 + $0x420] sm:$0xff]
      %v8955 = vld [vmem:[%s5 + $0x428] sm:$0xff]
      %v8956 = vld [vmem:[%s5 + $0x430] sm:$0xff]
      %v8957 = vld [vmem:[%s5 + $0x438] sm:$0xff]
      %v8958 = vld [vmem:[%s5 + $0x440] sm:$0xff]
      %v8959 = vld [vmem:[%s5 + $0x448] sm:$0xff]
      %v8960 = vld [vmem:[%s5 + $0x450] sm:$0xff]
      %v8961 = vld [vmem:[%s5 + $0x458] sm:$0xff]
      %v8962 = vld [vmem:[%s5 + $0x460] sm:$0xff]
      %v8963 = vld [vmem:[%s5 + $0x468] sm:$0xff]
      %v8964 = vld [vmem:[%s5 + $0x470] sm:$0xff]
      %v8965 = vld [vmem:[%s5 + $0x478] sm:$0xff]
      %v9014 = vunpack.c.l.b16 %v8918
      %v9015 = vunpack.c.h.b16 %v8918
      %v9016 = vunpack.c.l.b16 %v8919
      %v9017 = vunpack.c.h.b16 %v8919
      %v9018 = vunpack.c.l.b16 %v8920
      %v9019 = vunpack.c.h.b16 %v8920
      %v9020 = vunpack.c.l.b16 %v8921
      %v9021 = vunpack.c.h.b16 %v8921
      %v9022 = vunpack.c.l.b16 %v8922
      %v9023 = vunpack.c.h.b16 %v8922
      %v9024 = vunpack.c.l.b16 %v8923
      %v9025 = vunpack.c.h.b16 %v8923
      %v9026 = vunpack.c.l.b16 %v8924
      %v9027 = vunpack.c.h.b16 %v8924
      %v9028 = vunpack.c.l.b16 %v8925
      %v9029 = vunpack.c.h.b16 %v8925
      %v9030 = vunpack.c.l.b16 %v8926
      %v9031 = vunpack.c.h.b16 %v8926
      %v9032 = vunpack.c.l.b16 %v8927
      %v9033 = vunpack.c.h.b16 %v8927
      %v9034 = vunpack.c.l.b16 %v8928
      %v9035 = vunpack.c.h.b16 %v8928
      %v9036 = vunpack.c.l.b16 %v8929
      %v9037 = vunpack.c.h.b16 %v8929
      %v9038 = vunpack.c.l.b16 %v8930
      %v9039 = vunpack.c.h.b16 %v8930
      %v9040 = vunpack.c.l.b16 %v8931
      %v9041 = vunpack.c.h.b16 %v8931
      %v9042 = vunpack.c.l.b16 %v8932
      %v9043 = vunpack.c.h.b16 %v8932
      %v9044 = vunpack.c.l.b16 %v8933
      %v9045 = vunpack.c.h.b16 %v8933
      %v9046 = vunpack.c.l.b16 %v8934
      %v9047 = vunpack.c.h.b16 %v8934
      %v9048 = vunpack.c.l.b16 %v8935
      %v9049 = vunpack.c.h.b16 %v8935
      %v9050 = vunpack.c.l.b16 %v8936
      %v9051 = vunpack.c.h.b16 %v8936
      %v9052 = vunpack.c.l.b16 %v8937
      %v9053 = vunpack.c.h.b16 %v8937
      %v9054 = vunpack.c.l.b16 %v8938
      %v9055 = vunpack.c.h.b16 %v8938
      %v9056 = vunpack.c.l.b16 %v8939
      %v9057 = vunpack.c.h.b16 %v8939
      %v9058 = vunpack.c.l.b16 %v8940
      %v9059 = vunpack.c.h.b16 %v8940
      %v9060 = vunpack.c.l.b16 %v8941
      %v9061 = vunpack.c.h.b16 %v8941
      %v9062 = vunpack.c.l.b16 %v8942
      %v9063 = vunpack.c.h.b16 %v8942
      %v9064 = vunpack.c.l.b16 %v8943
      %v9065 = vunpack.c.h.b16 %v8943
      %v9066 = vunpack.c.l.b16 %v8944
      %v9067 = vunpack.c.h.b16 %v8944
      %v9068 = vunpack.c.l.b16 %v8945
      %v9069 = vunpack.c.h.b16 %v8945
      %v9070 = vunpack.c.l.b16 %v8946
      %v9071 = vunpack.c.h.b16 %v8946
      %v9072 = vunpack.c.l.b16 %v8947
      %v9073 = vunpack.c.h.b16 %v8947
      %v9074 = vunpack.c.l.b16 %v8948
      %v9075 = vunpack.c.h.b16 %v8948
      %v9076 = vunpack.c.l.b16 %v8949
      %v9077 = vunpack.c.h.b16 %v8949
      %v9078 = vunpack.c.l.b16 %v8950
      %v9079 = vunpack.c.h.b16 %v8950
      %v9080 = vunpack.c.l.b16 %v8951
      %v9081 = vunpack.c.h.b16 %v8951
      %v9082 = vunpack.c.l.b16 %v8952
      %v9083 = vunpack.c.h.b16 %v8952
      %v9084 = vunpack.c.l.b16 %v8953
      %v9085 = vunpack.c.h.b16 %v8953
      %v9086 = vunpack.c.l.b16 %v8954
      %v9087 = vunpack.c.h.b16 %v8954
      %v9088 = vunpack.c.l.b16 %v8955
      %v9089 = vunpack.c.h.b16 %v8955
      %v9090 = vunpack.c.l.b16 %v8956
      %v9091 = vunpack.c.h.b16 %v8956
      %v9092 = vunpack.c.l.b16 %v8957
      %v9093 = vunpack.c.h.b16 %v8957
      %v9094 = vunpack.c.l.b16 %v8958
      %v9095 = vunpack.c.h.b16 %v8958
      %v9096 = vunpack.c.l.b16 %v8959
      %v9097 = vunpack.c.h.b16 %v8959
      %v9098 = vunpack.c.l.b16 %v8960
      %v9099 = vunpack.c.h.b16 %v8960
      %v9100 = vunpack.c.l.b16 %v8961
      %v9101 = vunpack.c.h.b16 %v8961
      %v9102 = vunpack.c.l.b16 %v8962
      %v9103 = vunpack.c.h.b16 %v8962
      %v9104 = vunpack.c.l.b16 %v8963
      %v9105 = vunpack.c.h.b16 %v8963
      %v9106 = vunpack.c.l.b16 %v8964
      %v9107 = vunpack.c.h.b16 %v8964
      %v9108 = vunpack.c.l.b16 %v8965
      %v9109 = vunpack.c.h.b16 %v8965
      %v9110 = vpack.c.b16 %v9016, %v9014
      %v9111 = vpack.c.b16 %v9017, %v9015
      %v9112 = vpack.c.b16 %v9020, %v9018
      %v9113 = vpack.c.b16 %v9021, %v9019
      %v9114 = vpack.c.b16 %v9024, %v9022
      %v9115 = vpack.c.b16 %v9025, %v9023
      %v9116 = vpack.c.b16 %v9028, %v9026
      %v9117 = vpack.c.b16 %v9029, %v9027
      %v9118 = vpack.c.b16 %v9032, %v9030
      %v9119 = vpack.c.b16 %v9033, %v9031
      %v9120 = vpack.c.b16 %v9036, %v9034
      %v9121 = vpack.c.b16 %v9037, %v9035
      %v9122 = vpack.c.b16 %v9040, %v9038
      %v9123 = vpack.c.b16 %v9041, %v9039
      %v9124 = vpack.c.b16 %v9044, %v9042
      %v9125 = vpack.c.b16 %v9045, %v9043
      %v9126 = vpack.c.b16 %v9048, %v9046
      %v9127 = vpack.c.b16 %v9049, %v9047
      %v9128 = vpack.c.b16 %v9052, %v9050
      %v9129 = vpack.c.b16 %v9053, %v9051
      %v9130 = vpack.c.b16 %v9056, %v9054
      %v9131 = vpack.c.b16 %v9057, %v9055
      %v9132 = vpack.c.b16 %v9060, %v9058
      %v9133 = vpack.c.b16 %v9061, %v9059
      %v9134 = vpack.c.b16 %v9064, %v9062
      %v9135 = vpack.c.b16 %v9065, %v9063
      %v9136 = vpack.c.b16 %v9068, %v9066
      %v9137 = vpack.c.b16 %v9069, %v9067
      %v9138 = vpack.c.b16 %v9072, %v9070
      %v9139 = vpack.c.b16 %v9073, %v9071
      %v9140 = vpack.c.b16 %v9076, %v9074
      %v9141 = vpack.c.b16 %v9077, %v9075
      %v9142 = vpack.c.b16 %v9080, %v9078
      %v9143 = vpack.c.b16 %v9081, %v9079
      %v9144 = vpack.c.b16 %v9084, %v9082
      %v9145 = vpack.c.b16 %v9085, %v9083
      %v9146 = vpack.c.b16 %v9088, %v9086
      %v9147 = vpack.c.b16 %v9089, %v9087
      %v9148 = vpack.c.b16 %v9092, %v9090
      %v9149 = vpack.c.b16 %v9093, %v9091
      %v9150 = vpack.c.b16 %v9096, %v9094
      %v9151 = vpack.c.b16 %v9097, %v9095
      %v9152 = vpack.c.b16 %v9100, %v9098
      %v9153 = vpack.c.b16 %v9101, %v9099
      %v9154 = vpack.c.b16 %v9104, %v9102
      %v9155 = vpack.c.b16 %v9105, %v9103
      %v9156 = vpack.c.b16 %v9108, %v9106
      %v9157 = vpack.c.b16 %v9109, %v9107
      %9206 = vmatpush.bf16.msra.mxu0 %v9124
      %9207 = vmatpush.bf16.msra.mxu0 %v9122
      %9208 = vmatpush.bf16.msra.mxu0 %v9120
      %9209 = vmatpush.bf16.msra.mxu0 %v9118
      %9210 = vmatpush.bf16.msra.mxu0 %v9116
      %9211 = vmatpush.bf16.msra.mxu0 %v9114
      %9212 = vmatpush.bf16.msra.mxu0 %v9112
      %9213 = vmatpush.bf16.msra.mxu0 %v9110
      %9214 = vmatmul.bf16.gmra.mxu0 %v8518
      %v9215 = vpop.f32.mrf.mxu0
      %v9216 = vadd.f32 0.0, %v9215
      %v9217 = vpop.f32.mrf.mxu0
      %v9218 = vadd.f32 0.0, %v9217
      %9219 = vmatmul.bf16.gmra.mxu0 %v8519
      %v9220 = vpop.f32.mrf.mxu0
      %v9221 = vadd.f32 0.0, %v9220
      %v9222 = vpop.f32.mrf.mxu0
      %v9223 = vadd.f32 0.0, %v9222
      %9224 = vmatmul.bf16.gmra.mxu0 %v8520
      %v9225 = vpop.f32.mrf.mxu0
      %v9226 = vadd.f32 0.0, %v9225
      %v9227 = vpop.f32.mrf.mxu0
      %v9228 = vadd.f32 0.0, %v9227
      %9229 = vmatmul.bf16.gmra.mxu0 %v8521
      %v9230 = vpop.f32.mrf.mxu0
      %v9231 = vadd.f32 0.0, %v9230
      %v9232 = vpop.f32.mrf.mxu0
      %v9233 = vadd.f32 0.0, %v9232
      %9234 = vmatmul.bf16.gmra.mxu0 %v8522
      %v9235 = vpop.f32.mrf.mxu0
      %v9236 = vadd.f32 0.0, %v9235
      %v9237 = vpop.f32.mrf.mxu0
      %v9238 = vadd.f32 0.0, %v9237
      %9239 = vmatmul.bf16.gmra.mxu0 %v8523
      %v9240 = vpop.f32.mrf.mxu0
      %v9241 = vadd.f32 0.0, %v9240
      %v9242 = vpop.f32.mrf.mxu0
      %v9243 = vadd.f32 0.0, %v9242
      %9244 = vmatmul.bf16.gmra.mxu0 %v8524
      %v9245 = vpop.f32.mrf.mxu0
      %v9246 = vadd.f32 0.0, %v9245
      %v9247 = vpop.f32.mrf.mxu0
      %v9248 = vadd.f32 0.0, %v9247
      %9249 = vmatmul.bf16.gmra.mxu0 %v8525
      %v9250 = vpop.f32.mrf.mxu0
      %v9251 = vadd.f32 0.0, %v9250
      %v9252 = vpop.f32.mrf.mxu0
      %v9253 = vadd.f32 0.0, %v9252
      %9254 = vmatmul.bf16.gmra.mxu0 %v8526
      %v9255 = vpop.f32.mrf.mxu0
      %v9256 = vadd.f32 0.0, %v9255
      %v9257 = vpop.f32.mrf.mxu0
      %v9258 = vadd.f32 0.0, %v9257
      %9259 = vmatmul.bf16.gmra.mxu0 %v8527
      %v9260 = vpop.f32.mrf.mxu0
      %v9261 = vadd.f32 0.0, %v9260
      %v9262 = vpop.f32.mrf.mxu0
      %v9263 = vadd.f32 0.0, %v9262
      %9264 = vmatmul.bf16.gmra.mxu0 %v8528
      %v9265 = vpop.f32.mrf.mxu0
      %v9266 = vadd.f32 0.0, %v9265
      %v9267 = vpop.f32.mrf.mxu0
      %v9268 = vadd.f32 0.0, %v9267
      %9269 = vmatmul.bf16.gmra.mxu0 %v8529
      %v9270 = vpop.f32.mrf.mxu0
      %v9271 = vadd.f32 0.0, %v9270
      %v9272 = vpop.f32.mrf.mxu0
      %v9273 = vadd.f32 0.0, %v9272
      %9274 = vmatmul.bf16.gmra.mxu0 %v8530
      %v9275 = vpop.f32.mrf.mxu0
      %v9276 = vadd.f32 0.0, %v9275
      %v9277 = vpop.f32.mrf.mxu0
      %v9278 = vadd.f32 0.0, %v9277
      %9279 = vmatmul.bf16.gmra.mxu0 %v8531
      %v9280 = vpop.f32.mrf.mxu0
      %v9281 = vadd.f32 0.0, %v9280
      %v9282 = vpop.f32.mrf.mxu0
      %v9283 = vadd.f32 0.0, %v9282
      %9284 = vmatmul.bf16.gmra.mxu0 %v8532
      %v9285 = vpop.f32.mrf.mxu0
      %v9286 = vadd.f32 0.0, %v9285
      %v9287 = vpop.f32.mrf.mxu0
      %v9288 = vadd.f32 0.0, %v9287
      %9289 = vmatmul.bf16.gmra.mxu0 %v8533
      %v9290 = vpop.f32.mrf.mxu0
      %v9291 = vadd.f32 0.0, %v9290
      %v9292 = vpop.f32.mrf.mxu0
      %v9293 = vadd.f32 0.0, %v9292
      %9294 = vdwg.mxu0
      %9295 = vmatpush.bf16.msra.mxu0 %v9140
      %9296 = vmatpush.bf16.msra.mxu0 %v9138
      %9297 = vmatpush.bf16.msra.mxu0 %v9136
      %9298 = vmatpush.bf16.msra.mxu0 %v9134
      %9299 = vmatpush.bf16.msra.mxu0 %v9132
      %9300 = vmatpush.bf16.msra.mxu0 %v9130
      %9301 = vmatpush.bf16.msra.mxu0 %v9128
      %9302 = vmatpush.bf16.msra.mxu0 %v9126
      %9303 = vmatmul.bf16.gmra.mxu0 %v8609
      %v9304 = vpop.f32.mrf.mxu0
      %v9305 = vadd.f32 %v9216, %v9304
      %v9306 = vpop.f32.mrf.mxu0
      %v9307 = vadd.f32 %v9218, %v9306
      %9308 = vmatmul.bf16.gmra.mxu0 %v8621
      %v9309 = vpop.f32.mrf.mxu0
      %v9310 = vadd.f32 %v9221, %v9309
      %v9311 = vpop.f32.mrf.mxu0
      %v9312 = vadd.f32 %v9223, %v9311
      %9313 = vmatmul.bf16.gmra.mxu0 %v8633
      %v9314 = vpop.f32.mrf.mxu0
      %v9315 = vadd.f32 %v9226, %v9314
      %v9316 = vpop.f32.mrf.mxu0
      %v9317 = vadd.f32 %v9228, %v9316
      %9318 = vmatmul.bf16.gmra.mxu0 %v8645
      %v9319 = vpop.f32.mrf.mxu0
      %v9320 = vadd.f32 %v9231, %v9319
      %v9321 = vpop.f32.mrf.mxu0
      %v9322 = vadd.f32 %v9233, %v9321
      %9323 = vmatmul.bf16.gmra.mxu0 %v8657
      %v9324 = vpop.f32.mrf.mxu0
      %v9325 = vadd.f32 %v9236, %v9324
      %v9326 = vpop.f32.mrf.mxu0
      %v9327 = vadd.f32 %v9238, %v9326
      %9328 = vmatmul.bf16.gmra.mxu0 %v8669
      %v9329 = vpop.f32.mrf.mxu0
      %v9330 = vadd.f32 %v9241, %v9329
      %v9331 = vpop.f32.mrf.mxu0
      %v9332 = vadd.f32 %v9243, %v9331
      %9333 = vmatmul.bf16.gmra.mxu0 %v8681
      %v9334 = vpop.f32.mrf.mxu0
      %v9335 = vadd.f32 %v9246, %v9334
      %v9336 = vpop.f32.mrf.mxu0
      %v9337 = vadd.f32 %v9248, %v9336
      %9338 = vmatmul.bf16.gmra.mxu0 %v8693
      %v9339 = vpop.f32.mrf.mxu0
      %v9340 = vadd.f32 %v9251, %v9339
      %v9341 = vpop.f32.mrf.mxu0
      %v9342 = vadd.f32 %v9253, %v9341
      %9343 = vmatmul.bf16.gmra.mxu0 %v8705
      %v9344 = vpop.f32.mrf.mxu0
      %v9345 = vadd.f32 %v9256, %v9344
      %v9346 = vpop.f32.mrf.mxu0
      %v9347 = vadd.f32 %v9258, %v9346
      %9348 = vmatmul.bf16.gmra.mxu0 %v8717
      %v9349 = vpop.f32.mrf.mxu0
      %v9350 = vadd.f32 %v9261, %v9349
      %v9351 = vpop.f32.mrf.mxu0
      %v9352 = vadd.f32 %v9263, %v9351
      %9353 = vmatmul.bf16.gmra.mxu0 %v8729
      %v9354 = vpop.f32.mrf.mxu0
      %v9355 = vadd.f32 %v9266, %v9354
      %v9356 = vpop.f32.mrf.mxu0
      %v9357 = vadd.f32 %v9268, %v9356
      %9358 = vmatmul.bf16.gmra.mxu0 %v8741
      %v9359 = vpop.f32.mrf.mxu0
      %v9360 = vadd.f32 %v9271, %v9359
      %v9361 = vpop.f32.mrf.mxu0
      %v9362 = vadd.f32 %v9273, %v9361
      %9363 = vmatmul.bf16.gmra.mxu0 %v8753
      %v9364 = vpop.f32.mrf.mxu0
      %v9365 = vadd.f32 %v9276, %v9364
      %v9366 = vpop.f32.mrf.mxu0
      %v9367 = vadd.f32 %v9278, %v9366
      %9368 = vmatmul.bf16.gmra.mxu0 %v8765
      %v9369 = vpop.f32.mrf.mxu0
      %v9370 = vadd.f32 %v9281, %v9369
      %v9371 = vpop.f32.mrf.mxu0
      %v9372 = vadd.f32 %v9283, %v9371
      %9373 = vmatmul.bf16.gmra.mxu0 %v8777
      %v9374 = vpop.f32.mrf.mxu0
      %v9375 = vadd.f32 %v9286, %v9374
      %v9376 = vpop.f32.mrf.mxu0
      %v9377 = vadd.f32 %v9288, %v9376
      %9378 = vmatmul.bf16.gmra.mxu0 %v8789
      %v9379 = vpop.f32.mrf.mxu0
      %v9380 = vadd.f32 %v9291, %v9379
      %v9381 = vpop.f32.mrf.mxu0
      %v9382 = vadd.f32 %v9293, %v9381
      %9383 = vdwg.mxu0
      %9384 = vmatpush.bf16.msra.mxu0 %v9156
      %9385 = vmatpush.bf16.msra.mxu0 %v9154
      %9386 = vmatpush.bf16.msra.mxu0 %v9152
      %9387 = vmatpush.bf16.msra.mxu0 %v9150
      %9388 = vmatpush.bf16.msra.mxu0 %v9148
      %9389 = vmatpush.bf16.msra.mxu0 %v9146
      %9390 = vmatpush.bf16.msra.mxu0 %v9144
      %9391 = vmatpush.bf16.msra.mxu0 %v9142
      %9392 = vmatmul.bf16.gmra.mxu0 %v8856
      %v9393 = vpop.f32.mrf.mxu0
      %v9394 = vadd.f32 %v9305, %v9393
      %v9395 = vpop.f32.mrf.mxu0
      %v9396 = vadd.f32 %v9307, %v9395
      %9397 = vmatmul.bf16.gmra.mxu0 %v8859
      %v9398 = vpop.f32.mrf.mxu0
      %v9399 = vadd.f32 %v9310, %v9398
      %v9400 = vpop.f32.mrf.mxu0
      %v9401 = vadd.f32 %v9312, %v9400
      %9402 = vmatmul.bf16.gmra.mxu0 %v8862
      %v9403 = vpop.f32.mrf.mxu0
      %v9404 = vadd.f32 %v9315, %v9403
      %v9405 = vpop.f32.mrf.mxu0
      %v9406 = vadd.f32 %v9317, %v9405
      %9407 = vmatmul.bf16.gmra.mxu0 %v8865
      %v9408 = vpop.f32.mrf.mxu0
      %v9409 = vadd.f32 %v9320, %v9408
      %v9410 = vpop.f32.mrf.mxu0
      %v9411 = vadd.f32 %v9322, %v9410
      %9412 = vmatmul.bf16.gmra.mxu0 %v8868
      %v9413 = vpop.f32.mrf.mxu0
      %v9414 = vadd.f32 %v9325, %v9413
      %v9415 = vpop.f32.mrf.mxu0
      %v9416 = vadd.f32 %v9327, %v9415
      %9417 = vmatmul.bf16.gmra.mxu0 %v8871
      %v9418 = vpop.f32.mrf.mxu0
      %v9419 = vadd.f32 %v9330, %v9418
      %v9420 = vpop.f32.mrf.mxu0
      %v9421 = vadd.f32 %v9332, %v9420
      %9422 = vmatmul.bf16.gmra.mxu0 %v8874
      %v9423 = vpop.f32.mrf.mxu0
      %v9424 = vadd.f32 %v9335, %v9423
      %v9425 = vpop.f32.mrf.mxu0
      %v9426 = vadd.f32 %v9337, %v9425
      %9427 = vmatmul.bf16.gmra.mxu0 %v8877
      %v9428 = vpop.f32.mrf.mxu0
      %v9429 = vadd.f32 %v9340, %v9428
      %v9430 = vpop.f32.mrf.mxu0
      %v9431 = vadd.f32 %v9342, %v9430
      %9432 = vmatmul.bf16.gmra.mxu0 %v8880
      %v9433 = vpop.f32.mrf.mxu0
      %v9434 = vadd.f32 %v9345, %v9433
      %v9435 = vpop.f32.mrf.mxu0
      %v9436 = vadd.f32 %v9347, %v9435
      %9437 = vmatmul.bf16.gmra.mxu0 %v8883
      %v9438 = vpop.f32.mrf.mxu0
      %v9439 = vadd.f32 %v9350, %v9438
      %v9440 = vpop.f32.mrf.mxu0
      %v9441 = vadd.f32 %v9352, %v9440
      %9442 = vmatmul.bf16.gmra.mxu0 %v8886
      %v9443 = vpop.f32.mrf.mxu0
      %v9444 = vadd.f32 %v9355, %v9443
      %v9445 = vpop.f32.mrf.mxu0
      %v9446 = vadd.f32 %v9357, %v9445
      %9447 = vmatmul.bf16.gmra.mxu0 %v8889
      %v9448 = vpop.f32.mrf.mxu0
      %v9449 = vadd.f32 %v9360, %v9448
      %v9450 = vpop.f32.mrf.mxu0
      %v9451 = vadd.f32 %v9362, %v9450
      %9452 = vmatmul.bf16.gmra.mxu0 %v8892
      %v9453 = vpop.f32.mrf.mxu0
      %v9454 = vadd.f32 %v9365, %v9453
      %v9455 = vpop.f32.mrf.mxu0
      %v9456 = vadd.f32 %v9367, %v9455
      %9457 = vmatmul.bf16.gmra.mxu0 %v8895
      %v9458 = vpop.f32.mrf.mxu0
      %v9459 = vadd.f32 %v9370, %v9458
      %v9460 = vpop.f32.mrf.mxu0
      %v9461 = vadd.f32 %v9372, %v9460
      %9462 = vmatmul.bf16.gmra.mxu0 %v8898
      %v9463 = vpop.f32.mrf.mxu0
      %v9464 = vadd.f32 %v9375, %v9463
      %v9465 = vpop.f32.mrf.mxu0
      %v9466 = vadd.f32 %v9377, %v9465
      %9467 = vmatmul.bf16.gmra.mxu0 %v8901
      %v9468 = vpop.f32.mrf.mxu0
      %v9469 = vadd.f32 %v9380, %v9468
      %v9470 = vpop.f32.mrf.mxu0
      %v9471 = vadd.f32 %v9382, %v9470
      %9472 = vdwg.mxu0
      %9473 = vmatpush.bf16.msra.mxu0 %v9125
      %9474 = vmatpush.bf16.msra.mxu0 %v9123
      %9475 = vmatpush.bf16.msra.mxu0 %v9121
      %9476 = vmatpush.bf16.msra.mxu0 %v9119
      %9477 = vmatpush.bf16.msra.mxu0 %v9117
      %9478 = vmatpush.bf16.msra.mxu0 %v9115
      %9479 = vmatpush.bf16.msra.mxu0 %v9113
      %9480 = vmatpush.bf16.msra.mxu0 %v9111
      %9481 = vmatmul.bf16.gmra.mxu0 %v8518
      %v9482 = vpop.f32.mrf.mxu0
      %v9483 = vadd.f32 0.0, %v9482
      %v9484 = vpop.f32.mrf.mxu0
      %v9485 = vadd.f32 0.0, %v9484
      %9486 = vmatmul.bf16.gmra.mxu0 %v8519
      %v9487 = vpop.f32.mrf.mxu0
      %v9488 = vadd.f32 0.0, %v9487
      %v9489 = vpop.f32.mrf.mxu0
      %v9490 = vadd.f32 0.0, %v9489
      %9491 = vmatmul.bf16.gmra.mxu0 %v8520
      %v9492 = vpop.f32.mrf.mxu0
      %v9493 = vadd.f32 0.0, %v9492
      %v9494 = vpop.f32.mrf.mxu0
      %v9495 = vadd.f32 0.0, %v9494
      %9496 = vmatmul.bf16.gmra.mxu0 %v8521
      %v9497 = vpop.f32.mrf.mxu0
      %v9498 = vadd.f32 0.0, %v9497
      %v9499 = vpop.f32.mrf.mxu0
      %v9500 = vadd.f32 0.0, %v9499
      %9501 = vmatmul.bf16.gmra.mxu0 %v8522
      %v9502 = vpop.f32.mrf.mxu0
      %v9503 = vadd.f32 0.0, %v9502
      %v9504 = vpop.f32.mrf.mxu0
      %v9505 = vadd.f32 0.0, %v9504
      %9506 = vmatmul.bf16.gmra.mxu0 %v8523
      %v9507 = vpop.f32.mrf.mxu0
      %v9508 = vadd.f32 0.0, %v9507
      %v9509 = vpop.f32.mrf.mxu0
      %v9510 = vadd.f32 0.0, %v9509
      %9511 = vmatmul.bf16.gmra.mxu0 %v8524
      %v9512 = vpop.f32.mrf.mxu0
      %v9513 = vadd.f32 0.0, %v9512
      %v9514 = vpop.f32.mrf.mxu0
      %v9515 = vadd.f32 0.0, %v9514
      %9516 = vmatmul.bf16.gmra.mxu0 %v8525
      %v9517 = vpop.f32.mrf.mxu0
      %v9518 = vadd.f32 0.0, %v9517
      %v9519 = vpop.f32.mrf.mxu0
      %v9520 = vadd.f32 0.0, %v9519
      %9521 = vmatmul.bf16.gmra.mxu0 %v8526
      %v9522 = vpop.f32.mrf.mxu0
      %v9523 = vadd.f32 0.0, %v9522
      %v9524 = vpop.f32.mrf.mxu0
      %v9525 = vadd.f32 0.0, %v9524
      %9526 = vmatmul.bf16.gmra.mxu0 %v8527
      %v9527 = vpop.f32.mrf.mxu0
      %v9528 = vadd.f32 0.0, %v9527
      %v9529 = vpop.f32.mrf.mxu0
      %v9530 = vadd.f32 0.0, %v9529
      %9531 = vmatmul.bf16.gmra.mxu0 %v8528
      %v9532 = vpop.f32.mrf.mxu0
      %v9533 = vadd.f32 0.0, %v9532
      %v9534 = vpop.f32.mrf.mxu0
      %v9535 = vadd.f32 0.0, %v9534
      %9536 = vmatmul.bf16.gmra.mxu0 %v8529
      %v9537 = vpop.f32.mrf.mxu0
      %v9538 = vadd.f32 0.0, %v9537
      %v9539 = vpop.f32.mrf.mxu0
      %v9540 = vadd.f32 0.0, %v9539
      %9541 = vmatmul.bf16.gmra.mxu0 %v8530
      %v9542 = vpop.f32.mrf.mxu0
      %v9543 = vadd.f32 0.0, %v9542
      %v9544 = vpop.f32.mrf.mxu0
      %v9545 = vadd.f32 0.0, %v9544
      %9546 = vmatmul.bf16.gmra.mxu0 %v8531
      %v9547 = vpop.f32.mrf.mxu0
      %v9548 = vadd.f32 0.0, %v9547
      %v9549 = vpop.f32.mrf.mxu0
      %v9550 = vadd.f32 0.0, %v9549
      %9551 = vmatmul.bf16.gmra.mxu0 %v8532
      %v9552 = vpop.f32.mrf.mxu0
      %v9553 = vadd.f32 0.0, %v9552
      %v9554 = vpop.f32.mrf.mxu0
      %v9555 = vadd.f32 0.0, %v9554
      %9556 = vmatmul.bf16.gmra.mxu0 %v8533
      %v9557 = vpop.f32.mrf.mxu0
      %v9558 = vadd.f32 0.0, %v9557
      %v9559 = vpop.f32.mrf.mxu0
      %v9560 = vadd.f32 0.0, %v9559
      %9561 = vdwg.mxu0
      %9562 = vmatpush.bf16.msra.mxu0 %v9141
      %9563 = vmatpush.bf16.msra.mxu0 %v9139
      %9564 = vmatpush.bf16.msra.mxu0 %v9137
      %9565 = vmatpush.bf16.msra.mxu0 %v9135
      %9566 = vmatpush.bf16.msra.mxu0 %v9133
      %9567 = vmatpush.bf16.msra.mxu0 %v9131
      %9568 = vmatpush.bf16.msra.mxu0 %v9129
      %9569 = vmatpush.bf16.msra.mxu0 %v9127
      %9570 = vmatmul.bf16.gmra.mxu0 %v8609
      %v9571 = vpop.f32.mrf.mxu0
      %v9572 = vadd.f32 %v9483, %v9571
      %v9573 = vpop.f32.mrf.mxu0
      %v9574 = vadd.f32 %v9485, %v9573
      %9575 = vmatmul.bf16.gmra.mxu0 %v8621
      %v9576 = vpop.f32.mrf.mxu0
      %v9577 = vadd.f32 %v9488, %v9576
      %v9578 = vpop.f32.mrf.mxu0
      %v9579 = vadd.f32 %v9490, %v9578
      %9580 = vmatmul.bf16.gmra.mxu0 %v8633
      %v9581 = vpop.f32.mrf.mxu0
      %v9582 = vadd.f32 %v9493, %v9581
      %v9583 = vpop.f32.mrf.mxu0
      %v9584 = vadd.f32 %v9495, %v9583
      %9585 = vmatmul.bf16.gmra.mxu0 %v8645
      %v9586 = vpop.f32.mrf.mxu0
      %v9587 = vadd.f32 %v9498, %v9586
      %v9588 = vpop.f32.mrf.mxu0
      %v9589 = vadd.f32 %v9500, %v9588
      %9590 = vmatmul.bf16.gmra.mxu0 %v8657
      %v9591 = vpop.f32.mrf.mxu0
      %v9592 = vadd.f32 %v9503, %v9591
      %v9593 = vpop.f32.mrf.mxu0
      %v9594 = vadd.f32 %v9505, %v9593
      %9595 = vmatmul.bf16.gmra.mxu0 %v8669
      %v9596 = vpop.f32.mrf.mxu0
      %v9597 = vadd.f32 %v9508, %v9596
      %v9598 = vpop.f32.mrf.mxu0
      %v9599 = vadd.f32 %v9510, %v9598
      %9600 = vmatmul.bf16.gmra.mxu0 %v8681
      %v9601 = vpop.f32.mrf.mxu0
      %v9602 = vadd.f32 %v9513, %v9601
      %v9603 = vpop.f32.mrf.mxu0
      %v9604 = vadd.f32 %v9515, %v9603
      %9605 = vmatmul.bf16.gmra.mxu0 %v8693
      %v9606 = vpop.f32.mrf.mxu0
      %v9607 = vadd.f32 %v9518, %v9606
      %v9608 = vpop.f32.mrf.mxu0
      %v9609 = vadd.f32 %v9520, %v9608
      %9610 = vmatmul.bf16.gmra.mxu0 %v8705
      %v9611 = vpop.f32.mrf.mxu0
      %v9612 = vadd.f32 %v9523, %v9611
      %v9613 = vpop.f32.mrf.mxu0
      %v9614 = vadd.f32 %v9525, %v9613
      %9615 = vmatmul.bf16.gmra.mxu0 %v8717
      %v9616 = vpop.f32.mrf.mxu0
      %v9617 = vadd.f32 %v9528, %v9616
      %v9618 = vpop.f32.mrf.mxu0
      %v9619 = vadd.f32 %v9530, %v9618
      %9620 = vmatmul.bf16.gmra.mxu0 %v8729
      %v9621 = vpop.f32.mrf.mxu0
      %v9622 = vadd.f32 %v9533, %v9621
      %v9623 = vpop.f32.mrf.mxu0
      %v9624 = vadd.f32 %v9535, %v9623
      %9625 = vmatmul.bf16.gmra.mxu0 %v8741
      %v9626 = vpop.f32.mrf.mxu0
      %v9627 = vadd.f32 %v9538, %v9626
      %v9628 = vpop.f32.mrf.mxu0
      %v9629 = vadd.f32 %v9540, %v9628
      %9630 = vmatmul.bf16.gmra.mxu0 %v8753
      %v9631 = vpop.f32.mrf.mxu0
      %v9632 = vadd.f32 %v9543, %v9631
      %v9633 = vpop.f32.mrf.mxu0
      %v9634 = vadd.f32 %v9545, %v9633
      %9635 = vmatmul.bf16.gmra.mxu0 %v8765
      %v9636 = vpop.f32.mrf.mxu0
      %v9637 = vadd.f32 %v9548, %v9636
      %v9638 = vpop.f32.mrf.mxu0
      %v9639 = vadd.f32 %v9550, %v9638
      %9640 = vmatmul.bf16.gmra.mxu0 %v8777
      %v9641 = vpop.f32.mrf.mxu0
      %v9642 = vadd.f32 %v9553, %v9641
      %v9643 = vpop.f32.mrf.mxu0
      %v9644 = vadd.f32 %v9555, %v9643
      %9645 = vmatmul.bf16.gmra.mxu0 %v8789
      %v9646 = vpop.f32.mrf.mxu0
      %v9647 = vadd.f32 %v9558, %v9646
      %v9648 = vpop.f32.mrf.mxu0
      %v9649 = vadd.f32 %v9560, %v9648
      %9650 = vdwg.mxu0
      %9651 = vmatpush.bf16.msra.mxu0 %v9157
      %9652 = vmatpush.bf16.msra.mxu0 %v9155
      %9653 = vmatpush.bf16.msra.mxu0 %v9153
      %9654 = vmatpush.bf16.msra.mxu0 %v9151
      %9655 = vmatpush.bf16.msra.mxu0 %v9149
      %9656 = vmatpush.bf16.msra.mxu0 %v9147
      %9657 = vmatpush.bf16.msra.mxu0 %v9145
      %9658 = vmatpush.bf16.msra.mxu0 %v9143
      %9659 = vmatmul.bf16.gmra.mxu0 %v8856
      %v9660 = vpop.f32.mrf.mxu0
      %v9661 = vadd.f32 %v9572, %v9660
      %v9662 = vpop.f32.mrf.mxu0
      %v9663 = vadd.f32 %v9574, %v9662
      %9664 = vmatmul.bf16.gmra.mxu0 %v8859
      %v9665 = vpop.f32.mrf.mxu0
      %v9666 = vadd.f32 %v9577, %v9665
      %v9667 = vpop.f32.mrf.mxu0
      %v9668 = vadd.f32 %v9579, %v9667
      %9669 = vmatmul.bf16.gmra.mxu0 %v8862
      %v9670 = vpop.f32.mrf.mxu0
      %v9671 = vadd.f32 %v9582, %v9670
      %v9672 = vpop.f32.mrf.mxu0
      %v9673 = vadd.f32 %v9584, %v9672
      %9674 = vmatmul.bf16.gmra.mxu0 %v8865
      %v9675 = vpop.f32.mrf.mxu0
      %v9676 = vadd.f32 %v9587, %v9675
      %v9677 = vpop.f32.mrf.mxu0
      %v9678 = vadd.f32 %v9589, %v9677
      %9679 = vmatmul.bf16.gmra.mxu0 %v8868
      %v9680 = vpop.f32.mrf.mxu0
      %v9681 = vadd.f32 %v9592, %v9680
      %v9682 = vpop.f32.mrf.mxu0
      %v9683 = vadd.f32 %v9594, %v9682
      %9684 = vmatmul.bf16.gmra.mxu0 %v8871
      %v9685 = vpop.f32.mrf.mxu0
      %v9686 = vadd.f32 %v9597, %v9685
      %v9687 = vpop.f32.mrf.mxu0
      %v9688 = vadd.f32 %v9599, %v9687
      %9689 = vmatmul.bf16.gmra.mxu0 %v8874
      %v9690 = vpop.f32.mrf.mxu0
      %v9691 = vadd.f32 %v9602, %v9690
      %v9692 = vpop.f32.mrf.mxu0
      %v9693 = vadd.f32 %v9604, %v9692
      %9694 = vmatmul.bf16.gmra.mxu0 %v8877
      %v9695 = vpop.f32.mrf.mxu0
      %v9696 = vadd.f32 %v9607, %v9695
      %v9697 = vpop.f32.mrf.mxu0
      %v9698 = vadd.f32 %v9609, %v9697
      %9699 = vmatmul.bf16.gmra.mxu0 %v8880
      %v9700 = vpop.f32.mrf.mxu0
      %v9701 = vadd.f32 %v9612, %v9700
      %v9702 = vpop.f32.mrf.mxu0
      %v9703 = vadd.f32 %v9614, %v9702
      %9704 = vmatmul.bf16.gmra.mxu0 %v8883
      %v9705 = vpop.f32.mrf.mxu0
      %v9706 = vadd.f32 %v9617, %v9705
      %v9707 = vpop.f32.mrf.mxu0
      %v9708 = vadd.f32 %v9619, %v9707
      %9709 = vmatmul.bf16.gmra.mxu0 %v8886
      %v9710 = vpop.f32.mrf.mxu0
      %v9711 = vadd.f32 %v9622, %v9710
      %v9712 = vpop.f32.mrf.mxu0
      %v9713 = vadd.f32 %v9624, %v9712
      %9714 = vmatmul.bf16.gmra.mxu0 %v8889
      %v9715 = vpop.f32.mrf.mxu0
      %v9716 = vadd.f32 %v9627, %v9715
      %v9717 = vpop.f32.mrf.mxu0
      %v9718 = vadd.f32 %v9629, %v9717
      %9719 = vmatmul.bf16.gmra.mxu0 %v8892
      %v9720 = vpop.f32.mrf.mxu0
      %v9721 = vadd.f32 %v9632, %v9720
      %v9722 = vpop.f32.mrf.mxu0
      %v9723 = vadd.f32 %v9634, %v9722
      %9724 = vmatmul.bf16.gmra.mxu0 %v8895
      %v9725 = vpop.f32.mrf.mxu0
      %v9726 = vadd.f32 %v9637, %v9725
      %v9727 = vpop.f32.mrf.mxu0
      %v9728 = vadd.f32 %v9639, %v9727
      %9729 = vmatmul.bf16.gmra.mxu0 %v8898
      %v9730 = vpop.f32.mrf.mxu0
      %v9731 = vadd.f32 %v9642, %v9730
      %v9732 = vpop.f32.mrf.mxu0
      %v9733 = vadd.f32 %v9644, %v9732
      %9734 = vmatmul.bf16.gmra.mxu0 %v8901
      %v9735 = vpop.f32.mrf.mxu0
      %v9736 = vadd.f32 %v9647, %v9735
      %v9737 = vpop.f32.mrf.mxu0
      %v9738 = vadd.f32 %v9649, %v9737
      %9739 = vdwg.mxu0
      %v9740 = vadd.f32 %v8043, %v9394
      %v9741 = vadd.f32 %v8310, %v9661
      %v9742 = vadd.f32 %v8045, %v9396
      %v9743 = vadd.f32 %v8312, %v9663
      %v9744 = vadd.f32 %v8048, %v9399
      %v9745 = vadd.f32 %v8315, %v9666
      %v9746 = vadd.f32 %v8050, %v9401
      %v9747 = vadd.f32 %v8317, %v9668
      %v9748 = vadd.f32 %v8053, %v9404
      %v9749 = vadd.f32 %v8320, %v9671
      %v9750 = vadd.f32 %v8055, %v9406
      %v9751 = vadd.f32 %v8322, %v9673
      %v9752 = vadd.f32 %v8058, %v9409
      %v9753 = vadd.f32 %v8325, %v9676
      %v9754 = vadd.f32 %v8060, %v9411
      %v9755 = vadd.f32 %v8327, %v9678
      %v9756 = vadd.f32 %v8063, %v9414
      %v9757 = vadd.f32 %v8330, %v9681
      %v9758 = vadd.f32 %v8065, %v9416
      %v9759 = vadd.f32 %v8332, %v9683
      %v9760 = vadd.f32 %v8068, %v9419
      %v9761 = vadd.f32 %v8335, %v9686
      %v9762 = vadd.f32 %v8070, %v9421
      %v9763 = vadd.f32 %v8337, %v9688
      %v9764 = vadd.f32 %v8073, %v9424
      %v9765 = vadd.f32 %v8340, %v9691
      %v9766 = vadd.f32 %v8075, %v9426
      %v9767 = vadd.f32 %v8342, %v9693
      %v9768 = vadd.f32 %v8078, %v9429
      %v9769 = vadd.f32 %v8345, %v9696
      %v9770 = vadd.f32 %v8080, %v9431
      %v9771 = vadd.f32 %v8347, %v9698
      %v9772 = vadd.f32 %v8083, %v9434
      %v9773 = vadd.f32 %v8350, %v9701
      %v9774 = vadd.f32 %v8085, %v9436
      %v9775 = vadd.f32 %v8352, %v9703
      %v9776 = vadd.f32 %v8088, %v9439
      %v9777 = vadd.f32 %v8355, %v9706
      %v9778 = vadd.f32 %v8090, %v9441
      %v9779 = vadd.f32 %v8357, %v9708
      %v9780 = vadd.f32 %v8093, %v9444
      %v9781 = vadd.f32 %v8360, %v9711
      %v9782 = vadd.f32 %v8095, %v9446
      %v9783 = vadd.f32 %v8362, %v9713
      %v9784 = vadd.f32 %v8098, %v9449
      %v9785 = vadd.f32 %v8365, %v9716
      %v9786 = vadd.f32 %v8100, %v9451
      %v9787 = vadd.f32 %v8367, %v9718
      %v9788 = vadd.f32 %v8103, %v9454
      %v9789 = vadd.f32 %v8370, %v9721
      %v9790 = vadd.f32 %v8105, %v9456
      %v9791 = vadd.f32 %v8372, %v9723
      %v9792 = vadd.f32 %v8108, %v9459
      %v9793 = vadd.f32 %v8375, %v9726
      %v9794 = vadd.f32 %v8110, %v9461
      %v9795 = vadd.f32 %v8377, %v9728
      %v9796 = vadd.f32 %v8113, %v9464
      %v9797 = vadd.f32 %v8380, %v9731
      %v9798 = vadd.f32 %v8115, %v9466
      %v9799 = vadd.f32 %v8382, %v9733
      %v9800 = vadd.f32 %v8118, %v9469
      %v9801 = vadd.f32 %v8385, %v9736
      %v9802 = vadd.f32 %v8120, %v9471
      %v9803 = vadd.f32 %v8387, %v9738
      %v9804 = vld [vmem:[%s6] sm:$0x3]
      %v9806 = vperm.slane %v9804, 0
      %v9807 = vperm.slane %v9804, 1
      %v9810 = vadd.f32 %v9740, %v9806
      %v9811 = vadd.f32 %v9741, %v9807
      %v9812 = vadd.f32 %v9742, %v9806
      %v9813 = vadd.f32 %v9743, %v9807
      %v9814 = vadd.f32 %v9744, %v9806
      %v9815 = vadd.f32 %v9745, %v9807
      %v9816 = vadd.f32 %v9746, %v9806
      %v9817 = vadd.f32 %v9747, %v9807
      %v9818 = vadd.f32 %v9748, %v9806
      %v9819 = vadd.f32 %v9749, %v9807
      %v9820 = vadd.f32 %v9750, %v9806
      %v9821 = vadd.f32 %v9751, %v9807
      %v9822 = vadd.f32 %v9752, %v9806
      %v9823 = vadd.f32 %v9753, %v9807
      %v9824 = vadd.f32 %v9754, %v9806
      %v9825 = vadd.f32 %v9755, %v9807
      %v9826 = vadd.f32 %v9756, %v9806
      %v9827 = vadd.f32 %v9757, %v9807
      %v9828 = vadd.f32 %v9758, %v9806
      %v9829 = vadd.f32 %v9759, %v9807
      %v9830 = vadd.f32 %v9760, %v9806
      %v9831 = vadd.f32 %v9761, %v9807
      %v9832 = vadd.f32 %v9762, %v9806
      %v9833 = vadd.f32 %v9763, %v9807
      %v9834 = vadd.f32 %v9764, %v9806
      %v9835 = vadd.f32 %v9765, %v9807
      %v9836 = vadd.f32 %v9766, %v9806
      %v9837 = vadd.f32 %v9767, %v9807
      %v9838 = vadd.f32 %v9768, %v9806
      %v9839 = vadd.f32 %v9769, %v9807
      %v9840 = vadd.f32 %v9770, %v9806
      %v9841 = vadd.f32 %v9771, %v9807
      %v9842 = vadd.f32 %v9772, %v9806
      %v9843 = vadd.f32 %v9773, %v9807
      %v9844 = vadd.f32 %v9774, %v9806
      %v9845 = vadd.f32 %v9775, %v9807
      %v9846 = vadd.f32 %v9776, %v9806
      %v9847 = vadd.f32 %v9777, %v9807
      %v9848 = vadd.f32 %v9778, %v9806
      %v9849 = vadd.f32 %v9779, %v9807
      %v9850 = vadd.f32 %v9780, %v9806
      %v9851 = vadd.f32 %v9781, %v9807
      %v9852 = vadd.f32 %v9782, %v9806
      %v9853 = vadd.f32 %v9783, %v9807
      %v9854 = vadd.f32 %v9784, %v9806
      %v9855 = vadd.f32 %v9785, %v9807
      %v9856 = vadd.f32 %v9786, %v9806
      %v9857 = vadd.f32 %v9787, %v9807
      %v9858 = vadd.f32 %v9788, %v9806
      %v9859 = vadd.f32 %v9789, %v9807
      %v9860 = vadd.f32 %v9790, %v9806
      %v9861 = vadd.f32 %v9791, %v9807
      %v9862 = vadd.f32 %v9792, %v9806
      %v9863 = vadd.f32 %v9793, %v9807
      %v9864 = vadd.f32 %v9794, %v9806
      %v9865 = vadd.f32 %v9795, %v9807
      %v9866 = vadd.f32 %v9796, %v9806
      %v9867 = vadd.f32 %v9797, %v9807
      %v9868 = vadd.f32 %v9798, %v9806
      %v9869 = vadd.f32 %v9799, %v9807
      %v9870 = vadd.f32 %v9800, %v9806
      %v9871 = vadd.f32 %v9801, %v9807
      %v9872 = vadd.f32 %v9802, %v9806
      %v9873 = vadd.f32 %v9803, %v9807
      %v9874 = vld [vmem:[%s339] sm:$0xff]
      %v9875 = vld [vmem:[%s339 + $0x8] sm:$0xff]
      %v9876 = vld [vmem:[%s339 + $0x10] sm:$0xff]
      %v9877 = vld [vmem:[%s339 + $0x18] sm:$0xff]
      %v9878 = vld [vmem:[%s339 + $0x20] sm:$0xff]
      %v9879 = vld [vmem:[%s339 + $0x28] sm:$0xff]
      %v9880 = vld [vmem:[%s339 + $0x30] sm:$0xff]
      %v9881 = vld [vmem:[%s339 + $0x38] sm:$0xff]
      %v9882 = vld [vmem:[%s339 + $0x40] sm:$0xff]
      %v9883 = vld [vmem:[%s339 + $0x48] sm:$0xff]
      %v9884 = vld [vmem:[%s339 + $0x50] sm:$0xff]
      %v9885 = vld [vmem:[%s339 + $0x58] sm:$0xff]
      %v9886 = vld [vmem:[%s339 + $0x60] sm:$0xff]
      %v9887 = vld [vmem:[%s339 + $0x68] sm:$0xff]
      %v9888 = vld [vmem:[%s339 + $0x70] sm:$0xff]
      %v9889 = vld [vmem:[%s339 + $0x78] sm:$0xff]
      %v9890 = vld [vmem:[%s339 + $0x80] sm:$0xff]
      %v9891 = vld [vmem:[%s339 + $0x88] sm:$0xff]
      %v9892 = vld [vmem:[%s339 + $0x90] sm:$0xff]
      %v9893 = vld [vmem:[%s339 + $0x98] sm:$0xff]
      %v9894 = vld [vmem:[%s339 + $0xa0] sm:$0xff]
      %v9895 = vld [vmem:[%s339 + $0xa8] sm:$0xff]
      %v9896 = vld [vmem:[%s339 + $0xb0] sm:$0xff]
      %v9897 = vld [vmem:[%s339 + $0xb8] sm:$0xff]
      %v9898 = vld [vmem:[%s339 + $0xc0] sm:$0xff]
      %v9899 = vld [vmem:[%s339 + $0xc8] sm:$0xff]
      %v9900 = vld [vmem:[%s339 + $0xd0] sm:$0xff]
      %v9901 = vld [vmem:[%s339 + $0xd8] sm:$0xff]
      %v9902 = vld [vmem:[%s339 + $0xe0] sm:$0xff]
      %v9903 = vld [vmem:[%s339 + $0xe8] sm:$0xff]
      %v9904 = vld [vmem:[%s339 + $0xf0] sm:$0xff]
      %v9905 = vld [vmem:[%s339 + $0xf8] sm:$0xff]
      %v9906 = vld [vmem:[%s344] sm:$0x1]
      %v9907 = vld [vmem:[%s344 + $0x1] sm:$0x1]
      %v9908 = vperm.slane %v9906, 0
      %v9909 = vsub.f32 %v9874, %v9908
      %v9910 = vsub.f32 %v9875, %v9908
      %v9911 = vsub.f32 %v9876, %v9908
      %v9912 = vsub.f32 %v9877, %v9908
      %v9913 = vsub.f32 %v9878, %v9908
      %v9914 = vsub.f32 %v9879, %v9908
      %v9915 = vsub.f32 %v9880, %v9908
      %v9916 = vsub.f32 %v9881, %v9908
      %v9917 = vsub.f32 %v9882, %v9908
      %v9918 = vsub.f32 %v9883, %v9908
      %v9919 = vsub.f32 %v9884, %v9908
      %v9920 = vsub.f32 %v9885, %v9908
      %v9921 = vsub.f32 %v9886, %v9908
      %v9922 = vsub.f32 %v9887, %v9908
      %v9923 = vsub.f32 %v9888, %v9908
      %v9924 = vsub.f32 %v9889, %v9908
      %v9925 = vsub.f32 %v9890, %v9908
      %v9926 = vsub.f32 %v9891, %v9908
      %v9927 = vsub.f32 %v9892, %v9908
      %v9928 = vsub.f32 %v9893, %v9908
      %v9929 = vsub.f32 %v9894, %v9908
      %v9930 = vsub.f32 %v9895, %v9908
      %v9931 = vsub.f32 %v9896, %v9908
      %v9932 = vsub.f32 %v9897, %v9908
      %v9933 = vsub.f32 %v9898, %v9908
      %v9934 = vsub.f32 %v9899, %v9908
      %v9935 = vsub.f32 %v9900, %v9908
      %v9936 = vsub.f32 %v9901, %v9908
      %v9937 = vsub.f32 %v9902, %v9908
      %v9938 = vsub.f32 %v9903, %v9908
      %v9939 = vsub.f32 %v9904, %v9908
      %v9940 = vsub.f32 %v9905, %v9908
      %v9941 = vperm.slane %v9907, 0
      %v9942 = vmul.f32 %v9909, %v9941
      %v9943 = vmul.f32 %v9910, %v9941
      %v9944 = vmul.f32 %v9911, %v9941
      %v9945 = vmul.f32 %v9912, %v9941
      %v9946 = vmul.f32 %v9913, %v9941
      %v9947 = vmul.f32 %v9914, %v9941
      %v9948 = vmul.f32 %v9915, %v9941
      %v9949 = vmul.f32 %v9916, %v9941
      %v9950 = vmul.f32 %v9917, %v9941
      %v9951 = vmul.f32 %v9918, %v9941
      %v9952 = vmul.f32 %v9919, %v9941
      %v9953 = vmul.f32 %v9920, %v9941
      %v9954 = vmul.f32 %v9921, %v9941
      %v9955 = vmul.f32 %v9922, %v9941
      %v9956 = vmul.f32 %v9923, %v9941
      %v9957 = vmul.f32 %v9924, %v9941
      %v9958 = vmul.f32 %v9925, %v9941
      %v9959 = vmul.f32 %v9926, %v9941
      %v9960 = vmul.f32 %v9927, %v9941
      %v9961 = vmul.f32 %v9928, %v9941
      %v9962 = vmul.f32 %v9929, %v9941
      %v9963 = vmul.f32 %v9930, %v9941
      %v9964 = vmul.f32 %v9931, %v9941
      %v9965 = vmul.f32 %v9932, %v9941
      %v9966 = vmul.f32 %v9933, %v9941
      %v9967 = vmul.f32 %v9934, %v9941
      %v9968 = vmul.f32 %v9935, %v9941
      %v9969 = vmul.f32 %v9936, %v9941
      %v9970 = vmul.f32 %v9937, %v9941
      %v9971 = vmul.f32 %v9938, %v9941
      %v9972 = vmul.f32 %v9939, %v9941
      %v9973 = vmul.f32 %v9940, %v9941
      %v9974 = vadd.f32 %v9810, 1.0
      %v9975 = vadd.f32 %v9812, 1.0
      %v9976 = vadd.f32 %v9814, 1.0
      %v9977 = vadd.f32 %v9816, 1.0
      %v9978 = vadd.f32 %v9818, 1.0
      %v9979 = vadd.f32 %v9820, 1.0
      %v9980 = vadd.f32 %v9822, 1.0
      %v9981 = vadd.f32 %v9824, 1.0
      %v9982 = vadd.f32 %v9826, 1.0
      %v9983 = vadd.f32 %v9828, 1.0
      %v9984 = vadd.f32 %v9830, 1.0
      %v9985 = vadd.f32 %v9832, 1.0
      %v9986 = vadd.f32 %v9834, 1.0
      %v9987 = vadd.f32 %v9836, 1.0
      %v9988 = vadd.f32 %v9838, 1.0
      %v9989 = vadd.f32 %v9840, 1.0
      %v9990 = vadd.f32 %v9842, 1.0
      %v9991 = vadd.f32 %v9844, 1.0
      %v9992 = vadd.f32 %v9846, 1.0
      %v9993 = vadd.f32 %v9848, 1.0
      %v9994 = vadd.f32 %v9850, 1.0
      %v9995 = vadd.f32 %v9852, 1.0
      %v9996 = vadd.f32 %v9854, 1.0
      %v9997 = vadd.f32 %v9856, 1.0
      %v9998 = vadd.f32 %v9858, 1.0
      %v9999 = vadd.f32 %v9860, 1.0
      %v10000 = vadd.f32 %v9862, 1.0
      %v10001 = vadd.f32 %v9864, 1.0
      %v10002 = vadd.f32 %v9866, 1.0
      %v10003 = vadd.f32 %v9868, 1.0
      %v10004 = vadd.f32 %v9870, 1.0
      %v10005 = vadd.f32 %v9872, 1.0
      %v10006 = vmul.f32 %v9942, %v9974
      %v10007 = vmul.f32 %v9943, %v9975
      %v10008 = vmul.f32 %v9944, %v9976
      %v10009 = vmul.f32 %v9945, %v9977
      %v10010 = vmul.f32 %v9946, %v9978
      %v10011 = vmul.f32 %v9947, %v9979
      %v10012 = vmul.f32 %v9948, %v9980
      %v10013 = vmul.f32 %v9949, %v9981
      %v10014 = vmul.f32 %v9950, %v9982
      %v10015 = vmul.f32 %v9951, %v9983
      %v10016 = vmul.f32 %v9952, %v9984
      %v10017 = vmul.f32 %v9953, %v9985
      %v10018 = vmul.f32 %v9954, %v9986
      %v10019 = vmul.f32 %v9955, %v9987
      %v10020 = vmul.f32 %v9956, %v9988
      %v10021 = vmul.f32 %v9957, %v9989
      %v10022 = vmul.f32 %v9958, %v9990
      %v10023 = vmul.f32 %v9959, %v9991
      %v10024 = vmul.f32 %v9960, %v9992
      %v10025 = vmul.f32 %v9961, %v9993
      %v10026 = vmul.f32 %v9962, %v9994
      %v10027 = vmul.f32 %v9963, %v9995
      %v10028 = vmul.f32 %v9964, %v9996
      %v10029 = vmul.f32 %v9965, %v9997
      %v10030 = vmul.f32 %v9966, %v9998
      %v10031 = vmul.f32 %v9967, %v9999
      %v10032 = vmul.f32 %v9968, %v10000
      %v10033 = vmul.f32 %v9969, %v10001
      %v10034 = vmul.f32 %v9970, %v10002
      %v10035 = vmul.f32 %v9971, %v10003
      %v10036 = vmul.f32 %v9972, %v10004
      %v10037 = vmul.f32 %v9973, %v10005
      %v10038 = vadd.f32 %v10006, %v9811
      %v10039 = vadd.f32 %v10007, %v9813
      %v10040 = vadd.f32 %v10008, %v9815
      %v10041 = vadd.f32 %v10009, %v9817
      %v10042 = vadd.f32 %v10010, %v9819
      %v10043 = vadd.f32 %v10011, %v9821
      %v10044 = vadd.f32 %v10012, %v9823
      %v10045 = vadd.f32 %v10013, %v9825
      %v10046 = vadd.f32 %v10014, %v9827
      %v10047 = vadd.f32 %v10015, %v9829
      %v10048 = vadd.f32 %v10016, %v9831
      %v10049 = vadd.f32 %v10017, %v9833
      %v10050 = vadd.f32 %v10018, %v9835
      %v10051 = vadd.f32 %v10019, %v9837
      %v10052 = vadd.f32 %v10020, %v9839
      %v10053 = vadd.f32 %v10021, %v9841
      %v10054 = vadd.f32 %v10022, %v9843
      %v10055 = vadd.f32 %v10023, %v9845
      %v10056 = vadd.f32 %v10024, %v9847
      %v10057 = vadd.f32 %v10025, %v9849
      %v10058 = vadd.f32 %v10026, %v9851
      %v10059 = vadd.f32 %v10027, %v9853
      %v10060 = vadd.f32 %v10028, %v9855
      %v10061 = vadd.f32 %v10029, %v9857
      %v10062 = vadd.f32 %v10030, %v9859
      %v10063 = vadd.f32 %v10031, %v9861
      %v10064 = vadd.f32 %v10032, %v9863
      %v10065 = vadd.f32 %v10033, %v9865
      %v10066 = vadd.f32 %v10034, %v9867
      %v10067 = vadd.f32 %v10035, %v9869
      %v10068 = vadd.f32 %v10036, %v9871
      %v10069 = vadd.f32 %v10037, %v9873
      %10070 = vst [vmem:[%s360] sm:$0xff] %v10038
      %10071 = vst [vmem:[%s360 + $0x8] sm:$0xff] %v10039
      %10072 = vst [vmem:[%s360 + $0x10] sm:$0xff] %v10040
      %10073 = vst [vmem:[%s360 + $0x18] sm:$0xff] %v10041
      %10074 = vst [vmem:[%s360 + $0x20] sm:$0xff] %v10042
      %10075 = vst [vmem:[%s360 + $0x28] sm:$0xff] %v10043
      %10076 = vst [vmem:[%s360 + $0x30] sm:$0xff] %v10044
      %10077 = vst [vmem:[%s360 + $0x38] sm:$0xff] %v10045
      %10078 = vst [vmem:[%s360 + $0x40] sm:$0xff] %v10046
      %10079 = vst [vmem:[%s360 + $0x48] sm:$0xff] %v10047
      %10080 = vst [vmem:[%s360 + $0x50] sm:$0xff] %v10048
      %10081 = vst [vmem:[%s360 + $0x58] sm:$0xff] %v10049
      %10082 = vst [vmem:[%s360 + $0x60] sm:$0xff] %v10050
      %10083 = vst [vmem:[%s360 + $0x68] sm:$0xff] %v10051
      %10084 = vst [vmem:[%s360 + $0x70] sm:$0xff] %v10052
      %10085 = vst [vmem:[%s360 + $0x78] sm:$0xff] %v10053
      %10086 = vst [vmem:[%s360 + $0x80] sm:$0xff] %v10054
      %10087 = vst [vmem:[%s360 + $0x88] sm:$0xff] %v10055
      %10088 = vst [vmem:[%s360 + $0x90] sm:$0xff] %v10056
      %10089 = vst [vmem:[%s360 + $0x98] sm:$0xff] %v10057
      %10090 = vst [vmem:[%s360 + $0xa0] sm:$0xff] %v10058
      %10091 = vst [vmem:[%s360 + $0xa8] sm:$0xff] %v10059
      %10092 = vst [vmem:[%s360 + $0xb0] sm:$0xff] %v10060
      %10093 = vst [vmem:[%s360 + $0xb8] sm:$0xff] %v10061
      %10094 = vst [vmem:[%s360 + $0xc0] sm:$0xff] %v10062
      %10095 = vst [vmem:[%s360 + $0xc8] sm:$0xff] %v10063
      %10096 = vst [vmem:[%s360 + $0xd0] sm:$0xff] %v10064
      %10097 = vst [vmem:[%s360 + $0xd8] sm:$0xff] %v10065
      %10098 = vst [vmem:[%s360 + $0xe0] sm:$0xff] %v10066
      %10099 = vst [vmem:[%s360 + $0xe8] sm:$0xff] %v10067
      %10100 = vst [vmem:[%s360 + $0xf0] sm:$0xff] %v10068
      %10101 = vst [vmem:[%s360 + $0xf8] sm:$0xff] %v10069
      %s10102 = smul.u32 32, %s23
      %p10103 = scmp.lt.s32.totalorder %s22, 1
      %s10104 = scalar_select %p10103, %s22, 1
      %p10105 = scmp.lt.s32.totalorder %s10102, 31
      %s10106 = scalar_select %p10105, %s10102, 31
      %s10107 = smul.addr %s10104, 32
      %s10108 = sadd.s32 %s10106, %s10107
      %s10109 = smul.addr %s10108, 8
      %s10110 = scalar_lea.vmem %s7, %s10109
      // Predicated region
      $region53: #{spade_forward.3} parent=47 // pred_check
        %p10111 = pneg %p216
      $region54: #{spade_forward.3} parent=47 // pred_check_branch
        %10113 = sbr.rel (%p10111) target = $region56
      $region55: #{spade_forward.3} parent=47 // pred_region
        %s10114 = smul.u32 32, %s23
      $region56: #{spade_forward.3} parent=47 // pred_fallthru
        _
    $region48: #{spade_forward.3} parent=5 // pred_fallthru
      _
    %p10115 = scmp.le.s32.totalorder 2, %s13
    // Predicated region
    $region57: #{spade_forward.3} parent=5 // pred_check
      %p10116 = pneg %p10115
    $region58: #{spade_forward.3} parent=5 // pred_check_branch
      %10118 = sbr.rel (%p10116) target = $region60
    $region59: #{spade_forward.3} parent=5 // pred_region
      %s10119 = ssub.s32 %s13, 2
      // Predicated region
      $region61: #{spade_forward.3} parent=59 // pred_check
        %p10120 = pneg %p222
      $region62: #{spade_forward.3} parent=59 // pred_check_branch
        %10122 = sbr.rel (%p10120) target = $region64
      $region63: #{spade_forward.3} parent=59 // pred_region
        %s10123 = smul.u32 32, %s25
        %p10124 = scmp.lt.s32.totalorder %s24, 1
        %s10125 = scalar_select %p10124, %s24, 1
        %p10126 = scmp.lt.s32.totalorder %s10123, 31
        %s10127 = scalar_select %p10126, %s10123, 31
        %s10128 = smul.addr %s10125, 32
        %s10129 = sadd.s32 %s10127, %s10128
        %s10130 = smul.addr %s10129, 8
        %s10131 = scalar_lea.vmem %s7, %s10130
      $region64: #{spade_forward.3} parent=59 // pred_fallthru
        _
    $region60: #{spade_forward.3} parent=5 // pred_fallthru
      _
  $region6: #{spade_forward.3} parent=0 // loop_footer
    %s17 = sadd.s32 1, %s13
  $region7: #{spade_forward.3} parent=0 // loop_footer_branch
    %12 = sbr.rel target = $region3
  $region8: #{spade_forward.3} parent=0 // loop_exit
    _

</llo_original>
